<compile_context>
chip_gen: v7x
topology: tpu7x:2x2x1
jax: 0.10.0
libtpu: 0.0.40
codegen_flags: <defaults>
</compile_context>

<pallas_src>
import numpy as np
import jax
import jax.numpy as jnp
from jax.experimental import pallas as pl
from jax.experimental.pallas import tpu as pltpu


# ----------------------------- host-side weight packing -------------------------
def _pack_weights(p, Ds, De, Hs, He, L):
    """Re-pack the 28 small Linear weights/biases into a single 2-D slab.

    Returns (slab, offsets) where offsets[name] = (row_offset, rows, cols).
    Every block's row offset is 8-aligned (sublane aligned).
    """
    f32 = jnp.float32
    g1w, g2w = p["g1w"].astype(f32), p["g2w"].astype(f32)
    emb = p["edgeemb"].astype(f32)

    def cat(*xs):
        return jnp.concatenate([x.astype(f32) for x in xs], axis=1)

    blocks = {}
    # gate1 input order: [s(Hs) | e(He) | label(L)]; gate2: [e(He) | s(Hs) | label(L)]
    blocks["gate_s"] = cat(g1w[:Hs], g2w[He:He + Hs])                   # (Hs, C1+C2)
    blocks["gate_e"] = cat(g1w[Hs:Hs + He], g2w[:He])                   # (He, C1+C2)
    blocks["gate_l"] = cat(emb @ g1w[Hs + He:], emb @ g2w[He + Hs:])    # (4,  C1+C2)
    blocks["gate_b"] = cat(p["g1b"], p["g2b"])                          # (1,  C1+C2)
    blocks["emb"] = emb                                                 # (4, L)

    def pack_gru(pre, comps, hd):
        rw, zw, cw, uw = p[f"{pre}_rw"], p[f"{pre}_zw"], p[f"{pre}_cw"], p[f"{pre}_uw"]
        o = 0
        for name, sz in comps:                       # x components: columns [r|z|c]
            blocks[f"{pre}_{name}"] = cat(rw[o:o + sz], zw[o:o + sz], cw[o:o + sz])
            o += sz
        blocks[f"{pre}_h"] = cat(rw[o:o + hd], zw[o:o + hd], uw)   # h path: [r|z|u]
        blocks[f"{pre}_bx"] = cat(p[f"{pre}_rb"], p[f"{pre}_zb"], p[f"{pre}_cb"])
        zb = jnp.zeros((1, hd), f32)
        blocks[f"{pre}_bh"] = cat(zb, zb, p[f"{pre}_ub"])

    pack_gru("s", [("sent", Ds), ("nss", Hs), ("nee", He), ("nel", L), ("g", Hs)], Hs)
    pack_gru("e", [("word", De), ("nss", Hs), ("nsl", L), ("g", Hs)], He)
    pack_gru("g", [("shm", Hs), ("ehm", He)], Hs)

    width = max(int(b.shape[1]) for b in blocks.values())
    offsets, rows, cur = {}, [], 0
    for name, b in blocks.items():
        r, c = int(b.shape[0]), int(b.shape[1])
        rpad = (-r) % 8
        rows.append(jnp.pad(b, ((0, rpad), (0, width - c))))
        offsets[name] = (cur, r, c)
        cur += r + rpad
    return jnp.concatenate(rows, axis=0), offsets


# ----------------------------- fused forward ------------------------------------
def grngob_forward(sent, smask, word, wmask, matrix, params,
                   num_layers=2, batch_block=None):
    """Fused GRNGOB forward (agg='gate').

    batch_block:
      None / B : single grid step, batch folded into the matmul M dimension
                 (recommended on single-TensorCore chips: v5e / v6e).
      1        : grid=(B,) with 'parallel' semantics so megacore chips (v7x, 2 TCs)
                 shard one batch element per TensorCore.
    """
    B, S, Ds = sent.shape
    _, E, De = word.shape
    Hs = params["s_uw"].shape[0]
    He = params["e_uw"].shape[0]
    NL, L = params["edgeemb"].shape
    C1, C2 = He + L, Hs + L
    assert Ds == Hs, "s_emb must equal s_hidden (s_h = zeros_like(sent))"

    bb = B if batch_block is None else int(batch_block)
    assert B % bb == 0

    # ---- host-side glue: masks / transposed int matrix / packed weights ---------
    smf = smask.astype(jnp.float32)
    wmf = wmask.astype(jnp.float32)
    smask_row = smf.reshape(B, 1, S)
    smask_col = smf.reshape(B, S, 1)
    wmask_col = wmf.reshape(B, E, 1)
    mat = matrix.astype(jnp.int32)
    mat_t = jnp.swapaxes(mat, 1, 2)
    slab, off = _pack_weights(params, Ds, De, Hs, He, L)

    def kernel(sent_ref, word_ref, smrow_ref, smcol_ref, wmcol_ref,
               mat_ref, matT_ref, w_ref, sh_out, eh_out, gh_out):
        f32 = jnp.float32
        # Load every packed weight block once (re-used across the unrolled layers).
        W = {k: w_ref[o:o + r, 0:c] for k, (o, r, c) in off.items()}

        sent_b = sent_ref[...]            # (bb, S, Ds)
        word_b = word_ref[...]            # (bb, E, De)
        sm_row = smrow_ref[...]           # (bb, 1, S)
        sm_col = smcol_ref[...]           # (bb, S, 1)
        wm_col = wmcol_ref[...]           # (bb, E, 1)
        mat_se = mat_ref[...]             # (bb, S, E) int32
        mat_es = matT_ref[...]            # (bb, E, S) int32

        m_se = (mat_se != 0).astype(f32)
        m_es = (mat_es != 0).astype(f32)

        # ------------------ loop-invariant precompute (hoisted) ------------------
        prod = jnp.einsum("bse,bte->bst", m_se, m_se, preferred_element_type=f32)
        ii = jax.lax.broadcasted_iota(jnp.int32, (S, S), 0)
        jj = jax.lax.broadcasted_iota(jnp.int32, (S, S), 1)
        not_eye = (ii != jj).astype(f32)
        s2s = (prod != 0).astype(f32) * not_eye[None] * sm_row          # (bb,S,S)

        # Edge-label embedding from the int matrix: one_hot @ edgeemb (both orientations).
        oh_se = (mat_se[..., None] ==
                 jax.lax.broadcasted_iota(jnp.int32, (bb, S, E, NL), 3)).astype(f32)
        oh_es = (mat_es[..., None] ==
                 jax.lax.broadcasted_iota(jnp.int32, (bb, E, S, NL), 3)).astype(f32)
        oh_se_f = oh_se.reshape(bb * S * E, NL)
        oh_es_f = oh_es.reshape(bb * E * S, NL)
        label_se = jnp.dot(oh_se_f, W["emb"],
                           preferred_element_type=f32).reshape(bb, S, E, L)
        label_es = jnp.dot(oh_es_f, W["emb"],
                           preferred_element_type=f32).reshape(bb, E, S, L)
        # Gate pre-activation: label + bias contributions are loop-invariant.
        lbl1 = jnp.dot(oh_se_f, W["gate_l"][:, :C1],
                       preferred_element_type=f32).reshape(bb, S, E, C1) + W["gate_b"][:, :C1]
        lbl2 = jnp.dot(oh_es_f, W["gate_l"][:, C1:],
                       preferred_element_type=f32).reshape(bb, E, S, C2) + W["gate_b"][:, C1:]

        # GRU x contributions from the constant input features (biases folded in).
        sent_ctr = jnp.dot(sent_b.reshape(bb * S, Ds), W["s_sent"],
                           preferred_element_type=f32).reshape(bb, S, 3 * Hs) + W["s_bx"]
        word_ctr = jnp.dot(word_b.reshape(bb * E, De), W["e_word"],
                           preferred_element_type=f32).reshape(bb, E, 3 * He) + W["e_bx"]

        # Mask denominators (guard is a no-op for any non-empty sentence mask).
        inv_s = 1.0 / jnp.maximum(jnp.sum(sm_col, axis=1), 1e-6)        # (bb,1)
        inv_w = 1.0 / (jnp.sum(wm_col, axis=1) + 1.0)                   # (bb,1)

        def gru_combine(pre_x, pre_h, h, hd):
            # pre_x = x@[Wr|Wz|Wc] + [br|bz|bc] ; pre_h = h@[Wr|Wz|Wu] + [0|0|bu]
            r = jax.nn.sigmoid(pre_x[..., :hd] + pre_h[..., :hd])
            z = jax.nn.sigmoid(pre_x[..., hd:2 * hd] + pre_h[..., hd:2 * hd])
            u = jnp.tanh(pre_x[..., 2 * hd:] + r * pre_h[..., 2 * hd:])
            return z * h + (1.0 - z) * u

        s_h = jnp.zeros((bb, S, Hs), f32)
        e_h = jnp.zeros((bb, E, He), f32)
        g_h = jnp.zeros((bb, Hs), f32)

        for _ in range(num_layers):
            # sentence -> sentence aggregation
            nss = jnp.einsum("bst,bth->bsh", s2s, s_h, preferred_element_type=f32)

            # fused gate1+gate2: rank-structured pre-activation, no (S*E, .) concat operand
            proj_s = jnp.dot(s_h.reshape(bb * S, Hs), W["gate_s"],
                             preferred_element_type=f32)                # (bb*S, C1+C2)
            proj_e = jnp.dot(e_h.reshape(bb * E, He), W["gate_e"],
                             preferred_element_type=f32)                # (bb*E, C1+C2)
            g1 = jax.nn.sigmoid(proj_s[:, :C1].reshape(bb, S, 1, C1)
                                + proj_e[:, :C1].reshape(bb, 1, E, C1)
                                + lbl1) * m_se[..., None]               # (bb,S,E,C1)
            g2 = jax.nn.sigmoid(proj_e[:, C1:].reshape(bb, E, 1, C2)
                                + proj_s[:, C1:].reshape(bb, 1, S, C2)
                                + lbl2) * m_es[..., None]               # (bb,E,S,C2)

            # masked neighbour reductions (reduced axis is the sublane axis in both)
            s_ne_e = jnp.sum(e_h[:, None, :, :] * g1[..., :He], axis=2)    # (bb,S,He)
            s_ne_l = jnp.sum(label_se * g1[..., He:], axis=2)              # (bb,S,L)
            e_ns_s = jnp.sum(s_h[:, None, :, :] * g2[..., :Hs], axis=2)    # (bb,E,Hs)
            e_ns_l = jnp.sum(label_es * g2[..., Hs:], axis=2)              # (bb,E,L)

            # sentence GRU (concat-free: per-component weight blocks, r|z|c fused)
            pre_sx = (sent_ctr
                      + jnp.dot(nss.reshape(bb * S, Hs), W["s_nss"],
                                preferred_element_type=f32).reshape(bb, S, 3 * Hs)
                      + jnp.dot(s_ne_e.reshape(bb * S, He), W["s_nee"],
                                preferred_element_type=f32).reshape(bb, S, 3 * Hs)
                      + jnp.dot(s_ne_l.reshape(bb * S, L), W["s_nel"],
                                preferred_element_type=f32).reshape(bb, S, 3 * Hs)
                      + jnp.dot(g_h, W["s_g"], preferred_element_type=f32)[:, None, :])
            pre_sh = jnp.dot(s_h.reshape(bb * S, Hs), W["s_h"],
                             preferred_element_type=f32).reshape(bb, S, 3 * Hs) + W["s_bh"]
            new_s = gru_combine(pre_sx, pre_sh, s_h, Hs) * sm_col

            # word GRU
            pre_ex = (word_ctr
                      + jnp.dot(e_ns_s.reshape(bb * E, Hs), W["e_nss"],
                                preferred_element_type=f32).reshape(bb, E, 3 * He)
                      + jnp.dot(e_ns_l.reshape(bb * E, L), W["e_nsl"],
                                preferred_element_type=f32).reshape(bb, E, 3 * He)
                      + jnp.dot(g_h, W["e_g"], preferred_element_type=f32)[:, None, :])
            pre_eh = jnp.dot(e_h.reshape(bb * E, He), W["e_h"],
                             preferred_element_type=f32).reshape(bb, E, 3 * He) + W["e_bh"]
            new_e = gru_combine(pre_ex, pre_eh, e_h, He) * wm_col

            # global GRU
            sh_mean = jnp.sum(new_s, axis=1) * inv_s                    # (bb,Hs)
            eh_mean = jnp.sum(new_e, axis=1) * inv_w                    # (bb,He)
            pre_gx = (jnp.dot(sh_mean, W["g_shm"], preferred_element_type=f32)
                      + jnp.dot(eh_mean, W["g_ehm"], preferred_element_type=f32)
                      + W["g_bx"])
            pre_gh = jnp.dot(g_h, W["g_h"], preferred_element_type=f32) + W["g_bh"]
            new_g = gru_combine(pre_gx, pre_gh, g_h, Hs)

            s_h, e_h, g_h = new_s, new_e, new_g

        # lane-dense output slabs (S*Hs = E*He = 128 lanes); reshaped back in wrapper
        sh_flat = jnp.concatenate([s_h[:, i, :] for i in range(S)], axis=-1)  # (bb, S*Hs)
        eh_flat = jnp.concatenate([e_h[:, i, :] for i in range(E)], axis=-1)  # (bb, E*He)
        sh_out[...] = sh_flat[:, None, :]
        eh_out[...] = eh_flat[:, None, :]
        gh_out[...] = g_h[:, None, :]

    def blk(trailing):
        nd = len(trailing)
        return pl.BlockSpec((bb,) + tuple(trailing),
                            lambda g, _nd=nd: (g,) + (0,) * _nd)

    in_specs = [blk((S, Ds)), blk((E, De)), blk((1, S)), blk((S, 1)), blk((E, 1)),
                blk((S, E)), blk((E, S)),
                pl.BlockSpec(tuple(slab.shape), lambda g: (0, 0))]
    out_specs = (blk((1, S * Hs)), blk((1, E * He)), blk((1, Hs)))
    out_shape = (jax.ShapeDtypeStruct((B, 1, S * Hs), jnp.float32),
                 jax.ShapeDtypeStruct((B, 1, E * He), jnp.float32),
                 jax.ShapeDtypeStruct((B, 1, Hs), jnp.float32))

    sh, eh, gh = pl.pallas_call(
        kernel,
        out_shape=out_shape,
        grid=(B // bb,),
        in_specs=in_specs,
        out_specs=out_specs,
        compiler_params=pltpu.CompilerParams(dimension_semantics=("parallel",)),
    )(sent.astype(jnp.float32), word.astype(jnp.float32),
      smask_row, smask_col, wmask_col, mat, mat_t, slab)

    # TODO(synk): final F.dropout(s_h, dp, training) omitted — eval-mode (identity).
    return sh.reshape(B, S, Hs), eh.reshape(B, E, He), gh.reshape(B, Hs)


# ----------------------------- reference (plain JAX) ----------------------------
def reference_forward(sent, smask, word, wmask, matrix, params, num_layers=2):
    B, S, _ = sent.shape
    E = word.shape[1]
    Hs = params["s_uw"].shape[0]
    He = params["e_uw"].shape[0]
    mask_se = (matrix != 0).astype(jnp.float32)
    label = params["edgeemb"][matrix]
    smf = smask.astype(jnp.float32)
    wmf = wmask.astype(jnp.float32)
    s2s = (jnp.einsum("bse,bte->bst", mask_se, mask_se) != 0).astype(jnp.float32)
    s2s = s2s * (1.0 - jnp.eye(S))[None] * smf[:, None, :]

    def gru(x, h, p, pre):
        rz = jnp.concatenate([x, h], -1)
        r = jax.nn.sigmoid(rz @ p[pre + "_rw"] + p[pre + "_rb"])
        z = jax.nn.sigmoid(rz @ p[pre + "_zw"] + p[pre + "_zb"])
        u = jnp.tanh(x @ p[pre + "_cw"] + p[pre + "_cb"]
                     + r * (h @ p[pre + "_uw"] + p[pre + "_ub"]))
        return z * h + (1.0 - z) * u

    s_h = jnp.zeros((B, S, Hs))
    e_h = jnp.zeros((B, E, He))
    g_h = jnp.zeros((B, Hs))
    for _ in range(num_layers):
        s_neigh_s_h = jnp.einsum("bst,bth->bsh", s2s, s_h)
        e_exp = jnp.broadcast_to(e_h[:, None], (B, S, E, He))
        s_exp = jnp.broadcast_to(s_h[:, :, None], (B, S, E, Hs))
        e_edge = jnp.concatenate([e_exp, label], -1)
        g1 = jax.nn.sigmoid(jnp.concatenate([s_exp, e_edge], -1) @ params["g1w"] + params["g1b"])
        s_neigh_e_h = jnp.sum(e_edge * g1 * mask_se[..., None], axis=2)
        s_edge = jnp.concatenate([s_exp, label], -1)
        g2 = jax.nn.sigmoid(jnp.concatenate([e_exp, s_edge], -1) @ params["g2w"] + params["g2b"])
        e_neigh_s_h = jnp.sum(s_edge * g2 * mask_se[..., None], axis=1)

        x_s = jnp.concatenate([sent, s_neigh_s_h, s_neigh_e_h,
                               jnp.broadcast_to(g_h[:, None], (B, S, Hs))], -1)
        new_sh = gru(x_s, s_h, params, "s")
        x_e = jnp.concatenate([word, e_neigh_s_h,
                               jnp.broadcast_to(g_h[:, None], (B, E, Hs))], -1)
        new_eh = gru(x_e, e_h, params, "e")
        new_sh = jnp.where(smf[..., None] != 0, new_sh, 0.0)
        new_eh = jnp.where(wmf[..., None] != 0, new_eh, 0.0)
        sh_mean = new_sh.sum(1) / smf.sum(1, keepdims=True)
        eh_mean = new_eh.sum(1) / (wmf.sum(1, keepdims=True) + 1.0)
        g_h = gru(jnp.concatenate([sh_mean, eh_mean], -1), g_h, params, "g")
        s_h, e_h = new_sh, new_eh
    return s_h, e_h, g_h


# ----------------------------- parameter init ----------------------------------
def init_params(key, s_emb, e_emb, s_hid, e_hid, label_dim):
    xs = s_emb + s_hid + label_dim + e_hid + s_hid   # s_gru x_dim
    xe = e_emb + s_hid + label_dim + s_hid           # e_gru x_dim
    xg = s_hid + e_hid                               # g_gru x_dim
    specs = {
        "edgeemb": (4, label_dim),
        "g1w": (s_hid + e_hid + label_dim, e_hid + label_dim), "g1b": (1, e_hid + label_dim),
        "g2w": (s_hid + e_hid + label_dim, s_hid + label_dim), "g2b": (1, s_hid + label_dim),
    }
    for pre, xd, hd in (("s", xs, s_hid), ("e", xe, e_hid), ("g", xg, s_hid)):
        specs[f"{pre}_rw"] = (xd + hd, hd); specs[f"{pre}_rb"] = (1, hd)
        specs[f"{pre}_zw"] = (xd + hd, hd); specs[f"{pre}_zb"] = (1, hd)
        specs[f"{pre}_cw"] = (xd, hd);      specs[f"{pre}_cb"] = (1, hd)
        specs[f"{pre}_uw"] = (hd, hd);      specs[f"{pre}_ub"] = (1, hd)
    keys = jax.random.split(key, len(specs))
    return {name: 0.1 * jax.random.normal(k, shape, jnp.float32)
            for (name, shape), k in zip(specs.items(), keys)}


if __name__ == "__main__":
    B, S, E = 2, 8, 8            # batch, snum, wnum
    s_emb = s_hidden = 16
    e_emb = 12
    e_hidden = 16
    label_dim = 8
    num_layers = 2

    key = jax.random.PRNGKey(0)
    kp, ks, kw = jax.random.split(key, 3)
    params = init_params(kp, s_emb, e_emb, s_hidden, e_hidden, label_dim)

    sent = jax.random.normal(ks, (B, S, s_emb), jnp.float32)
    word = jax.random.normal(kw, (B, E, e_emb), jnp.float32)
    smask_np = np.zeros((B, S), np.int32); smask_np[0, :6] = 1; smask_np[1, :7] = 1
    wmask_np = np.zeros((B, E), np.int32); wmask_np[0, :5] = 1; wmask_np[1, :7] = 1
    smask = jnp.asarray(smask_np)
    wmask = jnp.asarray(wmask_np)

    # Deterministic `elocs` -> edge-label matrix (host-side, exactly as in torch code).
    elocs = []
    for ib in range(B):
        eloc = []
        for ixw in range(E):
            eloc.append([([(ixw + ib) % S, (ixw + 2) % S], ((ixw + ib) % 3) + 1)])
        elocs.append(eloc)
    matrix_np = np.zeros((B, S, E), np.int32)
    for ib, eloc in enumerate(elocs):
        for ixw, loc in enumerate(eloc):
            for aftersf_ixs, r in loc:
                matrix_np[ib, aftersf_ixs, ixw] = r
    matrix = jnp.asarray(matrix_np)

    s_ref, e_ref, g_ref = reference_forward(sent, smask, word, wmask, matrix, params, num_layers)

    # 1) batch folded into the matmul M dimension (single grid step; v5e/v6e layout)
    s_h, e_h, g_h = grngob_forward(sent, smask, word, wmask, matrix, params, num_layers)
    jax.block_until_ready((s_h, e_h, g_h))
    np.testing.assert_allclose(np.asarray(s_h), np.asarray(s_ref), rtol=1e-4, atol=1e-4)
    np.testing.assert_allclose(np.asarray(e_h), np.asarray(e_ref), rtol=1e-4, atol=1e-4)
    np.testing.assert_allclose(np.asarray(g_h), np.asarray(g_ref), rtol=1e-4, atol=1e-4)

    # 2) one batch per grid step, 'parallel' grid (v7x megacore layout)
    s_h1, e_h1, g_h1 = grngob_forward(sent, smask, word, wmask, matrix, params,
                                      num_layers, batch_block=1)
    jax.block_until_ready((s_h1, e_h1, g_h1))
    np.testing.assert_allclose(np.asarray(s_h1), np.asarray(s_ref), rtol=1e-4, atol=1e-4)
    np.testing.assert_allclose(np.asarray(e_h1), np.asarray(e_ref), rtol=1e-4, atol=1e-4)
    np.testing.assert_allclose(np.asarray(g_h1), np.asarray(g_ref), rtol=1e-4, atol=1e-4)

    print("KERNEL_OK")
</pallas_src>

<mosaic_0001>
module attributes {stable_mosaic.version = 11 : i64} {
  func.func @kernel(%arg0: i32, %arg1: memref<2x8x16xf32, #tpu.memory_space<vmem>>, %arg2: memref<2x8x12xf32, #tpu.memory_space<vmem>>, %arg3: memref<2x1x8xf32, #tpu.memory_space<vmem>>, %arg4: memref<2x8x1xf32, #tpu.memory_space<vmem>>, %arg5: memref<2x8x1xf32, #tpu.memory_space<vmem>>, %arg6: memref<2x8x8xi32, #tpu.memory_space<vmem>>, %arg7: memref<2x8x8xi32, #tpu.memory_space<vmem>>, %arg8: memref<312x48xf32, #tpu.memory_space<vmem>>, %arg9: memref<2x1x128xf32, #tpu.memory_space<vmem>>, %arg10: memref<2x1x128xf32, #tpu.memory_space<vmem>>, %arg11: memref<2x1x16xf32, #tpu.memory_space<vmem>>) attributes {dimension_semantics = [#tpu.dimension_semantics<parallel>], iteration_bounds = array<i64: 1>, scalar_prefetch = 0 : i64, scratch_operands = 0 : i64, tpu.core_type = #tpu.core_type<tc>, window_params = [{transform_indices = @transform_0, window_bounds = array<i64: 2, 8, 16>}, {transform_indices = @transform_1, window_bounds = array<i64: 2, 8, 12>}, {transform_indices = @transform_2, window_bounds = array<i64: 2, 1, 8>}, {transform_indices = @transform_3, window_bounds = array<i64: 2, 8, 1>}, {transform_indices = @transform_4, window_bounds = array<i64: 2, 8, 1>}, {transform_indices = @transform_5, window_bounds = array<i64: 2, 8, 8>}, {transform_indices = @transform_6, window_bounds = array<i64: 2, 8, 8>}, {pipeline_mode = #tpu.pipeline_mode<synchronous>, transform_indices = @transform_7, window_bounds = array<i64: 312, 48>}, {transform_indices = @transform_8, window_bounds = array<i64: 2, 1, 128>}, {transform_indices = @transform_9, window_bounds = array<i64: 2, 1, 128>}, {transform_indices = @transform_10, window_bounds = array<i64: 2, 1, 16>}]} {
    %c0 = arith.constant 0 : index
    %c0_0 = arith.constant 0 : index
    %0 = vector.load %arg8[%c0, %c0_0] : memref<312x48xf32, #tpu.memory_space<vmem>>, vector<16x48xf32>
    %c16 = arith.constant 16 : index
    %c0_1 = arith.constant 0 : index
    %1 = vector.load %arg8[%c16, %c0_1] : memref<312x48xf32, #tpu.memory_space<vmem>>, vector<16x48xf32>
    %c32 = arith.constant 32 : index
    %c0_2 = arith.constant 0 : index
    %2 = vector.load %arg8[%c32, %c0_2] : memref<312x48xf32, #tpu.memory_space<vmem>>, vector<4x48xf32>
    %c40 = arith.constant 40 : index
    %c0_3 = arith.constant 0 : index
    %3 = vector.load %arg8[%c40, %c0_3] : memref<312x48xf32, #tpu.memory_space<vmem>>, vector<1x48xf32>
    %c48 = arith.constant 48 : index
    %c0_4 = arith.constant 0 : index
    %4 = vector.load %arg8[%c48, %c0_4] : memref<312x48xf32, #tpu.memory_space<vmem>>, vector<4x8xf32>
    %c56 = arith.constant 56 : index
    %c0_5 = arith.constant 0 : index
    %5 = vector.load %arg8[%c56, %c0_5] : memref<312x48xf32, #tpu.memory_space<vmem>>, vector<16x48xf32>
    %c72 = arith.constant 72 : index
    %c0_6 = arith.constant 0 : index
    %6 = vector.load %arg8[%c72, %c0_6] : memref<312x48xf32, #tpu.memory_space<vmem>>, vector<16x48xf32>
    %c88 = arith.constant 88 : index
    %c0_7 = arith.constant 0 : index
    %7 = vector.load %arg8[%c88, %c0_7] : memref<312x48xf32, #tpu.memory_space<vmem>>, vector<16x48xf32>
    %c104 = arith.constant 104 : index
    %c0_8 = arith.constant 0 : index
    %8 = vector.load %arg8[%c104, %c0_8] : memref<312x48xf32, #tpu.memory_space<vmem>>, vector<8x48xf32>
    %c112 = arith.constant 112 : index
    %c0_9 = arith.constant 0 : index
    %9 = vector.load %arg8[%c112, %c0_9] : memref<312x48xf32, #tpu.memory_space<vmem>>, vector<16x48xf32>
    %c128 = arith.constant 128 : index
    %c0_10 = arith.constant 0 : index
    %10 = vector.load %arg8[%c128, %c0_10] : memref<312x48xf32, #tpu.memory_space<vmem>>, vector<16x48xf32>
    %c144 = arith.constant 144 : index
    %c0_11 = arith.constant 0 : index
    %11 = vector.load %arg8[%c144, %c0_11] : memref<312x48xf32, #tpu.memory_space<vmem>>, vector<1x48xf32>
    %c152 = arith.constant 152 : index
    %c0_12 = arith.constant 0 : index
    %12 = vector.load %arg8[%c152, %c0_12] : memref<312x48xf32, #tpu.memory_space<vmem>>, vector<1x48xf32>
    %c160 = arith.constant 160 : index
    %c0_13 = arith.constant 0 : index
    %13 = vector.load %arg8[%c160, %c0_13] : memref<312x48xf32, #tpu.memory_space<vmem>>, vector<12x48xf32>
    %c176 = arith.constant 176 : index
    %c0_14 = arith.constant 0 : index
    %14 = vector.load %arg8[%c176, %c0_14] : memref<312x48xf32, #tpu.memory_space<vmem>>, vector<16x48xf32>
    %c192 = arith.constant 192 : index
    %c0_15 = arith.constant 0 : index
    %15 = vector.load %arg8[%c192, %c0_15] : memref<312x48xf32, #tpu.memory_space<vmem>>, vector<8x48xf32>
    %c200 = arith.constant 200 : index
    %c0_16 = arith.constant 0 : index
    %16 = vector.load %arg8[%c200, %c0_16] : memref<312x48xf32, #tpu.memory_space<vmem>>, vector<16x48xf32>
    %c216 = arith.constant 216 : index
    %c0_17 = arith.constant 0 : index
    %17 = vector.load %arg8[%c216, %c0_17] : memref<312x48xf32, #tpu.memory_space<vmem>>, vector<16x48xf32>
    %c232 = arith.constant 232 : index
    %c0_18 = arith.constant 0 : index
    %18 = vector.load %arg8[%c232, %c0_18] : memref<312x48xf32, #tpu.memory_space<vmem>>, vector<1x48xf32>
    %c240 = arith.constant 240 : index
    %c0_19 = arith.constant 0 : index
    %19 = vector.load %arg8[%c240, %c0_19] : memref<312x48xf32, #tpu.memory_space<vmem>>, vector<1x48xf32>
    %c248 = arith.constant 248 : index
    %c0_20 = arith.constant 0 : index
    %20 = vector.load %arg8[%c248, %c0_20] : memref<312x48xf32, #tpu.memory_space<vmem>>, vector<16x48xf32>
    %c264 = arith.constant 264 : index
    %c0_21 = arith.constant 0 : index
    %21 = vector.load %arg8[%c264, %c0_21] : memref<312x48xf32, #tpu.memory_space<vmem>>, vector<16x48xf32>
    %c280 = arith.constant 280 : index
    %c0_22 = arith.constant 0 : index
    %22 = vector.load %arg8[%c280, %c0_22] : memref<312x48xf32, #tpu.memory_space<vmem>>, vector<16x48xf32>
    %c296 = arith.constant 296 : index
    %c0_23 = arith.constant 0 : index
    %23 = vector.load %arg8[%c296, %c0_23] : memref<312x48xf32, #tpu.memory_space<vmem>>, vector<1x48xf32>
    %c304 = arith.constant 304 : index
    %c0_24 = arith.constant 0 : index
    %24 = vector.load %arg8[%c304, %c0_24] : memref<312x48xf32, #tpu.memory_space<vmem>>, vector<1x48xf32>
    %c0_25 = arith.constant 0 : index
    %c0_26 = arith.constant 0 : index
    %c0_27 = arith.constant 0 : index
    %25 = vector.load %arg1[%c0_25, %c0_26, %c0_27] : memref<2x8x16xf32, #tpu.memory_space<vmem>>, vector<2x8x16xf32>
    %c0_28 = arith.constant 0 : index
    %c0_29 = arith.constant 0 : index
    %c0_30 = arith.constant 0 : index
    %26 = vector.load %arg2[%c0_28, %c0_29, %c0_30] : memref<2x8x12xf32, #tpu.memory_space<vmem>>, vector<2x8x12xf32>
    %c0_31 = arith.constant 0 : index
    %c0_32 = arith.constant 0 : index
    %c0_33 = arith.constant 0 : index
    %27 = vector.load %arg3[%c0_31, %c0_32, %c0_33] : memref<2x1x8xf32, #tpu.memory_space<vmem>>, vector<2x1x8xf32>
    %c0_34 = arith.constant 0 : index
    %c0_35 = arith.constant 0 : index
    %c0_36 = arith.constant 0 : index
    %28 = vector.load %arg4[%c0_34, %c0_35, %c0_36] : memref<2x8x1xf32, #tpu.memory_space<vmem>>, vector<2x8x1xf32>
    %c0_37 = arith.constant 0 : index
    %c0_38 = arith.constant 0 : index
    %c0_39 = arith.constant 0 : index
    %29 = vector.load %arg5[%c0_37, %c0_38, %c0_39] : memref<2x8x1xf32, #tpu.memory_space<vmem>>, vector<2x8x1xf32>
    %c0_40 = arith.constant 0 : index
    %c0_41 = arith.constant 0 : index
    %c0_42 = arith.constant 0 : index
    %30 = vector.load %arg6[%c0_40, %c0_41, %c0_42] : memref<2x8x8xi32, #tpu.memory_space<vmem>>, vector<2x8x8xi32>
    %c0_43 = arith.constant 0 : index
    %c0_44 = arith.constant 0 : index
    %c0_45 = arith.constant 0 : index
    %31 = vector.load %arg7[%c0_43, %c0_44, %c0_45] : memref<2x8x8xi32, #tpu.memory_space<vmem>>, vector<2x8x8xi32>
    %c0_i32 = arith.constant 0 : i32
    %32 = vector.broadcast %c0_i32 : i32 to vector<2x8x8xi32>
    %33 = arith.cmpi ne, %30, %32 : vector<2x8x8xi32>
    %34 = arith.extui %33 : vector<2x8x8xi1> to vector<2x8x8xi32>
    %35 = arith.sitofp %34 : vector<2x8x8xi32> to vector<2x8x8xf32>
    %c0_i32_46 = arith.constant 0 : i32
    %36 = vector.broadcast %c0_i32_46 : i32 to vector<2x8x8xi32>
    %37 = arith.cmpi ne, %31, %36 : vector<2x8x8xi32>
    %38 = arith.extui %37 : vector<2x8x8xi1> to vector<2x8x8xi32>
    %39 = arith.sitofp %38 : vector<2x8x8xi32> to vector<2x8x8xf32>
    "tpu.trace_start"() <{level = 10 : i32, message = "bse,bte->bst"}> : () -> ()
    %cst = arith.constant dense<0.000000e+00> : vector<2x8x8xf32>
    %40 = tpu.matmul %35, %35, %cst {dimension_numbers = #tpu.dot_dimension_numbers<[2], [2], [1], [1], [0, 0, 0, 1, 1, 1], [0], [0]>} : vector<2x8x8xf32>, vector<2x8x8xf32>, vector<2x8x8xf32> -> vector<2x8x8xf32>
    "tpu.trace_stop"() : () -> ()
    %41 = tpu.iota {dimensions = array<i32: 0>} : vector<8x8xi32>
    %42 = tpu.iota {dimensions = array<i32: 1>} : vector<8x8xi32>
    %43 = arith.cmpi ne, %41, %42 : vector<8x8xi32>
    %44 = arith.extui %43 : vector<8x8xi1> to vector<8x8xi32>
    %45 = arith.sitofp %44 : vector<8x8xi32> to vector<8x8xf32>
    %cst_47 = arith.constant 0.000000e+00 : f32
    %46 = vector.broadcast %cst_47 : f32 to vector<2x8x8xf32>
    %47 = arith.cmpf one, %40, %46 : vector<2x8x8xf32>
    %48 = arith.extui %47 : vector<2x8x8xi1> to vector<2x8x8xi32>
    %49 = arith.sitofp %48 : vector<2x8x8xi32> to vector<2x8x8xf32>
    %50 = vector.shape_cast %45 : vector<8x8xf32> to vector<1x8x8xf32>
    %51 = vector.broadcast %50 : vector<1x8x8xf32> to vector<2x8x8xf32>
    %52 = arith.mulf %49, %51 : vector<2x8x8xf32>
    %53 = vector.broadcast %27 : vector<2x1x8xf32> to vector<2x8x8xf32>
    %54 = arith.mulf %52, %53 : vector<2x8x8xf32>
    %55 = vector.shape_cast %30 : vector<2x8x8xi32> to vector<2x8x8x1xi32>
    %56 = tpu.iota {dimensions = array<i32: 3>} : vector<2x8x8x4xi32>
    %57 = vector.broadcast %55 : vector<2x8x8x1xi32> to vector<2x8x8x4xi32>
    %58 = arith.cmpi eq, %57, %56 : vector<2x8x8x4xi32>
    %59 = arith.extui %58 : vector<2x8x8x4xi1> to vector<2x8x8x4xi32>
    %60 = arith.sitofp %59 : vector<2x8x8x4xi32> to vector<2x8x8x4xf32>
    %61 = vector.shape_cast %31 : vector<2x8x8xi32> to vector<2x8x8x1xi32>
    %62 = tpu.iota {dimensions = array<i32: 3>} : vector<2x8x8x4xi32>
    %63 = vector.broadcast %61 : vector<2x8x8x1xi32> to vector<2x8x8x4xi32>
    %64 = arith.cmpi eq, %63, %62 : vector<2x8x8x4xi32>
    %65 = arith.extui %64 : vector<2x8x8x4xi1> to vector<2x8x8x4xi32>
    %66 = arith.sitofp %65 : vector<2x8x8x4xi32> to vector<2x8x8x4xf32>
    %67 = vector.shape_cast %60 : vector<2x8x8x4xf32> to vector<128x4xf32>
    %68 = vector.shape_cast %66 : vector<2x8x8x4xf32> to vector<128x4xf32>
    %cst_48 = arith.constant dense<0.000000e+00> : vector<128x8xf32>
    %69 = tpu.matmul %67, %4, %cst_48 {dimension_numbers = #tpu.dot_dimension_numbers<[1], [0], [0], [1], [0, 0, 1, 1], [], []>} : vector<128x4xf32>, vector<4x8xf32>, vector<128x8xf32> -> vector<128x8xf32>
    %70 = vector.shape_cast %69 : vector<128x8xf32> to vector<2x8x8x8xf32>
    %cst_49 = arith.constant dense<0.000000e+00> : vector<128x8xf32>
    %71 = tpu.matmul %68, %4, %cst_49 {dimension_numbers = #tpu.dot_dimension_numbers<[1], [0], [0], [1], [0, 0, 1, 1], [], []>} : vector<128x4xf32>, vector<4x8xf32>, vector<128x8xf32> -> vector<128x8xf32>
    %72 = vector.shape_cast %71 : vector<128x8xf32> to vector<2x8x8x8xf32>
    %73 = vector.extract_strided_slice %2 {offsets = [0, 0], sizes = [4, 24], strides = [1, 1]} : vector<4x48xf32> to vector<4x24xf32>
    %cst_50 = arith.constant dense<0.000000e+00> : vector<128x24xf32>
    %74 = tpu.matmul %67, %73, %cst_50 {dimension_numbers = #tpu.dot_dimension_numbers<[1], [0], [0], [1], [0, 0, 1, 1], [], []>} : vector<128x4xf32>, vector<4x24xf32>, vector<128x24xf32> -> vector<128x24xf32>
    %75 = vector.shape_cast %74 : vector<128x24xf32> to vector<2x8x8x24xf32>
    %76 = vector.extract_strided_slice %3 {offsets = [0, 0], sizes = [1, 24], strides = [1, 1]} : vector<1x48xf32> to vector<1x24xf32>
    %77 = vector.shape_cast %76 : vector<1x24xf32> to vector<1x1x1x24xf32>
    %78 = vector.broadcast %77 : vector<1x1x1x24xf32> to vector<2x8x8x24xf32>
    %79 = arith.addf %75, %78 : vector<2x8x8x24xf32>
    %80 = vector.extract_strided_slice %2 {offsets = [0, 24], sizes = [4, 24], strides = [1, 1]} : vector<4x48xf32> to vector<4x24xf32>
    %cst_51 = arith.constant dense<0.000000e+00> : vector<128x24xf32>
    %81 = tpu.matmul %68, %80, %cst_51 {dimension_numbers = #tpu.dot_dimension_numbers<[1], [0], [0], [1], [0, 0, 1, 1], [], []>} : vector<128x4xf32>, vector<4x24xf32>, vector<128x24xf32> -> vector<128x24xf32>
    %82 = vector.shape_cast %81 : vector<128x24xf32> to vector<2x8x8x24xf32>
    %83 = vector.extract_strided_slice %3 {offsets = [0, 24], sizes = [1, 24], strides = [1, 1]} : vector<1x48xf32> to vector<1x24xf32>
    %84 = vector.shape_cast %83 : vector<1x24xf32> to vector<1x1x1x24xf32>
    %85 = vector.broadcast %84 : vector<1x1x1x24xf32> to vector<2x8x8x24xf32>
    %86 = arith.addf %82, %85 : vector<2x8x8x24xf32>
    %87 = vector.shape_cast %25 : vector<2x8x16xf32> to vector<16x16xf32>
    %cst_52 = arith.constant dense<0.000000e+00> : vector<16x48xf32>
    %88 = tpu.matmul %87, %5, %cst_52 {dimension_numbers = #tpu.dot_dimension_numbers<[1], [0], [0], [1], [0, 0, 1, 1], [], []>} : vector<16x16xf32>, vector<16x48xf32>, vector<16x48xf32> -> vector<16x48xf32>
    %89 = vector.shape_cast %88 : vector<16x48xf32> to vector<2x8x48xf32>
    %90 = vector.shape_cast %11 : vector<1x48xf32> to vector<1x1x48xf32>
    %91 = vector.broadcast %90 : vector<1x1x48xf32> to vector<2x8x48xf32>
    %92 = arith.addf %89, %91 : vector<2x8x48xf32>
    %93 = vector.shape_cast %26 : vector<2x8x12xf32> to vector<16x12xf32>
    %cst_53 = arith.constant dense<0.000000e+00> : vector<16x48xf32>
    %94 = tpu.matmul %93, %13, %cst_53 {dimension_numbers = #tpu.dot_dimension_numbers<[1], [0], [0], [1], [0, 0, 1, 1], [], []>} : vector<16x12xf32>, vector<12x48xf32>, vector<16x48xf32> -> vector<16x48xf32>
    %95 = vector.shape_cast %94 : vector<16x48xf32> to vector<2x8x48xf32>
    %96 = vector.shape_cast %18 : vector<1x48xf32> to vector<1x1x48xf32>
    %97 = vector.broadcast %96 : vector<1x1x48xf32> to vector<2x8x48xf32>
    %98 = arith.addf %95, %97 : vector<2x8x48xf32>
    %cst_54 = arith.constant dense<0.000000e+00> : vector<2x1xf32>
    %99 = vector.multi_reduction <add>, %28, %cst_54 [1] : vector<2x8x1xf32> to vector<2x1xf32>
    %cst_55 = arith.constant 9.99999997E-7 : f32
    %100 = vector.broadcast %cst_55 : f32 to vector<2x1xf32>
    %101 = arith.maximumf %99, %100 : vector<2x1xf32>
    %cst_56 = arith.constant 1.000000e+00 : f32
    %102 = vector.broadcast %cst_56 : f32 to vector<2x1xf32>
    %103 = arith.divf %102, %101 : vector<2x1xf32>
    %cst_57 = arith.constant dense<0.000000e+00> : vector<2x1xf32>
    %104 = vector.multi_reduction <add>, %29, %cst_57 [1] : vector<2x8x1xf32> to vector<2x1xf32>
    %cst_58 = arith.constant 1.000000e+00 : f32
    %105 = vector.broadcast %cst_58 : f32 to vector<2x1xf32>
    %106 = arith.addf %104, %105 : vector<2x1xf32>
    %cst_59 = arith.constant 1.000000e+00 : f32
    %107 = vector.broadcast %cst_59 : f32 to vector<2x1xf32>
    %108 = arith.divf %107, %106 : vector<2x1xf32>
    %cst_60 = arith.constant 0.000000e+00 : f32
    %109 = vector.broadcast %cst_60 : f32 to vector<2x8x16xf32>
    %cst_61 = arith.constant 0.000000e+00 : f32
    %110 = vector.broadcast %cst_61 : f32 to vector<2x8x16xf32>
    %cst_62 = arith.constant 0.000000e+00 : f32
    %111 = vector.broadcast %cst_62 : f32 to vector<2x16xf32>
    "tpu.trace_start"() <{level = 10 : i32, message = "bst,bth->bsh"}> : () -> ()
    %cst_63 = arith.constant dense<0.000000e+00> : vector<2x8x16xf32>
    %112 = tpu.matmul %54, %109, %cst_63 {dimension_numbers = #tpu.dot_dimension_numbers<[2], [1], [1], [2], [0, 0, 0, 1, 1, 2], [0], [0]>} : vector<2x8x8xf32>, vector<2x8x16xf32>, vector<2x8x16xf32> -> vector<2x8x16xf32>
    "tpu.trace_stop"() : () -> ()
    %113 = vector.shape_cast %109 : vector<2x8x16xf32> to vector<16x16xf32>
    %cst_64 = arith.constant dense<0.000000e+00> : vector<16x48xf32>
    %114 = tpu.matmul %113, %0, %cst_64 {dimension_numbers = #tpu.dot_dimension_numbers<[1], [0], [0], [1], [0, 0, 1, 1], [], []>} : vector<16x16xf32>, vector<16x48xf32>, vector<16x48xf32> -> vector<16x48xf32>
    %115 = vector.shape_cast %110 : vector<2x8x16xf32> to vector<16x16xf32>
    %cst_65 = arith.constant dense<0.000000e+00> : vector<16x48xf32>
    %116 = tpu.matmul %115, %1, %cst_65 {dimension_numbers = #tpu.dot_dimension_numbers<[1], [0], [0], [1], [0, 0, 1, 1], [], []>} : vector<16x16xf32>, vector<16x48xf32>, vector<16x48xf32> -> vector<16x48xf32>
    %117 = vector.extract_strided_slice %114 {offsets = [0, 0], sizes = [16, 24], strides = [1, 1]} : vector<16x48xf32> to vector<16x24xf32>
    %118 = vector.shape_cast %117 : vector<16x24xf32> to vector<2x8x1x24xf32>
    %119 = vector.extract_strided_slice %116 {offsets = [0, 0], sizes = [16, 24], strides = [1, 1]} : vector<16x48xf32> to vector<16x24xf32>
    %120 = vector.shape_cast %119 : vector<16x24xf32> to vector<2x1x8x24xf32>
    %121 = vector.broadcast %118 : vector<2x8x1x24xf32> to vector<2x8x8x24xf32>
    %122 = vector.broadcast %120 : vector<2x1x8x24xf32> to vector<2x8x8x24xf32>
    %123 = arith.addf %121, %122 : vector<2x8x8x24xf32>
    %124 = arith.addf %123, %79 : vector<2x8x8x24xf32>
    %125 = arith.negf %124 : vector<2x8x8x24xf32>
    %126 = math.exp %125 : vector<2x8x8x24xf32>
    %cst_66 = arith.constant 1.000000e+00 : f32
    %127 = vector.broadcast %cst_66 : f32 to vector<2x8x8x24xf32>
    %128 = arith.addf %127, %126 : vector<2x8x8x24xf32>
    %129 = arith.divf %127, %128 : vector<2x8x8x24xf32>
    %130 = vector.shape_cast %35 : vector<2x8x8xf32> to vector<2x8x8x1xf32>
    %131 = vector.broadcast %130 : vector<2x8x8x1xf32> to vector<2x8x8x24xf32>
    %132 = arith.mulf %129, %131 : vector<2x8x8x24xf32>
    %133 = vector.extract_strided_slice %116 {offsets = [0, 24], sizes = [16, 24], strides = [1, 1]} : vector<16x48xf32> to vector<16x24xf32>
    %134 = vector.shape_cast %133 : vector<16x24xf32> to vector<2x8x1x24xf32>
    %135 = vector.extract_strided_slice %114 {offsets = [0, 24], sizes = [16, 24], strides = [1, 1]} : vector<16x48xf32> to vector<16x24xf32>
    %136 = vector.shape_cast %135 : vector<16x24xf32> to vector<2x1x8x24xf32>
    %137 = vector.broadcast %134 : vector<2x8x1x24xf32> to vector<2x8x8x24xf32>
    %138 = vector.broadcast %136 : vector<2x1x8x24xf32> to vector<2x8x8x24xf32>
    %139 = arith.addf %137, %138 : vector<2x8x8x24xf32>
    %140 = arith.addf %139, %86 : vector<2x8x8x24xf32>
    %141 = arith.negf %140 : vector<2x8x8x24xf32>
    %142 = math.exp %141 : vector<2x8x8x24xf32>
    %cst_67 = arith.constant 1.000000e+00 : f32
    %143 = vector.broadcast %cst_67 : f32 to vector<2x8x8x24xf32>
    %144 = arith.addf %143, %142 : vector<2x8x8x24xf32>
    %145 = arith.divf %143, %144 : vector<2x8x8x24xf32>
    %146 = vector.shape_cast %39 : vector<2x8x8xf32> to vector<2x8x8x1xf32>
    %147 = vector.broadcast %146 : vector<2x8x8x1xf32> to vector<2x8x8x24xf32>
    %148 = arith.mulf %145, %147 : vector<2x8x8x24xf32>
    %149 = vector.shape_cast %110 : vector<2x8x16xf32> to vector<2x1x8x16xf32>
    %150 = vector.extract_strided_slice %132 {offsets = [0, 0, 0, 0], sizes = [2, 8, 8, 16], strides = [1, 1, 1, 1]} : vector<2x8x8x24xf32> to vector<2x8x8x16xf32>
    %151 = vector.broadcast %149 : vector<2x1x8x16xf32> to vector<2x8x8x16xf32>
    %152 = arith.mulf %151, %150 : vector<2x8x8x16xf32>
    %cst_68 = arith.constant dense<0.000000e+00> : vector<2x8x16xf32>
    %153 = vector.multi_reduction <add>, %152, %cst_68 [2] : vector<2x8x8x16xf32> to vector<2x8x16xf32>
    %154 = vector.extract_strided_slice %132 {offsets = [0, 0, 0, 16], sizes = [2, 8, 8, 8], strides = [1, 1, 1, 1]} : vector<2x8x8x24xf32> to vector<2x8x8x8xf32>
    %155 = arith.mulf %70, %154 : vector<2x8x8x8xf32>
    %cst_69 = arith.constant dense<0.000000e+00> : vector<2x8x8xf32>
    %156 = vector.multi_reduction <add>, %155, %cst_69 [2] : vector<2x8x8x8xf32> to vector<2x8x8xf32>
    %157 = vector.shape_cast %109 : vector<2x8x16xf32> to vector<2x1x8x16xf32>
    %158 = vector.extract_strided_slice %148 {offsets = [0, 0, 0, 0], sizes = [2, 8, 8, 16], strides = [1, 1, 1, 1]} : vector<2x8x8x24xf32> to vector<2x8x8x16xf32>
    %159 = vector.broadcast %157 : vector<2x1x8x16xf32> to vector<2x8x8x16xf32>
    %160 = arith.mulf %159, %158 : vector<2x8x8x16xf32>
    %cst_70 = arith.constant dense<0.000000e+00> : vector<2x8x16xf32>
    %161 = vector.multi_reduction <add>, %160, %cst_70 [2] : vector<2x8x8x16xf32> to vector<2x8x16xf32>
    %162 = vector.extract_strided_slice %148 {offsets = [0, 0, 0, 16], sizes = [2, 8, 8, 8], strides = [1, 1, 1, 1]} : vector<2x8x8x24xf32> to vector<2x8x8x8xf32>
    %163 = arith.mulf %72, %162 : vector<2x8x8x8xf32>
    %cst_71 = arith.constant dense<0.000000e+00> : vector<2x8x8xf32>
    %164 = vector.multi_reduction <add>, %163, %cst_71 [2] : vector<2x8x8x8xf32> to vector<2x8x8xf32>
    %165 = vector.shape_cast %112 : vector<2x8x16xf32> to vector<16x16xf32>
    %cst_72 = arith.constant dense<0.000000e+00> : vector<16x48xf32>
    %166 = tpu.matmul %165, %6, %cst_72 {dimension_numbers = #tpu.dot_dimension_numbers<[1], [0], [0], [1], [0, 0, 1, 1], [], []>} : vector<16x16xf32>, vector<16x48xf32>, vector<16x48xf32> -> vector<16x48xf32>
    %167 = vector.shape_cast %166 : vector<16x48xf32> to vector<2x8x48xf32>
    %168 = arith.addf %92, %167 : vector<2x8x48xf32>
    %169 = vector.shape_cast %153 : vector<2x8x16xf32> to vector<16x16xf32>
    %cst_73 = arith.constant dense<0.000000e+00> : vector<16x48xf32>
    %170 = tpu.matmul %169, %7, %cst_73 {dimension_numbers = #tpu.dot_dimension_numbers<[1], [0], [0], [1], [0, 0, 1, 1], [], []>} : vector<16x16xf32>, vector<16x48xf32>, vector<16x48xf32> -> vector<16x48xf32>
    %171 = vector.shape_cast %170 : vector<16x48xf32> to vector<2x8x48xf32>
    %172 = arith.addf %168, %171 : vector<2x8x48xf32>
    %173 = vector.shape_cast %156 : vector<2x8x8xf32> to vector<16x8xf32>
    %cst_74 = arith.constant dense<0.000000e+00> : vector<16x48xf32>
    %174 = tpu.matmul %173, %8, %cst_74 {dimension_numbers = #tpu.dot_dimension_numbers<[1], [0], [0], [1], [0, 0, 1, 1], [], []>} : vector<16x8xf32>, vector<8x48xf32>, vector<16x48xf32> -> vector<16x48xf32>
    %175 = vector.shape_cast %174 : vector<16x48xf32> to vector<2x8x48xf32>
    %176 = arith.addf %172, %175 : vector<2x8x48xf32>
    %cst_75 = arith.constant dense<0.000000e+00> : vector<2x48xf32>
    %177 = tpu.matmul %111, %9, %cst_75 {dimension_numbers = #tpu.dot_dimension_numbers<[1], [0], [0], [1], [0, 0, 1, 1], [], []>} : vector<2x16xf32>, vector<16x48xf32>, vector<2x48xf32> -> vector<2x48xf32>
    %178 = vector.shape_cast %177 : vector<2x48xf32> to vector<2x1x48xf32>
    %179 = vector.broadcast %178 : vector<2x1x48xf32> to vector<2x8x48xf32>
    %180 = arith.addf %176, %179 : vector<2x8x48xf32>
    %181 = vector.shape_cast %109 : vector<2x8x16xf32> to vector<16x16xf32>
    %cst_76 = arith.constant dense<0.000000e+00> : vector<16x48xf32>
    %182 = tpu.matmul %181, %10, %cst_76 {dimension_numbers = #tpu.dot_dimension_numbers<[1], [0], [0], [1], [0, 0, 1, 1], [], []>} : vector<16x16xf32>, vector<16x48xf32>, vector<16x48xf32> -> vector<16x48xf32>
    %183 = vector.shape_cast %182 : vector<16x48xf32> to vector<2x8x48xf32>
    %184 = vector.shape_cast %12 : vector<1x48xf32> to vector<1x1x48xf32>
    %185 = vector.broadcast %184 : vector<1x1x48xf32> to vector<2x8x48xf32>
    %186 = arith.addf %183, %185 : vector<2x8x48xf32>
    %187 = vector.extract_strided_slice %180 {offsets = [0, 0, 0], sizes = [2, 8, 16], strides = [1, 1, 1]} : vector<2x8x48xf32> to vector<2x8x16xf32>
    %188 = vector.extract_strided_slice %186 {offsets = [0, 0, 0], sizes = [2, 8, 16], strides = [1, 1, 1]} : vector<2x8x48xf32> to vector<2x8x16xf32>
    %189 = arith.addf %187, %188 : vector<2x8x16xf32>
    %190 = arith.negf %189 : vector<2x8x16xf32>
    %191 = math.exp %190 : vector<2x8x16xf32>
    %cst_77 = arith.constant 1.000000e+00 : f32
    %192 = vector.broadcast %cst_77 : f32 to vector<2x8x16xf32>
    %193 = arith.addf %192, %191 : vector<2x8x16xf32>
    %194 = arith.divf %192, %193 : vector<2x8x16xf32>
    %195 = vector.extract_strided_slice %180 {offsets = [0, 0, 16], sizes = [2, 8, 16], strides = [1, 1, 1]} : vector<2x8x48xf32> to vector<2x8x16xf32>
    %196 = vector.extract_strided_slice %186 {offsets = [0, 0, 16], sizes = [2, 8, 16], strides = [1, 1, 1]} : vector<2x8x48xf32> to vector<2x8x16xf32>
    %197 = arith.addf %195, %196 : vector<2x8x16xf32>
    %198 = arith.negf %197 : vector<2x8x16xf32>
    %199 = math.exp %198 : vector<2x8x16xf32>
    %cst_78 = arith.constant 1.000000e+00 : f32
    %200 = vector.broadcast %cst_78 : f32 to vector<2x8x16xf32>
    %201 = arith.addf %200, %199 : vector<2x8x16xf32>
    %202 = arith.divf %200, %201 : vector<2x8x16xf32>
    %203 = vector.extract_strided_slice %180 {offsets = [0, 0, 32], sizes = [2, 8, 16], strides = [1, 1, 1]} : vector<2x8x48xf32> to vector<2x8x16xf32>
    %204 = vector.extract_strided_slice %186 {offsets = [0, 0, 32], sizes = [2, 8, 16], strides = [1, 1, 1]} : vector<2x8x48xf32> to vector<2x8x16xf32>
    %205 = arith.mulf %194, %204 : vector<2x8x16xf32>
    %206 = arith.addf %203, %205 : vector<2x8x16xf32>
    %207 = math.tanh %206 : vector<2x8x16xf32>
    %208 = arith.mulf %202, %109 : vector<2x8x16xf32>
    %cst_79 = arith.constant 1.000000e+00 : f32
    %209 = vector.broadcast %cst_79 : f32 to vector<2x8x16xf32>
    %210 = arith.subf %209, %202 : vector<2x8x16xf32>
    %211 = arith.mulf %210, %207 : vector<2x8x16xf32>
    %212 = arith.addf %208, %211 : vector<2x8x16xf32>
    %213 = vector.broadcast %28 : vector<2x8x1xf32> to vector<2x8x16xf32>
    %214 = arith.mulf %212, %213 : vector<2x8x16xf32>
    %215 = vector.shape_cast %161 : vector<2x8x16xf32> to vector<16x16xf32>
    %cst_80 = arith.constant dense<0.000000e+00> : vector<16x48xf32>
    %216 = tpu.matmul %215, %14, %cst_80 {dimension_numbers = #tpu.dot_dimension_numbers<[1], [0], [0], [1], [0, 0, 1, 1], [], []>} : vector<16x16xf32>, vector<16x48xf32>, vector<16x48xf32> -> vector<16x48xf32>
    %217 = vector.shape_cast %216 : vector<16x48xf32> to vector<2x8x48xf32>
    %218 = arith.addf %98, %217 : vector<2x8x48xf32>
    %219 = vector.shape_cast %164 : vector<2x8x8xf32> to vector<16x8xf32>
    %cst_81 = arith.constant dense<0.000000e+00> : vector<16x48xf32>
    %220 = tpu.matmul %219, %15, %cst_81 {dimension_numbers = #tpu.dot_dimension_numbers<[1], [0], [0], [1], [0, 0, 1, 1], [], []>} : vector<16x8xf32>, vector<8x48xf32>, vector<16x48xf32> -> vector<16x48xf32>
    %221 = vector.shape_cast %220 : vector<16x48xf32> to vector<2x8x48xf32>
    %222 = arith.addf %218, %221 : vector<2x8x48xf32>
    %cst_82 = arith.constant dense<0.000000e+00> : vector<2x48xf32>
    %223 = tpu.matmul %111, %16, %cst_82 {dimension_numbers = #tpu.dot_dimension_numbers<[1], [0], [0], [1], [0, 0, 1, 1], [], []>} : vector<2x16xf32>, vector<16x48xf32>, vector<2x48xf32> -> vector<2x48xf32>
    %224 = vector.shape_cast %223 : vector<2x48xf32> to vector<2x1x48xf32>
    %225 = vector.broadcast %224 : vector<2x1x48xf32> to vector<2x8x48xf32>
    %226 = arith.addf %222, %225 : vector<2x8x48xf32>
    %227 = vector.shape_cast %110 : vector<2x8x16xf32> to vector<16x16xf32>
    %cst_83 = arith.constant dense<0.000000e+00> : vector<16x48xf32>
    %228 = tpu.matmul %227, %17, %cst_83 {dimension_numbers = #tpu.dot_dimension_numbers<[1], [0], [0], [1], [0, 0, 1, 1], [], []>} : vector<16x16xf32>, vector<16x48xf32>, vector<16x48xf32> -> vector<16x48xf32>
    %229 = vector.shape_cast %228 : vector<16x48xf32> to vector<2x8x48xf32>
    %230 = vector.shape_cast %19 : vector<1x48xf32> to vector<1x1x48xf32>
    %231 = vector.broadcast %230 : vector<1x1x48xf32> to vector<2x8x48xf32>
    %232 = arith.addf %229, %231 : vector<2x8x48xf32>
    %233 = vector.extract_strided_slice %226 {offsets = [0, 0, 0], sizes = [2, 8, 16], strides = [1, 1, 1]} : vector<2x8x48xf32> to vector<2x8x16xf32>
    %234 = vector.extract_strided_slice %232 {offsets = [0, 0, 0], sizes = [2, 8, 16], strides = [1, 1, 1]} : vector<2x8x48xf32> to vector<2x8x16xf32>
    %235 = arith.addf %233, %234 : vector<2x8x16xf32>
    %236 = arith.negf %235 : vector<2x8x16xf32>
    %237 = math.exp %236 : vector<2x8x16xf32>
    %cst_84 = arith.constant 1.000000e+00 : f32
    %238 = vector.broadcast %cst_84 : f32 to vector<2x8x16xf32>
    %239 = arith.addf %238, %237 : vector<2x8x16xf32>
    %240 = arith.divf %238, %239 : vector<2x8x16xf32>
    %241 = vector.extract_strided_slice %226 {offsets = [0, 0, 16], sizes = [2, 8, 16], strides = [1, 1, 1]} : vector<2x8x48xf32> to vector<2x8x16xf32>
    %242 = vector.extract_strided_slice %232 {offsets = [0, 0, 16], sizes = [2, 8, 16], strides = [1, 1, 1]} : vector<2x8x48xf32> to vector<2x8x16xf32>
    %243 = arith.addf %241, %242 : vector<2x8x16xf32>
    %244 = arith.negf %243 : vector<2x8x16xf32>
    %245 = math.exp %244 : vector<2x8x16xf32>
    %cst_85 = arith.constant 1.000000e+00 : f32
    %246 = vector.broadcast %cst_85 : f32 to vector<2x8x16xf32>
    %247 = arith.addf %246, %245 : vector<2x8x16xf32>
    %248 = arith.divf %246, %247 : vector<2x8x16xf32>
    %249 = vector.extract_strided_slice %226 {offsets = [0, 0, 32], sizes = [2, 8, 16], strides = [1, 1, 1]} : vector<2x8x48xf32> to vector<2x8x16xf32>
    %250 = vector.extract_strided_slice %232 {offsets = [0, 0, 32], sizes = [2, 8, 16], strides = [1, 1, 1]} : vector<2x8x48xf32> to vector<2x8x16xf32>
    %251 = arith.mulf %240, %250 : vector<2x8x16xf32>
    %252 = arith.addf %249, %251 : vector<2x8x16xf32>
    %253 = math.tanh %252 : vector<2x8x16xf32>
    %254 = arith.mulf %248, %110 : vector<2x8x16xf32>
    %cst_86 = arith.constant 1.000000e+00 : f32
    %255 = vector.broadcast %cst_86 : f32 to vector<2x8x16xf32>
    %256 = arith.subf %255, %248 : vector<2x8x16xf32>
    %257 = arith.mulf %256, %253 : vector<2x8x16xf32>
    %258 = arith.addf %254, %257 : vector<2x8x16xf32>
    %259 = vector.broadcast %29 : vector<2x8x1xf32> to vector<2x8x16xf32>
    %260 = arith.mulf %258, %259 : vector<2x8x16xf32>
    %cst_87 = arith.constant dense<0.000000e+00> : vector<2x16xf32>
    %261 = vector.multi_reduction <add>, %214, %cst_87 [1] : vector<2x8x16xf32> to vector<2x16xf32>
    %262 = vector.broadcast %103 : vector<2x1xf32> to vector<2x16xf32>
    %263 = arith.mulf %261, %262 : vector<2x16xf32>
    %cst_88 = arith.constant dense<0.000000e+00> : vector<2x16xf32>
    %264 = vector.multi_reduction <add>, %260, %cst_88 [1] : vector<2x8x16xf32> to vector<2x16xf32>
    %265 = vector.broadcast %108 : vector<2x1xf32> to vector<2x16xf32>
    %266 = arith.mulf %264, %265 : vector<2x16xf32>
    %cst_89 = arith.constant dense<0.000000e+00> : vector<2x48xf32>
    %267 = tpu.matmul %263, %20, %cst_89 {dimension_numbers = #tpu.dot_dimension_numbers<[1], [0], [0], [1], [0, 0, 1, 1], [], []>} : vector<2x16xf32>, vector<16x48xf32>, vector<2x48xf32> -> vector<2x48xf32>
    %cst_90 = arith.constant dense<0.000000e+00> : vector<2x48xf32>
    %268 = tpu.matmul %266, %21, %cst_90 {dimension_numbers = #tpu.dot_dimension_numbers<[1], [0], [0], [1], [0, 0, 1, 1], [], []>} : vector<2x16xf32>, vector<16x48xf32>, vector<2x48xf32> -> vector<2x48xf32>
    %269 = arith.addf %267, %268 : vector<2x48xf32>
    %270 = vector.broadcast %23 : vector<1x48xf32> to vector<2x48xf32>
    %271 = arith.addf %269, %270 : vector<2x48xf32>
    %cst_91 = arith.constant dense<0.000000e+00> : vector<2x48xf32>
    %272 = tpu.matmul %111, %22, %cst_91 {dimension_numbers = #tpu.dot_dimension_numbers<[1], [0], [0], [1], [0, 0, 1, 1], [], []>} : vector<2x16xf32>, vector<16x48xf32>, vector<2x48xf32> -> vector<2x48xf32>
    %273 = vector.broadcast %24 : vector<1x48xf32> to vector<2x48xf32>
    %274 = arith.addf %272, %273 : vector<2x48xf32>
    %275 = vector.extract_strided_slice %271 {offsets = [0, 0], sizes = [2, 16], strides = [1, 1]} : vector<2x48xf32> to vector<2x16xf32>
    %276 = vector.extract_strided_slice %274 {offsets = [0, 0], sizes = [2, 16], strides = [1, 1]} : vector<2x48xf32> to vector<2x16xf32>
    %277 = arith.addf %275, %276 : vector<2x16xf32>
    %278 = arith.negf %277 : vector<2x16xf32>
    %279 = math.exp %278 : vector<2x16xf32>
    %cst_92 = arith.constant 1.000000e+00 : f32
    %280 = vector.broadcast %cst_92 : f32 to vector<2x16xf32>
    %281 = arith.addf %280, %279 : vector<2x16xf32>
    %282 = arith.divf %280, %281 : vector<2x16xf32>
    %283 = vector.extract_strided_slice %271 {offsets = [0, 16], sizes = [2, 16], strides = [1, 1]} : vector<2x48xf32> to vector<2x16xf32>
    %284 = vector.extract_strided_slice %274 {offsets = [0, 16], sizes = [2, 16], strides = [1, 1]} : vector<2x48xf32> to vector<2x16xf32>
    %285 = arith.addf %283, %284 : vector<2x16xf32>
    %286 = arith.negf %285 : vector<2x16xf32>
    %287 = math.exp %286 : vector<2x16xf32>
    %cst_93 = arith.constant 1.000000e+00 : f32
    %288 = vector.broadcast %cst_93 : f32 to vector<2x16xf32>
    %289 = arith.addf %288, %287 : vector<2x16xf32>
    %290 = arith.divf %288, %289 : vector<2x16xf32>
    %291 = vector.extract_strided_slice %271 {offsets = [0, 32], sizes = [2, 16], strides = [1, 1]} : vector<2x48xf32> to vector<2x16xf32>
    %292 = vector.extract_strided_slice %274 {offsets = [0, 32], sizes = [2, 16], strides = [1, 1]} : vector<2x48xf32> to vector<2x16xf32>
    %293 = arith.mulf %282, %292 : vector<2x16xf32>
    %294 = arith.addf %291, %293 : vector<2x16xf32>
    %295 = math.tanh %294 : vector<2x16xf32>
    %296 = arith.mulf %290, %111 : vector<2x16xf32>
    %cst_94 = arith.constant 1.000000e+00 : f32
    %297 = vector.broadcast %cst_94 : f32 to vector<2x16xf32>
    %298 = arith.subf %297, %290 : vector<2x16xf32>
    %299 = arith.mulf %298, %295 : vector<2x16xf32>
    %300 = arith.addf %296, %299 : vector<2x16xf32>
    "tpu.trace_start"() <{level = 10 : i32, message = "bst,bth->bsh"}> : () -> ()
    %cst_95 = arith.constant dense<0.000000e+00> : vector<2x8x16xf32>
    %301 = tpu.matmul %54, %214, %cst_95 {dimension_numbers = #tpu.dot_dimension_numbers<[2], [1], [1], [2], [0, 0, 0, 1, 1, 2], [0], [0]>} : vector<2x8x8xf32>, vector<2x8x16xf32>, vector<2x8x16xf32> -> vector<2x8x16xf32>
    "tpu.trace_stop"() : () -> ()
    %302 = vector.shape_cast %214 : vector<2x8x16xf32> to vector<16x16xf32>
    %cst_96 = arith.constant dense<0.000000e+00> : vector<16x48xf32>
    %303 = tpu.matmul %302, %0, %cst_96 {dimension_numbers = #tpu.dot_dimension_numbers<[1], [0], [0], [1], [0, 0, 1, 1], [], []>} : vector<16x16xf32>, vector<16x48xf32>, vector<16x48xf32> -> vector<16x48xf32>
    %304 = vector.shape_cast %260 : vector<2x8x16xf32> to vector<16x16xf32>
    %cst_97 = arith.constant dense<0.000000e+00> : vector<16x48xf32>
    %305 = tpu.matmul %304, %1, %cst_97 {dimension_numbers = #tpu.dot_dimension_numbers<[1], [0], [0], [1], [0, 0, 1, 1], [], []>} : vector<16x16xf32>, vector<16x48xf32>, vector<16x48xf32> -> vector<16x48xf32>
    %306 = vector.extract_strided_slice %303 {offsets = [0, 0], sizes = [16, 24], strides = [1, 1]} : vector<16x48xf32> to vector<16x24xf32>
    %307 = vector.shape_cast %306 : vector<16x24xf32> to vector<2x8x1x24xf32>
    %308 = vector.extract_strided_slice %305 {offsets = [0, 0], sizes = [16, 24], strides = [1, 1]} : vector<16x48xf32> to vector<16x24xf32>
    %309 = vector.shape_cast %308 : vector<16x24xf32> to vector<2x1x8x24xf32>
    %310 = vector.broadcast %307 : vector<2x8x1x24xf32> to vector<2x8x8x24xf32>
    %311 = vector.broadcast %309 : vector<2x1x8x24xf32> to vector<2x8x8x24xf32>
    %312 = arith.addf %310, %311 : vector<2x8x8x24xf32>
    %313 = arith.addf %312, %79 : vector<2x8x8x24xf32>
    %314 = arith.negf %313 : vector<2x8x8x24xf32>
    %315 = math.exp %314 : vector<2x8x8x24xf32>
    %cst_98 = arith.constant 1.000000e+00 : f32
    %316 = vector.broadcast %cst_98 : f32 to vector<2x8x8x24xf32>
    %317 = arith.addf %316, %315 : vector<2x8x8x24xf32>
    %318 = arith.divf %316, %317 : vector<2x8x8x24xf32>
    %319 = vector.shape_cast %35 : vector<2x8x8xf32> to vector<2x8x8x1xf32>
    %320 = vector.broadcast %319 : vector<2x8x8x1xf32> to vector<2x8x8x24xf32>
    %321 = arith.mulf %318, %320 : vector<2x8x8x24xf32>
    %322 = vector.extract_strided_slice %305 {offsets = [0, 24], sizes = [16, 24], strides = [1, 1]} : vector<16x48xf32> to vector<16x24xf32>
    %323 = vector.shape_cast %322 : vector<16x24xf32> to vector<2x8x1x24xf32>
    %324 = vector.extract_strided_slice %303 {offsets = [0, 24], sizes = [16, 24], strides = [1, 1]} : vector<16x48xf32> to vector<16x24xf32>
    %325 = vector.shape_cast %324 : vector<16x24xf32> to vector<2x1x8x24xf32>
    %326 = vector.broadcast %323 : vector<2x8x1x24xf32> to vector<2x8x8x24xf32>
    %327 = vector.broadcast %325 : vector<2x1x8x24xf32> to vector<2x8x8x24xf32>
    %328 = arith.addf %326, %327 : vector<2x8x8x24xf32>
    %329 = arith.addf %328, %86 : vector<2x8x8x24xf32>
    %330 = arith.negf %329 : vector<2x8x8x24xf32>
    %331 = math.exp %330 : vector<2x8x8x24xf32>
    %cst_99 = arith.constant 1.000000e+00 : f32
    %332 = vector.broadcast %cst_99 : f32 to vector<2x8x8x24xf32>
    %333 = arith.addf %332, %331 : vector<2x8x8x24xf32>
    %334 = arith.divf %332, %333 : vector<2x8x8x24xf32>
    %335 = vector.shape_cast %39 : vector<2x8x8xf32> to vector<2x8x8x1xf32>
    %336 = vector.broadcast %335 : vector<2x8x8x1xf32> to vector<2x8x8x24xf32>
    %337 = arith.mulf %334, %336 : vector<2x8x8x24xf32>
    %338 = vector.shape_cast %260 : vector<2x8x16xf32> to vector<2x1x8x16xf32>
    %339 = vector.extract_strided_slice %321 {offsets = [0, 0, 0, 0], sizes = [2, 8, 8, 16], strides = [1, 1, 1, 1]} : vector<2x8x8x24xf32> to vector<2x8x8x16xf32>
    %340 = vector.broadcast %338 : vector<2x1x8x16xf32> to vector<2x8x8x16xf32>
    %341 = arith.mulf %340, %339 : vector<2x8x8x16xf32>
    %cst_100 = arith.constant dense<0.000000e+00> : vector<2x8x16xf32>
    %342 = vector.multi_reduction <add>, %341, %cst_100 [2] : vector<2x8x8x16xf32> to vector<2x8x16xf32>
    %343 = vector.extract_strided_slice %321 {offsets = [0, 0, 0, 16], sizes = [2, 8, 8, 8], strides = [1, 1, 1, 1]} : vector<2x8x8x24xf32> to vector<2x8x8x8xf32>
    %344 = arith.mulf %70, %343 : vector<2x8x8x8xf32>
    %cst_101 = arith.constant dense<0.000000e+00> : vector<2x8x8xf32>
    %345 = vector.multi_reduction <add>, %344, %cst_101 [2] : vector<2x8x8x8xf32> to vector<2x8x8xf32>
    %346 = vector.shape_cast %214 : vector<2x8x16xf32> to vector<2x1x8x16xf32>
    %347 = vector.extract_strided_slice %337 {offsets = [0, 0, 0, 0], sizes = [2, 8, 8, 16], strides = [1, 1, 1, 1]} : vector<2x8x8x24xf32> to vector<2x8x8x16xf32>
    %348 = vector.broadcast %346 : vector<2x1x8x16xf32> to vector<2x8x8x16xf32>
    %349 = arith.mulf %348, %347 : vector<2x8x8x16xf32>
    %cst_102 = arith.constant dense<0.000000e+00> : vector<2x8x16xf32>
    %350 = vector.multi_reduction <add>, %349, %cst_102 [2] : vector<2x8x8x16xf32> to vector<2x8x16xf32>
    %351 = vector.extract_strided_slice %337 {offsets = [0, 0, 0, 16], sizes = [2, 8, 8, 8], strides = [1, 1, 1, 1]} : vector<2x8x8x24xf32> to vector<2x8x8x8xf32>
    %352 = arith.mulf %72, %351 : vector<2x8x8x8xf32>
    %cst_103 = arith.constant dense<0.000000e+00> : vector<2x8x8xf32>
    %353 = vector.multi_reduction <add>, %352, %cst_103 [2] : vector<2x8x8x8xf32> to vector<2x8x8xf32>
    %354 = vector.shape_cast %301 : vector<2x8x16xf32> to vector<16x16xf32>
    %cst_104 = arith.constant dense<0.000000e+00> : vector<16x48xf32>
    %355 = tpu.matmul %354, %6, %cst_104 {dimension_numbers = #tpu.dot_dimension_numbers<[1], [0], [0], [1], [0, 0, 1, 1], [], []>} : vector<16x16xf32>, vector<16x48xf32>, vector<16x48xf32> -> vector<16x48xf32>
    %356 = vector.shape_cast %355 : vector<16x48xf32> to vector<2x8x48xf32>
    %357 = arith.addf %92, %356 : vector<2x8x48xf32>
    %358 = vector.shape_cast %342 : vector<2x8x16xf32> to vector<16x16xf32>
    %cst_105 = arith.constant dense<0.000000e+00> : vector<16x48xf32>
    %359 = tpu.matmul %358, %7, %cst_105 {dimension_numbers = #tpu.dot_dimension_numbers<[1], [0], [0], [1], [0, 0, 1, 1], [], []>} : vector<16x16xf32>, vector<16x48xf32>, vector<16x48xf32> -> vector<16x48xf32>
    %360 = vector.shape_cast %359 : vector<16x48xf32> to vector<2x8x48xf32>
    %361 = arith.addf %357, %360 : vector<2x8x48xf32>
    %362 = vector.shape_cast %345 : vector<2x8x8xf32> to vector<16x8xf32>
    %cst_106 = arith.constant dense<0.000000e+00> : vector<16x48xf32>
    %363 = tpu.matmul %362, %8, %cst_106 {dimension_numbers = #tpu.dot_dimension_numbers<[1], [0], [0], [1], [0, 0, 1, 1], [], []>} : vector<16x8xf32>, vector<8x48xf32>, vector<16x48xf32> -> vector<16x48xf32>
    %364 = vector.shape_cast %363 : vector<16x48xf32> to vector<2x8x48xf32>
    %365 = arith.addf %361, %364 : vector<2x8x48xf32>
    %cst_107 = arith.constant dense<0.000000e+00> : vector<2x48xf32>
    %366 = tpu.matmul %300, %9, %cst_107 {dimension_numbers = #tpu.dot_dimension_numbers<[1], [0], [0], [1], [0, 0, 1, 1], [], []>} : vector<2x16xf32>, vector<16x48xf32>, vector<2x48xf32> -> vector<2x48xf32>
    %367 = vector.shape_cast %366 : vector<2x48xf32> to vector<2x1x48xf32>
    %368 = vector.broadcast %367 : vector<2x1x48xf32> to vector<2x8x48xf32>
    %369 = arith.addf %365, %368 : vector<2x8x48xf32>
    %370 = vector.shape_cast %214 : vector<2x8x16xf32> to vector<16x16xf32>
    %cst_108 = arith.constant dense<0.000000e+00> : vector<16x48xf32>
    %371 = tpu.matmul %370, %10, %cst_108 {dimension_numbers = #tpu.dot_dimension_numbers<[1], [0], [0], [1], [0, 0, 1, 1], [], []>} : vector<16x16xf32>, vector<16x48xf32>, vector<16x48xf32> -> vector<16x48xf32>
    %372 = vector.shape_cast %371 : vector<16x48xf32> to vector<2x8x48xf32>
    %373 = vector.shape_cast %12 : vector<1x48xf32> to vector<1x1x48xf32>
    %374 = vector.broadcast %373 : vector<1x1x48xf32> to vector<2x8x48xf32>
    %375 = arith.addf %372, %374 : vector<2x8x48xf32>
    %376 = vector.extract_strided_slice %369 {offsets = [0, 0, 0], sizes = [2, 8, 16], strides = [1, 1, 1]} : vector<2x8x48xf32> to vector<2x8x16xf32>
    %377 = vector.extract_strided_slice %375 {offsets = [0, 0, 0], sizes = [2, 8, 16], strides = [1, 1, 1]} : vector<2x8x48xf32> to vector<2x8x16xf32>
    %378 = arith.addf %376, %377 : vector<2x8x16xf32>
    %379 = arith.negf %378 : vector<2x8x16xf32>
    %380 = math.exp %379 : vector<2x8x16xf32>
    %cst_109 = arith.constant 1.000000e+00 : f32
    %381 = vector.broadcast %cst_109 : f32 to vector<2x8x16xf32>
    %382 = arith.addf %381, %380 : vector<2x8x16xf32>
    %383 = arith.divf %381, %382 : vector<2x8x16xf32>
    %384 = vector.extract_strided_slice %369 {offsets = [0, 0, 16], sizes = [2, 8, 16], strides = [1, 1, 1]} : vector<2x8x48xf32> to vector<2x8x16xf32>
    %385 = vector.extract_strided_slice %375 {offsets = [0, 0, 16], sizes = [2, 8, 16], strides = [1, 1, 1]} : vector<2x8x48xf32> to vector<2x8x16xf32>
    %386 = arith.addf %384, %385 : vector<2x8x16xf32>
    %387 = arith.negf %386 : vector<2x8x16xf32>
    %388 = math.exp %387 : vector<2x8x16xf32>
    %cst_110 = arith.constant 1.000000e+00 : f32
    %389 = vector.broadcast %cst_110 : f32 to vector<2x8x16xf32>
    %390 = arith.addf %389, %388 : vector<2x8x16xf32>
    %391 = arith.divf %389, %390 : vector<2x8x16xf32>
    %392 = vector.extract_strided_slice %369 {offsets = [0, 0, 32], sizes = [2, 8, 16], strides = [1, 1, 1]} : vector<2x8x48xf32> to vector<2x8x16xf32>
    %393 = vector.extract_strided_slice %375 {offsets = [0, 0, 32], sizes = [2, 8, 16], strides = [1, 1, 1]} : vector<2x8x48xf32> to vector<2x8x16xf32>
    %394 = arith.mulf %383, %393 : vector<2x8x16xf32>
    %395 = arith.addf %392, %394 : vector<2x8x16xf32>
    %396 = math.tanh %395 : vector<2x8x16xf32>
    %397 = arith.mulf %391, %214 : vector<2x8x16xf32>
    %cst_111 = arith.constant 1.000000e+00 : f32
    %398 = vector.broadcast %cst_111 : f32 to vector<2x8x16xf32>
    %399 = arith.subf %398, %391 : vector<2x8x16xf32>
    %400 = arith.mulf %399, %396 : vector<2x8x16xf32>
    %401 = arith.addf %397, %400 : vector<2x8x16xf32>
    %402 = vector.broadcast %28 : vector<2x8x1xf32> to vector<2x8x16xf32>
    %403 = arith.mulf %401, %402 : vector<2x8x16xf32>
    %404 = vector.shape_cast %350 : vector<2x8x16xf32> to vector<16x16xf32>
    %cst_112 = arith.constant dense<0.000000e+00> : vector<16x48xf32>
    %405 = tpu.matmul %404, %14, %cst_112 {dimension_numbers = #tpu.dot_dimension_numbers<[1], [0], [0], [1], [0, 0, 1, 1], [], []>} : vector<16x16xf32>, vector<16x48xf32>, vector<16x48xf32> -> vector<16x48xf32>
    %406 = vector.shape_cast %405 : vector<16x48xf32> to vector<2x8x48xf32>
    %407 = arith.addf %98, %406 : vector<2x8x48xf32>
    %408 = vector.shape_cast %353 : vector<2x8x8xf32> to vector<16x8xf32>
    %cst_113 = arith.constant dense<0.000000e+00> : vector<16x48xf32>
    %409 = tpu.matmul %408, %15, %cst_113 {dimension_numbers = #tpu.dot_dimension_numbers<[1], [0], [0], [1], [0, 0, 1, 1], [], []>} : vector<16x8xf32>, vector<8x48xf32>, vector<16x48xf32> -> vector<16x48xf32>
    %410 = vector.shape_cast %409 : vector<16x48xf32> to vector<2x8x48xf32>
    %411 = arith.addf %407, %410 : vector<2x8x48xf32>
    %cst_114 = arith.constant dense<0.000000e+00> : vector<2x48xf32>
    %412 = tpu.matmul %300, %16, %cst_114 {dimension_numbers = #tpu.dot_dimension_numbers<[1], [0], [0], [1], [0, 0, 1, 1], [], []>} : vector<2x16xf32>, vector<16x48xf32>, vector<2x48xf32> -> vector<2x48xf32>
    %413 = vector.shape_cast %412 : vector<2x48xf32> to vector<2x1x48xf32>
    %414 = vector.broadcast %413 : vector<2x1x48xf32> to vector<2x8x48xf32>
    %415 = arith.addf %411, %414 : vector<2x8x48xf32>
    %416 = vector.shape_cast %260 : vector<2x8x16xf32> to vector<16x16xf32>
    %cst_115 = arith.constant dense<0.000000e+00> : vector<16x48xf32>
    %417 = tpu.matmul %416, %17, %cst_115 {dimension_numbers = #tpu.dot_dimension_numbers<[1], [0], [0], [1], [0, 0, 1, 1], [], []>} : vector<16x16xf32>, vector<16x48xf32>, vector<16x48xf32> -> vector<16x48xf32>
    %418 = vector.shape_cast %417 : vector<16x48xf32> to vector<2x8x48xf32>
    %419 = vector.shape_cast %19 : vector<1x48xf32> to vector<1x1x48xf32>
    %420 = vector.broadcast %419 : vector<1x1x48xf32> to vector<2x8x48xf32>
    %421 = arith.addf %418, %420 : vector<2x8x48xf32>
    %422 = vector.extract_strided_slice %415 {offsets = [0, 0, 0], sizes = [2, 8, 16], strides = [1, 1, 1]} : vector<2x8x48xf32> to vector<2x8x16xf32>
    %423 = vector.extract_strided_slice %421 {offsets = [0, 0, 0], sizes = [2, 8, 16], strides = [1, 1, 1]} : vector<2x8x48xf32> to vector<2x8x16xf32>
    %424 = arith.addf %422, %423 : vector<2x8x16xf32>
    %425 = arith.negf %424 : vector<2x8x16xf32>
    %426 = math.exp %425 : vector<2x8x16xf32>
    %cst_116 = arith.constant 1.000000e+00 : f32
    %427 = vector.broadcast %cst_116 : f32 to vector<2x8x16xf32>
    %428 = arith.addf %427, %426 : vector<2x8x16xf32>
    %429 = arith.divf %427, %428 : vector<2x8x16xf32>
    %430 = vector.extract_strided_slice %415 {offsets = [0, 0, 16], sizes = [2, 8, 16], strides = [1, 1, 1]} : vector<2x8x48xf32> to vector<2x8x16xf32>
    %431 = vector.extract_strided_slice %421 {offsets = [0, 0, 16], sizes = [2, 8, 16], strides = [1, 1, 1]} : vector<2x8x48xf32> to vector<2x8x16xf32>
    %432 = arith.addf %430, %431 : vector<2x8x16xf32>
    %433 = arith.negf %432 : vector<2x8x16xf32>
    %434 = math.exp %433 : vector<2x8x16xf32>
    %cst_117 = arith.constant 1.000000e+00 : f32
    %435 = vector.broadcast %cst_117 : f32 to vector<2x8x16xf32>
    %436 = arith.addf %435, %434 : vector<2x8x16xf32>
    %437 = arith.divf %435, %436 : vector<2x8x16xf32>
    %438 = vector.extract_strided_slice %415 {offsets = [0, 0, 32], sizes = [2, 8, 16], strides = [1, 1, 1]} : vector<2x8x48xf32> to vector<2x8x16xf32>
    %439 = vector.extract_strided_slice %421 {offsets = [0, 0, 32], sizes = [2, 8, 16], strides = [1, 1, 1]} : vector<2x8x48xf32> to vector<2x8x16xf32>
    %440 = arith.mulf %429, %439 : vector<2x8x16xf32>
    %441 = arith.addf %438, %440 : vector<2x8x16xf32>
    %442 = math.tanh %441 : vector<2x8x16xf32>
    %443 = arith.mulf %437, %260 : vector<2x8x16xf32>
    %cst_118 = arith.constant 1.000000e+00 : f32
    %444 = vector.broadcast %cst_118 : f32 to vector<2x8x16xf32>
    %445 = arith.subf %444, %437 : vector<2x8x16xf32>
    %446 = arith.mulf %445, %442 : vector<2x8x16xf32>
    %447 = arith.addf %443, %446 : vector<2x8x16xf32>
    %448 = vector.broadcast %29 : vector<2x8x1xf32> to vector<2x8x16xf32>
    %449 = arith.mulf %447, %448 : vector<2x8x16xf32>
    %cst_119 = arith.constant dense<0.000000e+00> : vector<2x16xf32>
    %450 = vector.multi_reduction <add>, %403, %cst_119 [1] : vector<2x8x16xf32> to vector<2x16xf32>
    %451 = vector.broadcast %103 : vector<2x1xf32> to vector<2x16xf32>
    %452 = arith.mulf %450, %451 : vector<2x16xf32>
    %cst_120 = arith.constant dense<0.000000e+00> : vector<2x16xf32>
    %453 = vector.multi_reduction <add>, %449, %cst_120 [1] : vector<2x8x16xf32> to vector<2x16xf32>
    %454 = vector.broadcast %108 : vector<2x1xf32> to vector<2x16xf32>
    %455 = arith.mulf %453, %454 : vector<2x16xf32>
    %cst_121 = arith.constant dense<0.000000e+00> : vector<2x48xf32>
    %456 = tpu.matmul %452, %20, %cst_121 {dimension_numbers = #tpu.dot_dimension_numbers<[1], [0], [0], [1], [0, 0, 1, 1], [], []>} : vector<2x16xf32>, vector<16x48xf32>, vector<2x48xf32> -> vector<2x48xf32>
    %cst_122 = arith.constant dense<0.000000e+00> : vector<2x48xf32>
    %457 = tpu.matmul %455, %21, %cst_122 {dimension_numbers = #tpu.dot_dimension_numbers<[1], [0], [0], [1], [0, 0, 1, 1], [], []>} : vector<2x16xf32>, vector<16x48xf32>, vector<2x48xf32> -> vector<2x48xf32>
    %458 = arith.addf %456, %457 : vector<2x48xf32>
    %459 = vector.broadcast %23 : vector<1x48xf32> to vector<2x48xf32>
    %460 = arith.addf %458, %459 : vector<2x48xf32>
    %cst_123 = arith.constant dense<0.000000e+00> : vector<2x48xf32>
    %461 = tpu.matmul %300, %22, %cst_123 {dimension_numbers = #tpu.dot_dimension_numbers<[1], [0], [0], [1], [0, 0, 1, 1], [], []>} : vector<2x16xf32>, vector<16x48xf32>, vector<2x48xf32> -> vector<2x48xf32>
    %462 = vector.broadcast %24 : vector<1x48xf32> to vector<2x48xf32>
    %463 = arith.addf %461, %462 : vector<2x48xf32>
    %464 = vector.extract_strided_slice %460 {offsets = [0, 0], sizes = [2, 16], strides = [1, 1]} : vector<2x48xf32> to vector<2x16xf32>
    %465 = vector.extract_strided_slice %463 {offsets = [0, 0], sizes = [2, 16], strides = [1, 1]} : vector<2x48xf32> to vector<2x16xf32>
    %466 = arith.addf %464, %465 : vector<2x16xf32>
    %467 = arith.negf %466 : vector<2x16xf32>
    %468 = math.exp %467 : vector<2x16xf32>
    %cst_124 = arith.constant 1.000000e+00 : f32
    %469 = vector.broadcast %cst_124 : f32 to vector<2x16xf32>
    %470 = arith.addf %469, %468 : vector<2x16xf32>
    %471 = arith.divf %469, %470 : vector<2x16xf32>
    %472 = vector.extract_strided_slice %460 {offsets = [0, 16], sizes = [2, 16], strides = [1, 1]} : vector<2x48xf32> to vector<2x16xf32>
    %473 = vector.extract_strided_slice %463 {offsets = [0, 16], sizes = [2, 16], strides = [1, 1]} : vector<2x48xf32> to vector<2x16xf32>
    %474 = arith.addf %472, %473 : vector<2x16xf32>
    %475 = arith.negf %474 : vector<2x16xf32>
    %476 = math.exp %475 : vector<2x16xf32>
    %cst_125 = arith.constant 1.000000e+00 : f32
    %477 = vector.broadcast %cst_125 : f32 to vector<2x16xf32>
    %478 = arith.addf %477, %476 : vector<2x16xf32>
    %479 = arith.divf %477, %478 : vector<2x16xf32>
    %480 = vector.extract_strided_slice %460 {offsets = [0, 32], sizes = [2, 16], strides = [1, 1]} : vector<2x48xf32> to vector<2x16xf32>
    %481 = vector.extract_strided_slice %463 {offsets = [0, 32], sizes = [2, 16], strides = [1, 1]} : vector<2x48xf32> to vector<2x16xf32>
    %482 = arith.mulf %471, %481 : vector<2x16xf32>
    %483 = arith.addf %480, %482 : vector<2x16xf32>
    %484 = math.tanh %483 : vector<2x16xf32>
    %485 = arith.mulf %479, %300 : vector<2x16xf32>
    %cst_126 = arith.constant 1.000000e+00 : f32
    %486 = vector.broadcast %cst_126 : f32 to vector<2x16xf32>
    %487 = arith.subf %486, %479 : vector<2x16xf32>
    %488 = arith.mulf %487, %484 : vector<2x16xf32>
    %489 = arith.addf %485, %488 : vector<2x16xf32>
    %490 = vector.extract_strided_slice %403 {offsets = [0, 0, 0], sizes = [2, 1, 16], strides = [1, 1, 1]} : vector<2x8x16xf32> to vector<2x1x16xf32>
    %491 = vector.shape_cast %490 : vector<2x1x16xf32> to vector<2x16xf32>
    %492 = vector.extract_strided_slice %403 {offsets = [0, 1, 0], sizes = [2, 1, 16], strides = [1, 1, 1]} : vector<2x8x16xf32> to vector<2x1x16xf32>
    %493 = vector.shape_cast %492 : vector<2x1x16xf32> to vector<2x16xf32>
    %494 = vector.extract_strided_slice %403 {offsets = [0, 2, 0], sizes = [2, 1, 16], strides = [1, 1, 1]} : vector<2x8x16xf32> to vector<2x1x16xf32>
    %495 = vector.shape_cast %494 : vector<2x1x16xf32> to vector<2x16xf32>
    %496 = vector.extract_strided_slice %403 {offsets = [0, 3, 0], sizes = [2, 1, 16], strides = [1, 1, 1]} : vector<2x8x16xf32> to vector<2x1x16xf32>
    %497 = vector.shape_cast %496 : vector<2x1x16xf32> to vector<2x16xf32>
    %498 = vector.extract_strided_slice %403 {offsets = [0, 4, 0], sizes = [2, 1, 16], strides = [1, 1, 1]} : vector<2x8x16xf32> to vector<2x1x16xf32>
    %499 = vector.shape_cast %498 : vector<2x1x16xf32> to vector<2x16xf32>
    %500 = vector.extract_strided_slice %403 {offsets = [0, 5, 0], sizes = [2, 1, 16], strides = [1, 1, 1]} : vector<2x8x16xf32> to vector<2x1x16xf32>
    %501 = vector.shape_cast %500 : vector<2x1x16xf32> to vector<2x16xf32>
    %502 = vector.extract_strided_slice %403 {offsets = [0, 6, 0], sizes = [2, 1, 16], strides = [1, 1, 1]} : vector<2x8x16xf32> to vector<2x1x16xf32>
    %503 = vector.shape_cast %502 : vector<2x1x16xf32> to vector<2x16xf32>
    %504 = vector.extract_strided_slice %403 {offsets = [0, 7, 0], sizes = [2, 1, 16], strides = [1, 1, 1]} : vector<2x8x16xf32> to vector<2x1x16xf32>
    %505 = vector.shape_cast %504 : vector<2x1x16xf32> to vector<2x16xf32>
    %506 = tpu.concatenate %491, %493, %495, %497, %499, %501, %503, %505 in 1 : vector<2x16xf32>, vector<2x16xf32>, vector<2x16xf32>, vector<2x16xf32>, vector<2x16xf32>, vector<2x16xf32>, vector<2x16xf32>, vector<2x16xf32> -> vector<2x128xf32>
    %507 = vector.extract_strided_slice %449 {offsets = [0, 0, 0], sizes = [2, 1, 16], strides = [1, 1, 1]} : vector<2x8x16xf32> to vector<2x1x16xf32>
    %508 = vector.shape_cast %507 : vector<2x1x16xf32> to vector<2x16xf32>
    %509 = vector.extract_strided_slice %449 {offsets = [0, 1, 0], sizes = [2, 1, 16], strides = [1, 1, 1]} : vector<2x8x16xf32> to vector<2x1x16xf32>
    %510 = vector.shape_cast %509 : vector<2x1x16xf32> to vector<2x16xf32>
    %511 = vector.extract_strided_slice %449 {offsets = [0, 2, 0], sizes = [2, 1, 16], strides = [1, 1, 1]} : vector<2x8x16xf32> to vector<2x1x16xf32>
    %512 = vector.shape_cast %511 : vector<2x1x16xf32> to vector<2x16xf32>
    %513 = vector.extract_strided_slice %449 {offsets = [0, 3, 0], sizes = [2, 1, 16], strides = [1, 1, 1]} : vector<2x8x16xf32> to vector<2x1x16xf32>
    %514 = vector.shape_cast %513 : vector<2x1x16xf32> to vector<2x16xf32>
    %515 = vector.extract_strided_slice %449 {offsets = [0, 4, 0], sizes = [2, 1, 16], strides = [1, 1, 1]} : vector<2x8x16xf32> to vector<2x1x16xf32>
    %516 = vector.shape_cast %515 : vector<2x1x16xf32> to vector<2x16xf32>
    %517 = vector.extract_strided_slice %449 {offsets = [0, 5, 0], sizes = [2, 1, 16], strides = [1, 1, 1]} : vector<2x8x16xf32> to vector<2x1x16xf32>
    %518 = vector.shape_cast %517 : vector<2x1x16xf32> to vector<2x16xf32>
    %519 = vector.extract_strided_slice %449 {offsets = [0, 6, 0], sizes = [2, 1, 16], strides = [1, 1, 1]} : vector<2x8x16xf32> to vector<2x1x16xf32>
    %520 = vector.shape_cast %519 : vector<2x1x16xf32> to vector<2x16xf32>
    %521 = vector.extract_strided_slice %449 {offsets = [0, 7, 0], sizes = [2, 1, 16], strides = [1, 1, 1]} : vector<2x8x16xf32> to vector<2x1x16xf32>
    %522 = vector.shape_cast %521 : vector<2x1x16xf32> to vector<2x16xf32>
    %523 = tpu.concatenate %508, %510, %512, %514, %516, %518, %520, %522 in 1 : vector<2x16xf32>, vector<2x16xf32>, vector<2x16xf32>, vector<2x16xf32>, vector<2x16xf32>, vector<2x16xf32>, vector<2x16xf32>, vector<2x16xf32> -> vector<2x128xf32>
    %524 = vector.shape_cast %506 : vector<2x128xf32> to vector<2x1x128xf32>
    %c0_127 = arith.constant 0 : index
    %c0_128 = arith.constant 0 : index
    %c0_129 = arith.constant 0 : index
    %525 = vector.load %arg9[%c0_127, %c0_128, %c0_129] : memref<2x1x128xf32, #tpu.memory_space<vmem>>, vector<2x1x128xf32>
    tpu.vector_store %arg9[%c0_127, %c0_128, %c0_129], %524 {strides = array<i32>} : memref<2x1x128xf32, #tpu.memory_space<vmem>>, vector<2x1x128xf32>,
    %526 = vector.shape_cast %523 : vector<2x128xf32> to vector<2x1x128xf32>
    %c0_130 = arith.constant 0 : index
    %c0_131 = arith.constant 0 : index
    %c0_132 = arith.constant 0 : index
    %527 = vector.load %arg10[%c0_130, %c0_131, %c0_132] : memref<2x1x128xf32, #tpu.memory_space<vmem>>, vector<2x1x128xf32>
    tpu.vector_store %arg10[%c0_130, %c0_131, %c0_132], %526 {strides = array<i32>} : memref<2x1x128xf32, #tpu.memory_space<vmem>>, vector<2x1x128xf32>,
    %528 = vector.shape_cast %489 : vector<2x16xf32> to vector<2x1x16xf32>
    %c0_133 = arith.constant 0 : index
    %c0_134 = arith.constant 0 : index
    %c0_135 = arith.constant 0 : index
    %529 = vector.load %arg11[%c0_133, %c0_134, %c0_135] : memref<2x1x16xf32, #tpu.memory_space<vmem>>, vector<2x1x16xf32>
    tpu.vector_store %arg11[%c0_133, %c0_134, %c0_135], %528 {strides = array<i32>} : memref<2x1x16xf32, #tpu.memory_space<vmem>>, vector<2x1x16xf32>,
    return
  }
  func.func @transform_0(%arg0: i32) -> (i32, i32, i32) {
    %c0_i32 = arith.constant 0 : i32
    %c0_i32_0 = arith.constant 0 : i32
    %c0_i32_1 = arith.constant 0 : i32
    return %arg0, %c0_i32, %c0_i32_0 : i32, i32, i32
  }
  func.func @transform_1(%arg0: i32) -> (i32, i32, i32) {
    %c0_i32 = arith.constant 0 : i32
    %c0_i32_0 = arith.constant 0 : i32
    %c0_i32_1 = arith.constant 0 : i32
    return %arg0, %c0_i32, %c0_i32_0 : i32, i32, i32
  }
  func.func @transform_2(%arg0: i32) -> (i32, i32, i32) {
    %c0_i32 = arith.constant 0 : i32
    %c0_i32_0 = arith.constant 0 : i32
    %c0_i32_1 = arith.constant 0 : i32
    return %arg0, %c0_i32, %c0_i32_0 : i32, i32, i32
  }
  func.func @transform_3(%arg0: i32) -> (i32, i32, i32) {
    %c0_i32 = arith.constant 0 : i32
    %c0_i32_0 = arith.constant 0 : i32
    %c0_i32_1 = arith.constant 0 : i32
    return %arg0, %c0_i32, %c0_i32_0 : i32, i32, i32
  }
  func.func @transform_4(%arg0: i32) -> (i32, i32, i32) {
    %c0_i32 = arith.constant 0 : i32
    %c0_i32_0 = arith.constant 0 : i32
    %c0_i32_1 = arith.constant 0 : i32
    return %arg0, %c0_i32, %c0_i32_0 : i32, i32, i32
  }
  func.func @transform_5(%arg0: i32) -> (i32, i32, i32) {
    %c0_i32 = arith.constant 0 : i32
    %c0_i32_0 = arith.constant 0 : i32
    %c0_i32_1 = arith.constant 0 : i32
    return %arg0, %c0_i32, %c0_i32_0 : i32, i32, i32
  }
  func.func @transform_6(%arg0: i32) -> (i32, i32, i32) {
    %c0_i32 = arith.constant 0 : i32
    %c0_i32_0 = arith.constant 0 : i32
    %c0_i32_1 = arith.constant 0 : i32
    return %arg0, %c0_i32, %c0_i32_0 : i32, i32, i32
  }
  func.func @transform_7(%arg0: i32) -> (i32, i32) {
    %c0_i32 = arith.constant 0 : i32
    %c0_i32_0 = arith.constant 0 : i32
    %c0_i32_1 = arith.constant 0 : i32
    return %c0_i32, %c0_i32_0 : i32, i32
  }
  func.func @transform_8(%arg0: i32) -> (i32, i32, i32) {
    %c0_i32 = arith.constant 0 : i32
    %c0_i32_0 = arith.constant 0 : i32
    %c0_i32_1 = arith.constant 0 : i32
    return %arg0, %c0_i32, %c0_i32_0 : i32, i32, i32
  }
  func.func @transform_9(%arg0: i32) -> (i32, i32, i32) {
    %c0_i32 = arith.constant 0 : i32
    %c0_i32_0 = arith.constant 0 : i32
    %c0_i32_1 = arith.constant 0 : i32
    return %arg0, %c0_i32, %c0_i32_0 : i32, i32, i32
  }
  func.func @transform_10(%arg0: i32) -> (i32, i32, i32) {
    %c0_i32 = arith.constant 0 : i32
    %c0_i32_0 = arith.constant 0 : i32
    %c0_i32_1 = arith.constant 0 : i32
    return %arg0, %c0_i32, %c0_i32_0 : i32, i32, i32
  }
}

</mosaic_0001>

<llo_original>
// kernel: tpu_custom_call.1
$region0: #{tpu_custom_call.1}
  #allocation0 [shape = 'u32[]', space=smem, size = 0x4, offset = 0x4, fixed_abs, tag = 'smem constant byte address 0x4 - core index']
  #allocation1 [shape = 'u32[144,128]{1,0:T(1,128)}', space=vmem, size = 0x12000, scoped, tag = 'internal scratch']
  %s0 = inlined_call_operand.vmem [shape: f32[2,8,16], index: 0, kind: input, shape index: {}]
  %s1 = inlined_call_operand.vmem [shape: f32[2,8,12], index: 1, kind: input, shape index: {}]
  %s2 = inlined_call_operand.vmem [shape: f32[2,1,8], index: 2, kind: input, shape index: {}]
  %s3 = inlined_call_operand.vmem [shape: f32[2,8,1], index: 3, kind: input, shape index: {}]
  %s4 = inlined_call_operand.vmem [shape: f32[2,8,1], index: 4, kind: input, shape index: {}]
  %s5 = inlined_call_operand.vmem [shape: s32[2,8,8], index: 5, kind: input, shape index: {}]
  %s6 = inlined_call_operand.vmem [shape: s32[2,8,8], index: 6, kind: input, shape index: {}]
  %s7 = inlined_call_operand.vmem [shape: f32[312,48], index: 7, kind: input, shape index: {}]
  %s8 = inlined_call_operand.hbm [shape: f32[2,1,128], index: 8, kind: output, shape index: {0}]
  %s9 = inlined_call_operand.hbm [shape: f32[2,1,128], index: 9, kind: output, shape index: {1}]
  %s10 = inlined_call_operand.hbm [shape: f32[2,1,16], index: 10, kind: output, shape index: {2}]
  %11 = xla_tuple %s8, %s9, %s10
  %s12 = sld [smem:[#allocation0]]
  $region58: #{tpu_custom_call.1} parent=0
    _
  %s14 = ssub.s32 1, %s12
  %s15 = scalar_select 0, %s14, %s12
  $region1: #{tpu_custom_call.1} parent=0
    #allocation2 [shape = 'u8[1024]{0}', space=vmem, size = 0x400, scoped, tag = 'output window, operand 0, single buffered']
    #allocation3 [shape = 's32[1]{0}', space=sflag, size = 0x4, scoped, tag = 'scoped memory for tpu_custom_call.1']
    #allocation4 [shape = 'u8[1024]{0}', space=vmem, size = 0x400, scoped, tag = 'output window, operand 1, single buffered']
    #allocation5 [shape = 's32[1]{0}', space=sflag, size = 0x4, scoped, tag = 'scoped memory for tpu_custom_call.1']
    #allocation6 [shape = 'u8[1024]{0}', space=vmem, size = 0x400, scoped, tag = 'output window, operand 2, single buffered']
    %16 = vsyncpa [#allocation3], 0
    %17 = vsyncpa [#allocation5], 0
    // Predicated region
    $region2: #{tpu_custom_call.1} parent=1 // pred_check
      _
    $region3: #{tpu_custom_call.1} parent=1 // pred_check_branch
      %19 = sbr.rel (0) target = $region5
    $region4: #{tpu_custom_call.1} parent=1 // pred_region
      _
    $region5: #{tpu_custom_call.1} parent=1 // pred_fallthru
      _
    // Predicated region
    $region6: #{tpu_custom_call.1} parent=1 // pred_check
      _
    $region7: #{tpu_custom_call.1} parent=1 // pred_check_branch
      %21 = sbr.rel (0) target = $region9
    $region8: #{tpu_custom_call.1} parent=1 // pred_region
      _
    $region9: #{tpu_custom_call.1} parent=1 // pred_fallthru
      _
    // Predicated region
    $region10: #{tpu_custom_call.1} parent=1 // pred_check
      _
    $region11: #{tpu_custom_call.1} parent=1 // pred_check_branch
      %23 = sbr.rel (0) target = $region13
    $region12: #{tpu_custom_call.1} parent=1 // pred_region
      _
    $region13: #{tpu_custom_call.1} parent=1 // pred_fallthru
      _
    // Predicated region
    $region14: #{tpu_custom_call.1} parent=1 // pred_check
      _
    $region15: #{tpu_custom_call.1} parent=1 // pred_check_branch
      %25 = sbr.rel (0) target = $region17
    $region16: #{tpu_custom_call.1} parent=1 // pred_region
      _
    $region17: #{tpu_custom_call.1} parent=1 // pred_fallthru
      _
    // Predicated region
    $region18: #{tpu_custom_call.1} parent=1 // pred_check
      _
    $region19: #{tpu_custom_call.1} parent=1 // pred_check_branch
      %27 = sbr.rel (0) target = $region21
    $region20: #{tpu_custom_call.1} parent=1 // pred_region
      _
    $region21: #{tpu_custom_call.1} parent=1 // pred_fallthru
      _
    // Predicated region
    $region22: #{tpu_custom_call.1} parent=1 // pred_check
      _
    $region23: #{tpu_custom_call.1} parent=1 // pred_check_branch
      %29 = sbr.rel (0) target = $region25
    $region24: #{tpu_custom_call.1} parent=1 // pred_region
      _
    $region25: #{tpu_custom_call.1} parent=1 // pred_fallthru
      _
    // Predicated region
    $region26: #{tpu_custom_call.1} parent=1 // pred_check
      _
    $region27: #{tpu_custom_call.1} parent=1 // pred_check_branch
      %31 = sbr.rel (0) target = $region29
    $region28: #{tpu_custom_call.1} parent=1 // pred_region
      _
    $region29: #{tpu_custom_call.1} parent=1 // pred_fallthru
      _
    // Predicated region
    $region30: #{tpu_custom_call.1} parent=1 // pred_check
      _
    $region31: #{tpu_custom_call.1} parent=1 // pred_check_branch
      %33 = sbr.rel (0) target = $region33
    $region32: #{tpu_custom_call.1} parent=1 // pred_region
      _
    $region33: #{tpu_custom_call.1} parent=1 // pred_fallthru
      _
    %v34 = vld [vmem:[%s7] sm:$0xff]
    %v35 = vld [vmem:[%s7 + $0x8] sm:$0xff]
    %v36 = vld [vmem:[%s7 + $0x10] sm:$0xff]
    %v37 = vld [vmem:[%s7 + $0x18] sm:$0xff]
    %v38 = vld [vmem:[%s7 + $0x20] sm:$0xf]
    %v39 = vld [vmem:[%s7 + $0x28] sm:$0x1]
    %v40 = vld [vmem:[%s7 + $0x30] sm:$0xf]
    %v41 = vld [vmem:[%s7 + $0x38] sm:$0xff]
    %v42 = vld [vmem:[%s7 + $0x40] sm:$0xff]
    %v43 = vld [vmem:[%s7 + $0x48] sm:$0xff]
    %v44 = vld [vmem:[%s7 + $0x50] sm:$0xff]
    %v45 = vld [vmem:[%s7 + $0x58] sm:$0xff]
    %v46 = vld [vmem:[%s7 + $0x60] sm:$0xff]
    %v47 = vld [vmem:[%s7 + $0x68] sm:$0xff]
    %v48 = vld [vmem:[%s7 + $0x70] sm:$0xff]
    %v49 = vld [vmem:[%s7 + $0x78] sm:$0xff]
    %v50 = vld [vmem:[%s7 + $0x80] sm:$0xff]
    %v51 = vld [vmem:[%s7 + $0x88] sm:$0xff]
    %v52 = vld [vmem:[%s7 + $0x90] sm:$0x1]
    %v53 = vld [vmem:[%s7 + $0x98] sm:$0x1]
    %v54 = vld [vmem:[%s7 + $0xa0] sm:$0xff]
    %v55 = vld [vmem:[%s7 + $0xa8] sm:$0xf]
    %v56 = vld [vmem:[%s7 + $0xb0] sm:$0xff]
    %v57 = vld [vmem:[%s7 + $0xb8] sm:$0xff]
    %v58 = vld [vmem:[%s7 + $0xc0] sm:$0xff]
    %v59 = vld [vmem:[%s7 + $0xc8] sm:$0xff]
    %v60 = vld [vmem:[%s7 + $0xd0] sm:$0xff]
    %v61 = vld [vmem:[%s7 + $0xd8] sm:$0xff]
    %v62 = vld [vmem:[%s7 + $0xe0] sm:$0xff]
    %v63 = vld [vmem:[%s7 + $0xe8] sm:$0x1]
    %v64 = vld [vmem:[%s7 + $0xf0] sm:$0x1]
    %v65 = vld [vmem:[%s7 + $0xf8] sm:$0xff]
    %v66 = vld [vmem:[%s7 + $0x100] sm:$0xff]
    %v67 = vld [vmem:[%s7 + $0x108] sm:$0xff]
    %v68 = vld [vmem:[%s7 + $0x110] sm:$0xff]
    %v69 = vld [vmem:[%s7 + $0x118] sm:$0xff]
    %v70 = vld [vmem:[%s7 + $0x120] sm:$0xff]
    %v71 = vld [vmem:[%s7 + $0x128] sm:$0x1]
    %v72 = vld [vmem:[%s7 + $0x130] sm:$0x1]
    %v73 = vld [vmem:[%s0] sm:$0xff]
    %v74 = vld [vmem:[%s0 + $0x8] sm:$0xff]
    %v75 = vld [vmem:[%s1] sm:$0xff]
    %v76 = vld [vmem:[%s1 + $0x8] sm:$0xff]
    %v77 = vld [vmem:[%s2] sm:$0x1]
    %v78 = vld [vmem:[%s2 + $0x1] sm:$0x1]
    %v79 = vld [vmem:[%s3] sm:$0xff]
    %v80 = vld [vmem:[%s3 + $0x8] sm:$0xff]
    %v81 = vld [vmem:[%s4] sm:$0xff]
    %v82 = vld [vmem:[%s4 + $0x8] sm:$0xff]
    %v83 = vld [vmem:[%s5] sm:$0xff]
    %v84 = vld [vmem:[%s5 + $0x8] sm:$0xff]
    %v85 = vld [vmem:[%s6] sm:$0xff]
    %v86 = vld [vmem:[%s6 + $0x8] sm:$0xff]
    %vm87 = vcmp.ne.s32.totalorder %v83, 0
    %vm88 = vcmp.ne.s32.totalorder %v84, 0
    %v89 = vsel %vm87, 1, 0
    %v90 = vsel %vm88, 1, 0
    %v91 = vcvt.s32.f32 %v89
    %v92 = vcvt.s32.f32 %v90
    %vm93 = vcmp.ne.s32.totalorder %v85, 0
    %vm94 = vcmp.ne.s32.totalorder %v86, 0
    %v95 = vsel %vm93, 1, 0
    %v96 = vsel %vm94, 1, 0
    %v97 = vcvt.s32.f32 %v95
    %v98 = vcvt.s32.f32 %v96
    %vm99 = vcmask 64512
    %v101 = vsel %vm99, %v91, 0
    %103 = vmatprep.subr.mxu0 0.0
    %104 = vmatpush1.xpose.msra.mxu0 %v101
    %105 = vmatprep.subr.mxu0 0.0
    %106 = vmatpush1.xpose.msra.mxu0 0.0
    %107 = vmatprep.subr.mxu0 0.0
    %108 = vmatpush1.xpose.msra.mxu0 0.0
    %109 = vmatprep.subr.mxu0 0.0
    %110 = vmatpush1.xpose.msra.mxu0 0.0
    %111 = vmatprep.subr.mxu0 0.0
    %112 = vmatpush1.xpose.msra.mxu0 0.0
    %113 = vmatprep.subr.mxu0 0.0
    %114 = vmatpush1.xpose.msra.mxu0 0.0
    %115 = vmatprep.subr.mxu0 0.0
    %116 = vmatpush1.xpose.msra.mxu0 0.0
    %117 = vmatprep.subr.mxu0 0.0
    %118 = vmatpush1.xpose.msra.mxu0 0.0
    %119 = vmatprep.subr.mxu0 0.0
    %120 = vmatpush1.xpose.msra.mxu0 0.0
    %121 = vmatprep.subr.mxu0 0.0
    %122 = vmatpush1.xpose.msra.mxu0 0.0
    %123 = vmatprep.subr.mxu0 0.0
    %124 = vmatpush1.xpose.msra.mxu0 0.0
    %125 = vmatprep.subr.mxu0 0.0
    %126 = vmatpush1.xpose.msra.mxu0 0.0
    %127 = vmatprep.subr.mxu0 0.0
    %128 = vmatpush1.xpose.msra.mxu0 0.0
    %129 = vmatprep.subr.mxu0 0.0
    %130 = vmatpush1.xpose.msra.mxu0 0.0
    %131 = vmatprep.subr.mxu0 0.0
    %132 = vmatpush1.xpose.msra.mxu0 0.0
    %133 = vmatprep.subr.mxu0 0.0
    %134 = vmatpush1.xpose.msra.mxu0 0.0
    %135 = vmatprep.subr.mxu0 0.0
    %136 = vmatpush1.xpose.msra.mxu0 0.0
    %137 = vmatprep.subr.mxu0 0.0
    %138 = vmatpush1.xpose.msra.mxu0 0.0
    %139 = vmatprep.subr.mxu0 0.0
    %140 = vmatpush1.xpose.msra.mxu0 0.0
    %141 = vmatprep.subr.mxu0 0.0
    %142 = vmatpush1.xpose.msra.mxu0 0.0
    %143 = vmatprep.subr.mxu0 0.0
    %144 = vmatpush1.xpose.msra.mxu0 0.0
    %145 = vmatprep.subr.mxu0 0.0
    %146 = vmatpush1.xpose.msra.mxu0 0.0
    %147 = vmatprep.subr.mxu0 0.0
    %148 = vmatpush1.xpose.msra.mxu0 0.0
    %149 = vmatprep.subr.mxu0 0.0
    %150 = vmatpush1.xpose.msra.mxu0 0.0
    %151 = vmatprep.subr.mxu0 0.0
    %152 = vmatpush1.xpose.msra.mxu0 0.0
    %153 = vmatprep.subr.mxu0 0.0
    %154 = vmatpush1.xpose.msra.mxu0 0.0
    %155 = vmatprep.subr.mxu0 0.0
    %156 = vmatpush1.xpose.msra.mxu0 0.0
    %157 = vmatprep.subr.mxu0 0.0
    %158 = vmatpush1.xpose.msra.mxu0 0.0
    %159 = vmatprep.subr.mxu0 0.0
    %160 = vmatpush1.xpose.msra.mxu0 0.0
    %161 = vmatprep.subr.mxu0 0.0
    %162 = vmatpush1.xpose.msra.mxu0 0.0
    %163 = vmatprep.subr.mxu0 0.0
    %164 = vmatpush1.xpose.msra.mxu0 0.0
    %165 = vmatprep.subr.mxu0 0.0
    %166 = vmatpush1.xpose.msra.mxu0 0.0
    %167 = vmatprep.mubr.f32.mxu0 0.0
    %168 = vmatmul.mubr.f32.gmra.mrb[0].mxu0 %v101
    %v169 = vpop.f32.mrb[0].mxu0
    %v170 = vadd.f32 0.0, %v169
    %v171 = vpop.f32.mrb[0].mxu0
    %172 = vdwg.mxu0
    %v174 = vsel %vm99, %v92, 0
    %176 = vmatprep.subr.mxu0 0.0
    %177 = vmatpush1.xpose.msra.mxu0 %v174
    %178 = vmatprep.subr.mxu0 0.0
    %179 = vmatpush1.xpose.msra.mxu0 0.0
    %180 = vmatprep.subr.mxu0 0.0
    %181 = vmatpush1.xpose.msra.mxu0 0.0
    %182 = vmatprep.subr.mxu0 0.0
    %183 = vmatpush1.xpose.msra.mxu0 0.0
    %184 = vmatprep.subr.mxu0 0.0
    %185 = vmatpush1.xpose.msra.mxu0 0.0
    %186 = vmatprep.subr.mxu0 0.0
    %187 = vmatpush1.xpose.msra.mxu0 0.0
    %188 = vmatprep.subr.mxu0 0.0
    %189 = vmatpush1.xpose.msra.mxu0 0.0
    %190 = vmatprep.subr.mxu0 0.0
    %191 = vmatpush1.xpose.msra.mxu0 0.0
    %192 = vmatprep.subr.mxu0 0.0
    %193 = vmatpush1.xpose.msra.mxu0 0.0
    %194 = vmatprep.subr.mxu0 0.0
    %195 = vmatpush1.xpose.msra.mxu0 0.0
    %196 = vmatprep.subr.mxu0 0.0
    %197 = vmatpush1.xpose.msra.mxu0 0.0
    %198 = vmatprep.subr.mxu0 0.0
    %199 = vmatpush1.xpose.msra.mxu0 0.0
    %200 = vmatprep.subr.mxu0 0.0
    %201 = vmatpush1.xpose.msra.mxu0 0.0
    %202 = vmatprep.subr.mxu0 0.0
    %203 = vmatpush1.xpose.msra.mxu0 0.0
    %204 = vmatprep.subr.mxu0 0.0
    %205 = vmatpush1.xpose.msra.mxu0 0.0
    %206 = vmatprep.subr.mxu0 0.0
    %207 = vmatpush1.xpose.msra.mxu0 0.0
    %208 = vmatprep.subr.mxu0 0.0
    %209 = vmatpush1.xpose.msra.mxu0 0.0
    %210 = vmatprep.subr.mxu0 0.0
    %211 = vmatpush1.xpose.msra.mxu0 0.0
    %212 = vmatprep.subr.mxu0 0.0
    %213 = vmatpush1.xpose.msra.mxu0 0.0
    %214 = vmatprep.subr.mxu0 0.0
    %215 = vmatpush1.xpose.msra.mxu0 0.0
    %216 = vmatprep.subr.mxu0 0.0
    %217 = vmatpush1.xpose.msra.mxu0 0.0
    %218 = vmatprep.subr.mxu0 0.0
    %219 = vmatpush1.xpose.msra.mxu0 0.0
    %220 = vmatprep.subr.mxu0 0.0
    %221 = vmatpush1.xpose.msra.mxu0 0.0
    %222 = vmatprep.subr.mxu0 0.0
    %223 = vmatpush1.xpose.msra.mxu0 0.0
    %224 = vmatprep.subr.mxu0 0.0
    %225 = vmatpush1.xpose.msra.mxu0 0.0
    %226 = vmatprep.subr.mxu0 0.0
    %227 = vmatpush1.xpose.msra.mxu0 0.0
    %228 = vmatprep.subr.mxu0 0.0
    %229 = vmatpush1.xpose.msra.mxu0 0.0
    %230 = vmatprep.subr.mxu0 0.0
    %231 = vmatpush1.xpose.msra.mxu0 0.0
    %232 = vmatprep.subr.mxu0 0.0
    %233 = vmatpush1.xpose.msra.mxu0 0.0
    %234 = vmatprep.subr.mxu0 0.0
    %235 = vmatpush1.xpose.msra.mxu0 0.0
    %236 = vmatprep.subr.mxu0 0.0
    %237 = vmatpush1.xpose.msra.mxu0 0.0
    %238 = vmatprep.subr.mxu0 0.0
    %239 = vmatpush1.xpose.msra.mxu0 0.0
    %240 = vmatprep.mubr.f32.mxu0 0.0
    %241 = vmatmul.mubr.f32.gmra.mrb[0].mxu0 %v174
    %v242 = vpop.f32.mrb[0].mxu0
    %v243 = vadd.f32 0.0, %v242
    %v244 = vpop.f32.mrb[0].mxu0
    %245 = vdwg.mxu0
    %v246 = vlaneseq
    %v247 = vshrl.u32 %v246, 7
    %v248 = vlaneseq
    %v249 = vand.u32 %v248, 127
    %vm250 = vcmp.ne.s32.totalorder %v247, %v249
    %v251 = vsel %vm250, 1, 0
    %v252 = vcvt.s32.f32 %v251
    %vm253 = vcmp.ne.f32.partialorder %v170, 0.0
    %vm254 = vcmp.ne.f32.partialorder %v243, 0.0
    %v255 = vsel %vm253, 1, 0
    %v256 = vsel %vm254, 1, 0
    %v257 = vcvt.s32.f32 %v255
    %v258 = vcvt.s32.f32 %v256
    %v259 = vmul.f32 %v257, %v252
    %v260 = vmul.f32 %v258, %v252
    %v263 = vlaneseq
    %v264 = vshrl.u32 %v263, 7
    %v265 = vsub.s32 0, %v264
    %v266 = vrot.slane %v77, %v265
    %v267 = vlaneseq
    %v268 = vshrl.u32 %v267, 7
    %v269 = vsub.s32 0, %v268
    %v270 = vrot.slane %v78, %v269
    %v273 = vmul.f32 %v259, %v266
    %v274 = vmul.f32 %v260, %v270
    %v275 = vlaneseq
    %v276 = vshrl.u32 %v275, 7
    %v277 = vsub.s32 0, %v276
    %v278 = vrot.slane %v83, %v277
    %280 = vbcast.lane.b32.xlu0 %v278, 256
    %v281 = vpop.permute.xlu0 %280
    %v282 = vlaneseq
    %v283 = vshrl.u32 %v282, 7
    %v284 = vsub.s32 1, %v283
    %v285 = vrot.slane %v83, %v284
    %287 = vbcast.lane.b32.xlu0 %v285, 256
    %v288 = vpop.permute.xlu0 %287
    %v289 = vlaneseq
    %v290 = vshrl.u32 %v289, 7
    %v291 = vsub.s32 2, %v290
    %v292 = vrot.slane %v83, %v291
    %294 = vbcast.lane.b32.xlu0 %v292, 256
    %v295 = vpop.permute.xlu0 %294
    %v296 = vlaneseq
    %v297 = vshrl.u32 %v296, 7
    %v298 = vsub.s32 3, %v297
    %v299 = vrot.slane %v83, %v298
    %301 = vbcast.lane.b32.xlu0 %v299, 256
    %v302 = vpop.permute.xlu0 %301
    %v303 = vlaneseq
    %v304 = vshrl.u32 %v303, 7
    %v305 = vsub.s32 4, %v304
    %v306 = vrot.slane %v83, %v305
    %308 = vbcast.lane.b32.xlu0 %v306, 256
    %v309 = vpop.permute.xlu0 %308
    %v310 = vlaneseq
    %v311 = vshrl.u32 %v310, 7
    %v312 = vsub.s32 5, %v311
    %v313 = vrot.slane %v83, %v312
    %315 = vbcast.lane.b32.xlu0 %v313, 256
    %v316 = vpop.permute.xlu0 %315
    %v317 = vlaneseq
    %v318 = vshrl.u32 %v317, 7
    %v319 = vsub.s32 6, %v318
    %v320 = vrot.slane %v83, %v319
    %322 = vbcast.lane.b32.xlu0 %v320, 256
    %v323 = vpop.permute.xlu0 %322
    %v324 = vlaneseq
    %v325 = vshrl.u32 %v324, 7
    %v326 = vsub.s32 7, %v325
    %v327 = vrot.slane %v83, %v326
    %329 = vbcast.lane.b32.xlu0 %v327, 256
    %v330 = vpop.permute.xlu0 %329
    %v331 = vlaneseq
    %v332 = vshrl.u32 %v331, 7
    %v333 = vsub.s32 0, %v332
    %v334 = vrot.slane %v84, %v333
    %336 = vbcast.lane.b32.xlu0 %v334, 256
    %v337 = vpop.permute.xlu0 %336
    %v338 = vlaneseq
    %v339 = vshrl.u32 %v338, 7
    %v340 = vsub.s32 1, %v339
    %v341 = vrot.slane %v84, %v340
    %343 = vbcast.lane.b32.xlu0 %v341, 256
    %v344 = vpop.permute.xlu0 %343
    %v345 = vlaneseq
    %v346 = vshrl.u32 %v345, 7
    %v347 = vsub.s32 2, %v346
    %v348 = vrot.slane %v84, %v347
    %350 = vbcast.lane.b32.xlu0 %v348, 256
    %v351 = vpop.permute.xlu0 %350
    %v352 = vlaneseq
    %v353 = vshrl.u32 %v352, 7
    %v354 = vsub.s32 3, %v353
    %v355 = vrot.slane %v84, %v354
    %357 = vbcast.lane.b32.xlu0 %v355, 256
    %v358 = vpop.permute.xlu0 %357
    %v359 = vlaneseq
    %v360 = vshrl.u32 %v359, 7
    %v361 = vsub.s32 4, %v360
    %v362 = vrot.slane %v84, %v361
    %364 = vbcast.lane.b32.xlu0 %v362, 256
    %v365 = vpop.permute.xlu0 %364
    %v366 = vlaneseq
    %v367 = vshrl.u32 %v366, 7
    %v368 = vsub.s32 5, %v367
    %v369 = vrot.slane %v84, %v368
    %371 = vbcast.lane.b32.xlu0 %v369, 256
    %v372 = vpop.permute.xlu0 %371
    %v373 = vlaneseq
    %v374 = vshrl.u32 %v373, 7
    %v375 = vsub.s32 6, %v374
    %v376 = vrot.slane %v84, %v375
    %378 = vbcast.lane.b32.xlu0 %v376, 256
    %v379 = vpop.permute.xlu0 %378
    %v380 = vlaneseq
    %v381 = vshrl.u32 %v380, 7
    %v382 = vsub.s32 7, %v381
    %v383 = vrot.slane %v84, %v382
    %385 = vbcast.lane.b32.xlu0 %v383, 256
    %v386 = vpop.permute.xlu0 %385
    %vm387 = vcmp.eq.s32.totalorder %v281, %v249
    %vm388 = vcmp.eq.s32.totalorder %v288, %v249
    %vm389 = vcmp.eq.s32.totalorder %v295, %v249
    %vm390 = vcmp.eq.s32.totalorder %v302, %v249
    %vm391 = vcmp.eq.s32.totalorder %v309, %v249
    %vm392 = vcmp.eq.s32.totalorder %v316, %v249
    %vm393 = vcmp.eq.s32.totalorder %v323, %v249
    %vm394 = vcmp.eq.s32.totalorder %v330, %v249
    %vm395 = vcmp.eq.s32.totalorder %v337, %v249
    %vm396 = vcmp.eq.s32.totalorder %v344, %v249
    %vm397 = vcmp.eq.s32.totalorder %v351, %v249
    %vm398 = vcmp.eq.s32.totalorder %v358, %v249
    %vm399 = vcmp.eq.s32.totalorder %v365, %v249
    %vm400 = vcmp.eq.s32.totalorder %v372, %v249
    %vm401 = vcmp.eq.s32.totalorder %v379, %v249
    %vm402 = vcmp.eq.s32.totalorder %v386, %v249
    %v403 = vsel %vm387, 1, 0
    %v404 = vsel %vm388, 1, 0
    %v405 = vsel %vm389, 1, 0
    %v406 = vsel %vm390, 1, 0
    %v407 = vsel %vm391, 1, 0
    %v408 = vsel %vm392, 1, 0
    %v409 = vsel %vm393, 1, 0
    %v410 = vsel %vm394, 1, 0
    %v411 = vsel %vm395, 1, 0
    %v412 = vsel %vm396, 1, 0
    %v413 = vsel %vm397, 1, 0
    %v414 = vsel %vm398, 1, 0
    %v415 = vsel %vm399, 1, 0
    %v416 = vsel %vm400, 1, 0
    %v417 = vsel %vm401, 1, 0
    %v418 = vsel %vm402, 1, 0
    %v419 = vcvt.s32.f32 %v403
    %v420 = vcvt.s32.f32 %v404
    %v421 = vcvt.s32.f32 %v405
    %v422 = vcvt.s32.f32 %v406
    %v423 = vcvt.s32.f32 %v407
    %v424 = vcvt.s32.f32 %v408
    %v425 = vcvt.s32.f32 %v409
    %v426 = vcvt.s32.f32 %v410
    %v427 = vcvt.s32.f32 %v411
    %v428 = vcvt.s32.f32 %v412
    %v429 = vcvt.s32.f32 %v413
    %v430 = vcvt.s32.f32 %v414
    %v431 = vcvt.s32.f32 %v415
    %v432 = vcvt.s32.f32 %v416
    %v433 = vcvt.s32.f32 %v417
    %v434 = vcvt.s32.f32 %v418
    %v435 = vlaneseq
    %v436 = vshrl.u32 %v435, 7
    %v437 = vsub.s32 0, %v436
    %v438 = vrot.slane %v85, %v437
    %440 = vbcast.lane.b32.xlu0 %v438, 256
    %v441 = vpop.permute.xlu0 %440
    %v442 = vlaneseq
    %v443 = vshrl.u32 %v442, 7
    %v444 = vsub.s32 1, %v443
    %v445 = vrot.slane %v85, %v444
    %447 = vbcast.lane.b32.xlu0 %v445, 256
    %v448 = vpop.permute.xlu0 %447
    %v449 = vlaneseq
    %v450 = vshrl.u32 %v449, 7
    %v451 = vsub.s32 2, %v450
    %v452 = vrot.slane %v85, %v451
    %454 = vbcast.lane.b32.xlu0 %v452, 256
    %v455 = vpop.permute.xlu0 %454
    %v456 = vlaneseq
    %v457 = vshrl.u32 %v456, 7
    %v458 = vsub.s32 3, %v457
    %v459 = vrot.slane %v85, %v458
    %461 = vbcast.lane.b32.xlu0 %v459, 256
    %v462 = vpop.permute.xlu0 %461
    %v463 = vlaneseq
    %v464 = vshrl.u32 %v463, 7
    %v465 = vsub.s32 4, %v464
    %v466 = vrot.slane %v85, %v465
    %468 = vbcast.lane.b32.xlu0 %v466, 256
    %v469 = vpop.permute.xlu0 %468
    %v470 = vlaneseq
    %v471 = vshrl.u32 %v470, 7
    %v472 = vsub.s32 5, %v471
    %v473 = vrot.slane %v85, %v472
    %475 = vbcast.lane.b32.xlu0 %v473, 256
    %v476 = vpop.permute.xlu0 %475
    %v477 = vlaneseq
    %v478 = vshrl.u32 %v477, 7
    %v479 = vsub.s32 6, %v478
    %v480 = vrot.slane %v85, %v479
    %482 = vbcast.lane.b32.xlu0 %v480, 256
    %v483 = vpop.permute.xlu0 %482
    %v484 = vlaneseq
    %v485 = vshrl.u32 %v484, 7
    %v486 = vsub.s32 7, %v485
    %v487 = vrot.slane %v85, %v486
    %489 = vbcast.lane.b32.xlu0 %v487, 256
    %v490 = vpop.permute.xlu0 %489
    %v491 = vlaneseq
    %v492 = vshrl.u32 %v491, 7
    %v493 = vsub.s32 0, %v492
    %v494 = vrot.slane %v86, %v493
    %496 = vbcast.lane.b32.xlu0 %v494, 256
    %v497 = vpop.permute.xlu0 %496
    %v498 = vlaneseq
    %v499 = vshrl.u32 %v498, 7
    %v500 = vsub.s32 1, %v499
    %v501 = vrot.slane %v86, %v500
    %503 = vbcast.lane.b32.xlu0 %v501, 256
    %v504 = vpop.permute.xlu0 %503
    %v505 = vlaneseq
    %v506 = vshrl.u32 %v505, 7
    %v507 = vsub.s32 2, %v506
    %v508 = vrot.slane %v86, %v507
    %510 = vbcast.lane.b32.xlu0 %v508, 256
    %v511 = vpop.permute.xlu0 %510
    %v512 = vlaneseq
    %v513 = vshrl.u32 %v512, 7
    %v514 = vsub.s32 3, %v513
    %v515 = vrot.slane %v86, %v514
    %517 = vbcast.lane.b32.xlu0 %v515, 256
    %v518 = vpop.permute.xlu0 %517
    %v519 = vlaneseq
    %v520 = vshrl.u32 %v519, 7
    %v521 = vsub.s32 4, %v520
    %v522 = vrot.slane %v86, %v521
    %524 = vbcast.lane.b32.xlu0 %v522, 256
    %v525 = vpop.permute.xlu0 %524
    %v526 = vlaneseq
    %v527 = vshrl.u32 %v526, 7
    %v528 = vsub.s32 5, %v527
    %v529 = vrot.slane %v86, %v528
    %531 = vbcast.lane.b32.xlu0 %v529, 256
    %v532 = vpop.permute.xlu0 %531
    %v533 = vlaneseq
    %v534 = vshrl.u32 %v533, 7
    %v535 = vsub.s32 6, %v534
    %v536 = vrot.slane %v86, %v535
    %538 = vbcast.lane.b32.xlu0 %v536, 256
    %v539 = vpop.permute.xlu0 %538
    %v540 = vlaneseq
    %v541 = vshrl.u32 %v540, 7
    %v542 = vsub.s32 7, %v541
    %v543 = vrot.slane %v86, %v542
    %545 = vbcast.lane.b32.xlu0 %v543, 256
    %v546 = vpop.permute.xlu0 %545
    %vm547 = vcmp.eq.s32.totalorder %v441, %v249
    %vm548 = vcmp.eq.s32.totalorder %v448, %v249
    %vm549 = vcmp.eq.s32.totalorder %v455, %v249
    %vm550 = vcmp.eq.s32.totalorder %v462, %v249
    %vm551 = vcmp.eq.s32.totalorder %v469, %v249
    %vm552 = vcmp.eq.s32.totalorder %v476, %v249
    %vm553 = vcmp.eq.s32.totalorder %v483, %v249
    %vm554 = vcmp.eq.s32.totalorder %v490, %v249
    %vm555 = vcmp.eq.s32.totalorder %v497, %v249
    %vm556 = vcmp.eq.s32.totalorder %v504, %v249
    %vm557 = vcmp.eq.s32.totalorder %v511, %v249
    %vm558 = vcmp.eq.s32.totalorder %v518, %v249
    %vm559 = vcmp.eq.s32.totalorder %v525, %v249
    %vm560 = vcmp.eq.s32.totalorder %v532, %v249
    %vm561 = vcmp.eq.s32.totalorder %v539, %v249
    %vm562 = vcmp.eq.s32.totalorder %v546, %v249
    %v563 = vsel %vm547, 1, 0
    %v564 = vsel %vm548, 1, 0
    %v565 = vsel %vm549, 1, 0
    %v566 = vsel %vm550, 1, 0
    %v567 = vsel %vm551, 1, 0
    %v568 = vsel %vm552, 1, 0
    %v569 = vsel %vm553, 1, 0
    %v570 = vsel %vm554, 1, 0
    %v571 = vsel %vm555, 1, 0
    %v572 = vsel %vm556, 1, 0
    %v573 = vsel %vm557, 1, 0
    %v574 = vsel %vm558, 1, 0
    %v575 = vsel %vm559, 1, 0
    %v576 = vsel %vm560, 1, 0
    %v577 = vsel %vm561, 1, 0
    %v578 = vsel %vm562, 1, 0
    %v579 = vcvt.s32.f32 %v563
    %v580 = vcvt.s32.f32 %v564
    %v581 = vcvt.s32.f32 %v565
    %v582 = vcvt.s32.f32 %v566
    %v583 = vcvt.s32.f32 %v567
    %v584 = vcvt.s32.f32 %v568
    %v585 = vcvt.s32.f32 %v569
    %v586 = vcvt.s32.f32 %v570
    %v587 = vcvt.s32.f32 %v571
    %v588 = vcvt.s32.f32 %v572
    %v589 = vcvt.s32.f32 %v573
    %v590 = vcvt.s32.f32 %v574
    %v591 = vcvt.s32.f32 %v575
    %v592 = vcvt.s32.f32 %v576
    %v593 = vcvt.s32.f32 %v577
    %v594 = vcvt.s32.f32 %v578
    %vm595 = vcmask 31744
    %v597 = vsel %vm595, %v419, 0
    %v600 = vsel %vm595, %v420, 0
    %v603 = vsel %vm595, %v421, 0
    %v606 = vsel %vm595, %v422, 0
    %v609 = vsel %vm595, %v423, 0
    %v612 = vsel %vm595, %v424, 0
    %v615 = vsel %vm595, %v425, 0
    %v618 = vsel %vm595, %v426, 0
    %v621 = vsel %vm595, %v427, 0
    %v624 = vsel %vm595, %v428, 0
    %v627 = vsel %vm595, %v429, 0
    %v630 = vsel %vm595, %v430, 0
    %v633 = vsel %vm595, %v431, 0
    %v636 = vsel %vm595, %v432, 0
    %v639 = vsel %vm595, %v433, 0
    %v642 = vsel %vm595, %v434, 0
    %vm644 = vcmask 1043456
    %v646 = vsel %vm644, %v40, 0
    %648 = vmatprep.subr.mxu0 0.0
    %649 = vmatpush1.msra.mxu0 %v646
    %650 = vmatprep.subr.mxu0 0.0
    %651 = vmatpush1.msra.mxu0 0.0
    %652 = vmatprep.subr.mxu0 0.0
    %653 = vmatpush1.msra.mxu0 0.0
    %654 = vmatprep.subr.mxu0 0.0
    %655 = vmatpush1.msra.mxu0 0.0
    %656 = vmatprep.subr.mxu0 0.0
    %657 = vmatpush1.msra.mxu0 0.0
    %658 = vmatprep.subr.mxu0 0.0
    %659 = vmatpush1.msra.mxu0 0.0
    %660 = vmatprep.subr.mxu0 0.0
    %661 = vmatpush1.msra.mxu0 0.0
    %662 = vmatprep.subr.mxu0 0.0
    %663 = vmatpush1.msra.mxu0 0.0
    %664 = vmatprep.subr.mxu0 0.0
    %665 = vmatpush1.msra.mxu0 0.0
    %666 = vmatprep.subr.mxu0 0.0
    %667 = vmatpush1.msra.mxu0 0.0
    %668 = vmatprep.subr.mxu0 0.0
    %669 = vmatpush1.msra.mxu0 0.0
    %670 = vmatprep.subr.mxu0 0.0
    %671 = vmatpush1.msra.mxu0 0.0
    %672 = vmatprep.subr.mxu0 0.0
    %673 = vmatpush1.msra.mxu0 0.0
    %674 = vmatprep.subr.mxu0 0.0
    %675 = vmatpush1.msra.mxu0 0.0
    %676 = vmatprep.subr.mxu0 0.0
    %677 = vmatpush1.msra.mxu0 0.0
    %678 = vmatprep.subr.mxu0 0.0
    %679 = vmatpush1.msra.mxu0 0.0
    %680 = vmatprep.subr.mxu0 0.0
    %681 = vmatpush1.msra.mxu0 0.0
    %682 = vmatprep.subr.mxu0 0.0
    %683 = vmatpush1.msra.mxu0 0.0
    %684 = vmatprep.subr.mxu0 0.0
    %685 = vmatpush1.msra.mxu0 0.0
    %686 = vmatprep.subr.mxu0 0.0
    %687 = vmatpush1.msra.mxu0 0.0
    %688 = vmatprep.subr.mxu0 0.0
    %689 = vmatpush1.msra.mxu0 0.0
    %690 = vmatprep.subr.mxu0 0.0
    %691 = vmatpush1.msra.mxu0 0.0
    %692 = vmatprep.subr.mxu0 0.0
    %693 = vmatpush1.msra.mxu0 0.0
    %694 = vmatprep.subr.mxu0 0.0
    %695 = vmatpush1.msra.mxu0 0.0
    %696 = vmatprep.subr.mxu0 0.0
    %697 = vmatpush1.msra.mxu0 0.0
    %698 = vmatprep.subr.mxu0 0.0
    %699 = vmatpush1.msra.mxu0 0.0
    %700 = vmatprep.subr.mxu0 0.0
    %701 = vmatpush1.msra.mxu0 0.0
    %702 = vmatprep.subr.mxu0 0.0
    %703 = vmatpush1.msra.mxu0 0.0
    %704 = vmatprep.subr.mxu0 0.0
    %705 = vmatpush1.msra.mxu0 0.0
    %706 = vmatprep.subr.mxu0 0.0
    %707 = vmatpush1.msra.mxu0 0.0
    %708 = vmatprep.subr.mxu0 0.0
    %709 = vmatpush1.msra.mxu0 0.0
    %710 = vmatprep.subr.mxu0 0.0
    %711 = vmatpush1.msra.mxu0 0.0
    %712 = vmatprep.mubr.f32.mxu0 0.0
    %713 = vmatmul.mubr.f32.gmra.mrb[0].mxu0 %v597
    %v714 = vpop.f32.mrb[0].mxu0
    %v715 = vadd.f32 0.0, %v714
    %v716 = vpop.f32.mrb[0].mxu0
    %717 = vmatprep.mubr.f32.mxu0 0.0
    %718 = vmatmul.mubr.f32.gmra.mrb[0].mxu0 %v600
    %v719 = vpop.f32.mrb[0].mxu0
    %v720 = vadd.f32 0.0, %v719
    %v721 = vpop.f32.mrb[0].mxu0
    %722 = vmatprep.mubr.f32.mxu0 0.0
    %723 = vmatmul.mubr.f32.gmra.mrb[0].mxu0 %v603
    %v724 = vpop.f32.mrb[0].mxu0
    %v725 = vadd.f32 0.0, %v724
    %v726 = vpop.f32.mrb[0].mxu0
    %727 = vmatprep.mubr.f32.mxu0 0.0
    %728 = vmatmul.mubr.f32.gmra.mrb[0].mxu0 %v606
    %v729 = vpop.f32.mrb[0].mxu0
    %v730 = vadd.f32 0.0, %v729
    %v731 = vpop.f32.mrb[0].mxu0
    %732 = vmatprep.mubr.f32.mxu0 0.0
    %733 = vmatmul.mubr.f32.gmra.mrb[0].mxu0 %v609
    %v734 = vpop.f32.mrb[0].mxu0
    %v735 = vadd.f32 0.0, %v734
    %v736 = vpop.f32.mrb[0].mxu0
    %737 = vmatprep.mubr.f32.mxu0 0.0
    %738 = vmatmul.mubr.f32.gmra.mrb[0].mxu0 %v612
    %v739 = vpop.f32.mrb[0].mxu0
    %v740 = vadd.f32 0.0, %v739
    %v741 = vpop.f32.mrb[0].mxu0
    %742 = vmatprep.mubr.f32.mxu0 0.0
    %743 = vmatmul.mubr.f32.gmra.mrb[0].mxu0 %v615
    %v744 = vpop.f32.mrb[0].mxu0
    %v745 = vadd.f32 0.0, %v744
    %v746 = vpop.f32.mrb[0].mxu0
    %747 = vmatprep.mubr.f32.mxu0 0.0
    %748 = vmatmul.mubr.f32.gmra.mrb[0].mxu0 %v618
    %v749 = vpop.f32.mrb[0].mxu0
    %v750 = vadd.f32 0.0, %v749
    %v751 = vpop.f32.mrb[0].mxu0
    %752 = vmatprep.mubr.f32.mxu0 0.0
    %753 = vmatmul.mubr.f32.gmra.mrb[0].mxu0 %v621
    %v754 = vpop.f32.mrb[0].mxu0
    %v755 = vadd.f32 0.0, %v754
    %v756 = vpop.f32.mrb[0].mxu0
    %757 = vmatprep.mubr.f32.mxu0 0.0
    %758 = vmatmul.mubr.f32.gmra.mrb[0].mxu0 %v624
    %v759 = vpop.f32.mrb[0].mxu0
    %v760 = vadd.f32 0.0, %v759
    %v761 = vpop.f32.mrb[0].mxu0
    %762 = vmatprep.mubr.f32.mxu0 0.0
    %763 = vmatmul.mubr.f32.gmra.mrb[0].mxu0 %v627
    %v764 = vpop.f32.mrb[0].mxu0
    %v765 = vadd.f32 0.0, %v764
    %v766 = vpop.f32.mrb[0].mxu0
    %767 = vmatprep.mubr.f32.mxu0 0.0
    %768 = vmatmul.mubr.f32.gmra.mrb[0].mxu0 %v630
    %v769 = vpop.f32.mrb[0].mxu0
    %v770 = vadd.f32 0.0, %v769
    %v771 = vpop.f32.mrb[0].mxu0
    %772 = vmatprep.mubr.f32.mxu0 0.0
    %773 = vmatmul.mubr.f32.gmra.mrb[0].mxu0 %v633
    %v774 = vpop.f32.mrb[0].mxu0
    %v775 = vadd.f32 0.0, %v774
    %v776 = vpop.f32.mrb[0].mxu0
    %777 = vmatprep.mubr.f32.mxu0 0.0
    %778 = vmatmul.mubr.f32.gmra.mrb[0].mxu0 %v636
    %v779 = vpop.f32.mrb[0].mxu0
    %v780 = vadd.f32 0.0, %v779
    %v781 = vpop.f32.mrb[0].mxu0
    %782 = vmatprep.mubr.f32.mxu0 0.0
    %783 = vmatmul.mubr.f32.gmra.mrb[0].mxu0 %v639
    %v784 = vpop.f32.mrb[0].mxu0
    %v785 = vadd.f32 0.0, %v784
    %v786 = vpop.f32.mrb[0].mxu0
    %787 = vmatprep.mubr.f32.mxu0 0.0
    %788 = vmatmul.mubr.f32.gmra.mrb[0].mxu0 %v642
    %v789 = vpop.f32.mrb[0].mxu0
    %v790 = vadd.f32 0.0, %v789
    %v791 = vpop.f32.mrb[0].mxu0
    %792 = vdwg.mxu0
    %v794 = vsel %vm595, %v579, 0
    %v797 = vsel %vm595, %v580, 0
    %v800 = vsel %vm595, %v581, 0
    %v803 = vsel %vm595, %v582, 0
    %v806 = vsel %vm595, %v583, 0
    %v809 = vsel %vm595, %v584, 0
    %v812 = vsel %vm595, %v585, 0
    %v815 = vsel %vm595, %v586, 0
    %v818 = vsel %vm595, %v587, 0
    %v821 = vsel %vm595, %v588, 0
    %v824 = vsel %vm595, %v589, 0
    %v827 = vsel %vm595, %v590, 0
    %v830 = vsel %vm595, %v591, 0
    %v833 = vsel %vm595, %v592, 0
    %v836 = vsel %vm595, %v593, 0
    %v839 = vsel %vm595, %v594, 0
    %841 = vmatprep.subr.mxu0 0.0
    %842 = vmatpush1.msra.mxu0 %v646
    %843 = vmatprep.subr.mxu0 0.0
    %844 = vmatpush1.msra.mxu0 0.0
    %845 = vmatprep.subr.mxu0 0.0
    %846 = vmatpush1.msra.mxu0 0.0
    %847 = vmatprep.subr.mxu0 0.0
    %848 = vmatpush1.msra.mxu0 0.0
    %849 = vmatprep.subr.mxu0 0.0
    %850 = vmatpush1.msra.mxu0 0.0
    %851 = vmatprep.subr.mxu0 0.0
    %852 = vmatpush1.msra.mxu0 0.0
    %853 = vmatprep.subr.mxu0 0.0
    %854 = vmatpush1.msra.mxu0 0.0
    %855 = vmatprep.subr.mxu0 0.0
    %856 = vmatpush1.msra.mxu0 0.0
    %857 = vmatprep.subr.mxu0 0.0
    %858 = vmatpush1.msra.mxu0 0.0
    %859 = vmatprep.subr.mxu0 0.0
    %860 = vmatpush1.msra.mxu0 0.0
    %861 = vmatprep.subr.mxu0 0.0
    %862 = vmatpush1.msra.mxu0 0.0
    %863 = vmatprep.subr.mxu0 0.0
    %864 = vmatpush1.msra.mxu0 0.0
    %865 = vmatprep.subr.mxu0 0.0
    %866 = vmatpush1.msra.mxu0 0.0
    %867 = vmatprep.subr.mxu0 0.0
    %868 = vmatpush1.msra.mxu0 0.0
    %869 = vmatprep.subr.mxu0 0.0
    %870 = vmatpush1.msra.mxu0 0.0
    %871 = vmatprep.subr.mxu0 0.0
    %872 = vmatpush1.msra.mxu0 0.0
    %873 = vmatprep.subr.mxu0 0.0
    %874 = vmatpush1.msra.mxu0 0.0
    %875 = vmatprep.subr.mxu0 0.0
    %876 = vmatpush1.msra.mxu0 0.0
    %877 = vmatprep.subr.mxu0 0.0
    %878 = vmatpush1.msra.mxu0 0.0
    %879 = vmatprep.subr.mxu0 0.0
    %880 = vmatpush1.msra.mxu0 0.0
    %881 = vmatprep.subr.mxu0 0.0
    %882 = vmatpush1.msra.mxu0 0.0
    %883 = vmatprep.subr.mxu0 0.0
    %884 = vmatpush1.msra.mxu0 0.0
    %885 = vmatprep.subr.mxu0 0.0
    %886 = vmatpush1.msra.mxu0 0.0
    %887 = vmatprep.subr.mxu0 0.0
    %888 = vmatpush1.msra.mxu0 0.0
    %889 = vmatprep.subr.mxu0 0.0
    %890 = vmatpush1.msra.mxu0 0.0
    %891 = vmatprep.subr.mxu0 0.0
    %892 = vmatpush1.msra.mxu0 0.0
    %893 = vmatprep.subr.mxu0 0.0
    %894 = vmatpush1.msra.mxu0 0.0
    %895 = vmatprep.subr.mxu0 0.0
    %896 = vmatpush1.msra.mxu0 0.0
    %897 = vmatprep.subr.mxu0 0.0
    %898 = vmatpush1.msra.mxu0 0.0
    %899 = vmatprep.subr.mxu0 0.0
    %900 = vmatpush1.msra.mxu0 0.0
    %901 = vmatprep.subr.mxu0 0.0
    %902 = vmatpush1.msra.mxu0 0.0
    %903 = vmatprep.subr.mxu0 0.0
    %904 = vmatpush1.msra.mxu0 0.0
    %905 = vmatprep.mubr.f32.mxu0 0.0
    %906 = vmatmul.mubr.f32.gmra.mrb[0].mxu0 %v794
    %v907 = vpop.f32.mrb[0].mxu0
    %v908 = vadd.f32 0.0, %v907
    %v909 = vpop.f32.mrb[0].mxu0
    %910 = vmatprep.mubr.f32.mxu0 0.0
    %911 = vmatmul.mubr.f32.gmra.mrb[0].mxu0 %v797
    %v912 = vpop.f32.mrb[0].mxu0
    %v913 = vadd.f32 0.0, %v912
    %v914 = vpop.f32.mrb[0].mxu0
    %915 = vmatprep.mubr.f32.mxu0 0.0
    %916 = vmatmul.mubr.f32.gmra.mrb[0].mxu0 %v800
    %v917 = vpop.f32.mrb[0].mxu0
    %v918 = vadd.f32 0.0, %v917
    %v919 = vpop.f32.mrb[0].mxu0
    %920 = vmatprep.mubr.f32.mxu0 0.0
    %921 = vmatmul.mubr.f32.gmra.mrb[0].mxu0 %v803
    %v922 = vpop.f32.mrb[0].mxu0
    %v923 = vadd.f32 0.0, %v922
    %v924 = vpop.f32.mrb[0].mxu0
    %925 = vmatprep.mubr.f32.mxu0 0.0
    %926 = vmatmul.mubr.f32.gmra.mrb[0].mxu0 %v806
    %v927 = vpop.f32.mrb[0].mxu0
    %v928 = vadd.f32 0.0, %v927
    %v929 = vpop.f32.mrb[0].mxu0
    %930 = vmatprep.mubr.f32.mxu0 0.0
    %931 = vmatmul.mubr.f32.gmra.mrb[0].mxu0 %v809
    %v932 = vpop.f32.mrb[0].mxu0
    %v933 = vadd.f32 0.0, %v932
    %v934 = vpop.f32.mrb[0].mxu0
    %935 = vmatprep.mubr.f32.mxu0 0.0
    %936 = vmatmul.mubr.f32.gmra.mrb[0].mxu0 %v812
    %v937 = vpop.f32.mrb[0].mxu0
    %v938 = vadd.f32 0.0, %v937
    %v939 = vpop.f32.mrb[0].mxu0
    %940 = vmatprep.mubr.f32.mxu0 0.0
    %941 = vmatmul.mubr.f32.gmra.mrb[0].mxu0 %v815
    %v942 = vpop.f32.mrb[0].mxu0
    %v943 = vadd.f32 0.0, %v942
    %v944 = vpop.f32.mrb[0].mxu0
    %945 = vmatprep.mubr.f32.mxu0 0.0
    %946 = vmatmul.mubr.f32.gmra.mrb[0].mxu0 %v818
    %v947 = vpop.f32.mrb[0].mxu0
    %v948 = vadd.f32 0.0, %v947
    %v949 = vpop.f32.mrb[0].mxu0
    %950 = vmatprep.mubr.f32.mxu0 0.0
    %951 = vmatmul.mubr.f32.gmra.mrb[0].mxu0 %v821
    %v952 = vpop.f32.mrb[0].mxu0
    %v953 = vadd.f32 0.0, %v952
    %v954 = vpop.f32.mrb[0].mxu0
    %955 = vmatprep.mubr.f32.mxu0 0.0
    %956 = vmatmul.mubr.f32.gmra.mrb[0].mxu0 %v824
    %v957 = vpop.f32.mrb[0].mxu0
    %v958 = vadd.f32 0.0, %v957
    %v959 = vpop.f32.mrb[0].mxu0
    %960 = vmatprep.mubr.f32.mxu0 0.0
    %961 = vmatmul.mubr.f32.gmra.mrb[0].mxu0 %v827
    %v962 = vpop.f32.mrb[0].mxu0
    %v963 = vadd.f32 0.0, %v962
    %v964 = vpop.f32.mrb[0].mxu0
    %965 = vmatprep.mubr.f32.mxu0 0.0
    %966 = vmatmul.mubr.f32.gmra.mrb[0].mxu0 %v830
    %v967 = vpop.f32.mrb[0].mxu0
    %v968 = vadd.f32 0.0, %v967
    %v969 = vpop.f32.mrb[0].mxu0
    %970 = vmatprep.mubr.f32.mxu0 0.0
    %971 = vmatmul.mubr.f32.gmra.mrb[0].mxu0 %v833
    %v972 = vpop.f32.mrb[0].mxu0
    %v973 = vadd.f32 0.0, %v972
    %v974 = vpop.f32.mrb[0].mxu0
    %975 = vmatprep.mubr.f32.mxu0 0.0
    %976 = vmatmul.mubr.f32.gmra.mrb[0].mxu0 %v836
    %v977 = vpop.f32.mrb[0].mxu0
    %v978 = vadd.f32 0.0, %v977
    %v979 = vpop.f32.mrb[0].mxu0
    %980 = vmatprep.mubr.f32.mxu0 0.0
    %981 = vmatmul.mubr.f32.gmra.mrb[0].mxu0 %v839
    %v982 = vpop.f32.mrb[0].mxu0
    %v983 = vadd.f32 0.0, %v982
    %v984 = vpop.f32.mrb[0].mxu0
    %985 = vdwg.mxu0
    %v987 = vsel %vm644, %v38, 0
    %989 = vmatprep.subr.mxu0 0.0
    %990 = vmatpush1.msra.mxu0 %v987
    %991 = vmatprep.subr.mxu0 0.0
    %992 = vmatpush1.msra.mxu0 0.0
    %993 = vmatprep.subr.mxu0 0.0
    %994 = vmatpush1.msra.mxu0 0.0
    %995 = vmatprep.subr.mxu0 0.0
    %996 = vmatpush1.msra.mxu0 0.0
    %997 = vmatprep.subr.mxu0 0.0
    %998 = vmatpush1.msra.mxu0 0.0
    %999 = vmatprep.subr.mxu0 0.0
    %1000 = vmatpush1.msra.mxu0 0.0
    %1001 = vmatprep.subr.mxu0 0.0
    %1002 = vmatpush1.msra.mxu0 0.0
    %1003 = vmatprep.subr.mxu0 0.0
    %1004 = vmatpush1.msra.mxu0 0.0
    %1005 = vmatprep.subr.mxu0 0.0
    %1006 = vmatpush1.msra.mxu0 0.0
    %1007 = vmatprep.subr.mxu0 0.0
    %1008 = vmatpush1.msra.mxu0 0.0
    %1009 = vmatprep.subr.mxu0 0.0
    %1010 = vmatpush1.msra.mxu0 0.0
    %1011 = vmatprep.subr.mxu0 0.0
    %1012 = vmatpush1.msra.mxu0 0.0
    %1013 = vmatprep.subr.mxu0 0.0
    %1014 = vmatpush1.msra.mxu0 0.0
    %1015 = vmatprep.subr.mxu0 0.0
    %1016 = vmatpush1.msra.mxu0 0.0
    %1017 = vmatprep.subr.mxu0 0.0
    %1018 = vmatpush1.msra.mxu0 0.0
    %1019 = vmatprep.subr.mxu0 0.0
    %1020 = vmatpush1.msra.mxu0 0.0
    %1021 = vmatprep.subr.mxu0 0.0
    %1022 = vmatpush1.msra.mxu0 0.0
    %1023 = vmatprep.subr.mxu0 0.0
    %1024 = vmatpush1.msra.mxu0 0.0
    %1025 = vmatprep.subr.mxu0 0.0
    %1026 = vmatpush1.msra.mxu0 0.0
    %1027 = vmatprep.subr.mxu0 0.0
    %1028 = vmatpush1.msra.mxu0 0.0
    %1029 = vmatprep.subr.mxu0 0.0
    %1030 = vmatpush1.msra.mxu0 0.0
    %1031 = vmatprep.subr.mxu0 0.0
    %1032 = vmatpush1.msra.mxu0 0.0
    %1033 = vmatprep.subr.mxu0 0.0
    %1034 = vmatpush1.msra.mxu0 0.0
    %1035 = vmatprep.subr.mxu0 0.0
    %1036 = vmatpush1.msra.mxu0 0.0
    %1037 = vmatprep.subr.mxu0 0.0
    %1038 = vmatpush1.msra.mxu0 0.0
    %1039 = vmatprep.subr.mxu0 0.0
    %1040 = vmatpush1.msra.mxu0 0.0
    %1041 = vmatprep.subr.mxu0 0.0
    %1042 = vmatpush1.msra.mxu0 0.0
    %1043 = vmatprep.subr.mxu0 0.0
    %1044 = vmatpush1.msra.mxu0 0.0
    %1045 = vmatprep.subr.mxu0 0.0
    %1046 = vmatpush1.msra.mxu0 0.0
    %1047 = vmatprep.subr.mxu0 0.0
    %1048 = vmatpush1.msra.mxu0 0.0
    %1049 = vmatprep.subr.mxu0 0.0
    %1050 = vmatpush1.msra.mxu0 0.0
    %1051 = vmatprep.subr.mxu0 0.0
    %1052 = vmatpush1.msra.mxu0 0.0
    %1053 = vmatprep.mubr.f32.mxu0 0.0
    %1054 = vmatmul.mubr.f32.gmra.mrb[0].mxu0 %v597
    %v1055 = vpop.f32.mrb[0].mxu0
    %v1056 = vadd.f32 0.0, %v1055
    %v1057 = vpop.f32.mrb[0].mxu0
    %1058 = vmatprep.mubr.f32.mxu0 0.0
    %1059 = vmatmul.mubr.f32.gmra.mrb[0].mxu0 %v600
    %v1060 = vpop.f32.mrb[0].mxu0
    %v1061 = vadd.f32 0.0, %v1060
    %v1062 = vpop.f32.mrb[0].mxu0
    %1063 = vmatprep.mubr.f32.mxu0 0.0
    %1064 = vmatmul.mubr.f32.gmra.mrb[0].mxu0 %v603
    %v1065 = vpop.f32.mrb[0].mxu0
    %v1066 = vadd.f32 0.0, %v1065
    %v1067 = vpop.f32.mrb[0].mxu0
    %1068 = vmatprep.mubr.f32.mxu0 0.0
    %1069 = vmatmul.mubr.f32.gmra.mrb[0].mxu0 %v606
    %v1070 = vpop.f32.mrb[0].mxu0
    %v1071 = vadd.f32 0.0, %v1070
    %v1072 = vpop.f32.mrb[0].mxu0
    %1073 = vmatprep.mubr.f32.mxu0 0.0
    %1074 = vmatmul.mubr.f32.gmra.mrb[0].mxu0 %v609
    %v1075 = vpop.f32.mrb[0].mxu0
    %v1076 = vadd.f32 0.0, %v1075
    %v1077 = vpop.f32.mrb[0].mxu0
    %1078 = vmatprep.mubr.f32.mxu0 0.0
    %1079 = vmatmul.mubr.f32.gmra.mrb[0].mxu0 %v612
    %v1080 = vpop.f32.mrb[0].mxu0
    %v1081 = vadd.f32 0.0, %v1080
    %v1082 = vpop.f32.mrb[0].mxu0
    %1083 = vmatprep.mubr.f32.mxu0 0.0
    %1084 = vmatmul.mubr.f32.gmra.mrb[0].mxu0 %v615
    %v1085 = vpop.f32.mrb[0].mxu0
    %v1086 = vadd.f32 0.0, %v1085
    %v1087 = vpop.f32.mrb[0].mxu0
    %1088 = vmatprep.mubr.f32.mxu0 0.0
    %1089 = vmatmul.mubr.f32.gmra.mrb[0].mxu0 %v618
    %v1090 = vpop.f32.mrb[0].mxu0
    %v1091 = vadd.f32 0.0, %v1090
    %v1092 = vpop.f32.mrb[0].mxu0
    %1093 = vmatprep.mubr.f32.mxu0 0.0
    %1094 = vmatmul.mubr.f32.gmra.mrb[0].mxu0 %v621
    %v1095 = vpop.f32.mrb[0].mxu0
    %v1096 = vadd.f32 0.0, %v1095
    %v1097 = vpop.f32.mrb[0].mxu0
    %1098 = vmatprep.mubr.f32.mxu0 0.0
    %1099 = vmatmul.mubr.f32.gmra.mrb[0].mxu0 %v624
    %v1100 = vpop.f32.mrb[0].mxu0
    %v1101 = vadd.f32 0.0, %v1100
    %v1102 = vpop.f32.mrb[0].mxu0
    %1103 = vmatprep.mubr.f32.mxu0 0.0
    %1104 = vmatmul.mubr.f32.gmra.mrb[0].mxu0 %v627
    %v1105 = vpop.f32.mrb[0].mxu0
    %v1106 = vadd.f32 0.0, %v1105
    %v1107 = vpop.f32.mrb[0].mxu0
    %1108 = vmatprep.mubr.f32.mxu0 0.0
    %1109 = vmatmul.mubr.f32.gmra.mrb[0].mxu0 %v630
    %v1110 = vpop.f32.mrb[0].mxu0
    %v1111 = vadd.f32 0.0, %v1110
    %v1112 = vpop.f32.mrb[0].mxu0
    %1113 = vmatprep.mubr.f32.mxu0 0.0
    %1114 = vmatmul.mubr.f32.gmra.mrb[0].mxu0 %v633
    %v1115 = vpop.f32.mrb[0].mxu0
    %v1116 = vadd.f32 0.0, %v1115
    %v1117 = vpop.f32.mrb[0].mxu0
    %1118 = vmatprep.mubr.f32.mxu0 0.0
    %1119 = vmatmul.mubr.f32.gmra.mrb[0].mxu0 %v636
    %v1120 = vpop.f32.mrb[0].mxu0
    %v1121 = vadd.f32 0.0, %v1120
    %v1122 = vpop.f32.mrb[0].mxu0
    %1123 = vmatprep.mubr.f32.mxu0 0.0
    %1124 = vmatmul.mubr.f32.gmra.mrb[0].mxu0 %v639
    %v1125 = vpop.f32.mrb[0].mxu0
    %v1126 = vadd.f32 0.0, %v1125
    %v1127 = vpop.f32.mrb[0].mxu0
    %1128 = vmatprep.mubr.f32.mxu0 0.0
    %1129 = vmatmul.mubr.f32.gmra.mrb[0].mxu0 %v642
    %v1130 = vpop.f32.mrb[0].mxu0
    %v1131 = vadd.f32 0.0, %v1130
    %v1132 = vpop.f32.mrb[0].mxu0
    %1133 = vdwg.mxu0
    %v1134 = vlaneseq
    %v1135 = vshrl.u32 %v1134, 7
    %v1136 = vsub.s32 0, %v1135
    %v1137 = vrot.slane %v39, %v1136
    %v1138 = vadd.f32 %v1056, %v1137
    %v1139 = vadd.f32 %v1061, %v1137
    %v1140 = vadd.f32 %v1066, %v1137
    %v1141 = vadd.f32 %v1071, %v1137
    %v1142 = vadd.f32 %v1076, %v1137
    %v1143 = vadd.f32 %v1081, %v1137
    %v1144 = vadd.f32 %v1086, %v1137
    %v1145 = vadd.f32 %v1091, %v1137
    %v1146 = vadd.f32 %v1096, %v1137
    %v1147 = vadd.f32 %v1101, %v1137
    %v1148 = vadd.f32 %v1106, %v1137
    %v1149 = vadd.f32 %v1111, %v1137
    %v1150 = vadd.f32 %v1116, %v1137
    %v1151 = vadd.f32 %v1121, %v1137
    %v1152 = vadd.f32 %v1126, %v1137
    %v1153 = vadd.f32 %v1131, %v1137
    %1154 = vrot.lane.b32.xlu0 %v38, 104
    %v1155 = vpop.permute.xlu0 %1154
    %v1156 = vsel %vm644, %v1155, 0
    %1158 = vmatprep.subr.mxu0 0.0
    %1159 = vmatpush1.msra.mxu0 %v1156
    %1160 = vmatprep.subr.mxu0 0.0
    %1161 = vmatpush1.msra.mxu0 0.0
    %1162 = vmatprep.subr.mxu0 0.0
    %1163 = vmatpush1.msra.mxu0 0.0
    %1164 = vmatprep.subr.mxu0 0.0
    %1165 = vmatpush1.msra.mxu0 0.0
    %1166 = vmatprep.subr.mxu0 0.0
    %1167 = vmatpush1.msra.mxu0 0.0
    %1168 = vmatprep.subr.mxu0 0.0
    %1169 = vmatpush1.msra.mxu0 0.0
    %1170 = vmatprep.subr.mxu0 0.0
    %1171 = vmatpush1.msra.mxu0 0.0
    %1172 = vmatprep.subr.mxu0 0.0
    %1173 = vmatpush1.msra.mxu0 0.0
    %1174 = vmatprep.subr.mxu0 0.0
    %1175 = vmatpush1.msra.mxu0 0.0
    %1176 = vmatprep.subr.mxu0 0.0
    %1177 = vmatpush1.msra.mxu0 0.0
    %1178 = vmatprep.subr.mxu0 0.0
    %1179 = vmatpush1.msra.mxu0 0.0
    %1180 = vmatprep.subr.mxu0 0.0
    %1181 = vmatpush1.msra.mxu0 0.0
    %1182 = vmatprep.subr.mxu0 0.0
    %1183 = vmatpush1.msra.mxu0 0.0
    %1184 = vmatprep.subr.mxu0 0.0
    %1185 = vmatpush1.msra.mxu0 0.0
    %1186 = vmatprep.subr.mxu0 0.0
    %1187 = vmatpush1.msra.mxu0 0.0
    %1188 = vmatprep.subr.mxu0 0.0
    %1189 = vmatpush1.msra.mxu0 0.0
    %1190 = vmatprep.subr.mxu0 0.0
    %1191 = vmatpush1.msra.mxu0 0.0
    %1192 = vmatprep.subr.mxu0 0.0
    %1193 = vmatpush1.msra.mxu0 0.0
    %1194 = vmatprep.subr.mxu0 0.0
    %1195 = vmatpush1.msra.mxu0 0.0
    %1196 = vmatprep.subr.mxu0 0.0
    %1197 = vmatpush1.msra.mxu0 0.0
    %1198 = vmatprep.subr.mxu0 0.0
    %1199 = vmatpush1.msra.mxu0 0.0
    %1200 = vmatprep.subr.mxu0 0.0
    %1201 = vmatpush1.msra.mxu0 0.0
    %1202 = vmatprep.subr.mxu0 0.0
    %1203 = vmatpush1.msra.mxu0 0.0
    %1204 = vmatprep.subr.mxu0 0.0
    %1205 = vmatpush1.msra.mxu0 0.0
    %1206 = vmatprep.subr.mxu0 0.0
    %1207 = vmatpush1.msra.mxu0 0.0
    %1208 = vmatprep.subr.mxu0 0.0
    %1209 = vmatpush1.msra.mxu0 0.0
    %1210 = vmatprep.subr.mxu0 0.0
    %1211 = vmatpush1.msra.mxu0 0.0
    %1212 = vmatprep.subr.mxu0 0.0
    %1213 = vmatpush1.msra.mxu0 0.0
    %1214 = vmatprep.subr.mxu0 0.0
    %1215 = vmatpush1.msra.mxu0 0.0
    %1216 = vmatprep.subr.mxu0 0.0
    %1217 = vmatpush1.msra.mxu0 0.0
    %1218 = vmatprep.subr.mxu0 0.0
    %1219 = vmatpush1.msra.mxu0 0.0
    %1220 = vmatprep.subr.mxu0 0.0
    %1221 = vmatpush1.msra.mxu0 0.0
    %1222 = vmatprep.mubr.f32.mxu0 0.0
    %1223 = vmatmul.mubr.f32.gmra.mrb[0].mxu0 %v794
    %v1224 = vpop.f32.mrb[0].mxu0
    %v1225 = vadd.f32 0.0, %v1224
    %v1226 = vpop.f32.mrb[0].mxu0
    %1227 = vmatprep.mubr.f32.mxu0 0.0
    %1228 = vmatmul.mubr.f32.gmra.mrb[0].mxu0 %v797
    %v1229 = vpop.f32.mrb[0].mxu0
    %v1230 = vadd.f32 0.0, %v1229
    %v1231 = vpop.f32.mrb[0].mxu0
    %1232 = vmatprep.mubr.f32.mxu0 0.0
    %1233 = vmatmul.mubr.f32.gmra.mrb[0].mxu0 %v800
    %v1234 = vpop.f32.mrb[0].mxu0
    %v1235 = vadd.f32 0.0, %v1234
    %v1236 = vpop.f32.mrb[0].mxu0
    %1237 = vmatprep.mubr.f32.mxu0 0.0
    %1238 = vmatmul.mubr.f32.gmra.mrb[0].mxu0 %v803
    %v1239 = vpop.f32.mrb[0].mxu0
    %v1240 = vadd.f32 0.0, %v1239
    %v1241 = vpop.f32.mrb[0].mxu0
    %1242 = vmatprep.mubr.f32.mxu0 0.0
    %1243 = vmatmul.mubr.f32.gmra.mrb[0].mxu0 %v806
    %v1244 = vpop.f32.mrb[0].mxu0
    %v1245 = vadd.f32 0.0, %v1244
    %v1246 = vpop.f32.mrb[0].mxu0
    %1247 = vmatprep.mubr.f32.mxu0 0.0
    %1248 = vmatmul.mubr.f32.gmra.mrb[0].mxu0 %v809
    %v1249 = vpop.f32.mrb[0].mxu0
    %v1250 = vadd.f32 0.0, %v1249
    %v1251 = vpop.f32.mrb[0].mxu0
    %1252 = vmatprep.mubr.f32.mxu0 0.0
    %1253 = vmatmul.mubr.f32.gmra.mrb[0].mxu0 %v812
    %v1254 = vpop.f32.mrb[0].mxu0
    %v1255 = vadd.f32 0.0, %v1254
    %v1256 = vpop.f32.mrb[0].mxu0
    %1257 = vmatprep.mubr.f32.mxu0 0.0
    %1258 = vmatmul.mubr.f32.gmra.mrb[0].mxu0 %v815
    %v1259 = vpop.f32.mrb[0].mxu0
    %v1260 = vadd.f32 0.0, %v1259
    %v1261 = vpop.f32.mrb[0].mxu0
    %1262 = vmatprep.mubr.f32.mxu0 0.0
    %1263 = vmatmul.mubr.f32.gmra.mrb[0].mxu0 %v818
    %v1264 = vpop.f32.mrb[0].mxu0
    %v1265 = vadd.f32 0.0, %v1264
    %v1266 = vpop.f32.mrb[0].mxu0
    %1267 = vmatprep.mubr.f32.mxu0 0.0
    %1268 = vmatmul.mubr.f32.gmra.mrb[0].mxu0 %v821
    %v1269 = vpop.f32.mrb[0].mxu0
    %v1270 = vadd.f32 0.0, %v1269
    %v1271 = vpop.f32.mrb[0].mxu0
    %1272 = vmatprep.mubr.f32.mxu0 0.0
    %1273 = vmatmul.mubr.f32.gmra.mrb[0].mxu0 %v824
    %v1274 = vpop.f32.mrb[0].mxu0
    %v1275 = vadd.f32 0.0, %v1274
    %v1276 = vpop.f32.mrb[0].mxu0
    %1277 = vmatprep.mubr.f32.mxu0 0.0
    %1278 = vmatmul.mubr.f32.gmra.mrb[0].mxu0 %v827
    %v1279 = vpop.f32.mrb[0].mxu0
    %v1280 = vadd.f32 0.0, %v1279
    %v1281 = vpop.f32.mrb[0].mxu0
    %1282 = vmatprep.mubr.f32.mxu0 0.0
    %1283 = vmatmul.mubr.f32.gmra.mrb[0].mxu0 %v830
    %v1284 = vpop.f32.mrb[0].mxu0
    %v1285 = vadd.f32 0.0, %v1284
    %v1286 = vpop.f32.mrb[0].mxu0
    %1287 = vmatprep.mubr.f32.mxu0 0.0
    %1288 = vmatmul.mubr.f32.gmra.mrb[0].mxu0 %v833
    %v1289 = vpop.f32.mrb[0].mxu0
    %v1290 = vadd.f32 0.0, %v1289
    %v1291 = vpop.f32.mrb[0].mxu0
    %1292 = vmatprep.mubr.f32.mxu0 0.0
    %1293 = vmatmul.mubr.f32.gmra.mrb[0].mxu0 %v836
    %v1294 = vpop.f32.mrb[0].mxu0
    %v1295 = vadd.f32 0.0, %v1294
    %v1296 = vpop.f32.mrb[0].mxu0
    %1297 = vmatprep.mubr.f32.mxu0 0.0
    %1298 = vmatmul.mubr.f32.gmra.mrb[0].mxu0 %v839
    %v1299 = vpop.f32.mrb[0].mxu0
    %v1300 = vadd.f32 0.0, %v1299
    %v1301 = vpop.f32.mrb[0].mxu0
    %1302 = vdwg.mxu0
    %1304 = vrot.lane.b32.xlu0 %v1137, 104
    %v1305 = vpop.permute.xlu0 %1304
    %v1307 = vadd.f32 %v1225, %v1305
    %v1308 = vadd.f32 %v1230, %v1305
    %v1309 = vadd.f32 %v1235, %v1305
    %v1310 = vadd.f32 %v1240, %v1305
    %v1311 = vadd.f32 %v1245, %v1305
    %v1312 = vadd.f32 %v1250, %v1305
    %v1313 = vadd.f32 %v1255, %v1305
    %v1314 = vadd.f32 %v1260, %v1305
    %v1315 = vadd.f32 %v1265, %v1305
    %v1316 = vadd.f32 %v1270, %v1305
    %v1317 = vadd.f32 %v1275, %v1305
    %v1318 = vadd.f32 %v1280, %v1305
    %v1319 = vadd.f32 %v1285, %v1305
    %v1320 = vadd.f32 %v1290, %v1305
    %v1321 = vadd.f32 %v1295, %v1305
    %v1322 = vadd.f32 %v1300, %v1305
    %vm1323 = vcmask 130048
    %v1325 = vsel %vm1323, %v73, 0
    %v1328 = vsel %vm1323, %v74, 0
    %1330 = vmatprep.subr.mxu0 0.0
    %1331 = vmatpush1.msra.mxu0 %v41
    %1332 = vmatprep.subr.mxu0 0.0
    %1333 = vmatpush1.msra.mxu0 %v42
    %1334 = vmatprep.subr.mxu0 0.0
    %1335 = vmatpush1.msra.mxu0 0.0
    %1336 = vmatprep.subr.mxu0 0.0
    %1337 = vmatpush1.msra.mxu0 0.0
    %1338 = vmatprep.subr.mxu0 0.0
    %1339 = vmatpush1.msra.mxu0 0.0
    %1340 = vmatprep.subr.mxu0 0.0
    %1341 = vmatpush1.msra.mxu0 0.0
    %1342 = vmatprep.subr.mxu0 0.0
    %1343 = vmatpush1.msra.mxu0 0.0
    %1344 = vmatprep.subr.mxu0 0.0
    %1345 = vmatpush1.msra.mxu0 0.0
    %1346 = vmatprep.subr.mxu0 0.0
    %1347 = vmatpush1.msra.mxu0 0.0
    %1348 = vmatprep.subr.mxu0 0.0
    %1349 = vmatpush1.msra.mxu0 0.0
    %1350 = vmatprep.subr.mxu0 0.0
    %1351 = vmatpush1.msra.mxu0 0.0
    %1352 = vmatprep.subr.mxu0 0.0
    %1353 = vmatpush1.msra.mxu0 0.0
    %1354 = vmatprep.subr.mxu0 0.0
    %1355 = vmatpush1.msra.mxu0 0.0
    %1356 = vmatprep.subr.mxu0 0.0
    %1357 = vmatpush1.msra.mxu0 0.0
    %1358 = vmatprep.subr.mxu0 0.0
    %1359 = vmatpush1.msra.mxu0 0.0
    %1360 = vmatprep.subr.mxu0 0.0
    %1361 = vmatpush1.msra.mxu0 0.0
    %1362 = vmatprep.subr.mxu0 0.0
    %1363 = vmatpush1.msra.mxu0 0.0
    %1364 = vmatprep.subr.mxu0 0.0
    %1365 = vmatpush1.msra.mxu0 0.0
    %1366 = vmatprep.subr.mxu0 0.0
    %1367 = vmatpush1.msra.mxu0 0.0
    %1368 = vmatprep.subr.mxu0 0.0
    %1369 = vmatpush1.msra.mxu0 0.0
    %1370 = vmatprep.subr.mxu0 0.0
    %1371 = vmatpush1.msra.mxu0 0.0
    %1372 = vmatprep.subr.mxu0 0.0
    %1373 = vmatpush1.msra.mxu0 0.0
    %1374 = vmatprep.subr.mxu0 0.0
    %1375 = vmatpush1.msra.mxu0 0.0
    %1376 = vmatprep.subr.mxu0 0.0
    %1377 = vmatpush1.msra.mxu0 0.0
    %1378 = vmatprep.subr.mxu0 0.0
    %1379 = vmatpush1.msra.mxu0 0.0
    %1380 = vmatprep.subr.mxu0 0.0
    %1381 = vmatpush1.msra.mxu0 0.0
    %1382 = vmatprep.subr.mxu0 0.0
    %1383 = vmatpush1.msra.mxu0 0.0
    %1384 = vmatprep.subr.mxu0 0.0
    %1385 = vmatpush1.msra.mxu0 0.0
    %1386 = vmatprep.subr.mxu0 0.0
    %1387 = vmatpush1.msra.mxu0 0.0
    %1388 = vmatprep.subr.mxu0 0.0
    %1389 = vmatpush1.msra.mxu0 0.0
    %1390 = vmatprep.subr.mxu0 0.0
    %1391 = vmatpush1.msra.mxu0 0.0
    %1392 = vmatprep.subr.mxu0 0.0
    %1393 = vmatpush1.msra.mxu0 0.0
    %1394 = vmatprep.mubr.f32.mxu0 0.0
    %1395 = vmatmul.mubr.f32.gmra.mrb[0].mxu0 %v1325
    %v1396 = vpop.f32.mrb[0].mxu0
    %v1397 = vadd.f32 0.0, %v1396
    %v1398 = vpop.f32.mrb[0].mxu0
    %1399 = vmatprep.mubr.f32.mxu0 0.0
    %1400 = vmatmul.mubr.f32.gmra.mrb[0].mxu0 %v1328
    %v1401 = vpop.f32.mrb[0].mxu0
    %v1402 = vadd.f32 0.0, %v1401
    %v1403 = vpop.f32.mrb[0].mxu0
    %1404 = vdwg.mxu0
    %v1405 = vlaneseq
    %v1406 = vshrl.u32 %v1405, 7
    %v1407 = vsub.s32 0, %v1406
    %v1408 = vrot.slane %v52, %v1407
    %v1409 = vadd.f32 %v1397, %v1408
    %v1410 = vadd.f32 %v1402, %v1408
    %vm1411 = vcmask 97280
    %v1413 = vsel %vm1411, %v75, 0
    %v1416 = vsel %vm1411, %v76, 0
    %v1419 = vsel %vm644, %v55, 0
    %1421 = vmatprep.subr.mxu0 0.0
    %1422 = vmatpush1.msra.mxu0 %v54
    %1423 = vmatprep.subr.mxu0 0.0
    %1424 = vmatpush1.msra.mxu0 %v1419
    %1425 = vmatprep.subr.mxu0 0.0
    %1426 = vmatpush1.msra.mxu0 0.0
    %1427 = vmatprep.subr.mxu0 0.0
    %1428 = vmatpush1.msra.mxu0 0.0
    %1429 = vmatprep.subr.mxu0 0.0
    %1430 = vmatpush1.msra.mxu0 0.0
    %1431 = vmatprep.subr.mxu0 0.0
    %1432 = vmatpush1.msra.mxu0 0.0
    %1433 = vmatprep.subr.mxu0 0.0
    %1434 = vmatpush1.msra.mxu0 0.0
    %1435 = vmatprep.subr.mxu0 0.0
    %1436 = vmatpush1.msra.mxu0 0.0
    %1437 = vmatprep.subr.mxu0 0.0
    %1438 = vmatpush1.msra.mxu0 0.0
    %1439 = vmatprep.subr.mxu0 0.0
    %1440 = vmatpush1.msra.mxu0 0.0
    %1441 = vmatprep.subr.mxu0 0.0
    %1442 = vmatpush1.msra.mxu0 0.0
    %1443 = vmatprep.subr.mxu0 0.0
    %1444 = vmatpush1.msra.mxu0 0.0
    %1445 = vmatprep.subr.mxu0 0.0
    %1446 = vmatpush1.msra.mxu0 0.0
    %1447 = vmatprep.subr.mxu0 0.0
    %1448 = vmatpush1.msra.mxu0 0.0
    %1449 = vmatprep.subr.mxu0 0.0
    %1450 = vmatpush1.msra.mxu0 0.0
    %1451 = vmatprep.subr.mxu0 0.0
    %1452 = vmatpush1.msra.mxu0 0.0
    %1453 = vmatprep.subr.mxu0 0.0
    %1454 = vmatpush1.msra.mxu0 0.0
    %1455 = vmatprep.subr.mxu0 0.0
    %1456 = vmatpush1.msra.mxu0 0.0
    %1457 = vmatprep.subr.mxu0 0.0
    %1458 = vmatpush1.msra.mxu0 0.0
    %1459 = vmatprep.subr.mxu0 0.0
    %1460 = vmatpush1.msra.mxu0 0.0
    %1461 = vmatprep.subr.mxu0 0.0
    %1462 = vmatpush1.msra.mxu0 0.0
    %1463 = vmatprep.subr.mxu0 0.0
    %1464 = vmatpush1.msra.mxu0 0.0
    %1465 = vmatprep.subr.mxu0 0.0
    %1466 = vmatpush1.msra.mxu0 0.0
    %1467 = vmatprep.subr.mxu0 0.0
    %1468 = vmatpush1.msra.mxu0 0.0
    %1469 = vmatprep.subr.mxu0 0.0
    %1470 = vmatpush1.msra.mxu0 0.0
    %1471 = vmatprep.subr.mxu0 0.0
    %1472 = vmatpush1.msra.mxu0 0.0
    %1473 = vmatprep.subr.mxu0 0.0
    %1474 = vmatpush1.msra.mxu0 0.0
    %1475 = vmatprep.subr.mxu0 0.0
    %1476 = vmatpush1.msra.mxu0 0.0
    %1477 = vmatprep.subr.mxu0 0.0
    %1478 = vmatpush1.msra.mxu0 0.0
    %1479 = vmatprep.subr.mxu0 0.0
    %1480 = vmatpush1.msra.mxu0 0.0
    %1481 = vmatprep.subr.mxu0 0.0
    %1482 = vmatpush1.msra.mxu0 0.0
    %1483 = vmatprep.subr.mxu0 0.0
    %1484 = vmatpush1.msra.mxu0 0.0
    %1485 = vmatprep.mubr.f32.mxu0 0.0
    %1486 = vmatmul.mubr.f32.gmra.mrb[0].mxu0 %v1413
    %v1487 = vpop.f32.mrb[0].mxu0
    %v1488 = vadd.f32 0.0, %v1487
    %v1489 = vpop.f32.mrb[0].mxu0
    %1490 = vmatprep.mubr.f32.mxu0 0.0
    %1491 = vmatmul.mubr.f32.gmra.mrb[0].mxu0 %v1416
    %v1492 = vpop.f32.mrb[0].mxu0
    %v1493 = vadd.f32 0.0, %v1492
    %v1494 = vpop.f32.mrb[0].mxu0
    %1495 = vdwg.mxu0
    %v1496 = vlaneseq
    %v1497 = vshrl.u32 %v1496, 7
    %v1498 = vsub.s32 0, %v1497
    %v1499 = vrot.slane %v63, %v1498
    %v1500 = vadd.f32 %v1488, %v1499
    %v1501 = vadd.f32 %v1493, %v1499
    %vm1502 = vcmask 7168
    %v1503 = vsel %vm1502, %v79, 0.0
    %v1504 = vrot.slane %v1503, 4
    %v1505 = vadd.f32 %v1503, %v1504
    %v1506 = vrot.slane %v1505, 2
    %v1507 = vadd.f32 %v1505, %v1506
    %v1508 = vrot.slane %v1507, 1
    %v1509 = vadd.f32 %v1507, %v1508
    %v1510 = vsel %vm1502, %v80, 0.0
    %v1511 = vrot.slane %v1510, 4
    %v1512 = vadd.f32 %v1510, %v1511
    %v1513 = vrot.slane %v1512, 2
    %v1514 = vadd.f32 %v1512, %v1513
    %v1515 = vrot.slane %v1514, 1
    %v1516 = vadd.f32 %v1514, %v1515
    %v1517 = vmax.f32 %v1509, 1e-06
    %v1518 = vmax.f32 %v1516, 1e-06
    %v1519 = vrcp.pop %v1517
    %v1520 = vmul.f32 1.0, %v1519
    %v1521 = vrcp.pop %v1518
    %v1522 = vmul.f32 1.0, %v1521
    %v1523 = vsel %vm1502, %v81, 0.0
    %v1524 = vrot.slane %v1523, 4
    %v1525 = vadd.f32 %v1523, %v1524
    %v1526 = vrot.slane %v1525, 2
    %v1527 = vadd.f32 %v1525, %v1526
    %v1528 = vrot.slane %v1527, 1
    %v1529 = vadd.f32 %v1527, %v1528
    %v1530 = vsel %vm1502, %v82, 0.0
    %v1531 = vrot.slane %v1530, 4
    %v1532 = vadd.f32 %v1530, %v1531
    %v1533 = vrot.slane %v1532, 2
    %v1534 = vadd.f32 %v1532, %v1533
    %v1535 = vrot.slane %v1534, 1
    %v1536 = vadd.f32 %v1534, %v1535
    %v1537 = vadd.f32 %v1529, 1.0
    %v1538 = vadd.f32 %v1536, 1.0
    %v1539 = vrcp.pop %v1537
    %v1540 = vmul.f32 1.0, %v1539
    %v1541 = vrcp.pop %v1538
    %v1542 = vmul.f32 1.0, %v1541
    %v1544 = vsel %vm99, %v273, 0
    %1546 = vmatprep.subr.mxu0 0.0
    %1547 = vmatpush1.msra.mxu0 0.0
    %1548 = vmatprep.subr.mxu0 0.0
    %1549 = vmatpush1.msra.mxu0 0.0
    %1550 = vmatprep.subr.mxu0 0.0
    %1551 = vmatpush1.msra.mxu0 0.0
    %1552 = vmatprep.subr.mxu0 0.0
    %1553 = vmatpush1.msra.mxu0 0.0
    %1554 = vmatprep.subr.mxu0 0.0
    %1555 = vmatpush1.msra.mxu0 0.0
    %1556 = vmatprep.subr.mxu0 0.0
    %1557 = vmatpush1.msra.mxu0 0.0
    %1558 = vmatprep.subr.mxu0 0.0
    %1559 = vmatpush1.msra.mxu0 0.0
    %1560 = vmatprep.subr.mxu0 0.0
    %1561 = vmatpush1.msra.mxu0 0.0
    %1562 = vmatprep.subr.mxu0 0.0
    %1563 = vmatpush1.msra.mxu0 0.0
    %1564 = vmatprep.subr.mxu0 0.0
    %1565 = vmatpush1.msra.mxu0 0.0
    %1566 = vmatprep.subr.mxu0 0.0
    %1567 = vmatpush1.msra.mxu0 0.0
    %1568 = vmatprep.subr.mxu0 0.0
    %1569 = vmatpush1.msra.mxu0 0.0
    %1570 = vmatprep.subr.mxu0 0.0
    %1571 = vmatpush1.msra.mxu0 0.0
    %1572 = vmatprep.subr.mxu0 0.0
    %1573 = vmatpush1.msra.mxu0 0.0
    %1574 = vmatprep.subr.mxu0 0.0
    %1575 = vmatpush1.msra.mxu0 0.0
    %1576 = vmatprep.subr.mxu0 0.0
    %1577 = vmatpush1.msra.mxu0 0.0
    %1578 = vmatprep.subr.mxu0 0.0
    %1579 = vmatpush1.msra.mxu0 0.0
    %1580 = vmatprep.subr.mxu0 0.0
    %1581 = vmatpush1.msra.mxu0 0.0
    %1582 = vmatprep.subr.mxu0 0.0
    %1583 = vmatpush1.msra.mxu0 0.0
    %1584 = vmatprep.subr.mxu0 0.0
    %1585 = vmatpush1.msra.mxu0 0.0
    %1586 = vmatprep.subr.mxu0 0.0
    %1587 = vmatpush1.msra.mxu0 0.0
    %1588 = vmatprep.subr.mxu0 0.0
    %1589 = vmatpush1.msra.mxu0 0.0
    %1590 = vmatprep.subr.mxu0 0.0
    %1591 = vmatpush1.msra.mxu0 0.0
    %1592 = vmatprep.subr.mxu0 0.0
    %1593 = vmatpush1.msra.mxu0 0.0
    %1594 = vmatprep.subr.mxu0 0.0
    %1595 = vmatpush1.msra.mxu0 0.0
    %1596 = vmatprep.subr.mxu0 0.0
    %1597 = vmatpush1.msra.mxu0 0.0
    %1598 = vmatprep.subr.mxu0 0.0
    %1599 = vmatpush1.msra.mxu0 0.0
    %1600 = vmatprep.subr.mxu0 0.0
    %1601 = vmatpush1.msra.mxu0 0.0
    %1602 = vmatprep.subr.mxu0 0.0
    %1603 = vmatpush1.msra.mxu0 0.0
    %1604 = vmatprep.subr.mxu0 0.0
    %1605 = vmatpush1.msra.mxu0 0.0
    %1606 = vmatprep.subr.mxu0 0.0
    %1607 = vmatpush1.msra.mxu0 0.0
    %1608 = vmatprep.subr.mxu0 0.0
    %1609 = vmatpush1.msra.mxu0 0.0
    %1610 = vmatprep.mubr.f32.mxu0 0.0
    %1611 = vmatmul.mubr.f32.gmra.mrb[0].mxu0 %v1544
    %v1612 = vpop.f32.mrb[0].mxu0
    %v1613 = vadd.f32 0.0, %v1612
    %v1614 = vpop.f32.mrb[0].mxu0
    %1615 = vdwg.mxu0
    %v1617 = vsel %vm99, %v274, 0
    %1619 = vmatprep.subr.mxu0 0.0
    %1620 = vmatpush1.msra.mxu0 0.0
    %1621 = vmatprep.subr.mxu0 0.0
    %1622 = vmatpush1.msra.mxu0 0.0
    %1623 = vmatprep.subr.mxu0 0.0
    %1624 = vmatpush1.msra.mxu0 0.0
    %1625 = vmatprep.subr.mxu0 0.0
    %1626 = vmatpush1.msra.mxu0 0.0
    %1627 = vmatprep.subr.mxu0 0.0
    %1628 = vmatpush1.msra.mxu0 0.0
    %1629 = vmatprep.subr.mxu0 0.0
    %1630 = vmatpush1.msra.mxu0 0.0
    %1631 = vmatprep.subr.mxu0 0.0
    %1632 = vmatpush1.msra.mxu0 0.0
    %1633 = vmatprep.subr.mxu0 0.0
    %1634 = vmatpush1.msra.mxu0 0.0
    %1635 = vmatprep.subr.mxu0 0.0
    %1636 = vmatpush1.msra.mxu0 0.0
    %1637 = vmatprep.subr.mxu0 0.0
    %1638 = vmatpush1.msra.mxu0 0.0
    %1639 = vmatprep.subr.mxu0 0.0
    %1640 = vmatpush1.msra.mxu0 0.0
    %1641 = vmatprep.subr.mxu0 0.0
    %1642 = vmatpush1.msra.mxu0 0.0
    %1643 = vmatprep.subr.mxu0 0.0
    %1644 = vmatpush1.msra.mxu0 0.0
    %1645 = vmatprep.subr.mxu0 0.0
    %1646 = vmatpush1.msra.mxu0 0.0
    %1647 = vmatprep.subr.mxu0 0.0
    %1648 = vmatpush1.msra.mxu0 0.0
    %1649 = vmatprep.subr.mxu0 0.0
    %1650 = vmatpush1.msra.mxu0 0.0
    %1651 = vmatprep.subr.mxu0 0.0
    %1652 = vmatpush1.msra.mxu0 0.0
    %1653 = vmatprep.subr.mxu0 0.0
    %1654 = vmatpush1.msra.mxu0 0.0
    %1655 = vmatprep.subr.mxu0 0.0
    %1656 = vmatpush1.msra.mxu0 0.0
    %1657 = vmatprep.subr.mxu0 0.0
    %1658 = vmatpush1.msra.mxu0 0.0
    %1659 = vmatprep.subr.mxu0 0.0
    %1660 = vmatpush1.msra.mxu0 0.0
    %1661 = vmatprep.subr.mxu0 0.0
    %1662 = vmatpush1.msra.mxu0 0.0
    %1663 = vmatprep.subr.mxu0 0.0
    %1664 = vmatpush1.msra.mxu0 0.0
    %1665 = vmatprep.subr.mxu0 0.0
    %1666 = vmatpush1.msra.mxu0 0.0
    %1667 = vmatprep.subr.mxu0 0.0
    %1668 = vmatpush1.msra.mxu0 0.0
    %1669 = vmatprep.subr.mxu0 0.0
    %1670 = vmatpush1.msra.mxu0 0.0
    %1671 = vmatprep.subr.mxu0 0.0
    %1672 = vmatpush1.msra.mxu0 0.0
    %1673 = vmatprep.subr.mxu0 0.0
    %1674 = vmatpush1.msra.mxu0 0.0
    %1675 = vmatprep.subr.mxu0 0.0
    %1676 = vmatpush1.msra.mxu0 0.0
    %1677 = vmatprep.subr.mxu0 0.0
    %1678 = vmatpush1.msra.mxu0 0.0
    %1679 = vmatprep.subr.mxu0 0.0
    %1680 = vmatpush1.msra.mxu0 0.0
    %1681 = vmatprep.subr.mxu0 0.0
    %1682 = vmatpush1.msra.mxu0 0.0
    %1683 = vmatprep.mubr.f32.mxu0 0.0
    %1684 = vmatmul.mubr.f32.gmra.mrb[0].mxu0 %v1617
    %v1685 = vpop.f32.mrb[0].mxu0
    %v1686 = vadd.f32 0.0, %v1685
    %v1687 = vpop.f32.mrb[0].mxu0
    %1688 = vdwg.mxu0
    %v1690 = vsel %vm1323, 0.0, 0
    %1692 = vmatprep.subr.mxu0 0.0
    %1693 = vmatpush1.msra.mxu0 %v34
    %1694 = vmatprep.subr.mxu0 0.0
    %1695 = vmatpush1.msra.mxu0 %v35
    %1696 = vmatprep.subr.mxu0 0.0
    %1697 = vmatpush1.msra.mxu0 0.0
    %1698 = vmatprep.subr.mxu0 0.0
    %1699 = vmatpush1.msra.mxu0 0.0
    %1700 = vmatprep.subr.mxu0 0.0
    %1701 = vmatpush1.msra.mxu0 0.0
    %1702 = vmatprep.subr.mxu0 0.0
    %1703 = vmatpush1.msra.mxu0 0.0
    %1704 = vmatprep.subr.mxu0 0.0
    %1705 = vmatpush1.msra.mxu0 0.0
    %1706 = vmatprep.subr.mxu0 0.0
    %1707 = vmatpush1.msra.mxu0 0.0
    %1708 = vmatprep.subr.mxu0 0.0
    %1709 = vmatpush1.msra.mxu0 0.0
    %1710 = vmatprep.subr.mxu0 0.0
    %1711 = vmatpush1.msra.mxu0 0.0
    %1712 = vmatprep.subr.mxu0 0.0
    %1713 = vmatpush1.msra.mxu0 0.0
    %1714 = vmatprep.subr.mxu0 0.0
    %1715 = vmatpush1.msra.mxu0 0.0
    %1716 = vmatprep.subr.mxu0 0.0
    %1717 = vmatpush1.msra.mxu0 0.0
    %1718 = vmatprep.subr.mxu0 0.0
    %1719 = vmatpush1.msra.mxu0 0.0
    %1720 = vmatprep.subr.mxu0 0.0
    %1721 = vmatpush1.msra.mxu0 0.0
    %1722 = vmatprep.subr.mxu0 0.0
    %1723 = vmatpush1.msra.mxu0 0.0
    %1724 = vmatprep.subr.mxu0 0.0
    %1725 = vmatpush1.msra.mxu0 0.0
    %1726 = vmatprep.subr.mxu0 0.0
    %1727 = vmatpush1.msra.mxu0 0.0
    %1728 = vmatprep.subr.mxu0 0.0
    %1729 = vmatpush1.msra.mxu0 0.0
    %1730 = vmatprep.subr.mxu0 0.0
    %1731 = vmatpush1.msra.mxu0 0.0
    %1732 = vmatprep.subr.mxu0 0.0
    %1733 = vmatpush1.msra.mxu0 0.0
    %1734 = vmatprep.subr.mxu0 0.0
    %1735 = vmatpush1.msra.mxu0 0.0
    %1736 = vmatprep.subr.mxu0 0.0
    %1737 = vmatpush1.msra.mxu0 0.0
    %1738 = vmatprep.subr.mxu0 0.0
    %1739 = vmatpush1.msra.mxu0 0.0
    %1740 = vmatprep.subr.mxu0 0.0
    %1741 = vmatpush1.msra.mxu0 0.0
    %1742 = vmatprep.subr.mxu0 0.0
    %1743 = vmatpush1.msra.mxu0 0.0
    %1744 = vmatprep.subr.mxu0 0.0
    %1745 = vmatpush1.msra.mxu0 0.0
    %1746 = vmatprep.subr.mxu0 0.0
    %1747 = vmatpush1.msra.mxu0 0.0
    %1748 = vmatprep.subr.mxu0 0.0
    %1749 = vmatpush1.msra.mxu0 0.0
    %1750 = vmatprep.subr.mxu0 0.0
    %1751 = vmatpush1.msra.mxu0 0.0
    %1752 = vmatprep.subr.mxu0 0.0
    %1753 = vmatpush1.msra.mxu0 0.0
    %1754 = vmatprep.subr.mxu0 0.0
    %1755 = vmatpush1.msra.mxu0 0.0
    %1756 = vmatprep.mubr.f32.mxu0 0.0
    %1757 = vmatmul.mubr.f32.gmra.mrb[0].mxu0 %v1690
    %v1758 = vpop.f32.mrb[0].mxu0
    %v1759 = vadd.f32 0.0, %v1758
    %v1760 = vpop.f32.mrb[0].mxu0
    %1761 = vmatprep.mubr.f32.mxu0 0.0
    %1762 = vmatmul.mubr.f32.gmra.mrb[0].mxu0 %v1690
    %v1763 = vpop.f32.mrb[0].mxu0
    %v1764 = vadd.f32 0.0, %v1763
    %v1765 = vpop.f32.mrb[0].mxu0
    %1766 = vdwg.mxu0
    %1767 = vmatprep.subr.mxu0 0.0
    %1768 = vmatpush1.msra.mxu0 %v36
    %1769 = vmatprep.subr.mxu0 0.0
    %1770 = vmatpush1.msra.mxu0 %v37
    %1771 = vmatprep.subr.mxu0 0.0
    %1772 = vmatpush1.msra.mxu0 0.0
    %1773 = vmatprep.subr.mxu0 0.0
    %1774 = vmatpush1.msra.mxu0 0.0
    %1775 = vmatprep.subr.mxu0 0.0
    %1776 = vmatpush1.msra.mxu0 0.0
    %1777 = vmatprep.subr.mxu0 0.0
    %1778 = vmatpush1.msra.mxu0 0.0
    %1779 = vmatprep.subr.mxu0 0.0
    %1780 = vmatpush1.msra.mxu0 0.0
    %1781 = vmatprep.subr.mxu0 0.0
    %1782 = vmatpush1.msra.mxu0 0.0
    %1783 = vmatprep.subr.mxu0 0.0
    %1784 = vmatpush1.msra.mxu0 0.0
    %1785 = vmatprep.subr.mxu0 0.0
    %1786 = vmatpush1.msra.mxu0 0.0
    %1787 = vmatprep.subr.mxu0 0.0
    %1788 = vmatpush1.msra.mxu0 0.0
    %1789 = vmatprep.subr.mxu0 0.0
    %1790 = vmatpush1.msra.mxu0 0.0
    %1791 = vmatprep.subr.mxu0 0.0
    %1792 = vmatpush1.msra.mxu0 0.0
    %1793 = vmatprep.subr.mxu0 0.0
    %1794 = vmatpush1.msra.mxu0 0.0
    %1795 = vmatprep.subr.mxu0 0.0
    %1796 = vmatpush1.msra.mxu0 0.0
    %1797 = vmatprep.subr.mxu0 0.0
    %1798 = vmatpush1.msra.mxu0 0.0
    %1799 = vmatprep.subr.mxu0 0.0
    %1800 = vmatpush1.msra.mxu0 0.0
    %1801 = vmatprep.subr.mxu0 0.0
    %1802 = vmatpush1.msra.mxu0 0.0
    %1803 = vmatprep.subr.mxu0 0.0
    %1804 = vmatpush1.msra.mxu0 0.0
    %1805 = vmatprep.subr.mxu0 0.0
    %1806 = vmatpush1.msra.mxu0 0.0
    %1807 = vmatprep.subr.mxu0 0.0
    %1808 = vmatpush1.msra.mxu0 0.0
    %1809 = vmatprep.subr.mxu0 0.0
    %1810 = vmatpush1.msra.mxu0 0.0
    %1811 = vmatprep.subr.mxu0 0.0
    %1812 = vmatpush1.msra.mxu0 0.0
    %1813 = vmatprep.subr.mxu0 0.0
    %1814 = vmatpush1.msra.mxu0 0.0
    %1815 = vmatprep.subr.mxu0 0.0
    %1816 = vmatpush1.msra.mxu0 0.0
    %1817 = vmatprep.subr.mxu0 0.0
    %1818 = vmatpush1.msra.mxu0 0.0
    %1819 = vmatprep.subr.mxu0 0.0
    %1820 = vmatpush1.msra.mxu0 0.0
    %1821 = vmatprep.subr.mxu0 0.0
    %1822 = vmatpush1.msra.mxu0 0.0
    %1823 = vmatprep.subr.mxu0 0.0
    %1824 = vmatpush1.msra.mxu0 0.0
    %1825 = vmatprep.subr.mxu0 0.0
    %1826 = vmatpush1.msra.mxu0 0.0
    %1827 = vmatprep.subr.mxu0 0.0
    %1828 = vmatpush1.msra.mxu0 0.0
    %1829 = vmatprep.subr.mxu0 0.0
    %1830 = vmatpush1.msra.mxu0 0.0
    %1831 = vmatprep.mubr.f32.mxu0 0.0
    %1832 = vmatmul.mubr.f32.gmra.mrb[0].mxu0 %v1690
    %v1833 = vpop.f32.mrb[0].mxu0
    %v1834 = vadd.f32 0.0, %v1833
    %v1835 = vpop.f32.mrb[0].mxu0
    %1836 = vmatprep.mubr.f32.mxu0 0.0
    %1837 = vmatmul.mubr.f32.gmra.mrb[0].mxu0 %v1690
    %v1838 = vpop.f32.mrb[0].mxu0
    %v1839 = vadd.f32 0.0, %v1838
    %v1840 = vpop.f32.mrb[0].mxu0
    %1841 = vdwg.mxu0
    %v1844 = vcombine.high %v1759, %v1759
    %v1846 = vunpack.c.l.s4 1966171168
    %v1847 = vunpack.c.0.s8 %v1846
    %v1848 = vlaneseq
    %v1849 = vshrl.u32 %v1848, 7
    %v1850 = vsub.s32 %v1847, %v1849
    %v1851 = vrot.slane %v1759, %v1850
    %v1853 = vunpack.c.l.s4 1966171168
    %v1854 = vunpack.c.0.s8 %v1853
    %v1855 = vlaneseq
    %v1856 = vshrl.u32 %v1855, 7
    %v1857 = vsub.s32 %v1854, %v1856
    %v1858 = vrot.slane %v1844, %v1857
    %v1859 = vcombine.high %v1851, %v1851
    %v1860 = vcombine.high %v1858, %v1858
    %v1862 = vunpack.c.l.s4 1966171168
    %v1863 = vunpack.c.0.s8 %v1862
    %v1864 = vlaneseq
    %v1865 = vshrl.u32 %v1864, 7
    %v1866 = vsub.s32 %v1863, %v1865
    %v1867 = vrot.slane %v1851, %v1866
    %v1869 = vunpack.c.l.s4 1966171168
    %v1870 = vunpack.c.0.s8 %v1869
    %v1871 = vlaneseq
    %v1872 = vshrl.u32 %v1871, 7
    %v1873 = vsub.s32 %v1870, %v1872
    %v1874 = vrot.slane %v1858, %v1873
    %v1876 = vunpack.c.l.s4 1966171168
    %v1877 = vunpack.c.0.s8 %v1876
    %v1878 = vlaneseq
    %v1879 = vshrl.u32 %v1878, 7
    %v1880 = vsub.s32 %v1877, %v1879
    %v1881 = vrot.slane %v1859, %v1880
    %v1883 = vunpack.c.l.s4 1966171168
    %v1884 = vunpack.c.0.s8 %v1883
    %v1885 = vlaneseq
    %v1886 = vshrl.u32 %v1885, 7
    %v1887 = vsub.s32 %v1884, %v1886
    %v1888 = vrot.slane %v1860, %v1887
    %v1889 = vcombine.high %v1867, %v1867
    %v1890 = vcombine.high %v1874, %v1874
    %v1891 = vcombine.high %v1881, %v1881
    %v1892 = vcombine.high %v1888, %v1888
    %v1893 = vcombine.high %v1764, %v1764
    %v1895 = vunpack.c.l.s4 1966171168
    %v1896 = vunpack.c.0.s8 %v1895
    %v1897 = vlaneseq
    %v1898 = vshrl.u32 %v1897, 7
    %v1899 = vsub.s32 %v1896, %v1898
    %v1900 = vrot.slane %v1764, %v1899
    %v1902 = vunpack.c.l.s4 1966171168
    %v1903 = vunpack.c.0.s8 %v1902
    %v1904 = vlaneseq
    %v1905 = vshrl.u32 %v1904, 7
    %v1906 = vsub.s32 %v1903, %v1905
    %v1907 = vrot.slane %v1893, %v1906
    %v1908 = vcombine.high %v1900, %v1900
    %v1909 = vcombine.high %v1907, %v1907
    %v1911 = vunpack.c.l.s4 1966171168
    %v1912 = vunpack.c.0.s8 %v1911
    %v1913 = vlaneseq
    %v1914 = vshrl.u32 %v1913, 7
    %v1915 = vsub.s32 %v1912, %v1914
    %v1916 = vrot.slane %v1900, %v1915
    %v1918 = vunpack.c.l.s4 1966171168
    %v1919 = vunpack.c.0.s8 %v1918
    %v1920 = vlaneseq
    %v1921 = vshrl.u32 %v1920, 7
    %v1922 = vsub.s32 %v1919, %v1921
    %v1923 = vrot.slane %v1907, %v1922
    %v1925 = vunpack.c.l.s4 1966171168
    %v1926 = vunpack.c.0.s8 %v1925
    %v1927 = vlaneseq
    %v1928 = vshrl.u32 %v1927, 7
    %v1929 = vsub.s32 %v1926, %v1928
    %v1930 = vrot.slane %v1908, %v1929
    %v1932 = vunpack.c.l.s4 1966171168
    %v1933 = vunpack.c.0.s8 %v1932
    %v1934 = vlaneseq
    %v1935 = vshrl.u32 %v1934, 7
    %v1936 = vsub.s32 %v1933, %v1935
    %v1937 = vrot.slane %v1909, %v1936
    %v1938 = vcombine.high %v1916, %v1916
    %v1939 = vcombine.high %v1923, %v1923
    %v1940 = vcombine.high %v1930, %v1930
    %v1941 = vcombine.high %v1937, %v1937
    %v1942 = vlaneseq
    %v1943 = vshrl.u32 %v1942, 7
    %v1944 = vsub.s32 0, %v1943
    %v1945 = vrot.slane %v1867, %v1944
    %v1946 = vlaneseq
    %v1947 = vshrl.u32 %v1946, 7
    %v1948 = vsub.s32 0, %v1947
    %v1949 = vrot.slane %v1881, %v1948
    %v1950 = vlaneseq
    %v1951 = vshrl.u32 %v1950, 7
    %v1952 = vsub.s32 0, %v1951
    %v1953 = vrot.slane %v1889, %v1952
    %v1954 = vlaneseq
    %v1955 = vshrl.u32 %v1954, 7
    %v1956 = vsub.s32 0, %v1955
    %v1957 = vrot.slane %v1891, %v1956
    %v1958 = vlaneseq
    %v1959 = vshrl.u32 %v1958, 7
    %v1960 = vsub.s32 0, %v1959
    %v1961 = vrot.slane %v1874, %v1960
    %v1962 = vlaneseq
    %v1963 = vshrl.u32 %v1962, 7
    %v1964 = vsub.s32 0, %v1963
    %v1965 = vrot.slane %v1888, %v1964
    %v1966 = vlaneseq
    %v1967 = vshrl.u32 %v1966, 7
    %v1968 = vsub.s32 0, %v1967
    %v1969 = vrot.slane %v1890, %v1968
    %v1970 = vlaneseq
    %v1971 = vshrl.u32 %v1970, 7
    %v1972 = vsub.s32 0, %v1971
    %v1973 = vrot.slane %v1892, %v1972
    %v1974 = vlaneseq
    %v1975 = vshrl.u32 %v1974, 7
    %v1976 = vsub.s32 0, %v1975
    %v1977 = vrot.slane %v1916, %v1976
    %v1978 = vlaneseq
    %v1979 = vshrl.u32 %v1978, 7
    %v1980 = vsub.s32 0, %v1979
    %v1981 = vrot.slane %v1930, %v1980
    %v1982 = vlaneseq
    %v1983 = vshrl.u32 %v1982, 7
    %v1984 = vsub.s32 0, %v1983
    %v1985 = vrot.slane %v1938, %v1984
    %v1986 = vlaneseq
    %v1987 = vshrl.u32 %v1986, 7
    %v1988 = vsub.s32 0, %v1987
    %v1989 = vrot.slane %v1940, %v1988
    %v1990 = vlaneseq
    %v1991 = vshrl.u32 %v1990, 7
    %v1992 = vsub.s32 0, %v1991
    %v1993 = vrot.slane %v1923, %v1992
    %v1994 = vlaneseq
    %v1995 = vshrl.u32 %v1994, 7
    %v1996 = vsub.s32 0, %v1995
    %v1997 = vrot.slane %v1937, %v1996
    %v1998 = vlaneseq
    %v1999 = vshrl.u32 %v1998, 7
    %v2000 = vsub.s32 0, %v1999
    %v2001 = vrot.slane %v1939, %v2000
    %v2002 = vlaneseq
    %v2003 = vshrl.u32 %v2002, 7
    %v2004 = vsub.s32 0, %v2003
    %v2005 = vrot.slane %v1941, %v2004
    %v2022 = vadd.f32 %v1945, %v1834
    %v2023 = vadd.f32 %v1949, %v1834
    %v2024 = vadd.f32 %v1953, %v1834
    %v2025 = vadd.f32 %v1957, %v1834
    %v2026 = vadd.f32 %v1961, %v1834
    %v2027 = vadd.f32 %v1965, %v1834
    %v2028 = vadd.f32 %v1969, %v1834
    %v2029 = vadd.f32 %v1973, %v1834
    %v2030 = vadd.f32 %v1977, %v1839
    %v2031 = vadd.f32 %v1981, %v1839
    %v2032 = vadd.f32 %v1985, %v1839
    %v2033 = vadd.f32 %v1989, %v1839
    %v2034 = vadd.f32 %v1993, %v1839
    %v2035 = vadd.f32 %v1997, %v1839
    %v2036 = vadd.f32 %v2001, %v1839
    %v2037 = vadd.f32 %v2005, %v1839
    %v2038 = vadd.f32 %v2022, %v1138
    %v2039 = vadd.f32 %v2023, %v1139
    %v2040 = vadd.f32 %v2024, %v1140
    %v2041 = vadd.f32 %v2025, %v1141
    %v2042 = vadd.f32 %v2026, %v1142
    %v2043 = vadd.f32 %v2027, %v1143
    %v2044 = vadd.f32 %v2028, %v1144
    %v2045 = vadd.f32 %v2029, %v1145
    %v2046 = vadd.f32 %v2030, %v1146
    %v2047 = vadd.f32 %v2031, %v1147
    %v2048 = vadd.f32 %v2032, %v1148
    %v2049 = vadd.f32 %v2033, %v1149
    %v2050 = vadd.f32 %v2034, %v1150
    %v2051 = vadd.f32 %v2035, %v1151
    %v2052 = vadd.f32 %v2036, %v1152
    %v2053 = vadd.f32 %v2037, %v1153
    %v2054 = vxor.u32 %v2038, 2147483648
    %v2055 = vxor.u32 %v2039, 2147483648
    %v2056 = vxor.u32 %v2040, 2147483648
    %v2057 = vxor.u32 %v2041, 2147483648
    %v2058 = vxor.u32 %v2042, 2147483648
    %v2059 = vxor.u32 %v2043, 2147483648
    %v2060 = vxor.u32 %v2044, 2147483648
    %v2061 = vxor.u32 %v2045, 2147483648
    %v2062 = vxor.u32 %v2046, 2147483648
    %v2063 = vxor.u32 %v2047, 2147483648
    %v2064 = vxor.u32 %v2048, 2147483648
    %v2065 = vxor.u32 %v2049, 2147483648
    %v2066 = vxor.u32 %v2050, 2147483648
    %v2067 = vxor.u32 %v2051, 2147483648
    %v2068 = vxor.u32 %v2052, 2147483648
    %v2069 = vxor.u32 %v2053, 2147483648
    %v2070 = vmul.f32 %v2054, 1.442695
    %v2071 = vpow.pop %v2070
    %v2072 = vmul.f32 %v2055, 1.442695
    %v2073 = vpow.pop %v2072
    %v2074 = vmul.f32 %v2056, 1.442695
    %v2075 = vpow.pop %v2074
    %v2076 = vmul.f32 %v2057, 1.442695
    %v2077 = vpow.pop %v2076
    %v2078 = vmul.f32 %v2058, 1.442695
    %v2079 = vpow.pop %v2078
    %v2080 = vmul.f32 %v2059, 1.442695
    %v2081 = vpow.pop %v2080
    %v2082 = vmul.f32 %v2060, 1.442695
    %v2083 = vpow.pop %v2082
    %v2084 = vmul.f32 %v2061, 1.442695
    %v2085 = vpow.pop %v2084
    %v2086 = vmul.f32 %v2062, 1.442695
    %v2087 = vpow.pop %v2086
    %v2088 = vmul.f32 %v2063, 1.442695
    %v2089 = vpow.pop %v2088
    %v2090 = vmul.f32 %v2064, 1.442695
    %v2091 = vpow.pop %v2090
    %v2092 = vmul.f32 %v2065, 1.442695
    %v2093 = vpow.pop %v2092
    %v2094 = vmul.f32 %v2066, 1.442695
    %v2095 = vpow.pop %v2094
    %v2096 = vmul.f32 %v2067, 1.442695
    %v2097 = vpow.pop %v2096
    %v2098 = vmul.f32 %v2068, 1.442695
    %v2099 = vpow.pop %v2098
    %v2100 = vmul.f32 %v2069, 1.442695
    %v2101 = vpow.pop %v2100
    %v2102 = vadd.f32 %v2071, 1.0
    %v2103 = vadd.f32 %v2073, 1.0
    %v2104 = vadd.f32 %v2075, 1.0
    %v2105 = vadd.f32 %v2077, 1.0
    %v2106 = vadd.f32 %v2079, 1.0
    %v2107 = vadd.f32 %v2081, 1.0
    %v2108 = vadd.f32 %v2083, 1.0
    %v2109 = vadd.f32 %v2085, 1.0
    %v2110 = vadd.f32 %v2087, 1.0
    %v2111 = vadd.f32 %v2089, 1.0
    %v2112 = vadd.f32 %v2091, 1.0
    %v2113 = vadd.f32 %v2093, 1.0
    %v2114 = vadd.f32 %v2095, 1.0
    %v2115 = vadd.f32 %v2097, 1.0
    %v2116 = vadd.f32 %v2099, 1.0
    %v2117 = vadd.f32 %v2101, 1.0
    %v2118 = vrcp.pop %v2102
    %v2119 = vmul.f32 1.0, %v2118
    %v2120 = vrcp.pop %v2103
    %v2121 = vmul.f32 1.0, %v2120
    %v2122 = vrcp.pop %v2104
    %v2123 = vmul.f32 1.0, %v2122
    %v2124 = vrcp.pop %v2105
    %v2125 = vmul.f32 1.0, %v2124
    %v2126 = vrcp.pop %v2106
    %v2127 = vmul.f32 1.0, %v2126
    %v2128 = vrcp.pop %v2107
    %v2129 = vmul.f32 1.0, %v2128
    %v2130 = vrcp.pop %v2108
    %v2131 = vmul.f32 1.0, %v2130
    %v2132 = vrcp.pop %v2109
    %v2133 = vmul.f32 1.0, %v2132
    %v2134 = vrcp.pop %v2110
    %v2135 = vmul.f32 1.0, %v2134
    %v2136 = vrcp.pop %v2111
    %v2137 = vmul.f32 1.0, %v2136
    %v2138 = vrcp.pop %v2112
    %v2139 = vmul.f32 1.0, %v2138
    %v2140 = vrcp.pop %v2113
    %v2141 = vmul.f32 1.0, %v2140
    %v2142 = vrcp.pop %v2114
    %v2143 = vmul.f32 1.0, %v2142
    %v2144 = vrcp.pop %v2115
    %v2145 = vmul.f32 1.0, %v2144
    %v2146 = vrcp.pop %v2116
    %v2147 = vmul.f32 1.0, %v2146
    %v2148 = vrcp.pop %v2117
    %v2149 = vmul.f32 1.0, %v2148
    %v2150 = vlaneseq
    %v2151 = vshrl.u32 %v2150, 7
    %v2152 = vsub.s32 0, %v2151
    %v2153 = vrot.slane %v91, %v2152
    %2155 = vbcast.lane.b32.xlu0 %v2153, 256
    %v2156 = vpop.permute.xlu0 %2155
    %v2157 = vlaneseq
    %v2158 = vshrl.u32 %v2157, 7
    %v2159 = vsub.s32 1, %v2158
    %v2160 = vrot.slane %v91, %v2159
    %2162 = vbcast.lane.b32.xlu0 %v2160, 256
    %v2163 = vpop.permute.xlu0 %2162
    %v2164 = vlaneseq
    %v2165 = vshrl.u32 %v2164, 7
    %v2166 = vsub.s32 2, %v2165
    %v2167 = vrot.slane %v91, %v2166
    %2169 = vbcast.lane.b32.xlu0 %v2167, 256
    %v2170 = vpop.permute.xlu0 %2169
    %v2171 = vlaneseq
    %v2172 = vshrl.u32 %v2171, 7
    %v2173 = vsub.s32 3, %v2172
    %v2174 = vrot.slane %v91, %v2173
    %2176 = vbcast.lane.b32.xlu0 %v2174, 256
    %v2177 = vpop.permute.xlu0 %2176
    %v2178 = vlaneseq
    %v2179 = vshrl.u32 %v2178, 7
    %v2180 = vsub.s32 4, %v2179
    %v2181 = vrot.slane %v91, %v2180
    %2183 = vbcast.lane.b32.xlu0 %v2181, 256
    %v2184 = vpop.permute.xlu0 %2183
    %v2185 = vlaneseq
    %v2186 = vshrl.u32 %v2185, 7
    %v2187 = vsub.s32 5, %v2186
    %v2188 = vrot.slane %v91, %v2187
    %2190 = vbcast.lane.b32.xlu0 %v2188, 256
    %v2191 = vpop.permute.xlu0 %2190
    %v2192 = vlaneseq
    %v2193 = vshrl.u32 %v2192, 7
    %v2194 = vsub.s32 6, %v2193
    %v2195 = vrot.slane %v91, %v2194
    %2197 = vbcast.lane.b32.xlu0 %v2195, 256
    %v2198 = vpop.permute.xlu0 %2197
    %v2199 = vlaneseq
    %v2200 = vshrl.u32 %v2199, 7
    %v2201 = vsub.s32 7, %v2200
    %v2202 = vrot.slane %v91, %v2201
    %2204 = vbcast.lane.b32.xlu0 %v2202, 256
    %v2205 = vpop.permute.xlu0 %2204
    %v2206 = vlaneseq
    %v2207 = vshrl.u32 %v2206, 7
    %v2208 = vsub.s32 0, %v2207
    %v2209 = vrot.slane %v92, %v2208
    %2211 = vbcast.lane.b32.xlu0 %v2209, 256
    %v2212 = vpop.permute.xlu0 %2211
    %v2213 = vlaneseq
    %v2214 = vshrl.u32 %v2213, 7
    %v2215 = vsub.s32 1, %v2214
    %v2216 = vrot.slane %v92, %v2215
    %2218 = vbcast.lane.b32.xlu0 %v2216, 256
    %v2219 = vpop.permute.xlu0 %2218
    %v2220 = vlaneseq
    %v2221 = vshrl.u32 %v2220, 7
    %v2222 = vsub.s32 2, %v2221
    %v2223 = vrot.slane %v92, %v2222
    %2225 = vbcast.lane.b32.xlu0 %v2223, 256
    %v2226 = vpop.permute.xlu0 %2225
    %v2227 = vlaneseq
    %v2228 = vshrl.u32 %v2227, 7
    %v2229 = vsub.s32 3, %v2228
    %v2230 = vrot.slane %v92, %v2229
    %2232 = vbcast.lane.b32.xlu0 %v2230, 256
    %v2233 = vpop.permute.xlu0 %2232
    %v2234 = vlaneseq
    %v2235 = vshrl.u32 %v2234, 7
    %v2236 = vsub.s32 4, %v2235
    %v2237 = vrot.slane %v92, %v2236
    %2239 = vbcast.lane.b32.xlu0 %v2237, 256
    %v2240 = vpop.permute.xlu0 %2239
    %v2241 = vlaneseq
    %v2242 = vshrl.u32 %v2241, 7
    %v2243 = vsub.s32 5, %v2242
    %v2244 = vrot.slane %v92, %v2243
    %2246 = vbcast.lane.b32.xlu0 %v2244, 256
    %v2247 = vpop.permute.xlu0 %2246
    %v2248 = vlaneseq
    %v2249 = vshrl.u32 %v2248, 7
    %v2250 = vsub.s32 6, %v2249
    %v2251 = vrot.slane %v92, %v2250
    %2253 = vbcast.lane.b32.xlu0 %v2251, 256
    %v2254 = vpop.permute.xlu0 %2253
    %v2255 = vlaneseq
    %v2256 = vshrl.u32 %v2255, 7
    %v2257 = vsub.s32 7, %v2256
    %v2258 = vrot.slane %v92, %v2257
    %2260 = vbcast.lane.b32.xlu0 %v2258, 256
    %v2261 = vpop.permute.xlu0 %2260
    %v2262 = vmul.f32 %v2119, %v2156
    %v2263 = vmul.f32 %v2121, %v2163
    %v2264 = vmul.f32 %v2123, %v2170
    %v2265 = vmul.f32 %v2125, %v2177
    %v2266 = vmul.f32 %v2127, %v2184
    %v2267 = vmul.f32 %v2129, %v2191
    %v2268 = vmul.f32 %v2131, %v2198
    %v2269 = vmul.f32 %v2133, %v2205
    %v2270 = vmul.f32 %v2135, %v2212
    %v2271 = vmul.f32 %v2137, %v2219
    %v2272 = vmul.f32 %v2139, %v2226
    %v2273 = vmul.f32 %v2141, %v2233
    %v2274 = vmul.f32 %v2143, %v2240
    %v2275 = vmul.f32 %v2145, %v2247
    %v2276 = vmul.f32 %v2147, %v2254
    %v2277 = vmul.f32 %v2149, %v2261
    %v2280 = vcombine.high %v1834, %v1834
    %v2282 = vunpack.c.l.s4 1966171168
    %v2283 = vunpack.c.0.s8 %v2282
    %v2284 = vlaneseq
    %v2285 = vshrl.u32 %v2284, 7
    %v2286 = vsub.s32 %v2283, %v2285
    %v2287 = vrot.slane %v1834, %v2286
    %v2289 = vunpack.c.l.s4 1966171168
    %v2290 = vunpack.c.0.s8 %v2289
    %v2291 = vlaneseq
    %v2292 = vshrl.u32 %v2291, 7
    %v2293 = vsub.s32 %v2290, %v2292
    %v2294 = vrot.slane %v2280, %v2293
    %v2295 = vcombine.high %v2287, %v2287
    %v2296 = vcombine.high %v2294, %v2294
    %v2298 = vunpack.c.l.s4 1966171168
    %v2299 = vunpack.c.0.s8 %v2298
    %v2300 = vlaneseq
    %v2301 = vshrl.u32 %v2300, 7
    %v2302 = vsub.s32 %v2299, %v2301
    %v2303 = vrot.slane %v2287, %v2302
    %v2305 = vunpack.c.l.s4 1966171168
    %v2306 = vunpack.c.0.s8 %v2305
    %v2307 = vlaneseq
    %v2308 = vshrl.u32 %v2307, 7
    %v2309 = vsub.s32 %v2306, %v2308
    %v2310 = vrot.slane %v2294, %v2309
    %v2312 = vunpack.c.l.s4 1966171168
    %v2313 = vunpack.c.0.s8 %v2312
    %v2314 = vlaneseq
    %v2315 = vshrl.u32 %v2314, 7
    %v2316 = vsub.s32 %v2313, %v2315
    %v2317 = vrot.slane %v2295, %v2316
    %v2319 = vunpack.c.l.s4 1966171168
    %v2320 = vunpack.c.0.s8 %v2319
    %v2321 = vlaneseq
    %v2322 = vshrl.u32 %v2321, 7
    %v2323 = vsub.s32 %v2320, %v2322
    %v2324 = vrot.slane %v2296, %v2323
    %v2325 = vcombine.high %v2303, %v2303
    %v2326 = vcombine.high %v2310, %v2310
    %v2327 = vcombine.high %v2317, %v2317
    %v2328 = vcombine.high %v2324, %v2324
    %v2329 = vcombine.high %v1839, %v1839
    %v2331 = vunpack.c.l.s4 1966171168
    %v2332 = vunpack.c.0.s8 %v2331
    %v2333 = vlaneseq
    %v2334 = vshrl.u32 %v2333, 7
    %v2335 = vsub.s32 %v2332, %v2334
    %v2336 = vrot.slane %v1839, %v2335
    %v2338 = vunpack.c.l.s4 1966171168
    %v2339 = vunpack.c.0.s8 %v2338
    %v2340 = vlaneseq
    %v2341 = vshrl.u32 %v2340, 7
    %v2342 = vsub.s32 %v2339, %v2341
    %v2343 = vrot.slane %v2329, %v2342
    %v2344 = vcombine.high %v2336, %v2336
    %v2345 = vcombine.high %v2343, %v2343
    %v2347 = vunpack.c.l.s4 1966171168
    %v2348 = vunpack.c.0.s8 %v2347
    %v2349 = vlaneseq
    %v2350 = vshrl.u32 %v2349, 7
    %v2351 = vsub.s32 %v2348, %v2350
    %v2352 = vrot.slane %v2336, %v2351
    %v2354 = vunpack.c.l.s4 1966171168
    %v2355 = vunpack.c.0.s8 %v2354
    %v2356 = vlaneseq
    %v2357 = vshrl.u32 %v2356, 7
    %v2358 = vsub.s32 %v2355, %v2357
    %v2359 = vrot.slane %v2343, %v2358
    %v2361 = vunpack.c.l.s4 1966171168
    %v2362 = vunpack.c.0.s8 %v2361
    %v2363 = vlaneseq
    %v2364 = vshrl.u32 %v2363, 7
    %v2365 = vsub.s32 %v2362, %v2364
    %v2366 = vrot.slane %v2344, %v2365
    %v2368 = vunpack.c.l.s4 1966171168
    %v2369 = vunpack.c.0.s8 %v2368
    %v2370 = vlaneseq
    %v2371 = vshrl.u32 %v2370, 7
    %v2372 = vsub.s32 %v2369, %v2371
    %v2373 = vrot.slane %v2345, %v2372
    %v2374 = vcombine.high %v2352, %v2352
    %v2375 = vcombine.high %v2359, %v2359
    %v2376 = vcombine.high %v2366, %v2366
    %v2377 = vcombine.high %v2373, %v2373
    %v2378 = vlaneseq
    %v2379 = vshrl.u32 %v2378, 7
    %v2380 = vsub.s32 0, %v2379
    %v2381 = vrot.slane %v2303, %v2380
    %v2382 = vlaneseq
    %v2383 = vshrl.u32 %v2382, 7
    %v2384 = vsub.s32 0, %v2383
    %v2385 = vrot.slane %v2317, %v2384
    %v2386 = vlaneseq
    %v2387 = vshrl.u32 %v2386, 7
    %v2388 = vsub.s32 0, %v2387
    %v2389 = vrot.slane %v2325, %v2388
    %v2390 = vlaneseq
    %v2391 = vshrl.u32 %v2390, 7
    %v2392 = vsub.s32 0, %v2391
    %v2393 = vrot.slane %v2327, %v2392
    %v2394 = vlaneseq
    %v2395 = vshrl.u32 %v2394, 7
    %v2396 = vsub.s32 0, %v2395
    %v2397 = vrot.slane %v2310, %v2396
    %v2398 = vlaneseq
    %v2399 = vshrl.u32 %v2398, 7
    %v2400 = vsub.s32 0, %v2399
    %v2401 = vrot.slane %v2324, %v2400
    %v2402 = vlaneseq
    %v2403 = vshrl.u32 %v2402, 7
    %v2404 = vsub.s32 0, %v2403
    %v2405 = vrot.slane %v2326, %v2404
    %v2406 = vlaneseq
    %v2407 = vshrl.u32 %v2406, 7
    %v2408 = vsub.s32 0, %v2407
    %v2409 = vrot.slane %v2328, %v2408
    %v2410 = vlaneseq
    %v2411 = vshrl.u32 %v2410, 7
    %v2412 = vsub.s32 0, %v2411
    %v2413 = vrot.slane %v2352, %v2412
    %v2414 = vlaneseq
    %v2415 = vshrl.u32 %v2414, 7
    %v2416 = vsub.s32 0, %v2415
    %v2417 = vrot.slane %v2366, %v2416
    %v2418 = vlaneseq
    %v2419 = vshrl.u32 %v2418, 7
    %v2420 = vsub.s32 0, %v2419
    %v2421 = vrot.slane %v2374, %v2420
    %v2422 = vlaneseq
    %v2423 = vshrl.u32 %v2422, 7
    %v2424 = vsub.s32 0, %v2423
    %v2425 = vrot.slane %v2376, %v2424
    %v2426 = vlaneseq
    %v2427 = vshrl.u32 %v2426, 7
    %v2428 = vsub.s32 0, %v2427
    %v2429 = vrot.slane %v2359, %v2428
    %v2430 = vlaneseq
    %v2431 = vshrl.u32 %v2430, 7
    %v2432 = vsub.s32 0, %v2431
    %v2433 = vrot.slane %v2373, %v2432
    %v2434 = vlaneseq
    %v2435 = vshrl.u32 %v2434, 7
    %v2436 = vsub.s32 0, %v2435
    %v2437 = vrot.slane %v2375, %v2436
    %v2438 = vlaneseq
    %v2439 = vshrl.u32 %v2438, 7
    %v2440 = vsub.s32 0, %v2439
    %v2441 = vrot.slane %v2377, %v2440
    %v2458 = vadd.f32 %v2381, %v1759
    %v2459 = vadd.f32 %v2385, %v1759
    %v2460 = vadd.f32 %v2389, %v1759
    %v2461 = vadd.f32 %v2393, %v1759
    %v2462 = vadd.f32 %v2397, %v1759
    %v2463 = vadd.f32 %v2401, %v1759
    %v2464 = vadd.f32 %v2405, %v1759
    %v2465 = vadd.f32 %v2409, %v1759
    %v2466 = vadd.f32 %v2413, %v1764
    %v2467 = vadd.f32 %v2417, %v1764
    %v2468 = vadd.f32 %v2421, %v1764
    %v2469 = vadd.f32 %v2425, %v1764
    %v2470 = vadd.f32 %v2429, %v1764
    %v2471 = vadd.f32 %v2433, %v1764
    %v2472 = vadd.f32 %v2437, %v1764
    %v2473 = vadd.f32 %v2441, %v1764
    %2490 = vrot.lane.b32.xlu0 %v1307, 24
    %v2491 = vpop.permute.xlu0 %2490
    %2492 = vrot.lane.b32.xlu0 %v1308, 24
    %v2493 = vpop.permute.xlu0 %2492
    %2494 = vrot.lane.b32.xlu0 %v1309, 24
    %v2495 = vpop.permute.xlu0 %2494
    %2496 = vrot.lane.b32.xlu0 %v1310, 24
    %v2497 = vpop.permute.xlu0 %2496
    %2498 = vrot.lane.b32.xlu0 %v1311, 24
    %v2499 = vpop.permute.xlu0 %2498
    %2500 = vrot.lane.b32.xlu0 %v1312, 24
    %v2501 = vpop.permute.xlu0 %2500
    %2502 = vrot.lane.b32.xlu0 %v1313, 24
    %v2503 = vpop.permute.xlu0 %2502
    %2504 = vrot.lane.b32.xlu0 %v1314, 24
    %v2505 = vpop.permute.xlu0 %2504
    %2506 = vrot.lane.b32.xlu0 %v1315, 24
    %v2507 = vpop.permute.xlu0 %2506
    %2508 = vrot.lane.b32.xlu0 %v1316, 24
    %v2509 = vpop.permute.xlu0 %2508
    %2510 = vrot.lane.b32.xlu0 %v1317, 24
    %v2511 = vpop.permute.xlu0 %2510
    %2512 = vrot.lane.b32.xlu0 %v1318, 24
    %v2513 = vpop.permute.xlu0 %2512
    %2514 = vrot.lane.b32.xlu0 %v1319, 24
    %v2515 = vpop.permute.xlu0 %2514
    %2516 = vrot.lane.b32.xlu0 %v1320, 24
    %v2517 = vpop.permute.xlu0 %2516
    %2518 = vrot.lane.b32.xlu0 %v1321, 24
    %v2519 = vpop.permute.xlu0 %2518
    %2520 = vrot.lane.b32.xlu0 %v1322, 24
    %v2521 = vpop.permute.xlu0 %2520
    %v2538 = vadd.f32 %v2458, %v2491
    %v2539 = vadd.f32 %v2459, %v2493
    %v2540 = vadd.f32 %v2460, %v2495
    %v2541 = vadd.f32 %v2461, %v2497
    %v2542 = vadd.f32 %v2462, %v2499
    %v2543 = vadd.f32 %v2463, %v2501
    %v2544 = vadd.f32 %v2464, %v2503
    %v2545 = vadd.f32 %v2465, %v2505
    %v2546 = vadd.f32 %v2466, %v2507
    %v2547 = vadd.f32 %v2467, %v2509
    %v2548 = vadd.f32 %v2468, %v2511
    %v2549 = vadd.f32 %v2469, %v2513
    %v2550 = vadd.f32 %v2470, %v2515
    %v2551 = vadd.f32 %v2471, %v2517
    %v2552 = vadd.f32 %v2472, %v2519
    %v2553 = vadd.f32 %v2473, %v2521
    %v2554 = vxor.u32 %v2538, 2147483648
    %v2555 = vxor.u32 %v2539, 2147483648
    %v2556 = vxor.u32 %v2540, 2147483648
    %v2557 = vxor.u32 %v2541, 2147483648
    %v2558 = vxor.u32 %v2542, 2147483648
    %v2559 = vxor.u32 %v2543, 2147483648
    %v2560 = vxor.u32 %v2544, 2147483648
    %v2561 = vxor.u32 %v2545, 2147483648
    %v2562 = vxor.u32 %v2546, 2147483648
    %v2563 = vxor.u32 %v2547, 2147483648
    %v2564 = vxor.u32 %v2548, 2147483648
    %v2565 = vxor.u32 %v2549, 2147483648
    %v2566 = vxor.u32 %v2550, 2147483648
    %v2567 = vxor.u32 %v2551, 2147483648
    %v2568 = vxor.u32 %v2552, 2147483648
    %v2569 = vxor.u32 %v2553, 2147483648
    %v2570 = vmul.f32 %v2554, 1.442695
    %v2571 = vpow.pop %v2570
    %v2572 = vmul.f32 %v2555, 1.442695
    %v2573 = vpow.pop %v2572
    %v2574 = vmul.f32 %v2556, 1.442695
    %v2575 = vpow.pop %v2574
    %v2576 = vmul.f32 %v2557, 1.442695
    %v2577 = vpow.pop %v2576
    %v2578 = vmul.f32 %v2558, 1.442695
    %v2579 = vpow.pop %v2578
    %v2580 = vmul.f32 %v2559, 1.442695
    %v2581 = vpow.pop %v2580
    %v2582 = vmul.f32 %v2560, 1.442695
    %v2583 = vpow.pop %v2582
    %v2584 = vmul.f32 %v2561, 1.442695
    %v2585 = vpow.pop %v2584
    %v2586 = vmul.f32 %v2562, 1.442695
    %v2587 = vpow.pop %v2586
    %v2588 = vmul.f32 %v2563, 1.442695
    %v2589 = vpow.pop %v2588
    %v2590 = vmul.f32 %v2564, 1.442695
    %v2591 = vpow.pop %v2590
    %v2592 = vmul.f32 %v2565, 1.442695
    %v2593 = vpow.pop %v2592
    %v2594 = vmul.f32 %v2566, 1.442695
    %v2595 = vpow.pop %v2594
    %v2596 = vmul.f32 %v2567, 1.442695
    %v2597 = vpow.pop %v2596
    %v2598 = vmul.f32 %v2568, 1.442695
    %v2599 = vpow.pop %v2598
    %v2600 = vmul.f32 %v2569, 1.442695
    %v2601 = vpow.pop %v2600
    %v2602 = vadd.f32 %v2571, 1.0
    %v2603 = vadd.f32 %v2573, 1.0
    %v2604 = vadd.f32 %v2575, 1.0
    %v2605 = vadd.f32 %v2577, 1.0
    %v2606 = vadd.f32 %v2579, 1.0
    %v2607 = vadd.f32 %v2581, 1.0
    %v2608 = vadd.f32 %v2583, 1.0
    %v2609 = vadd.f32 %v2585, 1.0
    %v2610 = vadd.f32 %v2587, 1.0
    %v2611 = vadd.f32 %v2589, 1.0
    %v2612 = vadd.f32 %v2591, 1.0
    %v2613 = vadd.f32 %v2593, 1.0
    %v2614 = vadd.f32 %v2595, 1.0
    %v2615 = vadd.f32 %v2597, 1.0
    %v2616 = vadd.f32 %v2599, 1.0
    %v2617 = vadd.f32 %v2601, 1.0
    %v2618 = vrcp.pop %v2602
    %v2619 = vmul.f32 1.0, %v2618
    %v2620 = vrcp.pop %v2603
    %v2621 = vmul.f32 1.0, %v2620
    %v2622 = vrcp.pop %v2604
    %v2623 = vmul.f32 1.0, %v2622
    %v2624 = vrcp.pop %v2605
    %v2625 = vmul.f32 1.0, %v2624
    %v2626 = vrcp.pop %v2606
    %v2627 = vmul.f32 1.0, %v2626
    %v2628 = vrcp.pop %v2607
    %v2629 = vmul.f32 1.0, %v2628
    %v2630 = vrcp.pop %v2608
    %v2631 = vmul.f32 1.0, %v2630
    %v2632 = vrcp.pop %v2609
    %v2633 = vmul.f32 1.0, %v2632
    %v2634 = vrcp.pop %v2610
    %v2635 = vmul.f32 1.0, %v2634
    %v2636 = vrcp.pop %v2611
    %v2637 = vmul.f32 1.0, %v2636
    %v2638 = vrcp.pop %v2612
    %v2639 = vmul.f32 1.0, %v2638
    %v2640 = vrcp.pop %v2613
    %v2641 = vmul.f32 1.0, %v2640
    %v2642 = vrcp.pop %v2614
    %v2643 = vmul.f32 1.0, %v2642
    %v2644 = vrcp.pop %v2615
    %v2645 = vmul.f32 1.0, %v2644
    %v2646 = vrcp.pop %v2616
    %v2647 = vmul.f32 1.0, %v2646
    %v2648 = vrcp.pop %v2617
    %v2649 = vmul.f32 1.0, %v2648
    %v2650 = vlaneseq
    %v2651 = vshrl.u32 %v2650, 7
    %v2652 = vsub.s32 0, %v2651
    %v2653 = vrot.slane %v97, %v2652
    %2655 = vbcast.lane.b32.xlu0 %v2653, 256
    %v2656 = vpop.permute.xlu0 %2655
    %v2657 = vlaneseq
    %v2658 = vshrl.u32 %v2657, 7
    %v2659 = vsub.s32 1, %v2658
    %v2660 = vrot.slane %v97, %v2659
    %2662 = vbcast.lane.b32.xlu0 %v2660, 256
    %v2663 = vpop.permute.xlu0 %2662
    %v2664 = vlaneseq
    %v2665 = vshrl.u32 %v2664, 7
    %v2666 = vsub.s32 2, %v2665
    %v2667 = vrot.slane %v97, %v2666
    %2669 = vbcast.lane.b32.xlu0 %v2667, 256
    %v2670 = vpop.permute.xlu0 %2669
    %v2671 = vlaneseq
    %v2672 = vshrl.u32 %v2671, 7
    %v2673 = vsub.s32 3, %v2672
    %v2674 = vrot.slane %v97, %v2673
    %2676 = vbcast.lane.b32.xlu0 %v2674, 256
    %v2677 = vpop.permute.xlu0 %2676
    %v2678 = vlaneseq
    %v2679 = vshrl.u32 %v2678, 7
    %v2680 = vsub.s32 4, %v2679
    %v2681 = vrot.slane %v97, %v2680
    %2683 = vbcast.lane.b32.xlu0 %v2681, 256
    %v2684 = vpop.permute.xlu0 %2683
    %v2685 = vlaneseq
    %v2686 = vshrl.u32 %v2685, 7
    %v2687 = vsub.s32 5, %v2686
    %v2688 = vrot.slane %v97, %v2687
    %2690 = vbcast.lane.b32.xlu0 %v2688, 256
    %v2691 = vpop.permute.xlu0 %2690
    %v2692 = vlaneseq
    %v2693 = vshrl.u32 %v2692, 7
    %v2694 = vsub.s32 6, %v2693
    %v2695 = vrot.slane %v97, %v2694
    %2697 = vbcast.lane.b32.xlu0 %v2695, 256
    %v2698 = vpop.permute.xlu0 %2697
    %v2699 = vlaneseq
    %v2700 = vshrl.u32 %v2699, 7
    %v2701 = vsub.s32 7, %v2700
    %v2702 = vrot.slane %v97, %v2701
    %2704 = vbcast.lane.b32.xlu0 %v2702, 256
    %v2705 = vpop.permute.xlu0 %2704
    %v2706 = vlaneseq
    %v2707 = vshrl.u32 %v2706, 7
    %v2708 = vsub.s32 0, %v2707
    %v2709 = vrot.slane %v98, %v2708
    %2711 = vbcast.lane.b32.xlu0 %v2709, 256
    %v2712 = vpop.permute.xlu0 %2711
    %v2713 = vlaneseq
    %v2714 = vshrl.u32 %v2713, 7
    %v2715 = vsub.s32 1, %v2714
    %v2716 = vrot.slane %v98, %v2715
    %2718 = vbcast.lane.b32.xlu0 %v2716, 256
    %v2719 = vpop.permute.xlu0 %2718
    %v2720 = vlaneseq
    %v2721 = vshrl.u32 %v2720, 7
    %v2722 = vsub.s32 2, %v2721
    %v2723 = vrot.slane %v98, %v2722
    %2725 = vbcast.lane.b32.xlu0 %v2723, 256
    %v2726 = vpop.permute.xlu0 %2725
    %v2727 = vlaneseq
    %v2728 = vshrl.u32 %v2727, 7
    %v2729 = vsub.s32 3, %v2728
    %v2730 = vrot.slane %v98, %v2729
    %2732 = vbcast.lane.b32.xlu0 %v2730, 256
    %v2733 = vpop.permute.xlu0 %2732
    %v2734 = vlaneseq
    %v2735 = vshrl.u32 %v2734, 7
    %v2736 = vsub.s32 4, %v2735
    %v2737 = vrot.slane %v98, %v2736
    %2739 = vbcast.lane.b32.xlu0 %v2737, 256
    %v2740 = vpop.permute.xlu0 %2739
    %v2741 = vlaneseq
    %v2742 = vshrl.u32 %v2741, 7
    %v2743 = vsub.s32 5, %v2742
    %v2744 = vrot.slane %v98, %v2743
    %2746 = vbcast.lane.b32.xlu0 %v2744, 256
    %v2747 = vpop.permute.xlu0 %2746
    %v2748 = vlaneseq
    %v2749 = vshrl.u32 %v2748, 7
    %v2750 = vsub.s32 6, %v2749
    %v2751 = vrot.slane %v98, %v2750
    %2753 = vbcast.lane.b32.xlu0 %v2751, 256
    %v2754 = vpop.permute.xlu0 %2753
    %v2755 = vlaneseq
    %v2756 = vshrl.u32 %v2755, 7
    %v2757 = vsub.s32 7, %v2756
    %v2758 = vrot.slane %v98, %v2757
    %2760 = vbcast.lane.b32.xlu0 %v2758, 256
    %v2761 = vpop.permute.xlu0 %2760
    %v2762 = vmul.f32 %v2619, %v2656
    %v2763 = vmul.f32 %v2621, %v2663
    %v2764 = vmul.f32 %v2623, %v2670
    %v2765 = vmul.f32 %v2625, %v2677
    %v2766 = vmul.f32 %v2627, %v2684
    %v2767 = vmul.f32 %v2629, %v2691
    %v2768 = vmul.f32 %v2631, %v2698
    %v2769 = vmul.f32 %v2633, %v2705
    %v2770 = vmul.f32 %v2635, %v2712
    %v2771 = vmul.f32 %v2637, %v2719
    %v2772 = vmul.f32 %v2639, %v2726
    %v2773 = vmul.f32 %v2641, %v2733
    %v2774 = vmul.f32 %v2643, %v2740
    %v2775 = vmul.f32 %v2645, %v2747
    %v2776 = vmul.f32 %v2647, %v2754
    %v2777 = vmul.f32 %v2649, %v2761
    %v2778 = vmul.f32 %v2262, 0.0
    %v2779 = vmul.f32 %v2263, 0.0
    %v2780 = vmul.f32 %v2264, 0.0
    %v2781 = vmul.f32 %v2265, 0.0
    %v2782 = vmul.f32 %v2266, 0.0
    %v2783 = vmul.f32 %v2267, 0.0
    %v2784 = vmul.f32 %v2268, 0.0
    %v2785 = vmul.f32 %v2269, 0.0
    %v2786 = vmul.f32 %v2270, 0.0
    %v2787 = vmul.f32 %v2271, 0.0
    %v2788 = vmul.f32 %v2272, 0.0
    %v2789 = vmul.f32 %v2273, 0.0
    %v2790 = vmul.f32 %v2274, 0.0
    %v2791 = vmul.f32 %v2275, 0.0
    %v2792 = vmul.f32 %v2276, 0.0
    %v2793 = vmul.f32 %v2277, 0.0
    %v2794 = vsel %vm1323, %v2778, 0.0
    %v2795 = vrot.slane %v2794, 4
    %v2796 = vadd.f32 %v2794, %v2795
    %v2797 = vrot.slane %v2796, 2
    %v2798 = vadd.f32 %v2796, %v2797
    %v2799 = vrot.slane %v2798, 1
    %v2800 = vadd.f32 %v2798, %v2799
    %v2801 = vsel %vm1323, %v2779, 0.0
    %v2802 = vrot.slane %v2801, 4
    %v2803 = vadd.f32 %v2801, %v2802
    %v2804 = vrot.slane %v2803, 2
    %v2805 = vadd.f32 %v2803, %v2804
    %v2806 = vrot.slane %v2805, 1
    %v2807 = vadd.f32 %v2805, %v2806
    %v2808 = vsel %vm1323, %v2780, 0.0
    %v2809 = vrot.slane %v2808, 4
    %v2810 = vadd.f32 %v2808, %v2809
    %v2811 = vrot.slane %v2810, 2
    %v2812 = vadd.f32 %v2810, %v2811
    %v2813 = vrot.slane %v2812, 1
    %v2814 = vadd.f32 %v2812, %v2813
    %v2815 = vsel %vm1323, %v2781, 0.0
    %v2816 = vrot.slane %v2815, 4
    %v2817 = vadd.f32 %v2815, %v2816
    %v2818 = vrot.slane %v2817, 2
    %v2819 = vadd.f32 %v2817, %v2818
    %v2820 = vrot.slane %v2819, 1
    %v2821 = vadd.f32 %v2819, %v2820
    %v2822 = vsel %vm1323, %v2782, 0.0
    %v2823 = vrot.slane %v2822, 4
    %v2824 = vadd.f32 %v2822, %v2823
    %v2825 = vrot.slane %v2824, 2
    %v2826 = vadd.f32 %v2824, %v2825
    %v2827 = vrot.slane %v2826, 1
    %v2828 = vadd.f32 %v2826, %v2827
    %v2829 = vsel %vm1323, %v2783, 0.0
    %v2830 = vrot.slane %v2829, 4
    %v2831 = vadd.f32 %v2829, %v2830
    %v2832 = vrot.slane %v2831, 2
    %v2833 = vadd.f32 %v2831, %v2832
    %v2834 = vrot.slane %v2833, 1
    %v2835 = vadd.f32 %v2833, %v2834
    %v2836 = vsel %vm1323, %v2784, 0.0
    %v2837 = vrot.slane %v2836, 4
    %v2838 = vadd.f32 %v2836, %v2837
    %v2839 = vrot.slane %v2838, 2
    %v2840 = vadd.f32 %v2838, %v2839
    %v2841 = vrot.slane %v2840, 1
    %v2842 = vadd.f32 %v2840, %v2841
    %v2843 = vsel %vm1323, %v2785, 0.0
    %v2844 = vrot.slane %v2843, 4
    %v2845 = vadd.f32 %v2843, %v2844
    %v2846 = vrot.slane %v2845, 2
    %v2847 = vadd.f32 %v2845, %v2846
    %v2848 = vrot.slane %v2847, 1
    %v2849 = vadd.f32 %v2847, %v2848
    %v2850 = vsel %vm1323, %v2786, 0.0
    %v2851 = vrot.slane %v2850, 4
    %v2852 = vadd.f32 %v2850, %v2851
    %v2853 = vrot.slane %v2852, 2
    %v2854 = vadd.f32 %v2852, %v2853
    %v2855 = vrot.slane %v2854, 1
    %v2856 = vadd.f32 %v2854, %v2855
    %v2857 = vsel %vm1323, %v2787, 0.0
    %v2858 = vrot.slane %v2857, 4
    %v2859 = vadd.f32 %v2857, %v2858
    %v2860 = vrot.slane %v2859, 2
    %v2861 = vadd.f32 %v2859, %v2860
    %v2862 = vrot.slane %v2861, 1
    %v2863 = vadd.f32 %v2861, %v2862
    %v2864 = vsel %vm1323, %v2788, 0.0
    %v2865 = vrot.slane %v2864, 4
    %v2866 = vadd.f32 %v2864, %v2865
    %v2867 = vrot.slane %v2866, 2
    %v2868 = vadd.f32 %v2866, %v2867
    %v2869 = vrot.slane %v2868, 1
    %v2870 = vadd.f32 %v2868, %v2869
    %v2871 = vsel %vm1323, %v2789, 0.0
    %v2872 = vrot.slane %v2871, 4
    %v2873 = vadd.f32 %v2871, %v2872
    %v2874 = vrot.slane %v2873, 2
    %v2875 = vadd.f32 %v2873, %v2874
    %v2876 = vrot.slane %v2875, 1
    %v2877 = vadd.f32 %v2875, %v2876
    %v2878 = vsel %vm1323, %v2790, 0.0
    %v2879 = vrot.slane %v2878, 4
    %v2880 = vadd.f32 %v2878, %v2879
    %v2881 = vrot.slane %v2880, 2
    %v2882 = vadd.f32 %v2880, %v2881
    %v2883 = vrot.slane %v2882, 1
    %v2884 = vadd.f32 %v2882, %v2883
    %v2885 = vsel %vm1323, %v2791, 0.0
    %v2886 = vrot.slane %v2885, 4
    %v2887 = vadd.f32 %v2885, %v2886
    %v2888 = vrot.slane %v2887, 2
    %v2889 = vadd.f32 %v2887, %v2888
    %v2890 = vrot.slane %v2889, 1
    %v2891 = vadd.f32 %v2889, %v2890
    %v2892 = vsel %vm1323, %v2792, 0.0
    %v2893 = vrot.slane %v2892, 4
    %v2894 = vadd.f32 %v2892, %v2893
    %v2895 = vrot.slane %v2894, 2
    %v2896 = vadd.f32 %v2894, %v2895
    %v2897 = vrot.slane %v2896, 1
    %v2898 = vadd.f32 %v2896, %v2897
    %v2899 = vsel %vm1323, %v2793, 0.0
    %v2900 = vrot.slane %v2899, 4
    %v2901 = vadd.f32 %v2899, %v2900
    %v2902 = vrot.slane %v2901, 2
    %v2903 = vadd.f32 %v2901, %v2902
    %v2904 = vrot.slane %v2903, 1
    %v2905 = vadd.f32 %v2903, %v2904
    %2922 = vrot.lane.b32.xlu0 %v2262, 112
    %v2923 = vpop.permute.xlu0 %2922
    %2924 = vrot.lane.b32.xlu0 %v2263, 112
    %v2925 = vpop.permute.xlu0 %2924
    %2926 = vrot.lane.b32.xlu0 %v2264, 112
    %v2927 = vpop.permute.xlu0 %2926
    %2928 = vrot.lane.b32.xlu0 %v2265, 112
    %v2929 = vpop.permute.xlu0 %2928
    %2930 = vrot.lane.b32.xlu0 %v2266, 112
    %v2931 = vpop.permute.xlu0 %2930
    %2932 = vrot.lane.b32.xlu0 %v2267, 112
    %v2933 = vpop.permute.xlu0 %2932
    %2934 = vrot.lane.b32.xlu0 %v2268, 112
    %v2935 = vpop.permute.xlu0 %2934
    %2936 = vrot.lane.b32.xlu0 %v2269, 112
    %v2937 = vpop.permute.xlu0 %2936
    %2938 = vrot.lane.b32.xlu0 %v2270, 112
    %v2939 = vpop.permute.xlu0 %2938
    %2940 = vrot.lane.b32.xlu0 %v2271, 112
    %v2941 = vpop.permute.xlu0 %2940
    %2942 = vrot.lane.b32.xlu0 %v2272, 112
    %v2943 = vpop.permute.xlu0 %2942
    %2944 = vrot.lane.b32.xlu0 %v2273, 112
    %v2945 = vpop.permute.xlu0 %2944
    %2946 = vrot.lane.b32.xlu0 %v2274, 112
    %v2947 = vpop.permute.xlu0 %2946
    %2948 = vrot.lane.b32.xlu0 %v2275, 112
    %v2949 = vpop.permute.xlu0 %2948
    %2950 = vrot.lane.b32.xlu0 %v2276, 112
    %v2951 = vpop.permute.xlu0 %2950
    %2952 = vrot.lane.b32.xlu0 %v2277, 112
    %v2953 = vpop.permute.xlu0 %2952
    %v2970 = vmul.f32 %v715, %v2923
    %v2971 = vmul.f32 %v720, %v2925
    %v2972 = vmul.f32 %v725, %v2927
    %v2973 = vmul.f32 %v730, %v2929
    %v2974 = vmul.f32 %v735, %v2931
    %v2975 = vmul.f32 %v740, %v2933
    %v2976 = vmul.f32 %v745, %v2935
    %v2977 = vmul.f32 %v750, %v2937
    %v2978 = vmul.f32 %v755, %v2939
    %v2979 = vmul.f32 %v760, %v2941
    %v2980 = vmul.f32 %v765, %v2943
    %v2981 = vmul.f32 %v770, %v2945
    %v2982 = vmul.f32 %v775, %v2947
    %v2983 = vmul.f32 %v780, %v2949
    %v2984 = vmul.f32 %v785, %v2951
    %v2985 = vmul.f32 %v790, %v2953
    %v2986 = vsel %vm99, %v2970, 0.0
    %v2987 = vrot.slane %v2986, 4
    %v2988 = vadd.f32 %v2986, %v2987
    %v2989 = vrot.slane %v2988, 2
    %v2990 = vadd.f32 %v2988, %v2989
    %v2991 = vrot.slane %v2990, 1
    %v2992 = vadd.f32 %v2990, %v2991
    %v2993 = vsel %vm99, %v2971, 0.0
    %v2994 = vrot.slane %v2993, 4
    %v2995 = vadd.f32 %v2993, %v2994
    %v2996 = vrot.slane %v2995, 2
    %v2997 = vadd.f32 %v2995, %v2996
    %v2998 = vrot.slane %v2997, 1
    %v2999 = vadd.f32 %v2997, %v2998
    %v3000 = vsel %vm99, %v2972, 0.0
    %v3001 = vrot.slane %v3000, 4
    %v3002 = vadd.f32 %v3000, %v3001
    %v3003 = vrot.slane %v3002, 2
    %v3004 = vadd.f32 %v3002, %v3003
    %v3005 = vrot.slane %v3004, 1
    %v3006 = vadd.f32 %v3004, %v3005
    %v3007 = vsel %vm99, %v2973, 0.0
    %v3008 = vrot.slane %v3007, 4
    %v3009 = vadd.f32 %v3007, %v3008
    %v3010 = vrot.slane %v3009, 2
    %v3011 = vadd.f32 %v3009, %v3010
    %v3012 = vrot.slane %v3011, 1
    %v3013 = vadd.f32 %v3011, %v3012
    %v3014 = vsel %vm99, %v2974, 0.0
    %v3015 = vrot.slane %v3014, 4
    %v3016 = vadd.f32 %v3014, %v3015
    %v3017 = vrot.slane %v3016, 2
    %v3018 = vadd.f32 %v3016, %v3017
    %v3019 = vrot.slane %v3018, 1
    %v3020 = vadd.f32 %v3018, %v3019
    %v3021 = vsel %vm99, %v2975, 0.0
    %v3022 = vrot.slane %v3021, 4
    %v3023 = vadd.f32 %v3021, %v3022
    %v3024 = vrot.slane %v3023, 2
    %v3025 = vadd.f32 %v3023, %v3024
    %v3026 = vrot.slane %v3025, 1
    %v3027 = vadd.f32 %v3025, %v3026
    %v3028 = vsel %vm99, %v2976, 0.0
    %v3029 = vrot.slane %v3028, 4
    %v3030 = vadd.f32 %v3028, %v3029
    %v3031 = vrot.slane %v3030, 2
    %v3032 = vadd.f32 %v3030, %v3031
    %v3033 = vrot.slane %v3032, 1
    %v3034 = vadd.f32 %v3032, %v3033
    %v3035 = vsel %vm99, %v2977, 0.0
    %v3036 = vrot.slane %v3035, 4
    %v3037 = vadd.f32 %v3035, %v3036
    %v3038 = vrot.slane %v3037, 2
    %v3039 = vadd.f32 %v3037, %v3038
    %v3040 = vrot.slane %v3039, 1
    %v3041 = vadd.f32 %v3039, %v3040
    %v3042 = vsel %vm99, %v2978, 0.0
    %v3043 = vrot.slane %v3042, 4
    %v3044 = vadd.f32 %v3042, %v3043
    %v3045 = vrot.slane %v3044, 2
    %v3046 = vadd.f32 %v3044, %v3045
    %v3047 = vrot.slane %v3046, 1
    %v3048 = vadd.f32 %v3046, %v3047
    %v3049 = vsel %vm99, %v2979, 0.0
    %v3050 = vrot.slane %v3049, 4
    %v3051 = vadd.f32 %v3049, %v3050
    %v3052 = vrot.slane %v3051, 2
    %v3053 = vadd.f32 %v3051, %v3052
    %v3054 = vrot.slane %v3053, 1
    %v3055 = vadd.f32 %v3053, %v3054
    %v3056 = vsel %vm99, %v2980, 0.0
    %v3057 = vrot.slane %v3056, 4
    %v3058 = vadd.f32 %v3056, %v3057
    %v3059 = vrot.slane %v3058, 2
    %v3060 = vadd.f32 %v3058, %v3059
    %v3061 = vrot.slane %v3060, 1
    %v3062 = vadd.f32 %v3060, %v3061
    %v3063 = vsel %vm99, %v2981, 0.0
    %v3064 = vrot.slane %v3063, 4
    %v3065 = vadd.f32 %v3063, %v3064
    %v3066 = vrot.slane %v3065, 2
    %v3067 = vadd.f32 %v3065, %v3066
    %v3068 = vrot.slane %v3067, 1
    %v3069 = vadd.f32 %v3067, %v3068
    %v3070 = vsel %vm99, %v2982, 0.0
    %v3071 = vrot.slane %v3070, 4
    %v3072 = vadd.f32 %v3070, %v3071
    %v3073 = vrot.slane %v3072, 2
    %v3074 = vadd.f32 %v3072, %v3073
    %v3075 = vrot.slane %v3074, 1
    %v3076 = vadd.f32 %v3074, %v3075
    %v3077 = vsel %vm99, %v2983, 0.0
    %v3078 = vrot.slane %v3077, 4
    %v3079 = vadd.f32 %v3077, %v3078
    %v3080 = vrot.slane %v3079, 2
    %v3081 = vadd.f32 %v3079, %v3080
    %v3082 = vrot.slane %v3081, 1
    %v3083 = vadd.f32 %v3081, %v3082
    %v3084 = vsel %vm99, %v2984, 0.0
    %v3085 = vrot.slane %v3084, 4
    %v3086 = vadd.f32 %v3084, %v3085
    %v3087 = vrot.slane %v3086, 2
    %v3088 = vadd.f32 %v3086, %v3087
    %v3089 = vrot.slane %v3088, 1
    %v3090 = vadd.f32 %v3088, %v3089
    %v3091 = vsel %vm99, %v2985, 0.0
    %v3092 = vrot.slane %v3091, 4
    %v3093 = vadd.f32 %v3091, %v3092
    %v3094 = vrot.slane %v3093, 2
    %v3095 = vadd.f32 %v3093, %v3094
    %v3096 = vrot.slane %v3095, 1
    %v3097 = vadd.f32 %v3095, %v3096
    %v3098 = vmul.f32 %v2762, 0.0
    %v3099 = vmul.f32 %v2763, 0.0
    %v3100 = vmul.f32 %v2764, 0.0
    %v3101 = vmul.f32 %v2765, 0.0
    %v3102 = vmul.f32 %v2766, 0.0
    %v3103 = vmul.f32 %v2767, 0.0
    %v3104 = vmul.f32 %v2768, 0.0
    %v3105 = vmul.f32 %v2769, 0.0
    %v3106 = vmul.f32 %v2770, 0.0
    %v3107 = vmul.f32 %v2771, 0.0
    %v3108 = vmul.f32 %v2772, 0.0
    %v3109 = vmul.f32 %v2773, 0.0
    %v3110 = vmul.f32 %v2774, 0.0
    %v3111 = vmul.f32 %v2775, 0.0
    %v3112 = vmul.f32 %v2776, 0.0
    %v3113 = vmul.f32 %v2777, 0.0
    %vm3114 = vcmask 326848
    %v3115 = vsel %vm3114, %v3098, 0.0
    %v3116 = vrot.slane %v3115, 4
    %v3117 = vadd.f32 %v3115, %v3116
    %v3118 = vrot.slane %v3117, 2
    %v3119 = vadd.f32 %v3117, %v3118
    %v3120 = vrot.slane %v3119, 1
    %v3121 = vadd.f32 %v3119, %v3120
    %v3122 = vsel %vm3114, %v3099, 0.0
    %v3123 = vrot.slane %v3122, 4
    %v3124 = vadd.f32 %v3122, %v3123
    %v3125 = vrot.slane %v3124, 2
    %v3126 = vadd.f32 %v3124, %v3125
    %v3127 = vrot.slane %v3126, 1
    %v3128 = vadd.f32 %v3126, %v3127
    %v3129 = vsel %vm3114, %v3100, 0.0
    %v3130 = vrot.slane %v3129, 4
    %v3131 = vadd.f32 %v3129, %v3130
    %v3132 = vrot.slane %v3131, 2
    %v3133 = vadd.f32 %v3131, %v3132
    %v3134 = vrot.slane %v3133, 1
    %v3135 = vadd.f32 %v3133, %v3134
    %v3136 = vsel %vm3114, %v3101, 0.0
    %v3137 = vrot.slane %v3136, 4
    %v3138 = vadd.f32 %v3136, %v3137
    %v3139 = vrot.slane %v3138, 2
    %v3140 = vadd.f32 %v3138, %v3139
    %v3141 = vrot.slane %v3140, 1
    %v3142 = vadd.f32 %v3140, %v3141
    %v3143 = vsel %vm3114, %v3102, 0.0
    %v3144 = vrot.slane %v3143, 4
    %v3145 = vadd.f32 %v3143, %v3144
    %v3146 = vrot.slane %v3145, 2
    %v3147 = vadd.f32 %v3145, %v3146
    %v3148 = vrot.slane %v3147, 1
    %v3149 = vadd.f32 %v3147, %v3148
    %v3150 = vsel %vm3114, %v3103, 0.0
    %v3151 = vrot.slane %v3150, 4
    %v3152 = vadd.f32 %v3150, %v3151
    %v3153 = vrot.slane %v3152, 2
    %v3154 = vadd.f32 %v3152, %v3153
    %v3155 = vrot.slane %v3154, 1
    %v3156 = vadd.f32 %v3154, %v3155
    %v3157 = vsel %vm3114, %v3104, 0.0
    %v3158 = vrot.slane %v3157, 4
    %v3159 = vadd.f32 %v3157, %v3158
    %v3160 = vrot.slane %v3159, 2
    %v3161 = vadd.f32 %v3159, %v3160
    %v3162 = vrot.slane %v3161, 1
    %v3163 = vadd.f32 %v3161, %v3162
    %v3164 = vsel %vm3114, %v3105, 0.0
    %v3165 = vrot.slane %v3164, 4
    %v3166 = vadd.f32 %v3164, %v3165
    %v3167 = vrot.slane %v3166, 2
    %v3168 = vadd.f32 %v3166, %v3167
    %v3169 = vrot.slane %v3168, 1
    %v3170 = vadd.f32 %v3168, %v3169
    %v3171 = vsel %vm3114, %v3106, 0.0
    %v3172 = vrot.slane %v3171, 4
    %v3173 = vadd.f32 %v3171, %v3172
    %v3174 = vrot.slane %v3173, 2
    %v3175 = vadd.f32 %v3173, %v3174
    %v3176 = vrot.slane %v3175, 1
    %v3177 = vadd.f32 %v3175, %v3176
    %v3178 = vsel %vm3114, %v3107, 0.0
    %v3179 = vrot.slane %v3178, 4
    %v3180 = vadd.f32 %v3178, %v3179
    %v3181 = vrot.slane %v3180, 2
    %v3182 = vadd.f32 %v3180, %v3181
    %v3183 = vrot.slane %v3182, 1
    %v3184 = vadd.f32 %v3182, %v3183
    %v3185 = vsel %vm3114, %v3108, 0.0
    %v3186 = vrot.slane %v3185, 4
    %v3187 = vadd.f32 %v3185, %v3186
    %v3188 = vrot.slane %v3187, 2
    %v3189 = vadd.f32 %v3187, %v3188
    %v3190 = vrot.slane %v3189, 1
    %v3191 = vadd.f32 %v3189, %v3190
    %v3192 = vsel %vm3114, %v3109, 0.0
    %v3193 = vrot.slane %v3192, 4
    %v3194 = vadd.f32 %v3192, %v3193
    %v3195 = vrot.slane %v3194, 2
    %v3196 = vadd.f32 %v3194, %v3195
    %v3197 = vrot.slane %v3196, 1
    %v3198 = vadd.f32 %v3196, %v3197
    %v3199 = vsel %vm3114, %v3110, 0.0
    %v3200 = vrot.slane %v3199, 4
    %v3201 = vadd.f32 %v3199, %v3200
    %v3202 = vrot.slane %v3201, 2
    %v3203 = vadd.f32 %v3201, %v3202
    %v3204 = vrot.slane %v3203, 1
    %v3205 = vadd.f32 %v3203, %v3204
    %v3206 = vsel %vm3114, %v3111, 0.0
    %v3207 = vrot.slane %v3206, 4
    %v3208 = vadd.f32 %v3206, %v3207
    %v3209 = vrot.slane %v3208, 2
    %v3210 = vadd.f32 %v3208, %v3209
    %v3211 = vrot.slane %v3210, 1
    %v3212 = vadd.f32 %v3210, %v3211
    %v3213 = vsel %vm3114, %v3112, 0.0
    %v3214 = vrot.slane %v3213, 4
    %v3215 = vadd.f32 %v3213, %v3214
    %v3216 = vrot.slane %v3215, 2
    %v3217 = vadd.f32 %v3215, %v3216
    %v3218 = vrot.slane %v3217, 1
    %v3219 = vadd.f32 %v3217, %v3218
    %v3220 = vsel %vm3114, %v3113, 0.0
    %v3221 = vrot.slane %v3220, 4
    %v3222 = vadd.f32 %v3220, %v3221
    %v3223 = vrot.slane %v3222, 2
    %v3224 = vadd.f32 %v3222, %v3223
    %v3225 = vrot.slane %v3224, 1
    %v3226 = vadd.f32 %v3224, %v3225
    %3243 = vrot.lane.b32.xlu0 %v2762, 88
    %v3244 = vpop.permute.xlu0 %3243
    %3245 = vrot.lane.b32.xlu0 %v2763, 88
    %v3246 = vpop.permute.xlu0 %3245
    %3247 = vrot.lane.b32.xlu0 %v2764, 88
    %v3248 = vpop.permute.xlu0 %3247
    %3249 = vrot.lane.b32.xlu0 %v2765, 88
    %v3250 = vpop.permute.xlu0 %3249
    %3251 = vrot.lane.b32.xlu0 %v2766, 88
    %v3252 = vpop.permute.xlu0 %3251
    %3253 = vrot.lane.b32.xlu0 %v2767, 88
    %v3254 = vpop.permute.xlu0 %3253
    %3255 = vrot.lane.b32.xlu0 %v2768, 88
    %v3256 = vpop.permute.xlu0 %3255
    %3257 = vrot.lane.b32.xlu0 %v2769, 88
    %v3258 = vpop.permute.xlu0 %3257
    %3259 = vrot.lane.b32.xlu0 %v2770, 88
    %v3260 = vpop.permute.xlu0 %3259
    %3261 = vrot.lane.b32.xlu0 %v2771, 88
    %v3262 = vpop.permute.xlu0 %3261
    %3263 = vrot.lane.b32.xlu0 %v2772, 88
    %v3264 = vpop.permute.xlu0 %3263
    %3265 = vrot.lane.b32.xlu0 %v2773, 88
    %v3266 = vpop.permute.xlu0 %3265
    %3267 = vrot.lane.b32.xlu0 %v2774, 88
    %v3268 = vpop.permute.xlu0 %3267
    %3269 = vrot.lane.b32.xlu0 %v2775, 88
    %v3270 = vpop.permute.xlu0 %3269
    %3271 = vrot.lane.b32.xlu0 %v2776, 88
    %v3272 = vpop.permute.xlu0 %3271
    %3273 = vrot.lane.b32.xlu0 %v2777, 88
    %v3274 = vpop.permute.xlu0 %3273
    %v3291 = vmul.f32 %v908, %v3244
    %v3292 = vmul.f32 %v913, %v3246
    %v3293 = vmul.f32 %v918, %v3248
    %v3294 = vmul.f32 %v923, %v3250
    %v3295 = vmul.f32 %v928, %v3252
    %v3296 = vmul.f32 %v933, %v3254
    %v3297 = vmul.f32 %v938, %v3256
    %v3298 = vmul.f32 %v943, %v3258
    %v3299 = vmul.f32 %v948, %v3260
    %v3300 = vmul.f32 %v953, %v3262
    %v3301 = vmul.f32 %v958, %v3264
    %v3302 = vmul.f32 %v963, %v3266
    %v3303 = vmul.f32 %v968, %v3268
    %v3304 = vmul.f32 %v973, %v3270
    %v3305 = vmul.f32 %v978, %v3272
    %v3306 = vmul.f32 %v983, %v3274
    %v3307 = vsel %vm99, %v3291, 0.0
    %v3308 = vrot.slane %v3307, 4
    %v3309 = vadd.f32 %v3307, %v3308
    %v3310 = vrot.slane %v3309, 2
    %v3311 = vadd.f32 %v3309, %v3310
    %v3312 = vrot.slane %v3311, 1
    %v3313 = vadd.f32 %v3311, %v3312
    %v3314 = vsel %vm99, %v3292, 0.0
    %v3315 = vrot.slane %v3314, 4
    %v3316 = vadd.f32 %v3314, %v3315
    %v3317 = vrot.slane %v3316, 2
    %v3318 = vadd.f32 %v3316, %v3317
    %v3319 = vrot.slane %v3318, 1
    %v3320 = vadd.f32 %v3318, %v3319
    %v3321 = vsel %vm99, %v3293, 0.0
    %v3322 = vrot.slane %v3321, 4
    %v3323 = vadd.f32 %v3321, %v3322
    %v3324 = vrot.slane %v3323, 2
    %v3325 = vadd.f32 %v3323, %v3324
    %v3326 = vrot.slane %v3325, 1
    %v3327 = vadd.f32 %v3325, %v3326
    %v3328 = vsel %vm99, %v3294, 0.0
    %v3329 = vrot.slane %v3328, 4
    %v3330 = vadd.f32 %v3328, %v3329
    %v3331 = vrot.slane %v3330, 2
    %v3332 = vadd.f32 %v3330, %v3331
    %v3333 = vrot.slane %v3332, 1
    %v3334 = vadd.f32 %v3332, %v3333
    %v3335 = vsel %vm99, %v3295, 0.0
    %v3336 = vrot.slane %v3335, 4
    %v3337 = vadd.f32 %v3335, %v3336
    %v3338 = vrot.slane %v3337, 2
    %v3339 = vadd.f32 %v3337, %v3338
    %v3340 = vrot.slane %v3339, 1
    %v3341 = vadd.f32 %v3339, %v3340
    %v3342 = vsel %vm99, %v3296, 0.0
    %v3343 = vrot.slane %v3342, 4
    %v3344 = vadd.f32 %v3342, %v3343
    %v3345 = vrot.slane %v3344, 2
    %v3346 = vadd.f32 %v3344, %v3345
    %v3347 = vrot.slane %v3346, 1
    %v3348 = vadd.f32 %v3346, %v3347
    %v3349 = vsel %vm99, %v3297, 0.0
    %v3350 = vrot.slane %v3349, 4
    %v3351 = vadd.f32 %v3349, %v3350
    %v3352 = vrot.slane %v3351, 2
    %v3353 = vadd.f32 %v3351, %v3352
    %v3354 = vrot.slane %v3353, 1
    %v3355 = vadd.f32 %v3353, %v3354
    %v3356 = vsel %vm99, %v3298, 0.0
    %v3357 = vrot.slane %v3356, 4
    %v3358 = vadd.f32 %v3356, %v3357
    %v3359 = vrot.slane %v3358, 2
    %v3360 = vadd.f32 %v3358, %v3359
    %v3361 = vrot.slane %v3360, 1
    %v3362 = vadd.f32 %v3360, %v3361
    %v3363 = vsel %vm99, %v3299, 0.0
    %v3364 = vrot.slane %v3363, 4
    %v3365 = vadd.f32 %v3363, %v3364
    %v3366 = vrot.slane %v3365, 2
    %v3367 = vadd.f32 %v3365, %v3366
    %v3368 = vrot.slane %v3367, 1
    %v3369 = vadd.f32 %v3367, %v3368
    %v3370 = vsel %vm99, %v3300, 0.0
    %v3371 = vrot.slane %v3370, 4
    %v3372 = vadd.f32 %v3370, %v3371
    %v3373 = vrot.slane %v3372, 2
    %v3374 = vadd.f32 %v3372, %v3373
    %v3375 = vrot.slane %v3374, 1
    %v3376 = vadd.f32 %v3374, %v3375
    %v3377 = vsel %vm99, %v3301, 0.0
    %v3378 = vrot.slane %v3377, 4
    %v3379 = vadd.f32 %v3377, %v3378
    %v3380 = vrot.slane %v3379, 2
    %v3381 = vadd.f32 %v3379, %v3380
    %v3382 = vrot.slane %v3381, 1
    %v3383 = vadd.f32 %v3381, %v3382
    %v3384 = vsel %vm99, %v3302, 0.0
    %v3385 = vrot.slane %v3384, 4
    %v3386 = vadd.f32 %v3384, %v3385
    %v3387 = vrot.slane %v3386, 2
    %v3388 = vadd.f32 %v3386, %v3387
    %v3389 = vrot.slane %v3388, 1
    %v3390 = vadd.f32 %v3388, %v3389
    %v3391 = vsel %vm99, %v3303, 0.0
    %v3392 = vrot.slane %v3391, 4
    %v3393 = vadd.f32 %v3391, %v3392
    %v3394 = vrot.slane %v3393, 2
    %v3395 = vadd.f32 %v3393, %v3394
    %v3396 = vrot.slane %v3395, 1
    %v3397 = vadd.f32 %v3395, %v3396
    %v3398 = vsel %vm99, %v3304, 0.0
    %v3399 = vrot.slane %v3398, 4
    %v3400 = vadd.f32 %v3398, %v3399
    %v3401 = vrot.slane %v3400, 2
    %v3402 = vadd.f32 %v3400, %v3401
    %v3403 = vrot.slane %v3402, 1
    %v3404 = vadd.f32 %v3402, %v3403
    %v3405 = vsel %vm99, %v3305, 0.0
    %v3406 = vrot.slane %v3405, 4
    %v3407 = vadd.f32 %v3405, %v3406
    %v3408 = vrot.slane %v3407, 2
    %v3409 = vadd.f32 %v3407, %v3408
    %v3410 = vrot.slane %v3409, 1
    %v3411 = vadd.f32 %v3409, %v3410
    %v3412 = vsel %vm99, %v3306, 0.0
    %v3413 = vrot.slane %v3412, 4
    %v3414 = vadd.f32 %v3412, %v3413
    %v3415 = vrot.slane %v3414, 2
    %v3416 = vadd.f32 %v3414, %v3415
    %v3417 = vrot.slane %v3416, 1
    %v3418 = vadd.f32 %v3416, %v3417
    %v3420 = vsel %vm1323, %v1613, 0
    %v3423 = vsel %vm1323, %v1686, 0
    %3425 = vmatprep.subr.mxu0 0.0
    %3426 = vmatpush1.msra.mxu0 %v43
    %3427 = vmatprep.subr.mxu0 0.0
    %3428 = vmatpush1.msra.mxu0 %v44
    %3429 = vmatprep.subr.mxu0 0.0
    %3430 = vmatpush1.msra.mxu0 0.0
    %3431 = vmatprep.subr.mxu0 0.0
    %3432 = vmatpush1.msra.mxu0 0.0
    %3433 = vmatprep.subr.mxu0 0.0
    %3434 = vmatpush1.msra.mxu0 0.0
    %3435 = vmatprep.subr.mxu0 0.0
    %3436 = vmatpush1.msra.mxu0 0.0
    %3437 = vmatprep.subr.mxu0 0.0
    %3438 = vmatpush1.msra.mxu0 0.0
    %3439 = vmatprep.subr.mxu0 0.0
    %3440 = vmatpush1.msra.mxu0 0.0
    %3441 = vmatprep.subr.mxu0 0.0
    %3442 = vmatpush1.msra.mxu0 0.0
    %3443 = vmatprep.subr.mxu0 0.0
    %3444 = vmatpush1.msra.mxu0 0.0
    %3445 = vmatprep.subr.mxu0 0.0
    %3446 = vmatpush1.msra.mxu0 0.0
    %3447 = vmatprep.subr.mxu0 0.0
    %3448 = vmatpush1.msra.mxu0 0.0
    %3449 = vmatprep.subr.mxu0 0.0
    %3450 = vmatpush1.msra.mxu0 0.0
    %3451 = vmatprep.subr.mxu0 0.0
    %3452 = vmatpush1.msra.mxu0 0.0
    %3453 = vmatprep.subr.mxu0 0.0
    %3454 = vmatpush1.msra.mxu0 0.0
    %3455 = vmatprep.subr.mxu0 0.0
    %3456 = vmatpush1.msra.mxu0 0.0
    %3457 = vmatprep.subr.mxu0 0.0
    %3458 = vmatpush1.msra.mxu0 0.0
    %3459 = vmatprep.subr.mxu0 0.0
    %3460 = vmatpush1.msra.mxu0 0.0
    %3461 = vmatprep.subr.mxu0 0.0
    %3462 = vmatpush1.msra.mxu0 0.0
    %3463 = vmatprep.subr.mxu0 0.0
    %3464 = vmatpush1.msra.mxu0 0.0
    %3465 = vmatprep.subr.mxu0 0.0
    %3466 = vmatpush1.msra.mxu0 0.0
    %3467 = vmatprep.subr.mxu0 0.0
    %3468 = vmatpush1.msra.mxu0 0.0
    %3469 = vmatprep.subr.mxu0 0.0
    %3470 = vmatpush1.msra.mxu0 0.0
    %3471 = vmatprep.subr.mxu0 0.0
    %3472 = vmatpush1.msra.mxu0 0.0
    %3473 = vmatprep.subr.mxu0 0.0
    %3474 = vmatpush1.msra.mxu0 0.0
    %3475 = vmatprep.subr.mxu0 0.0
    %3476 = vmatpush1.msra.mxu0 0.0
    %3477 = vmatprep.subr.mxu0 0.0
    %3478 = vmatpush1.msra.mxu0 0.0
    %3479 = vmatprep.subr.mxu0 0.0
    %3480 = vmatpush1.msra.mxu0 0.0
    %3481 = vmatprep.subr.mxu0 0.0
    %3482 = vmatpush1.msra.mxu0 0.0
    %3483 = vmatprep.subr.mxu0 0.0
    %3484 = vmatpush1.msra.mxu0 0.0
    %3485 = vmatprep.subr.mxu0 0.0
    %3486 = vmatpush1.msra.mxu0 0.0
    %3487 = vmatprep.subr.mxu0 0.0
    %3488 = vmatpush1.msra.mxu0 0.0
    %3489 = vmatprep.mubr.f32.mxu0 0.0
    %3490 = vmatmul.mubr.f32.gmra.mrb[0].mxu0 %v3420
    %v3491 = vpop.f32.mrb[0].mxu0
    %v3492 = vadd.f32 0.0, %v3491
    %v3493 = vpop.f32.mrb[0].mxu0
    %3494 = vmatprep.mubr.f32.mxu0 0.0
    %3495 = vmatmul.mubr.f32.gmra.mrb[0].mxu0 %v3423
    %v3496 = vpop.f32.mrb[0].mxu0
    %v3497 = vadd.f32 0.0, %v3496
    %v3498 = vpop.f32.mrb[0].mxu0
    %3499 = vdwg.mxu0
    %v3500 = vadd.f32 %v1409, %v3492
    %v3501 = vadd.f32 %v1410, %v3497
    %vm3518 = vcmask 1041409
    %v3519 = vsel %vm3518, %v2807, %v2800
    %vm3520 = vcmask 1042434
    %v3521 = vsel %vm3520, %v2814, %v3519
    %vm3522 = vcmask 1043459
    %v3523 = vsel %vm3522, %v2821, %v3521
    %vm3524 = vcmask 1044484
    %v3525 = vsel %vm3524, %v2828, %v3523
    %vm3526 = vcmask 1045509
    %v3527 = vsel %vm3526, %v2835, %v3525
    %vm3528 = vcmask 1046534
    %v3529 = vsel %vm3528, %v2842, %v3527
    %vm3530 = vcmask 1047559
    %v3531 = vsel %vm3530, %v2849, %v3529
    %v3532 = vsel %vm3518, %v2863, %v2856
    %v3533 = vsel %vm3520, %v2870, %v3532
    %v3534 = vsel %vm3522, %v2877, %v3533
    %v3535 = vsel %vm3524, %v2884, %v3534
    %v3536 = vsel %vm3526, %v2891, %v3535
    %v3537 = vsel %vm3528, %v2898, %v3536
    %v3538 = vsel %vm3530, %v2905, %v3537
    %v3539 = vsel %vm1323, %v3531, 0
    %v3541 = vsel %vm1323, %v3538, 0
    %3543 = vmatprep.subr.mxu0 0.0
    %3544 = vmatpush1.msra.mxu0 %v45
    %3545 = vmatprep.subr.mxu0 0.0
    %3546 = vmatpush1.msra.mxu0 %v46
    %3547 = vmatprep.subr.mxu0 0.0
    %3548 = vmatpush1.msra.mxu0 0.0
    %3549 = vmatprep.subr.mxu0 0.0
    %3550 = vmatpush1.msra.mxu0 0.0
    %3551 = vmatprep.subr.mxu0 0.0
    %3552 = vmatpush1.msra.mxu0 0.0
    %3553 = vmatprep.subr.mxu0 0.0
    %3554 = vmatpush1.msra.mxu0 0.0
    %3555 = vmatprep.subr.mxu0 0.0
    %3556 = vmatpush1.msra.mxu0 0.0
    %3557 = vmatprep.subr.mxu0 0.0
    %3558 = vmatpush1.msra.mxu0 0.0
    %3559 = vmatprep.subr.mxu0 0.0
    %3560 = vmatpush1.msra.mxu0 0.0
    %3561 = vmatprep.subr.mxu0 0.0
    %3562 = vmatpush1.msra.mxu0 0.0
    %3563 = vmatprep.subr.mxu0 0.0
    %3564 = vmatpush1.msra.mxu0 0.0
    %3565 = vmatprep.subr.mxu0 0.0
    %3566 = vmatpush1.msra.mxu0 0.0
    %3567 = vmatprep.subr.mxu0 0.0
    %3568 = vmatpush1.msra.mxu0 0.0
    %3569 = vmatprep.subr.mxu0 0.0
    %3570 = vmatpush1.msra.mxu0 0.0
    %3571 = vmatprep.subr.mxu0 0.0
    %3572 = vmatpush1.msra.mxu0 0.0
    %3573 = vmatprep.subr.mxu0 0.0
    %3574 = vmatpush1.msra.mxu0 0.0
    %3575 = vmatprep.subr.mxu0 0.0
    %3576 = vmatpush1.msra.mxu0 0.0
    %3577 = vmatprep.subr.mxu0 0.0
    %3578 = vmatpush1.msra.mxu0 0.0
    %3579 = vmatprep.subr.mxu0 0.0
    %3580 = vmatpush1.msra.mxu0 0.0
    %3581 = vmatprep.subr.mxu0 0.0
    %3582 = vmatpush1.msra.mxu0 0.0
    %3583 = vmatprep.subr.mxu0 0.0
    %3584 = vmatpush1.msra.mxu0 0.0
    %3585 = vmatprep.subr.mxu0 0.0
    %3586 = vmatpush1.msra.mxu0 0.0
    %3587 = vmatprep.subr.mxu0 0.0
    %3588 = vmatpush1.msra.mxu0 0.0
    %3589 = vmatprep.subr.mxu0 0.0
    %3590 = vmatpush1.msra.mxu0 0.0
    %3591 = vmatprep.subr.mxu0 0.0
    %3592 = vmatpush1.msra.mxu0 0.0
    %3593 = vmatprep.subr.mxu0 0.0
    %3594 = vmatpush1.msra.mxu0 0.0
    %3595 = vmatprep.subr.mxu0 0.0
    %3596 = vmatpush1.msra.mxu0 0.0
    %3597 = vmatprep.subr.mxu0 0.0
    %3598 = vmatpush1.msra.mxu0 0.0
    %3599 = vmatprep.subr.mxu0 0.0
    %3600 = vmatpush1.msra.mxu0 0.0
    %3601 = vmatprep.subr.mxu0 0.0
    %3602 = vmatpush1.msra.mxu0 0.0
    %3603 = vmatprep.subr.mxu0 0.0
    %3604 = vmatpush1.msra.mxu0 0.0
    %3605 = vmatprep.subr.mxu0 0.0
    %3606 = vmatpush1.msra.mxu0 0.0
    %3607 = vmatprep.mubr.f32.mxu0 0.0
    %3608 = vmatmul.mubr.f32.gmra.mrb[0].mxu0 %v3539
    %v3609 = vpop.f32.mrb[0].mxu0
    %v3610 = vadd.f32 0.0, %v3609
    %v3611 = vpop.f32.mrb[0].mxu0
    %3612 = vmatprep.mubr.f32.mxu0 0.0
    %3613 = vmatmul.mubr.f32.gmra.mrb[0].mxu0 %v3541
    %v3614 = vpop.f32.mrb[0].mxu0
    %v3615 = vadd.f32 0.0, %v3614
    %v3616 = vpop.f32.mrb[0].mxu0
    %3617 = vdwg.mxu0
    %v3618 = vadd.f32 %v3500, %v3610
    %v3619 = vadd.f32 %v3501, %v3615
    %v3636 = vsel %vm3518, %v2999, %v2992
    %v3637 = vsel %vm3520, %v3006, %v3636
    %v3638 = vsel %vm3522, %v3013, %v3637
    %v3639 = vsel %vm3524, %v3020, %v3638
    %v3640 = vsel %vm3526, %v3027, %v3639
    %v3641 = vsel %vm3528, %v3034, %v3640
    %v3642 = vsel %vm3530, %v3041, %v3641
    %v3643 = vsel %vm3518, %v3055, %v3048
    %v3644 = vsel %vm3520, %v3062, %v3643
    %v3645 = vsel %vm3522, %v3069, %v3644
    %v3646 = vsel %vm3524, %v3076, %v3645
    %v3647 = vsel %vm3526, %v3083, %v3646
    %v3648 = vsel %vm3528, %v3090, %v3647
    %v3649 = vsel %vm3530, %v3097, %v3648
    %v3650 = vsel %vm99, %v3642, 0
    %v3652 = vsel %vm99, %v3649, 0
    %3654 = vmatprep.subr.mxu0 0.0
    %3655 = vmatpush1.msra.mxu0 %v47
    %3656 = vmatprep.subr.mxu0 0.0
    %3657 = vmatpush1.msra.mxu0 0.0
    %3658 = vmatprep.subr.mxu0 0.0
    %3659 = vmatpush1.msra.mxu0 0.0
    %3660 = vmatprep.subr.mxu0 0.0
    %3661 = vmatpush1.msra.mxu0 0.0
    %3662 = vmatprep.subr.mxu0 0.0
    %3663 = vmatpush1.msra.mxu0 0.0
    %3664 = vmatprep.subr.mxu0 0.0
    %3665 = vmatpush1.msra.mxu0 0.0
    %3666 = vmatprep.subr.mxu0 0.0
    %3667 = vmatpush1.msra.mxu0 0.0
    %3668 = vmatprep.subr.mxu0 0.0
    %3669 = vmatpush1.msra.mxu0 0.0
    %3670 = vmatprep.subr.mxu0 0.0
    %3671 = vmatpush1.msra.mxu0 0.0
    %3672 = vmatprep.subr.mxu0 0.0
    %3673 = vmatpush1.msra.mxu0 0.0
    %3674 = vmatprep.subr.mxu0 0.0
    %3675 = vmatpush1.msra.mxu0 0.0
    %3676 = vmatprep.subr.mxu0 0.0
    %3677 = vmatpush1.msra.mxu0 0.0
    %3678 = vmatprep.subr.mxu0 0.0
    %3679 = vmatpush1.msra.mxu0 0.0
    %3680 = vmatprep.subr.mxu0 0.0
    %3681 = vmatpush1.msra.mxu0 0.0
    %3682 = vmatprep.subr.mxu0 0.0
    %3683 = vmatpush1.msra.mxu0 0.0
    %3684 = vmatprep.subr.mxu0 0.0
    %3685 = vmatpush1.msra.mxu0 0.0
    %3686 = vmatprep.subr.mxu0 0.0
    %3687 = vmatpush1.msra.mxu0 0.0
    %3688 = vmatprep.subr.mxu0 0.0
    %3689 = vmatpush1.msra.mxu0 0.0
    %3690 = vmatprep.subr.mxu0 0.0
    %3691 = vmatpush1.msra.mxu0 0.0
    %3692 = vmatprep.subr.mxu0 0.0
    %3693 = vmatpush1.msra.mxu0 0.0
    %3694 = vmatprep.subr.mxu0 0.0
    %3695 = vmatpush1.msra.mxu0 0.0
    %3696 = vmatprep.subr.mxu0 0.0
    %3697 = vmatpush1.msra.mxu0 0.0
    %3698 = vmatprep.subr.mxu0 0.0
    %3699 = vmatpush1.msra.mxu0 0.0
    %3700 = vmatprep.subr.mxu0 0.0
    %3701 = vmatpush1.msra.mxu0 0.0
    %3702 = vmatprep.subr.mxu0 0.0
    %3703 = vmatpush1.msra.mxu0 0.0
    %3704 = vmatprep.subr.mxu0 0.0
    %3705 = vmatpush1.msra.mxu0 0.0
    %3706 = vmatprep.subr.mxu0 0.0
    %3707 = vmatpush1.msra.mxu0 0.0
    %3708 = vmatprep.subr.mxu0 0.0
    %3709 = vmatpush1.msra.mxu0 0.0
    %3710 = vmatprep.subr.mxu0 0.0
    %3711 = vmatpush1.msra.mxu0 0.0
    %3712 = vmatprep.subr.mxu0 0.0
    %3713 = vmatpush1.msra.mxu0 0.0
    %3714 = vmatprep.subr.mxu0 0.0
    %3715 = vmatpush1.msra.mxu0 0.0
    %3716 = vmatprep.subr.mxu0 0.0
    %3717 = vmatpush1.msra.mxu0 0.0
    %3718 = vmatprep.mubr.f32.mxu0 0.0
    %3719 = vmatmul.mubr.f32.gmra.mrb[0].mxu0 %v3650
    %v3720 = vpop.f32.mrb[0].mxu0
    %v3721 = vadd.f32 0.0, %v3720
    %v3722 = vpop.f32.mrb[0].mxu0
    %3723 = vmatprep.mubr.f32.mxu0 0.0
    %3724 = vmatmul.mubr.f32.gmra.mrb[0].mxu0 %v3652
    %v3725 = vpop.f32.mrb[0].mxu0
    %v3726 = vadd.f32 0.0, %v3725
    %v3727 = vpop.f32.mrb[0].mxu0
    %3728 = vdwg.mxu0
    %v3729 = vadd.f32 %v3618, %v3721
    %v3730 = vadd.f32 %v3619, %v3726
    %3731 = vmatprep.subr.mxu0 0.0
    %3732 = vmatpush1.msra.mxu0 %v48
    %3733 = vmatprep.subr.mxu0 0.0
    %3734 = vmatpush1.msra.mxu0 %v49
    %3735 = vmatprep.subr.mxu0 0.0
    %3736 = vmatpush1.msra.mxu0 0.0
    %3737 = vmatprep.subr.mxu0 0.0
    %3738 = vmatpush1.msra.mxu0 0.0
    %3739 = vmatprep.subr.mxu0 0.0
    %3740 = vmatpush1.msra.mxu0 0.0
    %3741 = vmatprep.subr.mxu0 0.0
    %3742 = vmatpush1.msra.mxu0 0.0
    %3743 = vmatprep.subr.mxu0 0.0
    %3744 = vmatpush1.msra.mxu0 0.0
    %3745 = vmatprep.subr.mxu0 0.0
    %3746 = vmatpush1.msra.mxu0 0.0
    %3747 = vmatprep.subr.mxu0 0.0
    %3748 = vmatpush1.msra.mxu0 0.0
    %3749 = vmatprep.subr.mxu0 0.0
    %3750 = vmatpush1.msra.mxu0 0.0
    %3751 = vmatprep.subr.mxu0 0.0
    %3752 = vmatpush1.msra.mxu0 0.0
    %3753 = vmatprep.subr.mxu0 0.0
    %3754 = vmatpush1.msra.mxu0 0.0
    %3755 = vmatprep.subr.mxu0 0.0
    %3756 = vmatpush1.msra.mxu0 0.0
    %3757 = vmatprep.subr.mxu0 0.0
    %3758 = vmatpush1.msra.mxu0 0.0
    %3759 = vmatprep.subr.mxu0 0.0
    %3760 = vmatpush1.msra.mxu0 0.0
    %3761 = vmatprep.subr.mxu0 0.0
    %3762 = vmatpush1.msra.mxu0 0.0
    %3763 = vmatprep.subr.mxu0 0.0
    %3764 = vmatpush1.msra.mxu0 0.0
    %3765 = vmatprep.subr.mxu0 0.0
    %3766 = vmatpush1.msra.mxu0 0.0
    %3767 = vmatprep.subr.mxu0 0.0
    %3768 = vmatpush1.msra.mxu0 0.0
    %3769 = vmatprep.subr.mxu0 0.0
    %3770 = vmatpush1.msra.mxu0 0.0
    %3771 = vmatprep.subr.mxu0 0.0
    %3772 = vmatpush1.msra.mxu0 0.0
    %3773 = vmatprep.subr.mxu0 0.0
    %3774 = vmatpush1.msra.mxu0 0.0
    %3775 = vmatprep.subr.mxu0 0.0
    %3776 = vmatpush1.msra.mxu0 0.0
    %3777 = vmatprep.subr.mxu0 0.0
    %3778 = vmatpush1.msra.mxu0 0.0
    %3779 = vmatprep.subr.mxu0 0.0
    %3780 = vmatpush1.msra.mxu0 0.0
    %3781 = vmatprep.subr.mxu0 0.0
    %3782 = vmatpush1.msra.mxu0 0.0
    %3783 = vmatprep.subr.mxu0 0.0
    %3784 = vmatpush1.msra.mxu0 0.0
    %3785 = vmatprep.subr.mxu0 0.0
    %3786 = vmatpush1.msra.mxu0 0.0
    %3787 = vmatprep.subr.mxu0 0.0
    %3788 = vmatpush1.msra.mxu0 0.0
    %3789 = vmatprep.subr.mxu0 0.0
    %3790 = vmatpush1.msra.mxu0 0.0
    %3791 = vmatprep.subr.mxu0 0.0
    %3792 = vmatpush1.msra.mxu0 0.0
    %3793 = vmatprep.subr.mxu0 0.0
    %3794 = vmatpush1.msra.mxu0 0.0
    %3795 = vmatprep.mubr.f32.mxu0 0.0
    %3796 = vmatmul.mubr.f32.gmra.mrb[0].mxu0 %v1690
    %v3797 = vpop.f32.mrb[0].mxu0
    %v3798 = vadd.f32 0.0, %v3797
    %v3799 = vpop.f32.mrb[0].mxu0
    %3800 = vdwg.mxu0
    %v3803 = vunpack.c.l.s4 1966171168
    %v3804 = vunpack.c.0.s8 %v3803
    %v3805 = vlaneseq
    %v3806 = vshrl.u32 %v3805, 7
    %v3807 = vsub.s32 %v3804, %v3806
    %v3808 = vrot.slane %v3798, %v3807
    %v3809 = vcombine.high %v3808, %v3808
    %v3811 = vunpack.c.l.s4 1966171168
    %v3812 = vunpack.c.0.s8 %v3811
    %v3813 = vlaneseq
    %v3814 = vshrl.u32 %v3813, 7
    %v3815 = vsub.s32 %v3812, %v3814
    %v3816 = vrot.slane %v3808, %v3815
    %v3818 = vunpack.c.l.s4 1966171168
    %v3819 = vunpack.c.0.s8 %v3818
    %v3820 = vlaneseq
    %v3821 = vshrl.u32 %v3820, 7
    %v3822 = vsub.s32 %v3819, %v3821
    %v3823 = vrot.slane %v3809, %v3822
    %v3824 = vlaneseq
    %v3825 = vshrl.u32 %v3824, 7
    %v3826 = vsub.s32 0, %v3825
    %v3827 = vrot.slane %v3816, %v3826
    %v3828 = vlaneseq
    %v3829 = vshrl.u32 %v3828, 7
    %v3830 = vsub.s32 0, %v3829
    %v3831 = vrot.slane %v3823, %v3830
    %v3834 = vadd.f32 %v3729, %v3827
    %v3835 = vadd.f32 %v3730, %v3831
    %3836 = vmatprep.subr.mxu0 0.0
    %3837 = vmatpush1.msra.mxu0 %v50
    %3838 = vmatprep.subr.mxu0 0.0
    %3839 = vmatpush1.msra.mxu0 %v51
    %3840 = vmatprep.subr.mxu0 0.0
    %3841 = vmatpush1.msra.mxu0 0.0
    %3842 = vmatprep.subr.mxu0 0.0
    %3843 = vmatpush1.msra.mxu0 0.0
    %3844 = vmatprep.subr.mxu0 0.0
    %3845 = vmatpush1.msra.mxu0 0.0
    %3846 = vmatprep.subr.mxu0 0.0
    %3847 = vmatpush1.msra.mxu0 0.0
    %3848 = vmatprep.subr.mxu0 0.0
    %3849 = vmatpush1.msra.mxu0 0.0
    %3850 = vmatprep.subr.mxu0 0.0
    %3851 = vmatpush1.msra.mxu0 0.0
    %3852 = vmatprep.subr.mxu0 0.0
    %3853 = vmatpush1.msra.mxu0 0.0
    %3854 = vmatprep.subr.mxu0 0.0
    %3855 = vmatpush1.msra.mxu0 0.0
    %3856 = vmatprep.subr.mxu0 0.0
    %3857 = vmatpush1.msra.mxu0 0.0
    %3858 = vmatprep.subr.mxu0 0.0
    %3859 = vmatpush1.msra.mxu0 0.0
    %3860 = vmatprep.subr.mxu0 0.0
    %3861 = vmatpush1.msra.mxu0 0.0
    %3862 = vmatprep.subr.mxu0 0.0
    %3863 = vmatpush1.msra.mxu0 0.0
    %3864 = vmatprep.subr.mxu0 0.0
    %3865 = vmatpush1.msra.mxu0 0.0
    %3866 = vmatprep.subr.mxu0 0.0
    %3867 = vmatpush1.msra.mxu0 0.0
    %3868 = vmatprep.subr.mxu0 0.0
    %3869 = vmatpush1.msra.mxu0 0.0
    %3870 = vmatprep.subr.mxu0 0.0
    %3871 = vmatpush1.msra.mxu0 0.0
    %3872 = vmatprep.subr.mxu0 0.0
    %3873 = vmatpush1.msra.mxu0 0.0
    %3874 = vmatprep.subr.mxu0 0.0
    %3875 = vmatpush1.msra.mxu0 0.0
    %3876 = vmatprep.subr.mxu0 0.0
    %3877 = vmatpush1.msra.mxu0 0.0
    %3878 = vmatprep.subr.mxu0 0.0
    %3879 = vmatpush1.msra.mxu0 0.0
    %3880 = vmatprep.subr.mxu0 0.0
    %3881 = vmatpush1.msra.mxu0 0.0
    %3882 = vmatprep.subr.mxu0 0.0
    %3883 = vmatpush1.msra.mxu0 0.0
    %3884 = vmatprep.subr.mxu0 0.0
    %3885 = vmatpush1.msra.mxu0 0.0
    %3886 = vmatprep.subr.mxu0 0.0
    %3887 = vmatpush1.msra.mxu0 0.0
    %3888 = vmatprep.subr.mxu0 0.0
    %3889 = vmatpush1.msra.mxu0 0.0
    %3890 = vmatprep.subr.mxu0 0.0
    %3891 = vmatpush1.msra.mxu0 0.0
    %3892 = vmatprep.subr.mxu0 0.0
    %3893 = vmatpush1.msra.mxu0 0.0
    %3894 = vmatprep.subr.mxu0 0.0
    %3895 = vmatpush1.msra.mxu0 0.0
    %3896 = vmatprep.subr.mxu0 0.0
    %3897 = vmatpush1.msra.mxu0 0.0
    %3898 = vmatprep.subr.mxu0 0.0
    %3899 = vmatpush1.msra.mxu0 0.0
    %3900 = vmatprep.mubr.f32.mxu0 0.0
    %3901 = vmatmul.mubr.f32.gmra.mrb[0].mxu0 %v1690
    %v3902 = vpop.f32.mrb[0].mxu0
    %v3903 = vadd.f32 0.0, %v3902
    %v3904 = vpop.f32.mrb[0].mxu0
    %3905 = vmatprep.mubr.f32.mxu0 0.0
    %3906 = vmatmul.mubr.f32.gmra.mrb[0].mxu0 %v1690
    %v3907 = vpop.f32.mrb[0].mxu0
    %v3908 = vadd.f32 0.0, %v3907
    %v3909 = vpop.f32.mrb[0].mxu0
    %3910 = vdwg.mxu0
    %v3911 = vlaneseq
    %v3912 = vshrl.u32 %v3911, 7
    %v3913 = vsub.s32 0, %v3912
    %v3914 = vrot.slane %v53, %v3913
    %v3915 = vadd.f32 %v3903, %v3914
    %v3916 = vadd.f32 %v3908, %v3914
    %v3917 = vadd.f32 %v3834, %v3915
    %v3918 = vadd.f32 %v3835, %v3916
    %v3919 = vxor.u32 %v3917, 2147483648
    %v3920 = vxor.u32 %v3918, 2147483648
    %v3921 = vmul.f32 %v3919, 1.442695
    %v3922 = vpow.pop %v3921
    %v3923 = vmul.f32 %v3920, 1.442695
    %v3924 = vpow.pop %v3923
    %v3925 = vadd.f32 %v3922, 1.0
    %v3926 = vadd.f32 %v3924, 1.0
    %v3927 = vrcp.pop %v3925
    %v3928 = vmul.f32 1.0, %v3927
    %v3929 = vrcp.pop %v3926
    %v3930 = vmul.f32 1.0, %v3929
    %3933 = vrot.lane.b32.xlu0 %v3915, 96
    %v3934 = vpop.permute.xlu0 %3933
    %3935 = vrot.lane.b32.xlu0 %v3916, 96
    %v3936 = vpop.permute.xlu0 %3935
    %v3939 = vmul.f32 %v3928, %v3934
    %v3940 = vmul.f32 %v3930, %v3936
    %3943 = vrot.lane.b32.xlu0 %v3939, 32
    %v3944 = vpop.permute.xlu0 %3943
    %3945 = vrot.lane.b32.xlu0 %v3940, 32
    %v3946 = vpop.permute.xlu0 %3945
    %v3949 = vadd.f32 %v3834, %v3944
    %v3950 = vadd.f32 %v3835, %v3946
    %v3951 = vtanh.pop %v3949
    %v3952 = vtanh.pop %v3950
    %v3953 = vmul.f32 %v3928, 0.0
    %v3954 = vmul.f32 %v3930, 0.0
    %v3955 = vsub.f32 1.0, %v3928
    %v3956 = vsub.f32 1.0, %v3930
    %3959 = vrot.lane.b32.xlu0 %v3951, 112
    %v3960 = vpop.permute.xlu0 %3959
    %3961 = vrot.lane.b32.xlu0 %v3952, 112
    %v3962 = vpop.permute.xlu0 %3961
    %v3965 = vmul.f32 %v3955, %v3960
    %v3966 = vmul.f32 %v3956, %v3962
    %v3967 = vadd.f32 %v3953, %v3965
    %v3968 = vadd.f32 %v3954, %v3966
    %3970 = vset.pattern.permute.xlu0 0
    %3971 = vperm.xlu0 %3970, %v79
    %v3972 = vpop.permute.xlu0 %3971
    %3975 = vset.pattern.permute.xlu0 0
    %3976 = vperm.xlu0 %3975, %v80
    %v3977 = vpop.permute.xlu0 %3976
    %v3979 = vmul.f32 %v3967, %v3972
    %v3980 = vmul.f32 %v3968, %v3977
    %v3997 = vsel %vm3518, %v3128, %v3121
    %v3998 = vsel %vm3520, %v3135, %v3997
    %v3999 = vsel %vm3522, %v3142, %v3998
    %v4000 = vsel %vm3524, %v3149, %v3999
    %v4001 = vsel %vm3526, %v3156, %v4000
    %v4002 = vsel %vm3528, %v3163, %v4001
    %v4003 = vsel %vm3530, %v3170, %v4002
    %v4004 = vsel %vm3518, %v3184, %v3177
    %v4005 = vsel %vm3520, %v3191, %v4004
    %v4006 = vsel %vm3522, %v3198, %v4005
    %v4007 = vsel %vm3524, %v3205, %v4006
    %v4008 = vsel %vm3526, %v3212, %v4007
    %v4009 = vsel %vm3528, %v3219, %v4008
    %v4010 = vsel %vm3530, %v3226, %v4009
    %4011 = vrot.lane.b32.xlu0 %v4003, 104
    %v4012 = vpop.permute.xlu0 %4011
    %4013 = vrot.lane.b32.xlu0 %v4010, 104
    %v4014 = vpop.permute.xlu0 %4013
    %v4015 = vsel %vm1323, %v4012, 0
    %v4017 = vsel %vm1323, %v4014, 0
    %4019 = vmatprep.subr.mxu0 0.0
    %4020 = vmatpush1.msra.mxu0 %v56
    %4021 = vmatprep.subr.mxu0 0.0
    %4022 = vmatpush1.msra.mxu0 %v57
    %4023 = vmatprep.subr.mxu0 0.0
    %4024 = vmatpush1.msra.mxu0 0.0
    %4025 = vmatprep.subr.mxu0 0.0
    %4026 = vmatpush1.msra.mxu0 0.0
    %4027 = vmatprep.subr.mxu0 0.0
    %4028 = vmatpush1.msra.mxu0 0.0
    %4029 = vmatprep.subr.mxu0 0.0
    %4030 = vmatpush1.msra.mxu0 0.0
    %4031 = vmatprep.subr.mxu0 0.0
    %4032 = vmatpush1.msra.mxu0 0.0
    %4033 = vmatprep.subr.mxu0 0.0
    %4034 = vmatpush1.msra.mxu0 0.0
    %4035 = vmatprep.subr.mxu0 0.0
    %4036 = vmatpush1.msra.mxu0 0.0
    %4037 = vmatprep.subr.mxu0 0.0
    %4038 = vmatpush1.msra.mxu0 0.0
    %4039 = vmatprep.subr.mxu0 0.0
    %4040 = vmatpush1.msra.mxu0 0.0
    %4041 = vmatprep.subr.mxu0 0.0
    %4042 = vmatpush1.msra.mxu0 0.0
    %4043 = vmatprep.subr.mxu0 0.0
    %4044 = vmatpush1.msra.mxu0 0.0
    %4045 = vmatprep.subr.mxu0 0.0
    %4046 = vmatpush1.msra.mxu0 0.0
    %4047 = vmatprep.subr.mxu0 0.0
    %4048 = vmatpush1.msra.mxu0 0.0
    %4049 = vmatprep.subr.mxu0 0.0
    %4050 = vmatpush1.msra.mxu0 0.0
    %4051 = vmatprep.subr.mxu0 0.0
    %4052 = vmatpush1.msra.mxu0 0.0
    %4053 = vmatprep.subr.mxu0 0.0
    %4054 = vmatpush1.msra.mxu0 0.0
    %4055 = vmatprep.subr.mxu0 0.0
    %4056 = vmatpush1.msra.mxu0 0.0
    %4057 = vmatprep.subr.mxu0 0.0
    %4058 = vmatpush1.msra.mxu0 0.0
    %4059 = vmatprep.subr.mxu0 0.0
    %4060 = vmatpush1.msra.mxu0 0.0
    %4061 = vmatprep.subr.mxu0 0.0
    %4062 = vmatpush1.msra.mxu0 0.0
    %4063 = vmatprep.subr.mxu0 0.0
    %4064 = vmatpush1.msra.mxu0 0.0
    %4065 = vmatprep.subr.mxu0 0.0
    %4066 = vmatpush1.msra.mxu0 0.0
    %4067 = vmatprep.subr.mxu0 0.0
    %4068 = vmatpush1.msra.mxu0 0.0
    %4069 = vmatprep.subr.mxu0 0.0
    %4070 = vmatpush1.msra.mxu0 0.0
    %4071 = vmatprep.subr.mxu0 0.0
    %4072 = vmatpush1.msra.mxu0 0.0
    %4073 = vmatprep.subr.mxu0 0.0
    %4074 = vmatpush1.msra.mxu0 0.0
    %4075 = vmatprep.subr.mxu0 0.0
    %4076 = vmatpush1.msra.mxu0 0.0
    %4077 = vmatprep.subr.mxu0 0.0
    %4078 = vmatpush1.msra.mxu0 0.0
    %4079 = vmatprep.subr.mxu0 0.0
    %4080 = vmatpush1.msra.mxu0 0.0
    %4081 = vmatprep.subr.mxu0 0.0
    %4082 = vmatpush1.msra.mxu0 0.0
    %4083 = vmatprep.mubr.f32.mxu0 0.0
    %4084 = vmatmul.mubr.f32.gmra.mrb[0].mxu0 %v4015
    %v4085 = vpop.f32.mrb[0].mxu0
    %v4086 = vadd.f32 0.0, %v4085
    %v4087 = vpop.f32.mrb[0].mxu0
    %4088 = vmatprep.mubr.f32.mxu0 0.0
    %4089 = vmatmul.mubr.f32.gmra.mrb[0].mxu0 %v4017
    %v4090 = vpop.f32.mrb[0].mxu0
    %v4091 = vadd.f32 0.0, %v4090
    %v4092 = vpop.f32.mrb[0].mxu0
    %4093 = vdwg.mxu0
    %v4094 = vadd.f32 %v1500, %v4086
    %v4095 = vadd.f32 %v1501, %v4091
    %v4112 = vsel %vm3518, %v3320, %v3313
    %v4113 = vsel %vm3520, %v3327, %v4112
    %v4114 = vsel %vm3522, %v3334, %v4113
    %v4115 = vsel %vm3524, %v3341, %v4114
    %v4116 = vsel %vm3526, %v3348, %v4115
    %v4117 = vsel %vm3528, %v3355, %v4116
    %v4118 = vsel %vm3530, %v3362, %v4117
    %v4119 = vsel %vm3518, %v3376, %v3369
    %v4120 = vsel %vm3520, %v3383, %v4119
    %v4121 = vsel %vm3522, %v3390, %v4120
    %v4122 = vsel %vm3524, %v3397, %v4121
    %v4123 = vsel %vm3526, %v3404, %v4122
    %v4124 = vsel %vm3528, %v3411, %v4123
    %v4125 = vsel %vm3530, %v3418, %v4124
    %v4126 = vsel %vm99, %v4118, 0
    %v4128 = vsel %vm99, %v4125, 0
    %4130 = vmatprep.subr.mxu0 0.0
    %4131 = vmatpush1.msra.mxu0 %v58
    %4132 = vmatprep.subr.mxu0 0.0
    %4133 = vmatpush1.msra.mxu0 0.0
    %4134 = vmatprep.subr.mxu0 0.0
    %4135 = vmatpush1.msra.mxu0 0.0
    %4136 = vmatprep.subr.mxu0 0.0
    %4137 = vmatpush1.msra.mxu0 0.0
    %4138 = vmatprep.subr.mxu0 0.0
    %4139 = vmatpush1.msra.mxu0 0.0
    %4140 = vmatprep.subr.mxu0 0.0
    %4141 = vmatpush1.msra.mxu0 0.0
    %4142 = vmatprep.subr.mxu0 0.0
    %4143 = vmatpush1.msra.mxu0 0.0
    %4144 = vmatprep.subr.mxu0 0.0
    %4145 = vmatpush1.msra.mxu0 0.0
    %4146 = vmatprep.subr.mxu0 0.0
    %4147 = vmatpush1.msra.mxu0 0.0
    %4148 = vmatprep.subr.mxu0 0.0
    %4149 = vmatpush1.msra.mxu0 0.0
    %4150 = vmatprep.subr.mxu0 0.0
    %4151 = vmatpush1.msra.mxu0 0.0
    %4152 = vmatprep.subr.mxu0 0.0
    %4153 = vmatpush1.msra.mxu0 0.0
    %4154 = vmatprep.subr.mxu0 0.0
    %4155 = vmatpush1.msra.mxu0 0.0
    %4156 = vmatprep.subr.mxu0 0.0
    %4157 = vmatpush1.msra.mxu0 0.0
    %4158 = vmatprep.subr.mxu0 0.0
    %4159 = vmatpush1.msra.mxu0 0.0
    %4160 = vmatprep.subr.mxu0 0.0
    %4161 = vmatpush1.msra.mxu0 0.0
    %4162 = vmatprep.subr.mxu0 0.0
    %4163 = vmatpush1.msra.mxu0 0.0
    %4164 = vmatprep.subr.mxu0 0.0
    %4165 = vmatpush1.msra.mxu0 0.0
    %4166 = vmatprep.subr.mxu0 0.0
    %4167 = vmatpush1.msra.mxu0 0.0
    %4168 = vmatprep.subr.mxu0 0.0
    %4169 = vmatpush1.msra.mxu0 0.0
    %4170 = vmatprep.subr.mxu0 0.0
    %4171 = vmatpush1.msra.mxu0 0.0
    %4172 = vmatprep.subr.mxu0 0.0
    %4173 = vmatpush1.msra.mxu0 0.0
    %4174 = vmatprep.subr.mxu0 0.0
    %4175 = vmatpush1.msra.mxu0 0.0
    %4176 = vmatprep.subr.mxu0 0.0
    %4177 = vmatpush1.msra.mxu0 0.0
    %4178 = vmatprep.subr.mxu0 0.0
    %4179 = vmatpush1.msra.mxu0 0.0
    %4180 = vmatprep.subr.mxu0 0.0
    %4181 = vmatpush1.msra.mxu0 0.0
    %4182 = vmatprep.subr.mxu0 0.0
    %4183 = vmatpush1.msra.mxu0 0.0
    %4184 = vmatprep.subr.mxu0 0.0
    %4185 = vmatpush1.msra.mxu0 0.0
    %4186 = vmatprep.subr.mxu0 0.0
    %4187 = vmatpush1.msra.mxu0 0.0
    %4188 = vmatprep.subr.mxu0 0.0
    %4189 = vmatpush1.msra.mxu0 0.0
    %4190 = vmatprep.subr.mxu0 0.0
    %4191 = vmatpush1.msra.mxu0 0.0
    %4192 = vmatprep.subr.mxu0 0.0
    %4193 = vmatpush1.msra.mxu0 0.0
    %4194 = vmatprep.mubr.f32.mxu0 0.0
    %4195 = vmatmul.mubr.f32.gmra.mrb[0].mxu0 %v4126
    %v4196 = vpop.f32.mrb[0].mxu0
    %v4197 = vadd.f32 0.0, %v4196
    %v4198 = vpop.f32.mrb[0].mxu0
    %4199 = vmatprep.mubr.f32.mxu0 0.0
    %4200 = vmatmul.mubr.f32.gmra.mrb[0].mxu0 %v4128
    %v4201 = vpop.f32.mrb[0].mxu0
    %v4202 = vadd.f32 0.0, %v4201
    %v4203 = vpop.f32.mrb[0].mxu0
    %4204 = vdwg.mxu0
    %v4205 = vadd.f32 %v4094, %v4197
    %v4206 = vadd.f32 %v4095, %v4202
    %4207 = vmatprep.subr.mxu0 0.0
    %4208 = vmatpush1.msra.mxu0 %v59
    %4209 = vmatprep.subr.mxu0 0.0
    %4210 = vmatpush1.msra.mxu0 %v60
    %4211 = vmatprep.subr.mxu0 0.0
    %4212 = vmatpush1.msra.mxu0 0.0
    %4213 = vmatprep.subr.mxu0 0.0
    %4214 = vmatpush1.msra.mxu0 0.0
    %4215 = vmatprep.subr.mxu0 0.0
    %4216 = vmatpush1.msra.mxu0 0.0
    %4217 = vmatprep.subr.mxu0 0.0
    %4218 = vmatpush1.msra.mxu0 0.0
    %4219 = vmatprep.subr.mxu0 0.0
    %4220 = vmatpush1.msra.mxu0 0.0
    %4221 = vmatprep.subr.mxu0 0.0
    %4222 = vmatpush1.msra.mxu0 0.0
    %4223 = vmatprep.subr.mxu0 0.0
    %4224 = vmatpush1.msra.mxu0 0.0
    %4225 = vmatprep.subr.mxu0 0.0
    %4226 = vmatpush1.msra.mxu0 0.0
    %4227 = vmatprep.subr.mxu0 0.0
    %4228 = vmatpush1.msra.mxu0 0.0
    %4229 = vmatprep.subr.mxu0 0.0
    %4230 = vmatpush1.msra.mxu0 0.0
    %4231 = vmatprep.subr.mxu0 0.0
    %4232 = vmatpush1.msra.mxu0 0.0
    %4233 = vmatprep.subr.mxu0 0.0
    %4234 = vmatpush1.msra.mxu0 0.0
    %4235 = vmatprep.subr.mxu0 0.0
    %4236 = vmatpush1.msra.mxu0 0.0
    %4237 = vmatprep.subr.mxu0 0.0
    %4238 = vmatpush1.msra.mxu0 0.0
    %4239 = vmatprep.subr.mxu0 0.0
    %4240 = vmatpush1.msra.mxu0 0.0
    %4241 = vmatprep.subr.mxu0 0.0
    %4242 = vmatpush1.msra.mxu0 0.0
    %4243 = vmatprep.subr.mxu0 0.0
    %4244 = vmatpush1.msra.mxu0 0.0
    %4245 = vmatprep.subr.mxu0 0.0
    %4246 = vmatpush1.msra.mxu0 0.0
    %4247 = vmatprep.subr.mxu0 0.0
    %4248 = vmatpush1.msra.mxu0 0.0
    %4249 = vmatprep.subr.mxu0 0.0
    %4250 = vmatpush1.msra.mxu0 0.0
    %4251 = vmatprep.subr.mxu0 0.0
    %4252 = vmatpush1.msra.mxu0 0.0
    %4253 = vmatprep.subr.mxu0 0.0
    %4254 = vmatpush1.msra.mxu0 0.0
    %4255 = vmatprep.subr.mxu0 0.0
    %4256 = vmatpush1.msra.mxu0 0.0
    %4257 = vmatprep.subr.mxu0 0.0
    %4258 = vmatpush1.msra.mxu0 0.0
    %4259 = vmatprep.subr.mxu0 0.0
    %4260 = vmatpush1.msra.mxu0 0.0
    %4261 = vmatprep.subr.mxu0 0.0
    %4262 = vmatpush1.msra.mxu0 0.0
    %4263 = vmatprep.subr.mxu0 0.0
    %4264 = vmatpush1.msra.mxu0 0.0
    %4265 = vmatprep.subr.mxu0 0.0
    %4266 = vmatpush1.msra.mxu0 0.0
    %4267 = vmatprep.subr.mxu0 0.0
    %4268 = vmatpush1.msra.mxu0 0.0
    %4269 = vmatprep.subr.mxu0 0.0
    %4270 = vmatpush1.msra.mxu0 0.0
    %4271 = vmatprep.mubr.f32.mxu0 0.0
    %4272 = vmatmul.mubr.f32.gmra.mrb[0].mxu0 %v1690
    %v4273 = vpop.f32.mrb[0].mxu0
    %v4274 = vadd.f32 0.0, %v4273
    %v4275 = vpop.f32.mrb[0].mxu0
    %4276 = vdwg.mxu0
    %v4279 = vunpack.c.l.s4 1966171168
    %v4280 = vunpack.c.0.s8 %v4279
    %v4281 = vlaneseq
    %v4282 = vshrl.u32 %v4281, 7
    %v4283 = vsub.s32 %v4280, %v4282
    %v4284 = vrot.slane %v4274, %v4283
    %v4285 = vcombine.high %v4284, %v4284
    %v4287 = vunpack.c.l.s4 1966171168
    %v4288 = vunpack.c.0.s8 %v4287
    %v4289 = vlaneseq
    %v4290 = vshrl.u32 %v4289, 7
    %v4291 = vsub.s32 %v4288, %v4290
    %v4292 = vrot.slane %v4284, %v4291
    %v4294 = vunpack.c.l.s4 1966171168
    %v4295 = vunpack.c.0.s8 %v4294
    %v4296 = vlaneseq
    %v4297 = vshrl.u32 %v4296, 7
    %v4298 = vsub.s32 %v4295, %v4297
    %v4299 = vrot.slane %v4285, %v4298
    %v4300 = vlaneseq
    %v4301 = vshrl.u32 %v4300, 7
    %v4302 = vsub.s32 0, %v4301
    %v4303 = vrot.slane %v4292, %v4302
    %v4304 = vlaneseq
    %v4305 = vshrl.u32 %v4304, 7
    %v4306 = vsub.s32 0, %v4305
    %v4307 = vrot.slane %v4299, %v4306
    %v4310 = vadd.f32 %v4205, %v4303
    %v4311 = vadd.f32 %v4206, %v4307
    %4312 = vmatprep.subr.mxu0 0.0
    %4313 = vmatpush1.msra.mxu0 %v61
    %4314 = vmatprep.subr.mxu0 0.0
    %4315 = vmatpush1.msra.mxu0 %v62
    %4316 = vmatprep.subr.mxu0 0.0
    %4317 = vmatpush1.msra.mxu0 0.0
    %4318 = vmatprep.subr.mxu0 0.0
    %4319 = vmatpush1.msra.mxu0 0.0
    %4320 = vmatprep.subr.mxu0 0.0
    %4321 = vmatpush1.msra.mxu0 0.0
    %4322 = vmatprep.subr.mxu0 0.0
    %4323 = vmatpush1.msra.mxu0 0.0
    %4324 = vmatprep.subr.mxu0 0.0
    %4325 = vmatpush1.msra.mxu0 0.0
    %4326 = vmatprep.subr.mxu0 0.0
    %4327 = vmatpush1.msra.mxu0 0.0
    %4328 = vmatprep.subr.mxu0 0.0
    %4329 = vmatpush1.msra.mxu0 0.0
    %4330 = vmatprep.subr.mxu0 0.0
    %4331 = vmatpush1.msra.mxu0 0.0
    %4332 = vmatprep.subr.mxu0 0.0
    %4333 = vmatpush1.msra.mxu0 0.0
    %4334 = vmatprep.subr.mxu0 0.0
    %4335 = vmatpush1.msra.mxu0 0.0
    %4336 = vmatprep.subr.mxu0 0.0
    %4337 = vmatpush1.msra.mxu0 0.0
    %4338 = vmatprep.subr.mxu0 0.0
    %4339 = vmatpush1.msra.mxu0 0.0
    %4340 = vmatprep.subr.mxu0 0.0
    %4341 = vmatpush1.msra.mxu0 0.0
    %4342 = vmatprep.subr.mxu0 0.0
    %4343 = vmatpush1.msra.mxu0 0.0
    %4344 = vmatprep.subr.mxu0 0.0
    %4345 = vmatpush1.msra.mxu0 0.0
    %4346 = vmatprep.subr.mxu0 0.0
    %4347 = vmatpush1.msra.mxu0 0.0
    %4348 = vmatprep.subr.mxu0 0.0
    %4349 = vmatpush1.msra.mxu0 0.0
    %4350 = vmatprep.subr.mxu0 0.0
    %4351 = vmatpush1.msra.mxu0 0.0
    %4352 = vmatprep.subr.mxu0 0.0
    %4353 = vmatpush1.msra.mxu0 0.0
    %4354 = vmatprep.subr.mxu0 0.0
    %4355 = vmatpush1.msra.mxu0 0.0
    %4356 = vmatprep.subr.mxu0 0.0
    %4357 = vmatpush1.msra.mxu0 0.0
    %4358 = vmatprep.subr.mxu0 0.0
    %4359 = vmatpush1.msra.mxu0 0.0
    %4360 = vmatprep.subr.mxu0 0.0
    %4361 = vmatpush1.msra.mxu0 0.0
    %4362 = vmatprep.subr.mxu0 0.0
    %4363 = vmatpush1.msra.mxu0 0.0
    %4364 = vmatprep.subr.mxu0 0.0
    %4365 = vmatpush1.msra.mxu0 0.0
    %4366 = vmatprep.subr.mxu0 0.0
    %4367 = vmatpush1.msra.mxu0 0.0
    %4368 = vmatprep.subr.mxu0 0.0
    %4369 = vmatpush1.msra.mxu0 0.0
    %4370 = vmatprep.subr.mxu0 0.0
    %4371 = vmatpush1.msra.mxu0 0.0
    %4372 = vmatprep.subr.mxu0 0.0
    %4373 = vmatpush1.msra.mxu0 0.0
    %4374 = vmatprep.subr.mxu0 0.0
    %4375 = vmatpush1.msra.mxu0 0.0
    %4376 = vmatprep.mubr.f32.mxu0 0.0
    %4377 = vmatmul.mubr.f32.gmra.mrb[0].mxu0 %v1690
    %v4378 = vpop.f32.mrb[0].mxu0
    %v4379 = vadd.f32 0.0, %v4378
    %v4380 = vpop.f32.mrb[0].mxu0
    %4381 = vmatprep.mubr.f32.mxu0 0.0
    %4382 = vmatmul.mubr.f32.gmra.mrb[0].mxu0 %v1690
    %v4383 = vpop.f32.mrb[0].mxu0
    %v4384 = vadd.f32 0.0, %v4383
    %v4385 = vpop.f32.mrb[0].mxu0
    %4386 = vdwg.mxu0
    %v4387 = vlaneseq
    %v4388 = vshrl.u32 %v4387, 7
    %v4389 = vsub.s32 0, %v4388
    %v4390 = vrot.slane %v64, %v4389
    %v4391 = vadd.f32 %v4379, %v4390
    %v4392 = vadd.f32 %v4384, %v4390
    %v4393 = vadd.f32 %v4310, %v4391
    %v4394 = vadd.f32 %v4311, %v4392
    %v4395 = vxor.u32 %v4393, 2147483648
    %v4396 = vxor.u32 %v4394, 2147483648
    %v4397 = vmul.f32 %v4395, 1.442695
    %v4398 = vpow.pop %v4397
    %v4399 = vmul.f32 %v4396, 1.442695
    %v4400 = vpow.pop %v4399
    %v4401 = vadd.f32 %v4398, 1.0
    %v4402 = vadd.f32 %v4400, 1.0
    %v4403 = vrcp.pop %v4401
    %v4404 = vmul.f32 1.0, %v4403
    %v4405 = vrcp.pop %v4402
    %v4406 = vmul.f32 1.0, %v4405
    %4409 = vrot.lane.b32.xlu0 %v4391, 96
    %v4410 = vpop.permute.xlu0 %4409
    %4411 = vrot.lane.b32.xlu0 %v4392, 96
    %v4412 = vpop.permute.xlu0 %4411
    %v4415 = vmul.f32 %v4404, %v4410
    %v4416 = vmul.f32 %v4406, %v4412
    %4419 = vrot.lane.b32.xlu0 %v4415, 32
    %v4420 = vpop.permute.xlu0 %4419
    %4421 = vrot.lane.b32.xlu0 %v4416, 32
    %v4422 = vpop.permute.xlu0 %4421
    %v4425 = vadd.f32 %v4310, %v4420
    %v4426 = vadd.f32 %v4311, %v4422
    %v4427 = vtanh.pop %v4425
    %v4428 = vtanh.pop %v4426
    %v4429 = vmul.f32 %v4404, 0.0
    %v4430 = vmul.f32 %v4406, 0.0
    %v4431 = vsub.f32 1.0, %v4404
    %v4432 = vsub.f32 1.0, %v4406
    %4435 = vrot.lane.b32.xlu0 %v4427, 112
    %v4436 = vpop.permute.xlu0 %4435
    %4437 = vrot.lane.b32.xlu0 %v4428, 112
    %v4438 = vpop.permute.xlu0 %4437
    %v4441 = vmul.f32 %v4431, %v4436
    %v4442 = vmul.f32 %v4432, %v4438
    %v4443 = vadd.f32 %v4429, %v4441
    %v4444 = vadd.f32 %v4430, %v4442
    %4446 = vset.pattern.permute.xlu0 0
    %4447 = vperm.xlu0 %4446, %v81
    %v4448 = vpop.permute.xlu0 %4447
    %4451 = vset.pattern.permute.xlu0 0
    %4452 = vperm.xlu0 %4451, %v82
    %v4453 = vpop.permute.xlu0 %4452
    %v4455 = vmul.f32 %v4443, %v4448
    %v4456 = vmul.f32 %v4444, %v4453
    %vm4457 = vcmask 261248
    %v4458 = vsel %vm4457, %v3979, 0.0
    %v4459 = vrot.slane %v4458, 4
    %v4460 = vadd.f32 %v4458, %v4459
    %v4461 = vrot.slane %v4460, 2
    %v4462 = vadd.f32 %v4460, %v4461
    %v4463 = vrot.slane %v4462, 1
    %v4464 = vadd.f32 %v4462, %v4463
    %v4465 = vsel %vm4457, %v3980, 0.0
    %v4466 = vrot.slane %v4465, 4
    %v4467 = vadd.f32 %v4465, %v4466
    %v4468 = vrot.slane %v4467, 2
    %v4469 = vadd.f32 %v4467, %v4468
    %v4470 = vrot.slane %v4469, 1
    %v4471 = vadd.f32 %v4469, %v4470
    %4473 = vset.pattern.permute.xlu0 0
    %4474 = vperm.xlu0 %4473, %v1520
    %v4475 = vpop.permute.xlu0 %4474
    %4478 = vset.pattern.permute.xlu0 0
    %4479 = vperm.xlu0 %4478, %v1522
    %v4480 = vpop.permute.xlu0 %4479
    %v4482 = vmul.f32 %v4464, %v4475
    %v4483 = vmul.f32 %v4471, %v4480
    %v4484 = vsel %vm4457, %v4455, 0.0
    %v4485 = vrot.slane %v4484, 4
    %v4486 = vadd.f32 %v4484, %v4485
    %v4487 = vrot.slane %v4486, 2
    %v4488 = vadd.f32 %v4486, %v4487
    %v4489 = vrot.slane %v4488, 1
    %v4490 = vadd.f32 %v4488, %v4489
    %v4491 = vsel %vm4457, %v4456, 0.0
    %v4492 = vrot.slane %v4491, 4
    %v4493 = vadd.f32 %v4491, %v4492
    %v4494 = vrot.slane %v4493, 2
    %v4495 = vadd.f32 %v4493, %v4494
    %v4496 = vrot.slane %v4495, 1
    %v4497 = vadd.f32 %v4495, %v4496
    %4499 = vset.pattern.permute.xlu0 0
    %4500 = vperm.xlu0 %4499, %v1540
    %v4501 = vpop.permute.xlu0 %4500
    %4504 = vset.pattern.permute.xlu0 0
    %4505 = vperm.xlu0 %4504, %v1542
    %v4506 = vpop.permute.xlu0 %4505
    %v4508 = vmul.f32 %v4490, %v4501
    %v4509 = vmul.f32 %v4497, %v4506
    %v4512 = vsel %vm3518, %v4509, %v4508
    %4513 = vrot.lane.b32.xlu0 %v4512, 112
    %v4514 = vpop.permute.xlu0 %4513
    %v4515 = vsel %vm1323, %v4514, 0
    %4517 = vmatprep.subr.mxu0 0.0
    %4518 = vmatpush1.msra.mxu0 %v67
    %4519 = vmatprep.subr.mxu0 0.0
    %4520 = vmatpush1.msra.mxu0 %v68
    %4521 = vmatprep.subr.mxu0 0.0
    %4522 = vmatpush1.msra.mxu0 0.0
    %4523 = vmatprep.subr.mxu0 0.0
    %4524 = vmatpush1.msra.mxu0 0.0
    %4525 = vmatprep.subr.mxu0 0.0
    %4526 = vmatpush1.msra.mxu0 0.0
    %4527 = vmatprep.subr.mxu0 0.0
    %4528 = vmatpush1.msra.mxu0 0.0
    %4529 = vmatprep.subr.mxu0 0.0
    %4530 = vmatpush1.msra.mxu0 0.0
    %4531 = vmatprep.subr.mxu0 0.0
    %4532 = vmatpush1.msra.mxu0 0.0
    %4533 = vmatprep.subr.mxu0 0.0
    %4534 = vmatpush1.msra.mxu0 0.0
    %4535 = vmatprep.subr.mxu0 0.0
    %4536 = vmatpush1.msra.mxu0 0.0
    %4537 = vmatprep.subr.mxu0 0.0
    %4538 = vmatpush1.msra.mxu0 0.0
    %4539 = vmatprep.subr.mxu0 0.0
    %4540 = vmatpush1.msra.mxu0 0.0
    %4541 = vmatprep.subr.mxu0 0.0
    %4542 = vmatpush1.msra.mxu0 0.0
    %4543 = vmatprep.subr.mxu0 0.0
    %4544 = vmatpush1.msra.mxu0 0.0
    %4545 = vmatprep.subr.mxu0 0.0
    %4546 = vmatpush1.msra.mxu0 0.0
    %4547 = vmatprep.subr.mxu0 0.0
    %4548 = vmatpush1.msra.mxu0 0.0
    %4549 = vmatprep.subr.mxu0 0.0
    %4550 = vmatpush1.msra.mxu0 0.0
    %4551 = vmatprep.subr.mxu0 0.0
    %4552 = vmatpush1.msra.mxu0 0.0
    %4553 = vmatprep.subr.mxu0 0.0
    %4554 = vmatpush1.msra.mxu0 0.0
    %4555 = vmatprep.subr.mxu0 0.0
    %4556 = vmatpush1.msra.mxu0 0.0
    %4557 = vmatprep.subr.mxu0 0.0
    %4558 = vmatpush1.msra.mxu0 0.0
    %4559 = vmatprep.subr.mxu0 0.0
    %4560 = vmatpush1.msra.mxu0 0.0
    %4561 = vmatprep.subr.mxu0 0.0
    %4562 = vmatpush1.msra.mxu0 0.0
    %4563 = vmatprep.subr.mxu0 0.0
    %4564 = vmatpush1.msra.mxu0 0.0
    %4565 = vmatprep.subr.mxu0 0.0
    %4566 = vmatpush1.msra.mxu0 0.0
    %4567 = vmatprep.subr.mxu0 0.0
    %4568 = vmatpush1.msra.mxu0 0.0
    %4569 = vmatprep.subr.mxu0 0.0
    %4570 = vmatpush1.msra.mxu0 0.0
    %4571 = vmatprep.subr.mxu0 0.0
    %4572 = vmatpush1.msra.mxu0 0.0
    %4573 = vmatprep.subr.mxu0 0.0
    %4574 = vmatpush1.msra.mxu0 0.0
    %4575 = vmatprep.subr.mxu0 0.0
    %4576 = vmatpush1.msra.mxu0 0.0
    %4577 = vmatprep.subr.mxu0 0.0
    %4578 = vmatpush1.msra.mxu0 0.0
    %4579 = vmatprep.subr.mxu0 0.0
    %4580 = vmatpush1.msra.mxu0 0.0
    %4581 = vmatprep.mubr.f32.mxu0 0.0
    %4582 = vmatmul.mubr.f32.gmra.mrb[0].mxu0 %v4515
    %v4583 = vpop.f32.mrb[0].mxu0
    %v4584 = vadd.f32 0.0, %v4583
    %v4585 = vpop.f32.mrb[0].mxu0
    %4586 = vdwg.mxu0
    %v4589 = vsel %vm3518, %v4483, %v4482
    %4590 = vrot.lane.b32.xlu0 %v4589, 112
    %v4591 = vpop.permute.xlu0 %4590
    %v4592 = vsel %vm1323, %v4591, 0
    %4594 = vmatprep.subr.mxu0 0.0
    %4595 = vmatpush1.msra.mxu0 %v65
    %4596 = vmatprep.subr.mxu0 0.0
    %4597 = vmatpush1.msra.mxu0 %v66
    %4598 = vmatprep.subr.mxu0 0.0
    %4599 = vmatpush1.msra.mxu0 0.0
    %4600 = vmatprep.subr.mxu0 0.0
    %4601 = vmatpush1.msra.mxu0 0.0
    %4602 = vmatprep.subr.mxu0 0.0
    %4603 = vmatpush1.msra.mxu0 0.0
    %4604 = vmatprep.subr.mxu0 0.0
    %4605 = vmatpush1.msra.mxu0 0.0
    %4606 = vmatprep.subr.mxu0 0.0
    %4607 = vmatpush1.msra.mxu0 0.0
    %4608 = vmatprep.subr.mxu0 0.0
    %4609 = vmatpush1.msra.mxu0 0.0
    %4610 = vmatprep.subr.mxu0 0.0
    %4611 = vmatpush1.msra.mxu0 0.0
    %4612 = vmatprep.subr.mxu0 0.0
    %4613 = vmatpush1.msra.mxu0 0.0
    %4614 = vmatprep.subr.mxu0 0.0
    %4615 = vmatpush1.msra.mxu0 0.0
    %4616 = vmatprep.subr.mxu0 0.0
    %4617 = vmatpush1.msra.mxu0 0.0
    %4618 = vmatprep.subr.mxu0 0.0
    %4619 = vmatpush1.msra.mxu0 0.0
    %4620 = vmatprep.subr.mxu0 0.0
    %4621 = vmatpush1.msra.mxu0 0.0
    %4622 = vmatprep.subr.mxu0 0.0
    %4623 = vmatpush1.msra.mxu0 0.0
    %4624 = vmatprep.subr.mxu0 0.0
    %4625 = vmatpush1.msra.mxu0 0.0
    %4626 = vmatprep.subr.mxu0 0.0
    %4627 = vmatpush1.msra.mxu0 0.0
    %4628 = vmatprep.subr.mxu0 0.0
    %4629 = vmatpush1.msra.mxu0 0.0
    %4630 = vmatprep.subr.mxu0 0.0
    %4631 = vmatpush1.msra.mxu0 0.0
    %4632 = vmatprep.subr.mxu0 0.0
    %4633 = vmatpush1.msra.mxu0 0.0
    %4634 = vmatprep.subr.mxu0 0.0
    %4635 = vmatpush1.msra.mxu0 0.0
    %4636 = vmatprep.subr.mxu0 0.0
    %4637 = vmatpush1.msra.mxu0 0.0
    %4638 = vmatprep.subr.mxu0 0.0
    %4639 = vmatpush1.msra.mxu0 0.0
    %4640 = vmatprep.subr.mxu0 0.0
    %4641 = vmatpush1.msra.mxu0 0.0
    %4642 = vmatprep.subr.mxu0 0.0
    %4643 = vmatpush1.msra.mxu0 0.0
    %4644 = vmatprep.subr.mxu0 0.0
    %4645 = vmatpush1.msra.mxu0 0.0
    %4646 = vmatprep.subr.mxu0 0.0
    %4647 = vmatpush1.msra.mxu0 0.0
    %4648 = vmatprep.subr.mxu0 0.0
    %4649 = vmatpush1.msra.mxu0 0.0
    %4650 = vmatprep.subr.mxu0 0.0
    %4651 = vmatpush1.msra.mxu0 0.0
    %4652 = vmatprep.subr.mxu0 0.0
    %4653 = vmatpush1.msra.mxu0 0.0
    %4654 = vmatprep.subr.mxu0 0.0
    %4655 = vmatpush1.msra.mxu0 0.0
    %4656 = vmatprep.subr.mxu0 0.0
    %4657 = vmatpush1.msra.mxu0 0.0
    %4658 = vmatprep.mubr.f32.mxu0 0.0
    %4659 = vmatmul.mubr.f32.gmra.mrb[0].mxu0 %v4592
    %v4660 = vpop.f32.mrb[0].mxu0
    %v4661 = vadd.f32 %v4584, %v4660
    %v4662 = vpop.f32.mrb[0].mxu0
    %4663 = vdwg.mxu0
    %v4664 = vlaneseq
    %v4665 = vshrl.u32 %v4664, 7
    %v4666 = vsub.s32 0, %v4665
    %v4667 = vrot.slane %v71, %v4666
    %v4668 = vadd.f32 %v4661, %v4667
    %v4669 = vlaneseq
    %v4670 = vshrl.u32 %v4669, 7
    %v4671 = vsub.s32 0, %v4670
    %v4672 = vrot.slane %v72, %v4671
    %4673 = vmatprep.subr.mxu0 0.0
    %4674 = vmatpush1.msra.mxu0 %v69
    %4675 = vmatprep.subr.mxu0 0.0
    %4676 = vmatpush1.msra.mxu0 %v70
    %4677 = vmatprep.subr.mxu0 0.0
    %4678 = vmatpush1.msra.mxu0 0.0
    %4679 = vmatprep.subr.mxu0 0.0
    %4680 = vmatpush1.msra.mxu0 0.0
    %4681 = vmatprep.subr.mxu0 0.0
    %4682 = vmatpush1.msra.mxu0 0.0
    %4683 = vmatprep.subr.mxu0 0.0
    %4684 = vmatpush1.msra.mxu0 0.0
    %4685 = vmatprep.subr.mxu0 0.0
    %4686 = vmatpush1.msra.mxu0 0.0
    %4687 = vmatprep.subr.mxu0 0.0
    %4688 = vmatpush1.msra.mxu0 0.0
    %4689 = vmatprep.subr.mxu0 0.0
    %4690 = vmatpush1.msra.mxu0 0.0
    %4691 = vmatprep.subr.mxu0 0.0
    %4692 = vmatpush1.msra.mxu0 0.0
    %4693 = vmatprep.subr.mxu0 0.0
    %4694 = vmatpush1.msra.mxu0 0.0
    %4695 = vmatprep.subr.mxu0 0.0
    %4696 = vmatpush1.msra.mxu0 0.0
    %4697 = vmatprep.subr.mxu0 0.0
    %4698 = vmatpush1.msra.mxu0 0.0
    %4699 = vmatprep.subr.mxu0 0.0
    %4700 = vmatpush1.msra.mxu0 0.0
    %4701 = vmatprep.subr.mxu0 0.0
    %4702 = vmatpush1.msra.mxu0 0.0
    %4703 = vmatprep.subr.mxu0 0.0
    %4704 = vmatpush1.msra.mxu0 0.0
    %4705 = vmatprep.subr.mxu0 0.0
    %4706 = vmatpush1.msra.mxu0 0.0
    %4707 = vmatprep.subr.mxu0 0.0
    %4708 = vmatpush1.msra.mxu0 0.0
    %4709 = vmatprep.subr.mxu0 0.0
    %4710 = vmatpush1.msra.mxu0 0.0
    %4711 = vmatprep.subr.mxu0 0.0
    %4712 = vmatpush1.msra.mxu0 0.0
    %4713 = vmatprep.subr.mxu0 0.0
    %4714 = vmatpush1.msra.mxu0 0.0
    %4715 = vmatprep.subr.mxu0 0.0
    %4716 = vmatpush1.msra.mxu0 0.0
    %4717 = vmatprep.subr.mxu0 0.0
    %4718 = vmatpush1.msra.mxu0 0.0
    %4719 = vmatprep.subr.mxu0 0.0
    %4720 = vmatpush1.msra.mxu0 0.0
    %4721 = vmatprep.subr.mxu0 0.0
    %4722 = vmatpush1.msra.mxu0 0.0
    %4723 = vmatprep.subr.mxu0 0.0
    %4724 = vmatpush1.msra.mxu0 0.0
    %4725 = vmatprep.subr.mxu0 0.0
    %4726 = vmatpush1.msra.mxu0 0.0
    %4727 = vmatprep.subr.mxu0 0.0
    %4728 = vmatpush1.msra.mxu0 0.0
    %4729 = vmatprep.subr.mxu0 0.0
    %4730 = vmatpush1.msra.mxu0 0.0
    %4731 = vmatprep.subr.mxu0 0.0
    %4732 = vmatpush1.msra.mxu0 0.0
    %4733 = vmatprep.subr.mxu0 0.0
    %4734 = vmatpush1.msra.mxu0 0.0
    %4735 = vmatprep.subr.mxu0 0.0
    %4736 = vmatpush1.msra.mxu0 0.0
    %4737 = vmatprep.mubr.f32.mxu0 0.0
    %4738 = vmatmul.mubr.f32.gmra.mrb[0].mxu0 %v1690
    %v4739 = vpop.f32.mrb[0].mxu0
    %v4740 = vadd.f32 %v4672, %v4739
    %v4741 = vpop.f32.mrb[0].mxu0
    %4742 = vdwg.mxu0
    %v4743 = vadd.f32 %v4668, %v4740
    %v4744 = vxor.u32 %v4743, 2147483648
    %v4745 = vmul.f32 %v4744, 1.442695
    %v4746 = vpow.pop %v4745
    %v4747 = vadd.f32 %v4746, 1.0
    %v4748 = vrcp.pop %v4747
    %v4749 = vmul.f32 1.0, %v4748
    %4751 = vrot.lane.b32.xlu0 %v4740, 96
    %v4752 = vpop.permute.xlu0 %4751
    %v4754 = vmul.f32 %v4749, %v4752
    %4756 = vrot.lane.b32.xlu0 %v4754, 32
    %v4757 = vpop.permute.xlu0 %4756
    %v4759 = vadd.f32 %v4668, %v4757
    %v4760 = vtanh.pop %v4759
    %v4761 = vmul.f32 %v4749, 0.0
    %v4762 = vsub.f32 1.0, %v4749
    %4764 = vrot.lane.b32.xlu0 %v4760, 112
    %v4765 = vpop.permute.xlu0 %4764
    %v4767 = vmul.f32 %v4762, %v4765
    %v4768 = vadd.f32 %v4761, %v4767
    %4770 = vrot.lane.b32.xlu0 %v3979, 112
    %v4771 = vpop.permute.xlu0 %4770
    %4773 = vmatprep.subr.mxu0 0.0
    %4774 = vmatpush1.msra.mxu0 %v4771
    %4775 = vmatprep.subr.mxu0 0.0
    %4776 = vmatpush1.msra.mxu0 0.0
    %4777 = vmatprep.subr.mxu0 0.0
    %4778 = vmatpush1.msra.mxu0 0.0
    %4779 = vmatprep.subr.mxu0 0.0
    %4780 = vmatpush1.msra.mxu0 0.0
    %4781 = vmatprep.subr.mxu0 0.0
    %4782 = vmatpush1.msra.mxu0 0.0
    %4783 = vmatprep.subr.mxu0 0.0
    %4784 = vmatpush1.msra.mxu0 0.0
    %4785 = vmatprep.subr.mxu0 0.0
    %4786 = vmatpush1.msra.mxu0 0.0
    %4787 = vmatprep.subr.mxu0 0.0
    %4788 = vmatpush1.msra.mxu0 0.0
    %4789 = vmatprep.subr.mxu0 0.0
    %4790 = vmatpush1.msra.mxu0 0.0
    %4791 = vmatprep.subr.mxu0 0.0
    %4792 = vmatpush1.msra.mxu0 0.0
    %4793 = vmatprep.subr.mxu0 0.0
    %4794 = vmatpush1.msra.mxu0 0.0
    %4795 = vmatprep.subr.mxu0 0.0
    %4796 = vmatpush1.msra.mxu0 0.0
    %4797 = vmatprep.subr.mxu0 0.0
    %4798 = vmatpush1.msra.mxu0 0.0
    %4799 = vmatprep.subr.mxu0 0.0
    %4800 = vmatpush1.msra.mxu0 0.0
    %4801 = vmatprep.subr.mxu0 0.0
    %4802 = vmatpush1.msra.mxu0 0.0
    %4803 = vmatprep.subr.mxu0 0.0
    %4804 = vmatpush1.msra.mxu0 0.0
    %4805 = vmatprep.subr.mxu0 0.0
    %4806 = vmatpush1.msra.mxu0 0.0
    %4807 = vmatprep.subr.mxu0 0.0
    %4808 = vmatpush1.msra.mxu0 0.0
    %4809 = vmatprep.subr.mxu0 0.0
    %4810 = vmatpush1.msra.mxu0 0.0
    %4811 = vmatprep.subr.mxu0 0.0
    %4812 = vmatpush1.msra.mxu0 0.0
    %4813 = vmatprep.subr.mxu0 0.0
    %4814 = vmatpush1.msra.mxu0 0.0
    %4815 = vmatprep.subr.mxu0 0.0
    %4816 = vmatpush1.msra.mxu0 0.0
    %4817 = vmatprep.subr.mxu0 0.0
    %4818 = vmatpush1.msra.mxu0 0.0
    %4819 = vmatprep.subr.mxu0 0.0
    %4820 = vmatpush1.msra.mxu0 0.0
    %4821 = vmatprep.subr.mxu0 0.0
    %4822 = vmatpush1.msra.mxu0 0.0
    %4823 = vmatprep.subr.mxu0 0.0
    %4824 = vmatpush1.msra.mxu0 0.0
    %4825 = vmatprep.subr.mxu0 0.0
    %4826 = vmatpush1.msra.mxu0 0.0
    %4827 = vmatprep.subr.mxu0 0.0
    %4828 = vmatpush1.msra.mxu0 0.0
    %4829 = vmatprep.subr.mxu0 0.0
    %4830 = vmatpush1.msra.mxu0 0.0
    %4831 = vmatprep.subr.mxu0 0.0
    %4832 = vmatpush1.msra.mxu0 0.0
    %4833 = vmatprep.subr.mxu0 0.0
    %4834 = vmatpush1.msra.mxu0 0.0
    %4835 = vmatprep.subr.mxu0 0.0
    %4836 = vmatpush1.msra.mxu0 0.0
    %4837 = vmatprep.mubr.f32.mxu0 0.0
    %4838 = vmatmul.mubr.f32.gmra.mrb[0].mxu0 %v1544
    %v4839 = vpop.f32.mrb[0].mxu0
    %v4840 = vadd.f32 0.0, %v4839
    %v4841 = vpop.f32.mrb[0].mxu0
    %4842 = vdwg.mxu0
    %4844 = vrot.lane.b32.xlu0 %v3980, 112
    %v4845 = vpop.permute.xlu0 %4844
    %4847 = vmatprep.subr.mxu0 0.0
    %4848 = vmatpush1.msra.mxu0 %v4845
    %4849 = vmatprep.subr.mxu0 0.0
    %4850 = vmatpush1.msra.mxu0 0.0
    %4851 = vmatprep.subr.mxu0 0.0
    %4852 = vmatpush1.msra.mxu0 0.0
    %4853 = vmatprep.subr.mxu0 0.0
    %4854 = vmatpush1.msra.mxu0 0.0
    %4855 = vmatprep.subr.mxu0 0.0
    %4856 = vmatpush1.msra.mxu0 0.0
    %4857 = vmatprep.subr.mxu0 0.0
    %4858 = vmatpush1.msra.mxu0 0.0
    %4859 = vmatprep.subr.mxu0 0.0
    %4860 = vmatpush1.msra.mxu0 0.0
    %4861 = vmatprep.subr.mxu0 0.0
    %4862 = vmatpush1.msra.mxu0 0.0
    %4863 = vmatprep.subr.mxu0 0.0
    %4864 = vmatpush1.msra.mxu0 0.0
    %4865 = vmatprep.subr.mxu0 0.0
    %4866 = vmatpush1.msra.mxu0 0.0
    %4867 = vmatprep.subr.mxu0 0.0
    %4868 = vmatpush1.msra.mxu0 0.0
    %4869 = vmatprep.subr.mxu0 0.0
    %4870 = vmatpush1.msra.mxu0 0.0
    %4871 = vmatprep.subr.mxu0 0.0
    %4872 = vmatpush1.msra.mxu0 0.0
    %4873 = vmatprep.subr.mxu0 0.0
    %4874 = vmatpush1.msra.mxu0 0.0
    %4875 = vmatprep.subr.mxu0 0.0
    %4876 = vmatpush1.msra.mxu0 0.0
    %4877 = vmatprep.subr.mxu0 0.0
    %4878 = vmatpush1.msra.mxu0 0.0
    %4879 = vmatprep.subr.mxu0 0.0
    %4880 = vmatpush1.msra.mxu0 0.0
    %4881 = vmatprep.subr.mxu0 0.0
    %4882 = vmatpush1.msra.mxu0 0.0
    %4883 = vmatprep.subr.mxu0 0.0
    %4884 = vmatpush1.msra.mxu0 0.0
    %4885 = vmatprep.subr.mxu0 0.0
    %4886 = vmatpush1.msra.mxu0 0.0
    %4887 = vmatprep.subr.mxu0 0.0
    %4888 = vmatpush1.msra.mxu0 0.0
    %4889 = vmatprep.subr.mxu0 0.0
    %4890 = vmatpush1.msra.mxu0 0.0
    %4891 = vmatprep.subr.mxu0 0.0
    %4892 = vmatpush1.msra.mxu0 0.0
    %4893 = vmatprep.subr.mxu0 0.0
    %4894 = vmatpush1.msra.mxu0 0.0
    %4895 = vmatprep.subr.mxu0 0.0
    %4896 = vmatpush1.msra.mxu0 0.0
    %4897 = vmatprep.subr.mxu0 0.0
    %4898 = vmatpush1.msra.mxu0 0.0
    %4899 = vmatprep.subr.mxu0 0.0
    %4900 = vmatpush1.msra.mxu0 0.0
    %4901 = vmatprep.subr.mxu0 0.0
    %4902 = vmatpush1.msra.mxu0 0.0
    %4903 = vmatprep.subr.mxu0 0.0
    %4904 = vmatpush1.msra.mxu0 0.0
    %4905 = vmatprep.subr.mxu0 0.0
    %4906 = vmatpush1.msra.mxu0 0.0
    %4907 = vmatprep.subr.mxu0 0.0
    %4908 = vmatpush1.msra.mxu0 0.0
    %4909 = vmatprep.subr.mxu0 0.0
    %4910 = vmatpush1.msra.mxu0 0.0
    %4911 = vmatprep.mubr.f32.mxu0 0.0
    %4912 = vmatmul.mubr.f32.gmra.mrb[0].mxu0 %v1617
    %v4913 = vpop.f32.mrb[0].mxu0
    %v4914 = vadd.f32 0.0, %v4913
    %v4915 = vpop.f32.mrb[0].mxu0
    %4916 = vdwg.mxu0
    %v4917 = vsel %vm1323, %v4771, 0
    %v4919 = vsel %vm1323, %v4845, 0
    %4921 = vmatprep.subr.mxu0 0.0
    %4922 = vmatpush1.msra.mxu0 %v34
    %4923 = vmatprep.subr.mxu0 0.0
    %4924 = vmatpush1.msra.mxu0 %v35
    %4925 = vmatprep.subr.mxu0 0.0
    %4926 = vmatpush1.msra.mxu0 0.0
    %4927 = vmatprep.subr.mxu0 0.0
    %4928 = vmatpush1.msra.mxu0 0.0
    %4929 = vmatprep.subr.mxu0 0.0
    %4930 = vmatpush1.msra.mxu0 0.0
    %4931 = vmatprep.subr.mxu0 0.0
    %4932 = vmatpush1.msra.mxu0 0.0
    %4933 = vmatprep.subr.mxu0 0.0
    %4934 = vmatpush1.msra.mxu0 0.0
    %4935 = vmatprep.subr.mxu0 0.0
    %4936 = vmatpush1.msra.mxu0 0.0
    %4937 = vmatprep.subr.mxu0 0.0
    %4938 = vmatpush1.msra.mxu0 0.0
    %4939 = vmatprep.subr.mxu0 0.0
    %4940 = vmatpush1.msra.mxu0 0.0
    %4941 = vmatprep.subr.mxu0 0.0
    %4942 = vmatpush1.msra.mxu0 0.0
    %4943 = vmatprep.subr.mxu0 0.0
    %4944 = vmatpush1.msra.mxu0 0.0
    %4945 = vmatprep.subr.mxu0 0.0
    %4946 = vmatpush1.msra.mxu0 0.0
    %4947 = vmatprep.subr.mxu0 0.0
    %4948 = vmatpush1.msra.mxu0 0.0
    %4949 = vmatprep.subr.mxu0 0.0
    %4950 = vmatpush1.msra.mxu0 0.0
    %4951 = vmatprep.subr.mxu0 0.0
    %4952 = vmatpush1.msra.mxu0 0.0
    %4953 = vmatprep.subr.mxu0 0.0
    %4954 = vmatpush1.msra.mxu0 0.0
    %4955 = vmatprep.subr.mxu0 0.0
    %4956 = vmatpush1.msra.mxu0 0.0
    %4957 = vmatprep.subr.mxu0 0.0
    %4958 = vmatpush1.msra.mxu0 0.0
    %4959 = vmatprep.subr.mxu0 0.0
    %4960 = vmatpush1.msra.mxu0 0.0
    %4961 = vmatprep.subr.mxu0 0.0
    %4962 = vmatpush1.msra.mxu0 0.0
    %4963 = vmatprep.subr.mxu0 0.0
    %4964 = vmatpush1.msra.mxu0 0.0
    %4965 = vmatprep.subr.mxu0 0.0
    %4966 = vmatpush1.msra.mxu0 0.0
    %4967 = vmatprep.subr.mxu0 0.0
    %4968 = vmatpush1.msra.mxu0 0.0
    %4969 = vmatprep.subr.mxu0 0.0
    %4970 = vmatpush1.msra.mxu0 0.0
    %4971 = vmatprep.subr.mxu0 0.0
    %4972 = vmatpush1.msra.mxu0 0.0
    %4973 = vmatprep.subr.mxu0 0.0
    %4974 = vmatpush1.msra.mxu0 0.0
    %4975 = vmatprep.subr.mxu0 0.0
    %4976 = vmatpush1.msra.mxu0 0.0
    %4977 = vmatprep.subr.mxu0 0.0
    %4978 = vmatpush1.msra.mxu0 0.0
    %4979 = vmatprep.subr.mxu0 0.0
    %4980 = vmatpush1.msra.mxu0 0.0
    %4981 = vmatprep.subr.mxu0 0.0
    %4982 = vmatpush1.msra.mxu0 0.0
    %4983 = vmatprep.subr.mxu0 0.0
    %4984 = vmatpush1.msra.mxu0 0.0
    %4985 = vmatprep.mubr.f32.mxu0 0.0
    %4986 = vmatmul.mubr.f32.gmra.mrb[0].mxu0 %v4917
    %v4987 = vpop.f32.mrb[0].mxu0
    %v4988 = vadd.f32 0.0, %v4987
    %v4989 = vpop.f32.mrb[0].mxu0
    %4990 = vmatprep.mubr.f32.mxu0 0.0
    %4991 = vmatmul.mubr.f32.gmra.mrb[0].mxu0 %v4919
    %v4992 = vpop.f32.mrb[0].mxu0
    %v4993 = vadd.f32 0.0, %v4992
    %v4994 = vpop.f32.mrb[0].mxu0
    %4995 = vdwg.mxu0
    %4998 = vrot.lane.b32.xlu0 %v4455, 112
    %v4999 = vpop.permute.xlu0 %4998
    %5000 = vrot.lane.b32.xlu0 %v4456, 112
    %v5001 = vpop.permute.xlu0 %5000
    %v5002 = vsel %vm1323, %v4999, 0
    %v5004 = vsel %vm1323, %v5001, 0
    %5006 = vmatprep.subr.mxu0 0.0
    %5007 = vmatpush1.msra.mxu0 %v36
    %5008 = vmatprep.subr.mxu0 0.0
    %5009 = vmatpush1.msra.mxu0 %v37
    %5010 = vmatprep.subr.mxu0 0.0
    %5011 = vmatpush1.msra.mxu0 0.0
    %5012 = vmatprep.subr.mxu0 0.0
    %5013 = vmatpush1.msra.mxu0 0.0
    %5014 = vmatprep.subr.mxu0 0.0
    %5015 = vmatpush1.msra.mxu0 0.0
    %5016 = vmatprep.subr.mxu0 0.0
    %5017 = vmatpush1.msra.mxu0 0.0
    %5018 = vmatprep.subr.mxu0 0.0
    %5019 = vmatpush1.msra.mxu0 0.0
    %5020 = vmatprep.subr.mxu0 0.0
    %5021 = vmatpush1.msra.mxu0 0.0
    %5022 = vmatprep.subr.mxu0 0.0
    %5023 = vmatpush1.msra.mxu0 0.0
    %5024 = vmatprep.subr.mxu0 0.0
    %5025 = vmatpush1.msra.mxu0 0.0
    %5026 = vmatprep.subr.mxu0 0.0
    %5027 = vmatpush1.msra.mxu0 0.0
    %5028 = vmatprep.subr.mxu0 0.0
    %5029 = vmatpush1.msra.mxu0 0.0
    %5030 = vmatprep.subr.mxu0 0.0
    %5031 = vmatpush1.msra.mxu0 0.0
    %5032 = vmatprep.subr.mxu0 0.0
    %5033 = vmatpush1.msra.mxu0 0.0
    %5034 = vmatprep.subr.mxu0 0.0
    %5035 = vmatpush1.msra.mxu0 0.0
    %5036 = vmatprep.subr.mxu0 0.0
    %5037 = vmatpush1.msra.mxu0 0.0
    %5038 = vmatprep.subr.mxu0 0.0
    %5039 = vmatpush1.msra.mxu0 0.0
    %5040 = vmatprep.subr.mxu0 0.0
    %5041 = vmatpush1.msra.mxu0 0.0
    %5042 = vmatprep.subr.mxu0 0.0
    %5043 = vmatpush1.msra.mxu0 0.0
    %5044 = vmatprep.subr.mxu0 0.0
    %5045 = vmatpush1.msra.mxu0 0.0
    %5046 = vmatprep.subr.mxu0 0.0
    %5047 = vmatpush1.msra.mxu0 0.0
    %5048 = vmatprep.subr.mxu0 0.0
    %5049 = vmatpush1.msra.mxu0 0.0
    %5050 = vmatprep.subr.mxu0 0.0
    %5051 = vmatpush1.msra.mxu0 0.0
    %5052 = vmatprep.subr.mxu0 0.0
    %5053 = vmatpush1.msra.mxu0 0.0
    %5054 = vmatprep.subr.mxu0 0.0
    %5055 = vmatpush1.msra.mxu0 0.0
    %5056 = vmatprep.subr.mxu0 0.0
    %5057 = vmatpush1.msra.mxu0 0.0
    %5058 = vmatprep.subr.mxu0 0.0
    %5059 = vmatpush1.msra.mxu0 0.0
    %5060 = vmatprep.subr.mxu0 0.0
    %5061 = vmatpush1.msra.mxu0 0.0
    %5062 = vmatprep.subr.mxu0 0.0
    %5063 = vmatpush1.msra.mxu0 0.0
    %5064 = vmatprep.subr.mxu0 0.0
    %5065 = vmatpush1.msra.mxu0 0.0
    %5066 = vmatprep.subr.mxu0 0.0
    %5067 = vmatpush1.msra.mxu0 0.0
    %5068 = vmatprep.subr.mxu0 0.0
    %5069 = vmatpush1.msra.mxu0 0.0
    %5070 = vmatprep.mubr.f32.mxu0 0.0
    %5071 = vmatmul.mubr.f32.gmra.mrb[0].mxu0 %v5002
    %v5072 = vpop.f32.mrb[0].mxu0
    %v5073 = vadd.f32 0.0, %v5072
    %v5074 = vpop.f32.mrb[0].mxu0
    %5075 = vmatprep.mubr.f32.mxu0 0.0
    %5076 = vmatmul.mubr.f32.gmra.mrb[0].mxu0 %v5004
    %v5077 = vpop.f32.mrb[0].mxu0
    %v5078 = vadd.f32 0.0, %v5077
    %v5079 = vpop.f32.mrb[0].mxu0
    %5080 = vdwg.mxu0
    %v5083 = vcombine.high %v4988, %v4988
    %v5085 = vunpack.c.l.s4 1966171168
    %v5086 = vunpack.c.0.s8 %v5085
    %v5087 = vlaneseq
    %v5088 = vshrl.u32 %v5087, 7
    %v5089 = vsub.s32 %v5086, %v5088
    %v5090 = vrot.slane %v4988, %v5089
    %v5092 = vunpack.c.l.s4 1966171168
    %v5093 = vunpack.c.0.s8 %v5092
    %v5094 = vlaneseq
    %v5095 = vshrl.u32 %v5094, 7
    %v5096 = vsub.s32 %v5093, %v5095
    %v5097 = vrot.slane %v5083, %v5096
    %v5098 = vcombine.high %v5090, %v5090
    %v5099 = vcombine.high %v5097, %v5097
    %v5101 = vunpack.c.l.s4 1966171168
    %v5102 = vunpack.c.0.s8 %v5101
    %v5103 = vlaneseq
    %v5104 = vshrl.u32 %v5103, 7
    %v5105 = vsub.s32 %v5102, %v5104
    %v5106 = vrot.slane %v5090, %v5105
    %v5108 = vunpack.c.l.s4 1966171168
    %v5109 = vunpack.c.0.s8 %v5108
    %v5110 = vlaneseq
    %v5111 = vshrl.u32 %v5110, 7
    %v5112 = vsub.s32 %v5109, %v5111
    %v5113 = vrot.slane %v5097, %v5112
    %v5115 = vunpack.c.l.s4 1966171168
    %v5116 = vunpack.c.0.s8 %v5115
    %v5117 = vlaneseq
    %v5118 = vshrl.u32 %v5117, 7
    %v5119 = vsub.s32 %v5116, %v5118
    %v5120 = vrot.slane %v5098, %v5119
    %v5122 = vunpack.c.l.s4 1966171168
    %v5123 = vunpack.c.0.s8 %v5122
    %v5124 = vlaneseq
    %v5125 = vshrl.u32 %v5124, 7
    %v5126 = vsub.s32 %v5123, %v5125
    %v5127 = vrot.slane %v5099, %v5126
    %v5128 = vcombine.high %v5106, %v5106
    %v5129 = vcombine.high %v5113, %v5113
    %v5130 = vcombine.high %v5120, %v5120
    %v5131 = vcombine.high %v5127, %v5127
    %v5132 = vcombine.high %v4993, %v4993
    %v5134 = vunpack.c.l.s4 1966171168
    %v5135 = vunpack.c.0.s8 %v5134
    %v5136 = vlaneseq
    %v5137 = vshrl.u32 %v5136, 7
    %v5138 = vsub.s32 %v5135, %v5137
    %v5139 = vrot.slane %v4993, %v5138
    %v5141 = vunpack.c.l.s4 1966171168
    %v5142 = vunpack.c.0.s8 %v5141
    %v5143 = vlaneseq
    %v5144 = vshrl.u32 %v5143, 7
    %v5145 = vsub.s32 %v5142, %v5144
    %v5146 = vrot.slane %v5132, %v5145
    %v5147 = vcombine.high %v5139, %v5139
    %v5148 = vcombine.high %v5146, %v5146
    %v5150 = vunpack.c.l.s4 1966171168
    %v5151 = vunpack.c.0.s8 %v5150
    %v5152 = vlaneseq
    %v5153 = vshrl.u32 %v5152, 7
    %v5154 = vsub.s32 %v5151, %v5153
    %v5155 = vrot.slane %v5139, %v5154
    %v5157 = vunpack.c.l.s4 1966171168
    %v5158 = vunpack.c.0.s8 %v5157
    %v5159 = vlaneseq
    %v5160 = vshrl.u32 %v5159, 7
    %v5161 = vsub.s32 %v5158, %v5160
    %v5162 = vrot.slane %v5146, %v5161
    %v5164 = vunpack.c.l.s4 1966171168
    %v5165 = vunpack.c.0.s8 %v5164
    %v5166 = vlaneseq
    %v5167 = vshrl.u32 %v5166, 7
    %v5168 = vsub.s32 %v5165, %v5167
    %v5169 = vrot.slane %v5147, %v5168
    %v5171 = vunpack.c.l.s4 1966171168
    %v5172 = vunpack.c.0.s8 %v5171
    %v5173 = vlaneseq
    %v5174 = vshrl.u32 %v5173, 7
    %v5175 = vsub.s32 %v5172, %v5174
    %v5176 = vrot.slane %v5148, %v5175
    %v5177 = vcombine.high %v5155, %v5155
    %v5178 = vcombine.high %v5162, %v5162
    %v5179 = vcombine.high %v5169, %v5169
    %v5180 = vcombine.high %v5176, %v5176
    %v5181 = vlaneseq
    %v5182 = vshrl.u32 %v5181, 7
    %v5183 = vsub.s32 0, %v5182
    %v5184 = vrot.slane %v5106, %v5183
    %v5185 = vlaneseq
    %v5186 = vshrl.u32 %v5185, 7
    %v5187 = vsub.s32 0, %v5186
    %v5188 = vrot.slane %v5120, %v5187
    %v5189 = vlaneseq
    %v5190 = vshrl.u32 %v5189, 7
    %v5191 = vsub.s32 0, %v5190
    %v5192 = vrot.slane %v5128, %v5191
    %v5193 = vlaneseq
    %v5194 = vshrl.u32 %v5193, 7
    %v5195 = vsub.s32 0, %v5194
    %v5196 = vrot.slane %v5130, %v5195
    %v5197 = vlaneseq
    %v5198 = vshrl.u32 %v5197, 7
    %v5199 = vsub.s32 0, %v5198
    %v5200 = vrot.slane %v5113, %v5199
    %v5201 = vlaneseq
    %v5202 = vshrl.u32 %v5201, 7
    %v5203 = vsub.s32 0, %v5202
    %v5204 = vrot.slane %v5127, %v5203
    %v5205 = vlaneseq
    %v5206 = vshrl.u32 %v5205, 7
    %v5207 = vsub.s32 0, %v5206
    %v5208 = vrot.slane %v5129, %v5207
    %v5209 = vlaneseq
    %v5210 = vshrl.u32 %v5209, 7
    %v5211 = vsub.s32 0, %v5210
    %v5212 = vrot.slane %v5131, %v5211
    %v5213 = vlaneseq
    %v5214 = vshrl.u32 %v5213, 7
    %v5215 = vsub.s32 0, %v5214
    %v5216 = vrot.slane %v5155, %v5215
    %v5217 = vlaneseq
    %v5218 = vshrl.u32 %v5217, 7
    %v5219 = vsub.s32 0, %v5218
    %v5220 = vrot.slane %v5169, %v5219
    %v5221 = vlaneseq
    %v5222 = vshrl.u32 %v5221, 7
    %v5223 = vsub.s32 0, %v5222
    %v5224 = vrot.slane %v5177, %v5223
    %v5225 = vlaneseq
    %v5226 = vshrl.u32 %v5225, 7
    %v5227 = vsub.s32 0, %v5226
    %v5228 = vrot.slane %v5179, %v5227
    %v5229 = vlaneseq
    %v5230 = vshrl.u32 %v5229, 7
    %v5231 = vsub.s32 0, %v5230
    %v5232 = vrot.slane %v5162, %v5231
    %v5233 = vlaneseq
    %v5234 = vshrl.u32 %v5233, 7
    %v5235 = vsub.s32 0, %v5234
    %v5236 = vrot.slane %v5176, %v5235
    %v5237 = vlaneseq
    %v5238 = vshrl.u32 %v5237, 7
    %v5239 = vsub.s32 0, %v5238
    %v5240 = vrot.slane %v5178, %v5239
    %v5241 = vlaneseq
    %v5242 = vshrl.u32 %v5241, 7
    %v5243 = vsub.s32 0, %v5242
    %v5244 = vrot.slane %v5180, %v5243
    %v5261 = vadd.f32 %v5184, %v5073
    %v5262 = vadd.f32 %v5188, %v5073
    %v5263 = vadd.f32 %v5192, %v5073
    %v5264 = vadd.f32 %v5196, %v5073
    %v5265 = vadd.f32 %v5200, %v5073
    %v5266 = vadd.f32 %v5204, %v5073
    %v5267 = vadd.f32 %v5208, %v5073
    %v5268 = vadd.f32 %v5212, %v5073
    %v5269 = vadd.f32 %v5216, %v5078
    %v5270 = vadd.f32 %v5220, %v5078
    %v5271 = vadd.f32 %v5224, %v5078
    %v5272 = vadd.f32 %v5228, %v5078
    %v5273 = vadd.f32 %v5232, %v5078
    %v5274 = vadd.f32 %v5236, %v5078
    %v5275 = vadd.f32 %v5240, %v5078
    %v5276 = vadd.f32 %v5244, %v5078
    %v5277 = vadd.f32 %v5261, %v1138
    %v5278 = vadd.f32 %v5262, %v1139
    %v5279 = vadd.f32 %v5263, %v1140
    %v5280 = vadd.f32 %v5264, %v1141
    %v5281 = vadd.f32 %v5265, %v1142
    %v5282 = vadd.f32 %v5266, %v1143
    %v5283 = vadd.f32 %v5267, %v1144
    %v5284 = vadd.f32 %v5268, %v1145
    %v5285 = vadd.f32 %v5269, %v1146
    %v5286 = vadd.f32 %v5270, %v1147
    %v5287 = vadd.f32 %v5271, %v1148
    %v5288 = vadd.f32 %v5272, %v1149
    %v5289 = vadd.f32 %v5273, %v1150
    %v5290 = vadd.f32 %v5274, %v1151
    %v5291 = vadd.f32 %v5275, %v1152
    %v5292 = vadd.f32 %v5276, %v1153
    %v5293 = vxor.u32 %v5277, 2147483648
    %v5294 = vxor.u32 %v5278, 2147483648
    %v5295 = vxor.u32 %v5279, 2147483648
    %v5296 = vxor.u32 %v5280, 2147483648
    %v5297 = vxor.u32 %v5281, 2147483648
    %v5298 = vxor.u32 %v5282, 2147483648
    %v5299 = vxor.u32 %v5283, 2147483648
    %v5300 = vxor.u32 %v5284, 2147483648
    %v5301 = vxor.u32 %v5285, 2147483648
    %v5302 = vxor.u32 %v5286, 2147483648
    %v5303 = vxor.u32 %v5287, 2147483648
    %v5304 = vxor.u32 %v5288, 2147483648
    %v5305 = vxor.u32 %v5289, 2147483648
    %v5306 = vxor.u32 %v5290, 2147483648
    %v5307 = vxor.u32 %v5291, 2147483648
    %v5308 = vxor.u32 %v5292, 2147483648
    %v5309 = vmul.f32 %v5293, 1.442695
    %v5310 = vpow.pop %v5309
    %v5311 = vmul.f32 %v5294, 1.442695
    %v5312 = vpow.pop %v5311
    %v5313 = vmul.f32 %v5295, 1.442695
    %v5314 = vpow.pop %v5313
    %v5315 = vmul.f32 %v5296, 1.442695
    %v5316 = vpow.pop %v5315
    %v5317 = vmul.f32 %v5297, 1.442695
    %v5318 = vpow.pop %v5317
    %v5319 = vmul.f32 %v5298, 1.442695
    %v5320 = vpow.pop %v5319
    %v5321 = vmul.f32 %v5299, 1.442695
    %v5322 = vpow.pop %v5321
    %v5323 = vmul.f32 %v5300, 1.442695
    %v5324 = vpow.pop %v5323
    %v5325 = vmul.f32 %v5301, 1.442695
    %v5326 = vpow.pop %v5325
    %v5327 = vmul.f32 %v5302, 1.442695
    %v5328 = vpow.pop %v5327
    %v5329 = vmul.f32 %v5303, 1.442695
    %v5330 = vpow.pop %v5329
    %v5331 = vmul.f32 %v5304, 1.442695
    %v5332 = vpow.pop %v5331
    %v5333 = vmul.f32 %v5305, 1.442695
    %v5334 = vpow.pop %v5333
    %v5335 = vmul.f32 %v5306, 1.442695
    %v5336 = vpow.pop %v5335
    %v5337 = vmul.f32 %v5307, 1.442695
    %v5338 = vpow.pop %v5337
    %v5339 = vmul.f32 %v5308, 1.442695
    %v5340 = vpow.pop %v5339
    %v5341 = vadd.f32 %v5310, 1.0
    %v5342 = vadd.f32 %v5312, 1.0
    %v5343 = vadd.f32 %v5314, 1.0
    %v5344 = vadd.f32 %v5316, 1.0
    %v5345 = vadd.f32 %v5318, 1.0
    %v5346 = vadd.f32 %v5320, 1.0
    %v5347 = vadd.f32 %v5322, 1.0
    %v5348 = vadd.f32 %v5324, 1.0
    %v5349 = vadd.f32 %v5326, 1.0
    %v5350 = vadd.f32 %v5328, 1.0
    %v5351 = vadd.f32 %v5330, 1.0
    %v5352 = vadd.f32 %v5332, 1.0
    %v5353 = vadd.f32 %v5334, 1.0
    %v5354 = vadd.f32 %v5336, 1.0
    %v5355 = vadd.f32 %v5338, 1.0
    %v5356 = vadd.f32 %v5340, 1.0
    %v5357 = vrcp.pop %v5341
    %v5358 = vmul.f32 1.0, %v5357
    %v5359 = vrcp.pop %v5342
    %v5360 = vmul.f32 1.0, %v5359
    %v5361 = vrcp.pop %v5343
    %v5362 = vmul.f32 1.0, %v5361
    %v5363 = vrcp.pop %v5344
    %v5364 = vmul.f32 1.0, %v5363
    %v5365 = vrcp.pop %v5345
    %v5366 = vmul.f32 1.0, %v5365
    %v5367 = vrcp.pop %v5346
    %v5368 = vmul.f32 1.0, %v5367
    %v5369 = vrcp.pop %v5347
    %v5370 = vmul.f32 1.0, %v5369
    %v5371 = vrcp.pop %v5348
    %v5372 = vmul.f32 1.0, %v5371
    %v5373 = vrcp.pop %v5349
    %v5374 = vmul.f32 1.0, %v5373
    %v5375 = vrcp.pop %v5350
    %v5376 = vmul.f32 1.0, %v5375
    %v5377 = vrcp.pop %v5351
    %v5378 = vmul.f32 1.0, %v5377
    %v5379 = vrcp.pop %v5352
    %v5380 = vmul.f32 1.0, %v5379
    %v5381 = vrcp.pop %v5353
    %v5382 = vmul.f32 1.0, %v5381
    %v5383 = vrcp.pop %v5354
    %v5384 = vmul.f32 1.0, %v5383
    %v5385 = vrcp.pop %v5355
    %v5386 = vmul.f32 1.0, %v5385
    %v5387 = vrcp.pop %v5356
    %v5388 = vmul.f32 1.0, %v5387
    %v5389 = vmul.f32 %v5358, %v2156
    %v5390 = vmul.f32 %v5360, %v2163
    %v5391 = vmul.f32 %v5362, %v2170
    %v5392 = vmul.f32 %v5364, %v2177
    %v5393 = vmul.f32 %v5366, %v2184
    %v5394 = vmul.f32 %v5368, %v2191
    %v5395 = vmul.f32 %v5370, %v2198
    %v5396 = vmul.f32 %v5372, %v2205
    %v5397 = vmul.f32 %v5374, %v2212
    %v5398 = vmul.f32 %v5376, %v2219
    %v5399 = vmul.f32 %v5378, %v2226
    %v5400 = vmul.f32 %v5380, %v2233
    %v5401 = vmul.f32 %v5382, %v2240
    %v5402 = vmul.f32 %v5384, %v2247
    %v5403 = vmul.f32 %v5386, %v2254
    %v5404 = vmul.f32 %v5388, %v2261
    %v5407 = vcombine.high %v5073, %v5073
    %v5409 = vunpack.c.l.s4 1966171168
    %v5410 = vunpack.c.0.s8 %v5409
    %v5411 = vlaneseq
    %v5412 = vshrl.u32 %v5411, 7
    %v5413 = vsub.s32 %v5410, %v5412
    %v5414 = vrot.slane %v5073, %v5413
    %v5416 = vunpack.c.l.s4 1966171168
    %v5417 = vunpack.c.0.s8 %v5416
    %v5418 = vlaneseq
    %v5419 = vshrl.u32 %v5418, 7
    %v5420 = vsub.s32 %v5417, %v5419
    %v5421 = vrot.slane %v5407, %v5420
    %v5422 = vcombine.high %v5414, %v5414
    %v5423 = vcombine.high %v5421, %v5421
    %v5425 = vunpack.c.l.s4 1966171168
    %v5426 = vunpack.c.0.s8 %v5425
    %v5427 = vlaneseq
    %v5428 = vshrl.u32 %v5427, 7
    %v5429 = vsub.s32 %v5426, %v5428
    %v5430 = vrot.slane %v5414, %v5429
    %v5432 = vunpack.c.l.s4 1966171168
    %v5433 = vunpack.c.0.s8 %v5432
    %v5434 = vlaneseq
    %v5435 = vshrl.u32 %v5434, 7
    %v5436 = vsub.s32 %v5433, %v5435
    %v5437 = vrot.slane %v5421, %v5436
    %v5439 = vunpack.c.l.s4 1966171168
    %v5440 = vunpack.c.0.s8 %v5439
    %v5441 = vlaneseq
    %v5442 = vshrl.u32 %v5441, 7
    %v5443 = vsub.s32 %v5440, %v5442
    %v5444 = vrot.slane %v5422, %v5443
    %v5446 = vunpack.c.l.s4 1966171168
    %v5447 = vunpack.c.0.s8 %v5446
    %v5448 = vlaneseq
    %v5449 = vshrl.u32 %v5448, 7
    %v5450 = vsub.s32 %v5447, %v5449
    %v5451 = vrot.slane %v5423, %v5450
    %v5452 = vcombine.high %v5430, %v5430
    %v5453 = vcombine.high %v5437, %v5437
    %v5454 = vcombine.high %v5444, %v5444
    %v5455 = vcombine.high %v5451, %v5451
    %v5456 = vcombine.high %v5078, %v5078
    %v5458 = vunpack.c.l.s4 1966171168
    %v5459 = vunpack.c.0.s8 %v5458
    %v5460 = vlaneseq
    %v5461 = vshrl.u32 %v5460, 7
    %v5462 = vsub.s32 %v5459, %v5461
    %v5463 = vrot.slane %v5078, %v5462
    %v5465 = vunpack.c.l.s4 1966171168
    %v5466 = vunpack.c.0.s8 %v5465
    %v5467 = vlaneseq
    %v5468 = vshrl.u32 %v5467, 7
    %v5469 = vsub.s32 %v5466, %v5468
    %v5470 = vrot.slane %v5456, %v5469
    %v5471 = vcombine.high %v5463, %v5463
    %v5472 = vcombine.high %v5470, %v5470
    %v5474 = vunpack.c.l.s4 1966171168
    %v5475 = vunpack.c.0.s8 %v5474
    %v5476 = vlaneseq
    %v5477 = vshrl.u32 %v5476, 7
    %v5478 = vsub.s32 %v5475, %v5477
    %v5479 = vrot.slane %v5463, %v5478
    %v5481 = vunpack.c.l.s4 1966171168
    %v5482 = vunpack.c.0.s8 %v5481
    %v5483 = vlaneseq
    %v5484 = vshrl.u32 %v5483, 7
    %v5485 = vsub.s32 %v5482, %v5484
    %v5486 = vrot.slane %v5470, %v5485
    %v5488 = vunpack.c.l.s4 1966171168
    %v5489 = vunpack.c.0.s8 %v5488
    %v5490 = vlaneseq
    %v5491 = vshrl.u32 %v5490, 7
    %v5492 = vsub.s32 %v5489, %v5491
    %v5493 = vrot.slane %v5471, %v5492
    %v5495 = vunpack.c.l.s4 1966171168
    %v5496 = vunpack.c.0.s8 %v5495
    %v5497 = vlaneseq
    %v5498 = vshrl.u32 %v5497, 7
    %v5499 = vsub.s32 %v5496, %v5498
    %v5500 = vrot.slane %v5472, %v5499
    %v5501 = vcombine.high %v5479, %v5479
    %v5502 = vcombine.high %v5486, %v5486
    %v5503 = vcombine.high %v5493, %v5493
    %v5504 = vcombine.high %v5500, %v5500
    %v5505 = vlaneseq
    %v5506 = vshrl.u32 %v5505, 7
    %v5507 = vsub.s32 0, %v5506
    %v5508 = vrot.slane %v5430, %v5507
    %v5509 = vlaneseq
    %v5510 = vshrl.u32 %v5509, 7
    %v5511 = vsub.s32 0, %v5510
    %v5512 = vrot.slane %v5444, %v5511
    %v5513 = vlaneseq
    %v5514 = vshrl.u32 %v5513, 7
    %v5515 = vsub.s32 0, %v5514
    %v5516 = vrot.slane %v5452, %v5515
    %v5517 = vlaneseq
    %v5518 = vshrl.u32 %v5517, 7
    %v5519 = vsub.s32 0, %v5518
    %v5520 = vrot.slane %v5454, %v5519
    %v5521 = vlaneseq
    %v5522 = vshrl.u32 %v5521, 7
    %v5523 = vsub.s32 0, %v5522
    %v5524 = vrot.slane %v5437, %v5523
    %v5525 = vlaneseq
    %v5526 = vshrl.u32 %v5525, 7
    %v5527 = vsub.s32 0, %v5526
    %v5528 = vrot.slane %v5451, %v5527
    %v5529 = vlaneseq
    %v5530 = vshrl.u32 %v5529, 7
    %v5531 = vsub.s32 0, %v5530
    %v5532 = vrot.slane %v5453, %v5531
    %v5533 = vlaneseq
    %v5534 = vshrl.u32 %v5533, 7
    %v5535 = vsub.s32 0, %v5534
    %v5536 = vrot.slane %v5455, %v5535
    %v5537 = vlaneseq
    %v5538 = vshrl.u32 %v5537, 7
    %v5539 = vsub.s32 0, %v5538
    %v5540 = vrot.slane %v5479, %v5539
    %v5541 = vlaneseq
    %v5542 = vshrl.u32 %v5541, 7
    %v5543 = vsub.s32 0, %v5542
    %v5544 = vrot.slane %v5493, %v5543
    %v5545 = vlaneseq
    %v5546 = vshrl.u32 %v5545, 7
    %v5547 = vsub.s32 0, %v5546
    %v5548 = vrot.slane %v5501, %v5547
    %v5549 = vlaneseq
    %v5550 = vshrl.u32 %v5549, 7
    %v5551 = vsub.s32 0, %v5550
    %v5552 = vrot.slane %v5503, %v5551
    %v5553 = vlaneseq
    %v5554 = vshrl.u32 %v5553, 7
    %v5555 = vsub.s32 0, %v5554
    %v5556 = vrot.slane %v5486, %v5555
    %v5557 = vlaneseq
    %v5558 = vshrl.u32 %v5557, 7
    %v5559 = vsub.s32 0, %v5558
    %v5560 = vrot.slane %v5500, %v5559
    %v5561 = vlaneseq
    %v5562 = vshrl.u32 %v5561, 7
    %v5563 = vsub.s32 0, %v5562
    %v5564 = vrot.slane %v5502, %v5563
    %v5565 = vlaneseq
    %v5566 = vshrl.u32 %v5565, 7
    %v5567 = vsub.s32 0, %v5566
    %v5568 = vrot.slane %v5504, %v5567
    %v5585 = vadd.f32 %v5508, %v4988
    %v5586 = vadd.f32 %v5512, %v4988
    %v5587 = vadd.f32 %v5516, %v4988
    %v5588 = vadd.f32 %v5520, %v4988
    %v5589 = vadd.f32 %v5524, %v4988
    %v5590 = vadd.f32 %v5528, %v4988
    %v5591 = vadd.f32 %v5532, %v4988
    %v5592 = vadd.f32 %v5536, %v4988
    %v5593 = vadd.f32 %v5540, %v4993
    %v5594 = vadd.f32 %v5544, %v4993
    %v5595 = vadd.f32 %v5548, %v4993
    %v5596 = vadd.f32 %v5552, %v4993
    %v5597 = vadd.f32 %v5556, %v4993
    %v5598 = vadd.f32 %v5560, %v4993
    %v5599 = vadd.f32 %v5564, %v4993
    %v5600 = vadd.f32 %v5568, %v4993
    %v5601 = vadd.f32 %v5585, %v2491
    %v5602 = vadd.f32 %v5586, %v2493
    %v5603 = vadd.f32 %v5587, %v2495
    %v5604 = vadd.f32 %v5588, %v2497
    %v5605 = vadd.f32 %v5589, %v2499
    %v5606 = vadd.f32 %v5590, %v2501
    %v5607 = vadd.f32 %v5591, %v2503
    %v5608 = vadd.f32 %v5592, %v2505
    %v5609 = vadd.f32 %v5593, %v2507
    %v5610 = vadd.f32 %v5594, %v2509
    %v5611 = vadd.f32 %v5595, %v2511
    %v5612 = vadd.f32 %v5596, %v2513
    %v5613 = vadd.f32 %v5597, %v2515
    %v5614 = vadd.f32 %v5598, %v2517
    %v5615 = vadd.f32 %v5599, %v2519
    %v5616 = vadd.f32 %v5600, %v2521
    %v5617 = vxor.u32 %v5601, 2147483648
    %v5618 = vxor.u32 %v5602, 2147483648
    %v5619 = vxor.u32 %v5603, 2147483648
    %v5620 = vxor.u32 %v5604, 2147483648
    %v5621 = vxor.u32 %v5605, 2147483648
    %v5622 = vxor.u32 %v5606, 2147483648
    %v5623 = vxor.u32 %v5607, 2147483648
    %v5624 = vxor.u32 %v5608, 2147483648
    %v5625 = vxor.u32 %v5609, 2147483648
    %v5626 = vxor.u32 %v5610, 2147483648
    %v5627 = vxor.u32 %v5611, 2147483648
    %v5628 = vxor.u32 %v5612, 2147483648
    %v5629 = vxor.u32 %v5613, 2147483648
    %v5630 = vxor.u32 %v5614, 2147483648
    %v5631 = vxor.u32 %v5615, 2147483648
    %v5632 = vxor.u32 %v5616, 2147483648
    %v5633 = vmul.f32 %v5617, 1.442695
    %v5634 = vpow.pop %v5633
    %v5635 = vmul.f32 %v5618, 1.442695
    %v5636 = vpow.pop %v5635
    %v5637 = vmul.f32 %v5619, 1.442695
    %v5638 = vpow.pop %v5637
    %v5639 = vmul.f32 %v5620, 1.442695
    %v5640 = vpow.pop %v5639
    %v5641 = vmul.f32 %v5621, 1.442695
    %v5642 = vpow.pop %v5641
    %v5643 = vmul.f32 %v5622, 1.442695
    %v5644 = vpow.pop %v5643
    %v5645 = vmul.f32 %v5623, 1.442695
    %v5646 = vpow.pop %v5645
    %v5647 = vmul.f32 %v5624, 1.442695
    %v5648 = vpow.pop %v5647
    %v5649 = vmul.f32 %v5625, 1.442695
    %v5650 = vpow.pop %v5649
    %v5651 = vmul.f32 %v5626, 1.442695
    %v5652 = vpow.pop %v5651
    %v5653 = vmul.f32 %v5627, 1.442695
    %v5654 = vpow.pop %v5653
    %v5655 = vmul.f32 %v5628, 1.442695
    %v5656 = vpow.pop %v5655
    %v5657 = vmul.f32 %v5629, 1.442695
    %v5658 = vpow.pop %v5657
    %v5659 = vmul.f32 %v5630, 1.442695
    %v5660 = vpow.pop %v5659
    %v5661 = vmul.f32 %v5631, 1.442695
    %v5662 = vpow.pop %v5661
    %v5663 = vmul.f32 %v5632, 1.442695
    %v5664 = vpow.pop %v5663
    %v5665 = vadd.f32 %v5634, 1.0
    %v5666 = vadd.f32 %v5636, 1.0
    %v5667 = vadd.f32 %v5638, 1.0
    %v5668 = vadd.f32 %v5640, 1.0
    %v5669 = vadd.f32 %v5642, 1.0
    %v5670 = vadd.f32 %v5644, 1.0
    %v5671 = vadd.f32 %v5646, 1.0
    %v5672 = vadd.f32 %v5648, 1.0
    %v5673 = vadd.f32 %v5650, 1.0
    %v5674 = vadd.f32 %v5652, 1.0
    %v5675 = vadd.f32 %v5654, 1.0
    %v5676 = vadd.f32 %v5656, 1.0
    %v5677 = vadd.f32 %v5658, 1.0
    %v5678 = vadd.f32 %v5660, 1.0
    %v5679 = vadd.f32 %v5662, 1.0
    %v5680 = vadd.f32 %v5664, 1.0
    %v5681 = vrcp.pop %v5665
    %v5682 = vmul.f32 1.0, %v5681
    %v5683 = vrcp.pop %v5666
    %v5684 = vmul.f32 1.0, %v5683
    %v5685 = vrcp.pop %v5667
    %v5686 = vmul.f32 1.0, %v5685
    %v5687 = vrcp.pop %v5668
    %v5688 = vmul.f32 1.0, %v5687
    %v5689 = vrcp.pop %v5669
    %v5690 = vmul.f32 1.0, %v5689
    %v5691 = vrcp.pop %v5670
    %v5692 = vmul.f32 1.0, %v5691
    %v5693 = vrcp.pop %v5671
    %v5694 = vmul.f32 1.0, %v5693
    %v5695 = vrcp.pop %v5672
    %v5696 = vmul.f32 1.0, %v5695
    %v5697 = vrcp.pop %v5673
    %v5698 = vmul.f32 1.0, %v5697
    %v5699 = vrcp.pop %v5674
    %v5700 = vmul.f32 1.0, %v5699
    %v5701 = vrcp.pop %v5675
    %v5702 = vmul.f32 1.0, %v5701
    %v5703 = vrcp.pop %v5676
    %v5704 = vmul.f32 1.0, %v5703
    %v5705 = vrcp.pop %v5677
    %v5706 = vmul.f32 1.0, %v5705
    %v5707 = vrcp.pop %v5678
    %v5708 = vmul.f32 1.0, %v5707
    %v5709 = vrcp.pop %v5679
    %v5710 = vmul.f32 1.0, %v5709
    %v5711 = vrcp.pop %v5680
    %v5712 = vmul.f32 1.0, %v5711
    %v5713 = vmul.f32 %v5682, %v2656
    %v5714 = vmul.f32 %v5684, %v2663
    %v5715 = vmul.f32 %v5686, %v2670
    %v5716 = vmul.f32 %v5688, %v2677
    %v5717 = vmul.f32 %v5690, %v2684
    %v5718 = vmul.f32 %v5692, %v2691
    %v5719 = vmul.f32 %v5694, %v2698
    %v5720 = vmul.f32 %v5696, %v2705
    %v5721 = vmul.f32 %v5698, %v2712
    %v5722 = vmul.f32 %v5700, %v2719
    %v5723 = vmul.f32 %v5702, %v2726
    %v5724 = vmul.f32 %v5704, %v2733
    %v5725 = vmul.f32 %v5706, %v2740
    %v5726 = vmul.f32 %v5708, %v2747
    %v5727 = vmul.f32 %v5710, %v2754
    %v5728 = vmul.f32 %v5712, %v2761
    %5745 = vrot.lane.b32.xlu0 %v5389, 16
    %v5746 = vpop.permute.xlu0 %5745
    %5747 = vrot.lane.b32.xlu0 %v5390, 16
    %v5748 = vpop.permute.xlu0 %5747
    %5749 = vrot.lane.b32.xlu0 %v5391, 16
    %v5750 = vpop.permute.xlu0 %5749
    %5751 = vrot.lane.b32.xlu0 %v5392, 16
    %v5752 = vpop.permute.xlu0 %5751
    %5753 = vrot.lane.b32.xlu0 %v5393, 16
    %v5754 = vpop.permute.xlu0 %5753
    %5755 = vrot.lane.b32.xlu0 %v5394, 16
    %v5756 = vpop.permute.xlu0 %5755
    %5757 = vrot.lane.b32.xlu0 %v5395, 16
    %v5758 = vpop.permute.xlu0 %5757
    %5759 = vrot.lane.b32.xlu0 %v5396, 16
    %v5760 = vpop.permute.xlu0 %5759
    %5761 = vrot.lane.b32.xlu0 %v5397, 16
    %v5762 = vpop.permute.xlu0 %5761
    %5763 = vrot.lane.b32.xlu0 %v5398, 16
    %v5764 = vpop.permute.xlu0 %5763
    %5765 = vrot.lane.b32.xlu0 %v5399, 16
    %v5766 = vpop.permute.xlu0 %5765
    %5767 = vrot.lane.b32.xlu0 %v5400, 16
    %v5768 = vpop.permute.xlu0 %5767
    %5769 = vrot.lane.b32.xlu0 %v5401, 16
    %v5770 = vpop.permute.xlu0 %5769
    %5771 = vrot.lane.b32.xlu0 %v5402, 16
    %v5772 = vpop.permute.xlu0 %5771
    %5773 = vrot.lane.b32.xlu0 %v5403, 16
    %v5774 = vpop.permute.xlu0 %5773
    %5775 = vrot.lane.b32.xlu0 %v5404, 16
    %v5776 = vpop.permute.xlu0 %5775
    %v5793 = vmul.f32 %v4455, %v5746
    %v5794 = vmul.f32 %v4455, %v5748
    %v5795 = vmul.f32 %v4455, %v5750
    %v5796 = vmul.f32 %v4455, %v5752
    %v5797 = vmul.f32 %v4455, %v5754
    %v5798 = vmul.f32 %v4455, %v5756
    %v5799 = vmul.f32 %v4455, %v5758
    %v5800 = vmul.f32 %v4455, %v5760
    %v5801 = vmul.f32 %v4456, %v5762
    %v5802 = vmul.f32 %v4456, %v5764
    %v5803 = vmul.f32 %v4456, %v5766
    %v5804 = vmul.f32 %v4456, %v5768
    %v5805 = vmul.f32 %v4456, %v5770
    %v5806 = vmul.f32 %v4456, %v5772
    %v5807 = vmul.f32 %v4456, %v5774
    %v5808 = vmul.f32 %v4456, %v5776
    %v5809 = vsel %vm4457, %v5793, 0.0
    %v5810 = vrot.slane %v5809, 4
    %v5811 = vadd.f32 %v5809, %v5810
    %v5812 = vrot.slane %v5811, 2
    %v5813 = vadd.f32 %v5811, %v5812
    %v5814 = vrot.slane %v5813, 1
    %v5815 = vadd.f32 %v5813, %v5814
    %v5816 = vsel %vm4457, %v5794, 0.0
    %v5817 = vrot.slane %v5816, 4
    %v5818 = vadd.f32 %v5816, %v5817
    %v5819 = vrot.slane %v5818, 2
    %v5820 = vadd.f32 %v5818, %v5819
    %v5821 = vrot.slane %v5820, 1
    %v5822 = vadd.f32 %v5820, %v5821
    %v5823 = vsel %vm4457, %v5795, 0.0
    %v5824 = vrot.slane %v5823, 4
    %v5825 = vadd.f32 %v5823, %v5824
    %v5826 = vrot.slane %v5825, 2
    %v5827 = vadd.f32 %v5825, %v5826
    %v5828 = vrot.slane %v5827, 1
    %v5829 = vadd.f32 %v5827, %v5828
    %v5830 = vsel %vm4457, %v5796, 0.0
    %v5831 = vrot.slane %v5830, 4
    %v5832 = vadd.f32 %v5830, %v5831
    %v5833 = vrot.slane %v5832, 2
    %v5834 = vadd.f32 %v5832, %v5833
    %v5835 = vrot.slane %v5834, 1
    %v5836 = vadd.f32 %v5834, %v5835
    %v5837 = vsel %vm4457, %v5797, 0.0
    %v5838 = vrot.slane %v5837, 4
    %v5839 = vadd.f32 %v5837, %v5838
    %v5840 = vrot.slane %v5839, 2
    %v5841 = vadd.f32 %v5839, %v5840
    %v5842 = vrot.slane %v5841, 1
    %v5843 = vadd.f32 %v5841, %v5842
    %v5844 = vsel %vm4457, %v5798, 0.0
    %v5845 = vrot.slane %v5844, 4
    %v5846 = vadd.f32 %v5844, %v5845
    %v5847 = vrot.slane %v5846, 2
    %v5848 = vadd.f32 %v5846, %v5847
    %v5849 = vrot.slane %v5848, 1
    %v5850 = vadd.f32 %v5848, %v5849
    %v5851 = vsel %vm4457, %v5799, 0.0
    %v5852 = vrot.slane %v5851, 4
    %v5853 = vadd.f32 %v5851, %v5852
    %v5854 = vrot.slane %v5853, 2
    %v5855 = vadd.f32 %v5853, %v5854
    %v5856 = vrot.slane %v5855, 1
    %v5857 = vadd.f32 %v5855, %v5856
    %v5858 = vsel %vm4457, %v5800, 0.0
    %v5859 = vrot.slane %v5858, 4
    %v5860 = vadd.f32 %v5858, %v5859
    %v5861 = vrot.slane %v5860, 2
    %v5862 = vadd.f32 %v5860, %v5861
    %v5863 = vrot.slane %v5862, 1
    %v5864 = vadd.f32 %v5862, %v5863
    %v5865 = vsel %vm4457, %v5801, 0.0
    %v5866 = vrot.slane %v5865, 4
    %v5867 = vadd.f32 %v5865, %v5866
    %v5868 = vrot.slane %v5867, 2
    %v5869 = vadd.f32 %v5867, %v5868
    %v5870 = vrot.slane %v5869, 1
    %v5871 = vadd.f32 %v5869, %v5870
    %v5872 = vsel %vm4457, %v5802, 0.0
    %v5873 = vrot.slane %v5872, 4
    %v5874 = vadd.f32 %v5872, %v5873
    %v5875 = vrot.slane %v5874, 2
    %v5876 = vadd.f32 %v5874, %v5875
    %v5877 = vrot.slane %v5876, 1
    %v5878 = vadd.f32 %v5876, %v5877
    %v5879 = vsel %vm4457, %v5803, 0.0
    %v5880 = vrot.slane %v5879, 4
    %v5881 = vadd.f32 %v5879, %v5880
    %v5882 = vrot.slane %v5881, 2
    %v5883 = vadd.f32 %v5881, %v5882
    %v5884 = vrot.slane %v5883, 1
    %v5885 = vadd.f32 %v5883, %v5884
    %v5886 = vsel %vm4457, %v5804, 0.0
    %v5887 = vrot.slane %v5886, 4
    %v5888 = vadd.f32 %v5886, %v5887
    %v5889 = vrot.slane %v5888, 2
    %v5890 = vadd.f32 %v5888, %v5889
    %v5891 = vrot.slane %v5890, 1
    %v5892 = vadd.f32 %v5890, %v5891
    %v5893 = vsel %vm4457, %v5805, 0.0
    %v5894 = vrot.slane %v5893, 4
    %v5895 = vadd.f32 %v5893, %v5894
    %v5896 = vrot.slane %v5895, 2
    %v5897 = vadd.f32 %v5895, %v5896
    %v5898 = vrot.slane %v5897, 1
    %v5899 = vadd.f32 %v5897, %v5898
    %v5900 = vsel %vm4457, %v5806, 0.0
    %v5901 = vrot.slane %v5900, 4
    %v5902 = vadd.f32 %v5900, %v5901
    %v5903 = vrot.slane %v5902, 2
    %v5904 = vadd.f32 %v5902, %v5903
    %v5905 = vrot.slane %v5904, 1
    %v5906 = vadd.f32 %v5904, %v5905
    %v5907 = vsel %vm4457, %v5807, 0.0
    %v5908 = vrot.slane %v5907, 4
    %v5909 = vadd.f32 %v5907, %v5908
    %v5910 = vrot.slane %v5909, 2
    %v5911 = vadd.f32 %v5909, %v5910
    %v5912 = vrot.slane %v5911, 1
    %v5913 = vadd.f32 %v5911, %v5912
    %v5914 = vsel %vm4457, %v5808, 0.0
    %v5915 = vrot.slane %v5914, 4
    %v5916 = vadd.f32 %v5914, %v5915
    %v5917 = vrot.slane %v5916, 2
    %v5918 = vadd.f32 %v5916, %v5917
    %v5919 = vrot.slane %v5918, 1
    %v5920 = vadd.f32 %v5918, %v5919
    %5921 = vrot.lane.b32.xlu0 %v5389, 112
    %v5922 = vpop.permute.xlu0 %5921
    %5923 = vrot.lane.b32.xlu0 %v5390, 112
    %v5924 = vpop.permute.xlu0 %5923
    %5925 = vrot.lane.b32.xlu0 %v5391, 112
    %v5926 = vpop.permute.xlu0 %5925
    %5927 = vrot.lane.b32.xlu0 %v5392, 112
    %v5928 = vpop.permute.xlu0 %5927
    %5929 = vrot.lane.b32.xlu0 %v5393, 112
    %v5930 = vpop.permute.xlu0 %5929
    %5931 = vrot.lane.b32.xlu0 %v5394, 112
    %v5932 = vpop.permute.xlu0 %5931
    %5933 = vrot.lane.b32.xlu0 %v5395, 112
    %v5934 = vpop.permute.xlu0 %5933
    %5935 = vrot.lane.b32.xlu0 %v5396, 112
    %v5936 = vpop.permute.xlu0 %5935
    %5937 = vrot.lane.b32.xlu0 %v5397, 112
    %v5938 = vpop.permute.xlu0 %5937
    %5939 = vrot.lane.b32.xlu0 %v5398, 112
    %v5940 = vpop.permute.xlu0 %5939
    %5941 = vrot.lane.b32.xlu0 %v5399, 112
    %v5942 = vpop.permute.xlu0 %5941
    %5943 = vrot.lane.b32.xlu0 %v5400, 112
    %v5944 = vpop.permute.xlu0 %5943
    %5945 = vrot.lane.b32.xlu0 %v5401, 112
    %v5946 = vpop.permute.xlu0 %5945
    %5947 = vrot.lane.b32.xlu0 %v5402, 112
    %v5948 = vpop.permute.xlu0 %5947
    %5949 = vrot.lane.b32.xlu0 %v5403, 112
    %v5950 = vpop.permute.xlu0 %5949
    %5951 = vrot.lane.b32.xlu0 %v5404, 112
    %v5952 = vpop.permute.xlu0 %5951
    %v5969 = vmul.f32 %v715, %v5922
    %v5970 = vmul.f32 %v720, %v5924
    %v5971 = vmul.f32 %v725, %v5926
    %v5972 = vmul.f32 %v730, %v5928
    %v5973 = vmul.f32 %v735, %v5930
    %v5974 = vmul.f32 %v740, %v5932
    %v5975 = vmul.f32 %v745, %v5934
    %v5976 = vmul.f32 %v750, %v5936
    %v5977 = vmul.f32 %v755, %v5938
    %v5978 = vmul.f32 %v760, %v5940
    %v5979 = vmul.f32 %v765, %v5942
    %v5980 = vmul.f32 %v770, %v5944
    %v5981 = vmul.f32 %v775, %v5946
    %v5982 = vmul.f32 %v780, %v5948
    %v5983 = vmul.f32 %v785, %v5950
    %v5984 = vmul.f32 %v790, %v5952
    %v5985 = vsel %vm99, %v5969, 0.0
    %v5986 = vrot.slane %v5985, 4
    %v5987 = vadd.f32 %v5985, %v5986
    %v5988 = vrot.slane %v5987, 2
    %v5989 = vadd.f32 %v5987, %v5988
    %v5990 = vrot.slane %v5989, 1
    %v5991 = vadd.f32 %v5989, %v5990
    %v5992 = vsel %vm99, %v5970, 0.0
    %v5993 = vrot.slane %v5992, 4
    %v5994 = vadd.f32 %v5992, %v5993
    %v5995 = vrot.slane %v5994, 2
    %v5996 = vadd.f32 %v5994, %v5995
    %v5997 = vrot.slane %v5996, 1
    %v5998 = vadd.f32 %v5996, %v5997
    %v5999 = vsel %vm99, %v5971, 0.0
    %v6000 = vrot.slane %v5999, 4
    %v6001 = vadd.f32 %v5999, %v6000
    %v6002 = vrot.slane %v6001, 2
    %v6003 = vadd.f32 %v6001, %v6002
    %v6004 = vrot.slane %v6003, 1
    %v6005 = vadd.f32 %v6003, %v6004
    %v6006 = vsel %vm99, %v5972, 0.0
    %v6007 = vrot.slane %v6006, 4
    %v6008 = vadd.f32 %v6006, %v6007
    %v6009 = vrot.slane %v6008, 2
    %v6010 = vadd.f32 %v6008, %v6009
    %v6011 = vrot.slane %v6010, 1
    %v6012 = vadd.f32 %v6010, %v6011
    %v6013 = vsel %vm99, %v5973, 0.0
    %v6014 = vrot.slane %v6013, 4
    %v6015 = vadd.f32 %v6013, %v6014
    %v6016 = vrot.slane %v6015, 2
    %v6017 = vadd.f32 %v6015, %v6016
    %v6018 = vrot.slane %v6017, 1
    %v6019 = vadd.f32 %v6017, %v6018
    %v6020 = vsel %vm99, %v5974, 0.0
    %v6021 = vrot.slane %v6020, 4
    %v6022 = vadd.f32 %v6020, %v6021
    %v6023 = vrot.slane %v6022, 2
    %v6024 = vadd.f32 %v6022, %v6023
    %v6025 = vrot.slane %v6024, 1
    %v6026 = vadd.f32 %v6024, %v6025
    %v6027 = vsel %vm99, %v5975, 0.0
    %v6028 = vrot.slane %v6027, 4
    %v6029 = vadd.f32 %v6027, %v6028
    %v6030 = vrot.slane %v6029, 2
    %v6031 = vadd.f32 %v6029, %v6030
    %v6032 = vrot.slane %v6031, 1
    %v6033 = vadd.f32 %v6031, %v6032
    %v6034 = vsel %vm99, %v5976, 0.0
    %v6035 = vrot.slane %v6034, 4
    %v6036 = vadd.f32 %v6034, %v6035
    %v6037 = vrot.slane %v6036, 2
    %v6038 = vadd.f32 %v6036, %v6037
    %v6039 = vrot.slane %v6038, 1
    %v6040 = vadd.f32 %v6038, %v6039
    %v6041 = vsel %vm99, %v5977, 0.0
    %v6042 = vrot.slane %v6041, 4
    %v6043 = vadd.f32 %v6041, %v6042
    %v6044 = vrot.slane %v6043, 2
    %v6045 = vadd.f32 %v6043, %v6044
    %v6046 = vrot.slane %v6045, 1
    %v6047 = vadd.f32 %v6045, %v6046
    %v6048 = vsel %vm99, %v5978, 0.0
    %v6049 = vrot.slane %v6048, 4
    %v6050 = vadd.f32 %v6048, %v6049
    %v6051 = vrot.slane %v6050, 2
    %v6052 = vadd.f32 %v6050, %v6051
    %v6053 = vrot.slane %v6052, 1
    %v6054 = vadd.f32 %v6052, %v6053
    %v6055 = vsel %vm99, %v5979, 0.0
    %v6056 = vrot.slane %v6055, 4
    %v6057 = vadd.f32 %v6055, %v6056
    %v6058 = vrot.slane %v6057, 2
    %v6059 = vadd.f32 %v6057, %v6058
    %v6060 = vrot.slane %v6059, 1
    %v6061 = vadd.f32 %v6059, %v6060
    %v6062 = vsel %vm99, %v5980, 0.0
    %v6063 = vrot.slane %v6062, 4
    %v6064 = vadd.f32 %v6062, %v6063
    %v6065 = vrot.slane %v6064, 2
    %v6066 = vadd.f32 %v6064, %v6065
    %v6067 = vrot.slane %v6066, 1
    %v6068 = vadd.f32 %v6066, %v6067
    %v6069 = vsel %vm99, %v5981, 0.0
    %v6070 = vrot.slane %v6069, 4
    %v6071 = vadd.f32 %v6069, %v6070
    %v6072 = vrot.slane %v6071, 2
    %v6073 = vadd.f32 %v6071, %v6072
    %v6074 = vrot.slane %v6073, 1
    %v6075 = vadd.f32 %v6073, %v6074
    %v6076 = vsel %vm99, %v5982, 0.0
    %v6077 = vrot.slane %v6076, 4
    %v6078 = vadd.f32 %v6076, %v6077
    %v6079 = vrot.slane %v6078, 2
    %v6080 = vadd.f32 %v6078, %v6079
    %v6081 = vrot.slane %v6080, 1
    %v6082 = vadd.f32 %v6080, %v6081
    %v6083 = vsel %vm99, %v5983, 0.0
    %v6084 = vrot.slane %v6083, 4
    %v6085 = vadd.f32 %v6083, %v6084
    %v6086 = vrot.slane %v6085, 2
    %v6087 = vadd.f32 %v6085, %v6086
    %v6088 = vrot.slane %v6087, 1
    %v6089 = vadd.f32 %v6087, %v6088
    %v6090 = vsel %vm99, %v5984, 0.0
    %v6091 = vrot.slane %v6090, 4
    %v6092 = vadd.f32 %v6090, %v6091
    %v6093 = vrot.slane %v6092, 2
    %v6094 = vadd.f32 %v6092, %v6093
    %v6095 = vrot.slane %v6094, 1
    %v6096 = vadd.f32 %v6094, %v6095
    %6113 = vrot.lane.b32.xlu0 %v5713, 120
    %v6114 = vpop.permute.xlu0 %6113
    %6115 = vrot.lane.b32.xlu0 %v5714, 120
    %v6116 = vpop.permute.xlu0 %6115
    %6117 = vrot.lane.b32.xlu0 %v5715, 120
    %v6118 = vpop.permute.xlu0 %6117
    %6119 = vrot.lane.b32.xlu0 %v5716, 120
    %v6120 = vpop.permute.xlu0 %6119
    %6121 = vrot.lane.b32.xlu0 %v5717, 120
    %v6122 = vpop.permute.xlu0 %6121
    %6123 = vrot.lane.b32.xlu0 %v5718, 120
    %v6124 = vpop.permute.xlu0 %6123
    %6125 = vrot.lane.b32.xlu0 %v5719, 120
    %v6126 = vpop.permute.xlu0 %6125
    %6127 = vrot.lane.b32.xlu0 %v5720, 120
    %v6128 = vpop.permute.xlu0 %6127
    %6129 = vrot.lane.b32.xlu0 %v5721, 120
    %v6130 = vpop.permute.xlu0 %6129
    %6131 = vrot.lane.b32.xlu0 %v5722, 120
    %v6132 = vpop.permute.xlu0 %6131
    %6133 = vrot.lane.b32.xlu0 %v5723, 120
    %v6134 = vpop.permute.xlu0 %6133
    %6135 = vrot.lane.b32.xlu0 %v5724, 120
    %v6136 = vpop.permute.xlu0 %6135
    %6137 = vrot.lane.b32.xlu0 %v5725, 120
    %v6138 = vpop.permute.xlu0 %6137
    %6139 = vrot.lane.b32.xlu0 %v5726, 120
    %v6140 = vpop.permute.xlu0 %6139
    %6141 = vrot.lane.b32.xlu0 %v5727, 120
    %v6142 = vpop.permute.xlu0 %6141
    %6143 = vrot.lane.b32.xlu0 %v5728, 120
    %v6144 = vpop.permute.xlu0 %6143
    %v6161 = vmul.f32 %v3979, %v6114
    %v6162 = vmul.f32 %v3979, %v6116
    %v6163 = vmul.f32 %v3979, %v6118
    %v6164 = vmul.f32 %v3979, %v6120
    %v6165 = vmul.f32 %v3979, %v6122
    %v6166 = vmul.f32 %v3979, %v6124
    %v6167 = vmul.f32 %v3979, %v6126
    %v6168 = vmul.f32 %v3979, %v6128
    %v6169 = vmul.f32 %v3980, %v6130
    %v6170 = vmul.f32 %v3980, %v6132
    %v6171 = vmul.f32 %v3980, %v6134
    %v6172 = vmul.f32 %v3980, %v6136
    %v6173 = vmul.f32 %v3980, %v6138
    %v6174 = vmul.f32 %v3980, %v6140
    %v6175 = vmul.f32 %v3980, %v6142
    %v6176 = vmul.f32 %v3980, %v6144
    %v6177 = vsel %vm4457, %v6161, 0.0
    %v6178 = vrot.slane %v6177, 4
    %v6179 = vadd.f32 %v6177, %v6178
    %v6180 = vrot.slane %v6179, 2
    %v6181 = vadd.f32 %v6179, %v6180
    %v6182 = vrot.slane %v6181, 1
    %v6183 = vadd.f32 %v6181, %v6182
    %v6184 = vsel %vm4457, %v6162, 0.0
    %v6185 = vrot.slane %v6184, 4
    %v6186 = vadd.f32 %v6184, %v6185
    %v6187 = vrot.slane %v6186, 2
    %v6188 = vadd.f32 %v6186, %v6187
    %v6189 = vrot.slane %v6188, 1
    %v6190 = vadd.f32 %v6188, %v6189
    %v6191 = vsel %vm4457, %v6163, 0.0
    %v6192 = vrot.slane %v6191, 4
    %v6193 = vadd.f32 %v6191, %v6192
    %v6194 = vrot.slane %v6193, 2
    %v6195 = vadd.f32 %v6193, %v6194
    %v6196 = vrot.slane %v6195, 1
    %v6197 = vadd.f32 %v6195, %v6196
    %v6198 = vsel %vm4457, %v6164, 0.0
    %v6199 = vrot.slane %v6198, 4
    %v6200 = vadd.f32 %v6198, %v6199
    %v6201 = vrot.slane %v6200, 2
    %v6202 = vadd.f32 %v6200, %v6201
    %v6203 = vrot.slane %v6202, 1
    %v6204 = vadd.f32 %v6202, %v6203
    %v6205 = vsel %vm4457, %v6165, 0.0
    %v6206 = vrot.slane %v6205, 4
    %v6207 = vadd.f32 %v6205, %v6206
    %v6208 = vrot.slane %v6207, 2
    %v6209 = vadd.f32 %v6207, %v6208
    %v6210 = vrot.slane %v6209, 1
    %v6211 = vadd.f32 %v6209, %v6210
    %v6212 = vsel %vm4457, %v6166, 0.0
    %v6213 = vrot.slane %v6212, 4
    %v6214 = vadd.f32 %v6212, %v6213
    %v6215 = vrot.slane %v6214, 2
    %v6216 = vadd.f32 %v6214, %v6215
    %v6217 = vrot.slane %v6216, 1
    %v6218 = vadd.f32 %v6216, %v6217
    %v6219 = vsel %vm4457, %v6167, 0.0
    %v6220 = vrot.slane %v6219, 4
    %v6221 = vadd.f32 %v6219, %v6220
    %v6222 = vrot.slane %v6221, 2
    %v6223 = vadd.f32 %v6221, %v6222
    %v6224 = vrot.slane %v6223, 1
    %v6225 = vadd.f32 %v6223, %v6224
    %v6226 = vsel %vm4457, %v6168, 0.0
    %v6227 = vrot.slane %v6226, 4
    %v6228 = vadd.f32 %v6226, %v6227
    %v6229 = vrot.slane %v6228, 2
    %v6230 = vadd.f32 %v6228, %v6229
    %v6231 = vrot.slane %v6230, 1
    %v6232 = vadd.f32 %v6230, %v6231
    %v6233 = vsel %vm4457, %v6169, 0.0
    %v6234 = vrot.slane %v6233, 4
    %v6235 = vadd.f32 %v6233, %v6234
    %v6236 = vrot.slane %v6235, 2
    %v6237 = vadd.f32 %v6235, %v6236
    %v6238 = vrot.slane %v6237, 1
    %v6239 = vadd.f32 %v6237, %v6238
    %v6240 = vsel %vm4457, %v6170, 0.0
    %v6241 = vrot.slane %v6240, 4
    %v6242 = vadd.f32 %v6240, %v6241
    %v6243 = vrot.slane %v6242, 2
    %v6244 = vadd.f32 %v6242, %v6243
    %v6245 = vrot.slane %v6244, 1
    %v6246 = vadd.f32 %v6244, %v6245
    %v6247 = vsel %vm4457, %v6171, 0.0
    %v6248 = vrot.slane %v6247, 4
    %v6249 = vadd.f32 %v6247, %v6248
    %v6250 = vrot.slane %v6249, 2
    %v6251 = vadd.f32 %v6249, %v6250
    %v6252 = vrot.slane %v6251, 1
    %v6253 = vadd.f32 %v6251, %v6252
    %v6254 = vsel %vm4457, %v6172, 0.0
    %v6255 = vrot.slane %v6254, 4
    %v6256 = vadd.f32 %v6254, %v6255
    %v6257 = vrot.slane %v6256, 2
    %v6258 = vadd.f32 %v6256, %v6257
    %v6259 = vrot.slane %v6258, 1
    %v6260 = vadd.f32 %v6258, %v6259
    %v6261 = vsel %vm4457, %v6173, 0.0
    %v6262 = vrot.slane %v6261, 4
    %v6263 = vadd.f32 %v6261, %v6262
    %v6264 = vrot.slane %v6263, 2
    %v6265 = vadd.f32 %v6263, %v6264
    %v6266 = vrot.slane %v6265, 1
    %v6267 = vadd.f32 %v6265, %v6266
    %v6268 = vsel %vm4457, %v6174, 0.0
    %v6269 = vrot.slane %v6268, 4
    %v6270 = vadd.f32 %v6268, %v6269
    %v6271 = vrot.slane %v6270, 2
    %v6272 = vadd.f32 %v6270, %v6271
    %v6273 = vrot.slane %v6272, 1
    %v6274 = vadd.f32 %v6272, %v6273
    %v6275 = vsel %vm4457, %v6175, 0.0
    %v6276 = vrot.slane %v6275, 4
    %v6277 = vadd.f32 %v6275, %v6276
    %v6278 = vrot.slane %v6277, 2
    %v6279 = vadd.f32 %v6277, %v6278
    %v6280 = vrot.slane %v6279, 1
    %v6281 = vadd.f32 %v6279, %v6280
    %v6282 = vsel %vm4457, %v6176, 0.0
    %v6283 = vrot.slane %v6282, 4
    %v6284 = vadd.f32 %v6282, %v6283
    %v6285 = vrot.slane %v6284, 2
    %v6286 = vadd.f32 %v6284, %v6285
    %v6287 = vrot.slane %v6286, 1
    %v6288 = vadd.f32 %v6286, %v6287
    %6289 = vrot.lane.b32.xlu0 %v5713, 88
    %v6290 = vpop.permute.xlu0 %6289
    %6291 = vrot.lane.b32.xlu0 %v5714, 88
    %v6292 = vpop.permute.xlu0 %6291
    %6293 = vrot.lane.b32.xlu0 %v5715, 88
    %v6294 = vpop.permute.xlu0 %6293
    %6295 = vrot.lane.b32.xlu0 %v5716, 88
    %v6296 = vpop.permute.xlu0 %6295
    %6297 = vrot.lane.b32.xlu0 %v5717, 88
    %v6298 = vpop.permute.xlu0 %6297
    %6299 = vrot.lane.b32.xlu0 %v5718, 88
    %v6300 = vpop.permute.xlu0 %6299
    %6301 = vrot.lane.b32.xlu0 %v5719, 88
    %v6302 = vpop.permute.xlu0 %6301
    %6303 = vrot.lane.b32.xlu0 %v5720, 88
    %v6304 = vpop.permute.xlu0 %6303
    %6305 = vrot.lane.b32.xlu0 %v5721, 88
    %v6306 = vpop.permute.xlu0 %6305
    %6307 = vrot.lane.b32.xlu0 %v5722, 88
    %v6308 = vpop.permute.xlu0 %6307
    %6309 = vrot.lane.b32.xlu0 %v5723, 88
    %v6310 = vpop.permute.xlu0 %6309
    %6311 = vrot.lane.b32.xlu0 %v5724, 88
    %v6312 = vpop.permute.xlu0 %6311
    %6313 = vrot.lane.b32.xlu0 %v5725, 88
    %v6314 = vpop.permute.xlu0 %6313
    %6315 = vrot.lane.b32.xlu0 %v5726, 88
    %v6316 = vpop.permute.xlu0 %6315
    %6317 = vrot.lane.b32.xlu0 %v5727, 88
    %v6318 = vpop.permute.xlu0 %6317
    %6319 = vrot.lane.b32.xlu0 %v5728, 88
    %v6320 = vpop.permute.xlu0 %6319
    %v6337 = vmul.f32 %v908, %v6290
    %v6338 = vmul.f32 %v913, %v6292
    %v6339 = vmul.f32 %v918, %v6294
    %v6340 = vmul.f32 %v923, %v6296
    %v6341 = vmul.f32 %v928, %v6298
    %v6342 = vmul.f32 %v933, %v6300
    %v6343 = vmul.f32 %v938, %v6302
    %v6344 = vmul.f32 %v943, %v6304
    %v6345 = vmul.f32 %v948, %v6306
    %v6346 = vmul.f32 %v953, %v6308
    %v6347 = vmul.f32 %v958, %v6310
    %v6348 = vmul.f32 %v963, %v6312
    %v6349 = vmul.f32 %v968, %v6314
    %v6350 = vmul.f32 %v973, %v6316
    %v6351 = vmul.f32 %v978, %v6318
    %v6352 = vmul.f32 %v983, %v6320
    %v6353 = vsel %vm99, %v6337, 0.0
    %v6354 = vrot.slane %v6353, 4
    %v6355 = vadd.f32 %v6353, %v6354
    %v6356 = vrot.slane %v6355, 2
    %v6357 = vadd.f32 %v6355, %v6356
    %v6358 = vrot.slane %v6357, 1
    %v6359 = vadd.f32 %v6357, %v6358
    %v6360 = vsel %vm99, %v6338, 0.0
    %v6361 = vrot.slane %v6360, 4
    %v6362 = vadd.f32 %v6360, %v6361
    %v6363 = vrot.slane %v6362, 2
    %v6364 = vadd.f32 %v6362, %v6363
    %v6365 = vrot.slane %v6364, 1
    %v6366 = vadd.f32 %v6364, %v6365
    %v6367 = vsel %vm99, %v6339, 0.0
    %v6368 = vrot.slane %v6367, 4
    %v6369 = vadd.f32 %v6367, %v6368
    %v6370 = vrot.slane %v6369, 2
    %v6371 = vadd.f32 %v6369, %v6370
    %v6372 = vrot.slane %v6371, 1
    %v6373 = vadd.f32 %v6371, %v6372
    %v6374 = vsel %vm99, %v6340, 0.0
    %v6375 = vrot.slane %v6374, 4
    %v6376 = vadd.f32 %v6374, %v6375
    %v6377 = vrot.slane %v6376, 2
    %v6378 = vadd.f32 %v6376, %v6377
    %v6379 = vrot.slane %v6378, 1
    %v6380 = vadd.f32 %v6378, %v6379
    %v6381 = vsel %vm99, %v6341, 0.0
    %v6382 = vrot.slane %v6381, 4
    %v6383 = vadd.f32 %v6381, %v6382
    %v6384 = vrot.slane %v6383, 2
    %v6385 = vadd.f32 %v6383, %v6384
    %v6386 = vrot.slane %v6385, 1
    %v6387 = vadd.f32 %v6385, %v6386
    %v6388 = vsel %vm99, %v6342, 0.0
    %v6389 = vrot.slane %v6388, 4
    %v6390 = vadd.f32 %v6388, %v6389
    %v6391 = vrot.slane %v6390, 2
    %v6392 = vadd.f32 %v6390, %v6391
    %v6393 = vrot.slane %v6392, 1
    %v6394 = vadd.f32 %v6392, %v6393
    %v6395 = vsel %vm99, %v6343, 0.0
    %v6396 = vrot.slane %v6395, 4
    %v6397 = vadd.f32 %v6395, %v6396
    %v6398 = vrot.slane %v6397, 2
    %v6399 = vadd.f32 %v6397, %v6398
    %v6400 = vrot.slane %v6399, 1
    %v6401 = vadd.f32 %v6399, %v6400
    %v6402 = vsel %vm99, %v6344, 0.0
    %v6403 = vrot.slane %v6402, 4
    %v6404 = vadd.f32 %v6402, %v6403
    %v6405 = vrot.slane %v6404, 2
    %v6406 = vadd.f32 %v6404, %v6405
    %v6407 = vrot.slane %v6406, 1
    %v6408 = vadd.f32 %v6406, %v6407
    %v6409 = vsel %vm99, %v6345, 0.0
    %v6410 = vrot.slane %v6409, 4
    %v6411 = vadd.f32 %v6409, %v6410
    %v6412 = vrot.slane %v6411, 2
    %v6413 = vadd.f32 %v6411, %v6412
    %v6414 = vrot.slane %v6413, 1
    %v6415 = vadd.f32 %v6413, %v6414
    %v6416 = vsel %vm99, %v6346, 0.0
    %v6417 = vrot.slane %v6416, 4
    %v6418 = vadd.f32 %v6416, %v6417
    %v6419 = vrot.slane %v6418, 2
    %v6420 = vadd.f32 %v6418, %v6419
    %v6421 = vrot.slane %v6420, 1
    %v6422 = vadd.f32 %v6420, %v6421
    %v6423 = vsel %vm99, %v6347, 0.0
    %v6424 = vrot.slane %v6423, 4
    %v6425 = vadd.f32 %v6423, %v6424
    %v6426 = vrot.slane %v6425, 2
    %v6427 = vadd.f32 %v6425, %v6426
    %v6428 = vrot.slane %v6427, 1
    %v6429 = vadd.f32 %v6427, %v6428
    %v6430 = vsel %vm99, %v6348, 0.0
    %v6431 = vrot.slane %v6430, 4
    %v6432 = vadd.f32 %v6430, %v6431
    %v6433 = vrot.slane %v6432, 2
    %v6434 = vadd.f32 %v6432, %v6433
    %v6435 = vrot.slane %v6434, 1
    %v6436 = vadd.f32 %v6434, %v6435
    %v6437 = vsel %vm99, %v6349, 0.0
    %v6438 = vrot.slane %v6437, 4
    %v6439 = vadd.f32 %v6437, %v6438
    %v6440 = vrot.slane %v6439, 2
    %v6441 = vadd.f32 %v6439, %v6440
    %v6442 = vrot.slane %v6441, 1
    %v6443 = vadd.f32 %v6441, %v6442
    %v6444 = vsel %vm99, %v6350, 0.0
    %v6445 = vrot.slane %v6444, 4
    %v6446 = vadd.f32 %v6444, %v6445
    %v6447 = vrot.slane %v6446, 2
    %v6448 = vadd.f32 %v6446, %v6447
    %v6449 = vrot.slane %v6448, 1
    %v6450 = vadd.f32 %v6448, %v6449
    %v6451 = vsel %vm99, %v6351, 0.0
    %v6452 = vrot.slane %v6451, 4
    %v6453 = vadd.f32 %v6451, %v6452
    %v6454 = vrot.slane %v6453, 2
    %v6455 = vadd.f32 %v6453, %v6454
    %v6456 = vrot.slane %v6455, 1
    %v6457 = vadd.f32 %v6455, %v6456
    %v6458 = vsel %vm99, %v6352, 0.0
    %v6459 = vrot.slane %v6458, 4
    %v6460 = vadd.f32 %v6458, %v6459
    %v6461 = vrot.slane %v6460, 2
    %v6462 = vadd.f32 %v6460, %v6461
    %v6463 = vrot.slane %v6462, 1
    %v6464 = vadd.f32 %v6462, %v6463
    %v6466 = vsel %vm1323, %v4840, 0
    %v6469 = vsel %vm1323, %v4914, 0
    %6471 = vmatprep.subr.mxu0 0.0
    %6472 = vmatpush1.msra.mxu0 %v43
    %6473 = vmatprep.subr.mxu0 0.0
    %6474 = vmatpush1.msra.mxu0 %v44
    %6475 = vmatprep.subr.mxu0 0.0
    %6476 = vmatpush1.msra.mxu0 0.0
    %6477 = vmatprep.subr.mxu0 0.0
    %6478 = vmatpush1.msra.mxu0 0.0
    %6479 = vmatprep.subr.mxu0 0.0
    %6480 = vmatpush1.msra.mxu0 0.0
    %6481 = vmatprep.subr.mxu0 0.0
    %6482 = vmatpush1.msra.mxu0 0.0
    %6483 = vmatprep.subr.mxu0 0.0
    %6484 = vmatpush1.msra.mxu0 0.0
    %6485 = vmatprep.subr.mxu0 0.0
    %6486 = vmatpush1.msra.mxu0 0.0
    %6487 = vmatprep.subr.mxu0 0.0
    %6488 = vmatpush1.msra.mxu0 0.0
    %6489 = vmatprep.subr.mxu0 0.0
    %6490 = vmatpush1.msra.mxu0 0.0
    %6491 = vmatprep.subr.mxu0 0.0
    %6492 = vmatpush1.msra.mxu0 0.0
    %6493 = vmatprep.subr.mxu0 0.0
    %6494 = vmatpush1.msra.mxu0 0.0
    %6495 = vmatprep.subr.mxu0 0.0
    %6496 = vmatpush1.msra.mxu0 0.0
    %6497 = vmatprep.subr.mxu0 0.0
    %6498 = vmatpush1.msra.mxu0 0.0
    %6499 = vmatprep.subr.mxu0 0.0
    %6500 = vmatpush1.msra.mxu0 0.0
    %6501 = vmatprep.subr.mxu0 0.0
    %6502 = vmatpush1.msra.mxu0 0.0
    %6503 = vmatprep.subr.mxu0 0.0
    %6504 = vmatpush1.msra.mxu0 0.0
    %6505 = vmatprep.subr.mxu0 0.0
    %6506 = vmatpush1.msra.mxu0 0.0
    %6507 = vmatprep.subr.mxu0 0.0
    %6508 = vmatpush1.msra.mxu0 0.0
    %6509 = vmatprep.subr.mxu0 0.0
    %6510 = vmatpush1.msra.mxu0 0.0
    %6511 = vmatprep.subr.mxu0 0.0
    %6512 = vmatpush1.msra.mxu0 0.0
    %6513 = vmatprep.subr.mxu0 0.0
    %6514 = vmatpush1.msra.mxu0 0.0
    %6515 = vmatprep.subr.mxu0 0.0
    %6516 = vmatpush1.msra.mxu0 0.0
    %6517 = vmatprep.subr.mxu0 0.0
    %6518 = vmatpush1.msra.mxu0 0.0
    %6519 = vmatprep.subr.mxu0 0.0
    %6520 = vmatpush1.msra.mxu0 0.0
    %6521 = vmatprep.subr.mxu0 0.0
    %6522 = vmatpush1.msra.mxu0 0.0
    %6523 = vmatprep.subr.mxu0 0.0
    %6524 = vmatpush1.msra.mxu0 0.0
    %6525 = vmatprep.subr.mxu0 0.0
    %6526 = vmatpush1.msra.mxu0 0.0
    %6527 = vmatprep.subr.mxu0 0.0
    %6528 = vmatpush1.msra.mxu0 0.0
    %6529 = vmatprep.subr.mxu0 0.0
    %6530 = vmatpush1.msra.mxu0 0.0
    %6531 = vmatprep.subr.mxu0 0.0
    %6532 = vmatpush1.msra.mxu0 0.0
    %6533 = vmatprep.subr.mxu0 0.0
    %6534 = vmatpush1.msra.mxu0 0.0
    %6535 = vmatprep.mubr.f32.mxu0 0.0
    %6536 = vmatmul.mubr.f32.gmra.mrb[0].mxu0 %v6466
    %v6537 = vpop.f32.mrb[0].mxu0
    %v6538 = vadd.f32 0.0, %v6537
    %v6539 = vpop.f32.mrb[0].mxu0
    %6540 = vmatprep.mubr.f32.mxu0 0.0
    %6541 = vmatmul.mubr.f32.gmra.mrb[0].mxu0 %v6469
    %v6542 = vpop.f32.mrb[0].mxu0
    %v6543 = vadd.f32 0.0, %v6542
    %v6544 = vpop.f32.mrb[0].mxu0
    %6545 = vdwg.mxu0
    %v6546 = vadd.f32 %v1409, %v6538
    %v6547 = vadd.f32 %v1410, %v6543
    %v6564 = vsel %vm3518, %v5822, %v5815
    %v6565 = vsel %vm3520, %v5829, %v6564
    %v6566 = vsel %vm3522, %v5836, %v6565
    %v6567 = vsel %vm3524, %v5843, %v6566
    %v6568 = vsel %vm3526, %v5850, %v6567
    %v6569 = vsel %vm3528, %v5857, %v6568
    %v6570 = vsel %vm3530, %v5864, %v6569
    %v6571 = vsel %vm3518, %v5878, %v5871
    %v6572 = vsel %vm3520, %v5885, %v6571
    %v6573 = vsel %vm3522, %v5892, %v6572
    %v6574 = vsel %vm3524, %v5899, %v6573
    %v6575 = vsel %vm3526, %v5906, %v6574
    %v6576 = vsel %vm3528, %v5913, %v6575
    %v6577 = vsel %vm3530, %v5920, %v6576
    %6578 = vrot.lane.b32.xlu0 %v6570, 112
    %v6579 = vpop.permute.xlu0 %6578
    %6580 = vrot.lane.b32.xlu0 %v6577, 112
    %v6581 = vpop.permute.xlu0 %6580
    %v6582 = vsel %vm1323, %v6579, 0
    %v6584 = vsel %vm1323, %v6581, 0
    %6586 = vmatprep.subr.mxu0 0.0
    %6587 = vmatpush1.msra.mxu0 %v45
    %6588 = vmatprep.subr.mxu0 0.0
    %6589 = vmatpush1.msra.mxu0 %v46
    %6590 = vmatprep.subr.mxu0 0.0
    %6591 = vmatpush1.msra.mxu0 0.0
    %6592 = vmatprep.subr.mxu0 0.0
    %6593 = vmatpush1.msra.mxu0 0.0
    %6594 = vmatprep.subr.mxu0 0.0
    %6595 = vmatpush1.msra.mxu0 0.0
    %6596 = vmatprep.subr.mxu0 0.0
    %6597 = vmatpush1.msra.mxu0 0.0
    %6598 = vmatprep.subr.mxu0 0.0
    %6599 = vmatpush1.msra.mxu0 0.0
    %6600 = vmatprep.subr.mxu0 0.0
    %6601 = vmatpush1.msra.mxu0 0.0
    %6602 = vmatprep.subr.mxu0 0.0
    %6603 = vmatpush1.msra.mxu0 0.0
    %6604 = vmatprep.subr.mxu0 0.0
    %6605 = vmatpush1.msra.mxu0 0.0
    %6606 = vmatprep.subr.mxu0 0.0
    %6607 = vmatpush1.msra.mxu0 0.0
    %6608 = vmatprep.subr.mxu0 0.0
    %6609 = vmatpush1.msra.mxu0 0.0
    %6610 = vmatprep.subr.mxu0 0.0
    %6611 = vmatpush1.msra.mxu0 0.0
    %6612 = vmatprep.subr.mxu0 0.0
    %6613 = vmatpush1.msra.mxu0 0.0
    %6614 = vmatprep.subr.mxu0 0.0
    %6615 = vmatpush1.msra.mxu0 0.0
    %6616 = vmatprep.subr.mxu0 0.0
    %6617 = vmatpush1.msra.mxu0 0.0
    %6618 = vmatprep.subr.mxu0 0.0
    %6619 = vmatpush1.msra.mxu0 0.0
    %6620 = vmatprep.subr.mxu0 0.0
    %6621 = vmatpush1.msra.mxu0 0.0
    %6622 = vmatprep.subr.mxu0 0.0
    %6623 = vmatpush1.msra.mxu0 0.0
    %6624 = vmatprep.subr.mxu0 0.0
    %6625 = vmatpush1.msra.mxu0 0.0
    %6626 = vmatprep.subr.mxu0 0.0
    %6627 = vmatpush1.msra.mxu0 0.0
    %6628 = vmatprep.subr.mxu0 0.0
    %6629 = vmatpush1.msra.mxu0 0.0
    %6630 = vmatprep.subr.mxu0 0.0
    %6631 = vmatpush1.msra.mxu0 0.0
    %6632 = vmatprep.subr.mxu0 0.0
    %6633 = vmatpush1.msra.mxu0 0.0
    %6634 = vmatprep.subr.mxu0 0.0
    %6635 = vmatpush1.msra.mxu0 0.0
    %6636 = vmatprep.subr.mxu0 0.0
    %6637 = vmatpush1.msra.mxu0 0.0
    %6638 = vmatprep.subr.mxu0 0.0
    %6639 = vmatpush1.msra.mxu0 0.0
    %6640 = vmatprep.subr.mxu0 0.0
    %6641 = vmatpush1.msra.mxu0 0.0
    %6642 = vmatprep.subr.mxu0 0.0
    %6643 = vmatpush1.msra.mxu0 0.0
    %6644 = vmatprep.subr.mxu0 0.0
    %6645 = vmatpush1.msra.mxu0 0.0
    %6646 = vmatprep.subr.mxu0 0.0
    %6647 = vmatpush1.msra.mxu0 0.0
    %6648 = vmatprep.subr.mxu0 0.0
    %6649 = vmatpush1.msra.mxu0 0.0
    %6650 = vmatprep.mubr.f32.mxu0 0.0
    %6651 = vmatmul.mubr.f32.gmra.mrb[0].mxu0 %v6582
    %v6652 = vpop.f32.mrb[0].mxu0
    %v6653 = vadd.f32 0.0, %v6652
    %v6654 = vpop.f32.mrb[0].mxu0
    %6655 = vmatprep.mubr.f32.mxu0 0.0
    %6656 = vmatmul.mubr.f32.gmra.mrb[0].mxu0 %v6584
    %v6657 = vpop.f32.mrb[0].mxu0
    %v6658 = vadd.f32 0.0, %v6657
    %v6659 = vpop.f32.mrb[0].mxu0
    %6660 = vdwg.mxu0
    %v6661 = vadd.f32 %v6546, %v6653
    %v6662 = vadd.f32 %v6547, %v6658
    %v6679 = vsel %vm3518, %v5998, %v5991
    %v6680 = vsel %vm3520, %v6005, %v6679
    %v6681 = vsel %vm3522, %v6012, %v6680
    %v6682 = vsel %vm3524, %v6019, %v6681
    %v6683 = vsel %vm3526, %v6026, %v6682
    %v6684 = vsel %vm3528, %v6033, %v6683
    %v6685 = vsel %vm3530, %v6040, %v6684
    %v6686 = vsel %vm3518, %v6054, %v6047
    %v6687 = vsel %vm3520, %v6061, %v6686
    %v6688 = vsel %vm3522, %v6068, %v6687
    %v6689 = vsel %vm3524, %v6075, %v6688
    %v6690 = vsel %vm3526, %v6082, %v6689
    %v6691 = vsel %vm3528, %v6089, %v6690
    %v6692 = vsel %vm3530, %v6096, %v6691
    %v6693 = vsel %vm99, %v6685, 0
    %v6695 = vsel %vm99, %v6692, 0
    %6697 = vmatprep.subr.mxu0 0.0
    %6698 = vmatpush1.msra.mxu0 %v47
    %6699 = vmatprep.subr.mxu0 0.0
    %6700 = vmatpush1.msra.mxu0 0.0
    %6701 = vmatprep.subr.mxu0 0.0
    %6702 = vmatpush1.msra.mxu0 0.0
    %6703 = vmatprep.subr.mxu0 0.0
    %6704 = vmatpush1.msra.mxu0 0.0
    %6705 = vmatprep.subr.mxu0 0.0
    %6706 = vmatpush1.msra.mxu0 0.0
    %6707 = vmatprep.subr.mxu0 0.0
    %6708 = vmatpush1.msra.mxu0 0.0
    %6709 = vmatprep.subr.mxu0 0.0
    %6710 = vmatpush1.msra.mxu0 0.0
    %6711 = vmatprep.subr.mxu0 0.0
    %6712 = vmatpush1.msra.mxu0 0.0
    %6713 = vmatprep.subr.mxu0 0.0
    %6714 = vmatpush1.msra.mxu0 0.0
    %6715 = vmatprep.subr.mxu0 0.0
    %6716 = vmatpush1.msra.mxu0 0.0
    %6717 = vmatprep.subr.mxu0 0.0
    %6718 = vmatpush1.msra.mxu0 0.0
    %6719 = vmatprep.subr.mxu0 0.0
    %6720 = vmatpush1.msra.mxu0 0.0
    %6721 = vmatprep.subr.mxu0 0.0
    %6722 = vmatpush1.msra.mxu0 0.0
    %6723 = vmatprep.subr.mxu0 0.0
    %6724 = vmatpush1.msra.mxu0 0.0
    %6725 = vmatprep.subr.mxu0 0.0
    %6726 = vmatpush1.msra.mxu0 0.0
    %6727 = vmatprep.subr.mxu0 0.0
    %6728 = vmatpush1.msra.mxu0 0.0
    %6729 = vmatprep.subr.mxu0 0.0
    %6730 = vmatpush1.msra.mxu0 0.0
    %6731 = vmatprep.subr.mxu0 0.0
    %6732 = vmatpush1.msra.mxu0 0.0
    %6733 = vmatprep.subr.mxu0 0.0
    %6734 = vmatpush1.msra.mxu0 0.0
    %6735 = vmatprep.subr.mxu0 0.0
    %6736 = vmatpush1.msra.mxu0 0.0
    %6737 = vmatprep.subr.mxu0 0.0
    %6738 = vmatpush1.msra.mxu0 0.0
    %6739 = vmatprep.subr.mxu0 0.0
    %6740 = vmatpush1.msra.mxu0 0.0
    %6741 = vmatprep.subr.mxu0 0.0
    %6742 = vmatpush1.msra.mxu0 0.0
    %6743 = vmatprep.subr.mxu0 0.0
    %6744 = vmatpush1.msra.mxu0 0.0
    %6745 = vmatprep.subr.mxu0 0.0
    %6746 = vmatpush1.msra.mxu0 0.0
    %6747 = vmatprep.subr.mxu0 0.0
    %6748 = vmatpush1.msra.mxu0 0.0
    %6749 = vmatprep.subr.mxu0 0.0
    %6750 = vmatpush1.msra.mxu0 0.0
    %6751 = vmatprep.subr.mxu0 0.0
    %6752 = vmatpush1.msra.mxu0 0.0
    %6753 = vmatprep.subr.mxu0 0.0
    %6754 = vmatpush1.msra.mxu0 0.0
    %6755 = vmatprep.subr.mxu0 0.0
    %6756 = vmatpush1.msra.mxu0 0.0
    %6757 = vmatprep.subr.mxu0 0.0
    %6758 = vmatpush1.msra.mxu0 0.0
    %6759 = vmatprep.subr.mxu0 0.0
    %6760 = vmatpush1.msra.mxu0 0.0
    %6761 = vmatprep.mubr.f32.mxu0 0.0
    %6762 = vmatmul.mubr.f32.gmra.mrb[0].mxu0 %v6693
    %v6763 = vpop.f32.mrb[0].mxu0
    %v6764 = vadd.f32 0.0, %v6763
    %v6765 = vpop.f32.mrb[0].mxu0
    %6766 = vmatprep.mubr.f32.mxu0 0.0
    %6767 = vmatmul.mubr.f32.gmra.mrb[0].mxu0 %v6695
    %v6768 = vpop.f32.mrb[0].mxu0
    %v6769 = vadd.f32 0.0, %v6768
    %v6770 = vpop.f32.mrb[0].mxu0
    %6771 = vdwg.mxu0
    %v6772 = vadd.f32 %v6661, %v6764
    %v6773 = vadd.f32 %v6662, %v6769
    %6775 = vrot.lane.b32.xlu0 %v4768, 112
    %v6776 = vpop.permute.xlu0 %6775
    %v6777 = vsel %vm1323, %v6776, 0
    %6779 = vmatprep.subr.mxu0 0.0
    %6780 = vmatpush1.msra.mxu0 %v48
    %6781 = vmatprep.subr.mxu0 0.0
    %6782 = vmatpush1.msra.mxu0 %v49
    %6783 = vmatprep.subr.mxu0 0.0
    %6784 = vmatpush1.msra.mxu0 0.0
    %6785 = vmatprep.subr.mxu0 0.0
    %6786 = vmatpush1.msra.mxu0 0.0
    %6787 = vmatprep.subr.mxu0 0.0
    %6788 = vmatpush1.msra.mxu0 0.0
    %6789 = vmatprep.subr.mxu0 0.0
    %6790 = vmatpush1.msra.mxu0 0.0
    %6791 = vmatprep.subr.mxu0 0.0
    %6792 = vmatpush1.msra.mxu0 0.0
    %6793 = vmatprep.subr.mxu0 0.0
    %6794 = vmatpush1.msra.mxu0 0.0
    %6795 = vmatprep.subr.mxu0 0.0
    %6796 = vmatpush1.msra.mxu0 0.0
    %6797 = vmatprep.subr.mxu0 0.0
    %6798 = vmatpush1.msra.mxu0 0.0
    %6799 = vmatprep.subr.mxu0 0.0
    %6800 = vmatpush1.msra.mxu0 0.0
    %6801 = vmatprep.subr.mxu0 0.0
    %6802 = vmatpush1.msra.mxu0 0.0
    %6803 = vmatprep.subr.mxu0 0.0
    %6804 = vmatpush1.msra.mxu0 0.0
    %6805 = vmatprep.subr.mxu0 0.0
    %6806 = vmatpush1.msra.mxu0 0.0
    %6807 = vmatprep.subr.mxu0 0.0
    %6808 = vmatpush1.msra.mxu0 0.0
    %6809 = vmatprep.subr.mxu0 0.0
    %6810 = vmatpush1.msra.mxu0 0.0
    %6811 = vmatprep.subr.mxu0 0.0
    %6812 = vmatpush1.msra.mxu0 0.0
    %6813 = vmatprep.subr.mxu0 0.0
    %6814 = vmatpush1.msra.mxu0 0.0
    %6815 = vmatprep.subr.mxu0 0.0
    %6816 = vmatpush1.msra.mxu0 0.0
    %6817 = vmatprep.subr.mxu0 0.0
    %6818 = vmatpush1.msra.mxu0 0.0
    %6819 = vmatprep.subr.mxu0 0.0
    %6820 = vmatpush1.msra.mxu0 0.0
    %6821 = vmatprep.subr.mxu0 0.0
    %6822 = vmatpush1.msra.mxu0 0.0
    %6823 = vmatprep.subr.mxu0 0.0
    %6824 = vmatpush1.msra.mxu0 0.0
    %6825 = vmatprep.subr.mxu0 0.0
    %6826 = vmatpush1.msra.mxu0 0.0
    %6827 = vmatprep.subr.mxu0 0.0
    %6828 = vmatpush1.msra.mxu0 0.0
    %6829 = vmatprep.subr.mxu0 0.0
    %6830 = vmatpush1.msra.mxu0 0.0
    %6831 = vmatprep.subr.mxu0 0.0
    %6832 = vmatpush1.msra.mxu0 0.0
    %6833 = vmatprep.subr.mxu0 0.0
    %6834 = vmatpush1.msra.mxu0 0.0
    %6835 = vmatprep.subr.mxu0 0.0
    %6836 = vmatpush1.msra.mxu0 0.0
    %6837 = vmatprep.subr.mxu0 0.0
    %6838 = vmatpush1.msra.mxu0 0.0
    %6839 = vmatprep.subr.mxu0 0.0
    %6840 = vmatpush1.msra.mxu0 0.0
    %6841 = vmatprep.subr.mxu0 0.0
    %6842 = vmatpush1.msra.mxu0 0.0
    %6843 = vmatprep.mubr.f32.mxu0 0.0
    %6844 = vmatmul.mubr.f32.gmra.mrb[0].mxu0 %v6777
    %v6845 = vpop.f32.mrb[0].mxu0
    %v6846 = vadd.f32 0.0, %v6845
    %v6847 = vpop.f32.mrb[0].mxu0
    %6848 = vdwg.mxu0
    %v6851 = vunpack.c.l.s4 1966171168
    %v6852 = vunpack.c.0.s8 %v6851
    %v6853 = vlaneseq
    %v6854 = vshrl.u32 %v6853, 7
    %v6855 = vsub.s32 %v6852, %v6854
    %v6856 = vrot.slane %v6846, %v6855
    %v6857 = vcombine.high %v6856, %v6856
    %v6859 = vunpack.c.l.s4 1966171168
    %v6860 = vunpack.c.0.s8 %v6859
    %v6861 = vlaneseq
    %v6862 = vshrl.u32 %v6861, 7
    %v6863 = vsub.s32 %v6860, %v6862
    %v6864 = vrot.slane %v6856, %v6863
    %v6866 = vunpack.c.l.s4 1966171168
    %v6867 = vunpack.c.0.s8 %v6866
    %v6868 = vlaneseq
    %v6869 = vshrl.u32 %v6868, 7
    %v6870 = vsub.s32 %v6867, %v6869
    %v6871 = vrot.slane %v6857, %v6870
    %v6872 = vlaneseq
    %v6873 = vshrl.u32 %v6872, 7
    %v6874 = vsub.s32 0, %v6873
    %v6875 = vrot.slane %v6864, %v6874
    %v6876 = vlaneseq
    %v6877 = vshrl.u32 %v6876, 7
    %v6878 = vsub.s32 0, %v6877
    %v6879 = vrot.slane %v6871, %v6878
    %v6882 = vadd.f32 %v6772, %v6875
    %v6883 = vadd.f32 %v6773, %v6879
    %6884 = vmatprep.subr.mxu0 0.0
    %6885 = vmatpush1.msra.mxu0 %v50
    %6886 = vmatprep.subr.mxu0 0.0
    %6887 = vmatpush1.msra.mxu0 %v51
    %6888 = vmatprep.subr.mxu0 0.0
    %6889 = vmatpush1.msra.mxu0 0.0
    %6890 = vmatprep.subr.mxu0 0.0
    %6891 = vmatpush1.msra.mxu0 0.0
    %6892 = vmatprep.subr.mxu0 0.0
    %6893 = vmatpush1.msra.mxu0 0.0
    %6894 = vmatprep.subr.mxu0 0.0
    %6895 = vmatpush1.msra.mxu0 0.0
    %6896 = vmatprep.subr.mxu0 0.0
    %6897 = vmatpush1.msra.mxu0 0.0
    %6898 = vmatprep.subr.mxu0 0.0
    %6899 = vmatpush1.msra.mxu0 0.0
    %6900 = vmatprep.subr.mxu0 0.0
    %6901 = vmatpush1.msra.mxu0 0.0
    %6902 = vmatprep.subr.mxu0 0.0
    %6903 = vmatpush1.msra.mxu0 0.0
    %6904 = vmatprep.subr.mxu0 0.0
    %6905 = vmatpush1.msra.mxu0 0.0
    %6906 = vmatprep.subr.mxu0 0.0
    %6907 = vmatpush1.msra.mxu0 0.0
    %6908 = vmatprep.subr.mxu0 0.0
    %6909 = vmatpush1.msra.mxu0 0.0
    %6910 = vmatprep.subr.mxu0 0.0
    %6911 = vmatpush1.msra.mxu0 0.0
    %6912 = vmatprep.subr.mxu0 0.0
    %6913 = vmatpush1.msra.mxu0 0.0
    %6914 = vmatprep.subr.mxu0 0.0
    %6915 = vmatpush1.msra.mxu0 0.0
    %6916 = vmatprep.subr.mxu0 0.0
    %6917 = vmatpush1.msra.mxu0 0.0
    %6918 = vmatprep.subr.mxu0 0.0
    %6919 = vmatpush1.msra.mxu0 0.0
    %6920 = vmatprep.subr.mxu0 0.0
    %6921 = vmatpush1.msra.mxu0 0.0
    %6922 = vmatprep.subr.mxu0 0.0
    %6923 = vmatpush1.msra.mxu0 0.0
    %6924 = vmatprep.subr.mxu0 0.0
    %6925 = vmatpush1.msra.mxu0 0.0
    %6926 = vmatprep.subr.mxu0 0.0
    %6927 = vmatpush1.msra.mxu0 0.0
    %6928 = vmatprep.subr.mxu0 0.0
    %6929 = vmatpush1.msra.mxu0 0.0
    %6930 = vmatprep.subr.mxu0 0.0
    %6931 = vmatpush1.msra.mxu0 0.0
    %6932 = vmatprep.subr.mxu0 0.0
    %6933 = vmatpush1.msra.mxu0 0.0
    %6934 = vmatprep.subr.mxu0 0.0
    %6935 = vmatpush1.msra.mxu0 0.0
    %6936 = vmatprep.subr.mxu0 0.0
    %6937 = vmatpush1.msra.mxu0 0.0
    %6938 = vmatprep.subr.mxu0 0.0
    %6939 = vmatpush1.msra.mxu0 0.0
    %6940 = vmatprep.subr.mxu0 0.0
    %6941 = vmatpush1.msra.mxu0 0.0
    %6942 = vmatprep.subr.mxu0 0.0
    %6943 = vmatpush1.msra.mxu0 0.0
    %6944 = vmatprep.subr.mxu0 0.0
    %6945 = vmatpush1.msra.mxu0 0.0
    %6946 = vmatprep.subr.mxu0 0.0
    %6947 = vmatpush1.msra.mxu0 0.0
    %6948 = vmatprep.mubr.f32.mxu0 0.0
    %6949 = vmatmul.mubr.f32.gmra.mrb[0].mxu0 %v4917
    %v6950 = vpop.f32.mrb[0].mxu0
    %v6951 = vadd.f32 0.0, %v6950
    %v6952 = vpop.f32.mrb[0].mxu0
    %6953 = vmatprep.mubr.f32.mxu0 0.0
    %6954 = vmatmul.mubr.f32.gmra.mrb[0].mxu0 %v4919
    %v6955 = vpop.f32.mrb[0].mxu0
    %v6956 = vadd.f32 0.0, %v6955
    %v6957 = vpop.f32.mrb[0].mxu0
    %6958 = vdwg.mxu0
    %v6959 = vadd.f32 %v6951, %v3914
    %v6960 = vadd.f32 %v6956, %v3914
    %v6961 = vadd.f32 %v6882, %v6959
    %v6962 = vadd.f32 %v6883, %v6960
    %v6963 = vxor.u32 %v6961, 2147483648
    %v6964 = vxor.u32 %v6962, 2147483648
    %v6965 = vmul.f32 %v6963, 1.442695
    %v6966 = vpow.pop %v6965
    %v6967 = vmul.f32 %v6964, 1.442695
    %v6968 = vpow.pop %v6967
    %v6969 = vadd.f32 %v6966, 1.0
    %v6970 = vadd.f32 %v6968, 1.0
    %v6971 = vrcp.pop %v6969
    %v6972 = vmul.f32 1.0, %v6971
    %v6973 = vrcp.pop %v6970
    %v6974 = vmul.f32 1.0, %v6973
    %6977 = vrot.lane.b32.xlu0 %v6959, 96
    %v6978 = vpop.permute.xlu0 %6977
    %6979 = vrot.lane.b32.xlu0 %v6960, 96
    %v6980 = vpop.permute.xlu0 %6979
    %v6983 = vmul.f32 %v6972, %v6978
    %v6984 = vmul.f32 %v6974, %v6980
    %6987 = vrot.lane.b32.xlu0 %v6983, 32
    %v6988 = vpop.permute.xlu0 %6987
    %6989 = vrot.lane.b32.xlu0 %v6984, 32
    %v6990 = vpop.permute.xlu0 %6989
    %v6993 = vadd.f32 %v6882, %v6988
    %v6994 = vadd.f32 %v6883, %v6990
    %v6995 = vtanh.pop %v6993
    %v6996 = vtanh.pop %v6994
    %v6997 = vmul.f32 %v6972, %v3979
    %v6998 = vmul.f32 %v6974, %v3980
    %v6999 = vsub.f32 1.0, %v6972
    %v7000 = vsub.f32 1.0, %v6974
    %7003 = vrot.lane.b32.xlu0 %v6995, 112
    %v7004 = vpop.permute.xlu0 %7003
    %7005 = vrot.lane.b32.xlu0 %v6996, 112
    %v7006 = vpop.permute.xlu0 %7005
    %v7009 = vmul.f32 %v6999, %v7004
    %v7010 = vmul.f32 %v7000, %v7006
    %v7011 = vadd.f32 %v6997, %v7009
    %v7012 = vadd.f32 %v6998, %v7010
    %v7013 = vmul.f32 %v7011, %v3972
    %v7014 = vmul.f32 %v7012, %v3977
    %v7031 = vsel %vm3518, %v6190, %v6183
    %v7032 = vsel %vm3520, %v6197, %v7031
    %v7033 = vsel %vm3522, %v6204, %v7032
    %v7034 = vsel %vm3524, %v6211, %v7033
    %v7035 = vsel %vm3526, %v6218, %v7034
    %v7036 = vsel %vm3528, %v6225, %v7035
    %v7037 = vsel %vm3530, %v6232, %v7036
    %v7038 = vsel %vm3518, %v6246, %v6239
    %v7039 = vsel %vm3520, %v6253, %v7038
    %v7040 = vsel %vm3522, %v6260, %v7039
    %v7041 = vsel %vm3524, %v6267, %v7040
    %v7042 = vsel %vm3526, %v6274, %v7041
    %v7043 = vsel %vm3528, %v6281, %v7042
    %v7044 = vsel %vm3530, %v6288, %v7043
    %7045 = vrot.lane.b32.xlu0 %v7037, 112
    %v7046 = vpop.permute.xlu0 %7045
    %7047 = vrot.lane.b32.xlu0 %v7044, 112
    %v7048 = vpop.permute.xlu0 %7047
    %v7049 = vsel %vm1323, %v7046, 0
    %v7051 = vsel %vm1323, %v7048, 0
    %7053 = vmatprep.subr.mxu0 0.0
    %7054 = vmatpush1.msra.mxu0 %v56
    %7055 = vmatprep.subr.mxu0 0.0
    %7056 = vmatpush1.msra.mxu0 %v57
    %7057 = vmatprep.subr.mxu0 0.0
    %7058 = vmatpush1.msra.mxu0 0.0
    %7059 = vmatprep.subr.mxu0 0.0
    %7060 = vmatpush1.msra.mxu0 0.0
    %7061 = vmatprep.subr.mxu0 0.0
    %7062 = vmatpush1.msra.mxu0 0.0
    %7063 = vmatprep.subr.mxu0 0.0
    %7064 = vmatpush1.msra.mxu0 0.0
    %7065 = vmatprep.subr.mxu0 0.0
    %7066 = vmatpush1.msra.mxu0 0.0
    %7067 = vmatprep.subr.mxu0 0.0
    %7068 = vmatpush1.msra.mxu0 0.0
    %7069 = vmatprep.subr.mxu0 0.0
    %7070 = vmatpush1.msra.mxu0 0.0
    %7071 = vmatprep.subr.mxu0 0.0
    %7072 = vmatpush1.msra.mxu0 0.0
    %7073 = vmatprep.subr.mxu0 0.0
    %7074 = vmatpush1.msra.mxu0 0.0
    %7075 = vmatprep.subr.mxu0 0.0
    %7076 = vmatpush1.msra.mxu0 0.0
    %7077 = vmatprep.subr.mxu0 0.0
    %7078 = vmatpush1.msra.mxu0 0.0
    %7079 = vmatprep.subr.mxu0 0.0
    %7080 = vmatpush1.msra.mxu0 0.0
    %7081 = vmatprep.subr.mxu0 0.0
    %7082 = vmatpush1.msra.mxu0 0.0
    %7083 = vmatprep.subr.mxu0 0.0
    %7084 = vmatpush1.msra.mxu0 0.0
    %7085 = vmatprep.subr.mxu0 0.0
    %7086 = vmatpush1.msra.mxu0 0.0
    %7087 = vmatprep.subr.mxu0 0.0
    %7088 = vmatpush1.msra.mxu0 0.0
    %7089 = vmatprep.subr.mxu0 0.0
    %7090 = vmatpush1.msra.mxu0 0.0
    %7091 = vmatprep.subr.mxu0 0.0
    %7092 = vmatpush1.msra.mxu0 0.0
    %7093 = vmatprep.subr.mxu0 0.0
    %7094 = vmatpush1.msra.mxu0 0.0
    %7095 = vmatprep.subr.mxu0 0.0
    %7096 = vmatpush1.msra.mxu0 0.0
    %7097 = vmatprep.subr.mxu0 0.0
    %7098 = vmatpush1.msra.mxu0 0.0
    %7099 = vmatprep.subr.mxu0 0.0
    %7100 = vmatpush1.msra.mxu0 0.0
    %7101 = vmatprep.subr.mxu0 0.0
    %7102 = vmatpush1.msra.mxu0 0.0
    %7103 = vmatprep.subr.mxu0 0.0
    %7104 = vmatpush1.msra.mxu0 0.0
    %7105 = vmatprep.subr.mxu0 0.0
    %7106 = vmatpush1.msra.mxu0 0.0
    %7107 = vmatprep.subr.mxu0 0.0
    %7108 = vmatpush1.msra.mxu0 0.0
    %7109 = vmatprep.subr.mxu0 0.0
    %7110 = vmatpush1.msra.mxu0 0.0
    %7111 = vmatprep.subr.mxu0 0.0
    %7112 = vmatpush1.msra.mxu0 0.0
    %7113 = vmatprep.subr.mxu0 0.0
    %7114 = vmatpush1.msra.mxu0 0.0
    %7115 = vmatprep.subr.mxu0 0.0
    %7116 = vmatpush1.msra.mxu0 0.0
    %7117 = vmatprep.mubr.f32.mxu0 0.0
    %7118 = vmatmul.mubr.f32.gmra.mrb[0].mxu0 %v7049
    %v7119 = vpop.f32.mrb[0].mxu0
    %v7120 = vadd.f32 0.0, %v7119
    %v7121 = vpop.f32.mrb[0].mxu0
    %7122 = vmatprep.mubr.f32.mxu0 0.0
    %7123 = vmatmul.mubr.f32.gmra.mrb[0].mxu0 %v7051
    %v7124 = vpop.f32.mrb[0].mxu0
    %v7125 = vadd.f32 0.0, %v7124
    %v7126 = vpop.f32.mrb[0].mxu0
    %7127 = vdwg.mxu0
    %v7128 = vadd.f32 %v1500, %v7120
    %v7129 = vadd.f32 %v1501, %v7125
    %v7146 = vsel %vm3518, %v6366, %v6359
    %v7147 = vsel %vm3520, %v6373, %v7146
    %v7148 = vsel %vm3522, %v6380, %v7147
    %v7149 = vsel %vm3524, %v6387, %v7148
    %v7150 = vsel %vm3526, %v6394, %v7149
    %v7151 = vsel %vm3528, %v6401, %v7150
    %v7152 = vsel %vm3530, %v6408, %v7151
    %v7153 = vsel %vm3518, %v6422, %v6415
    %v7154 = vsel %vm3520, %v6429, %v7153
    %v7155 = vsel %vm3522, %v6436, %v7154
    %v7156 = vsel %vm3524, %v6443, %v7155
    %v7157 = vsel %vm3526, %v6450, %v7156
    %v7158 = vsel %vm3528, %v6457, %v7157
    %v7159 = vsel %vm3530, %v6464, %v7158
    %v7160 = vsel %vm99, %v7152, 0
    %v7162 = vsel %vm99, %v7159, 0
    %7164 = vmatprep.subr.mxu0 0.0
    %7165 = vmatpush1.msra.mxu0 %v58
    %7166 = vmatprep.subr.mxu0 0.0
    %7167 = vmatpush1.msra.mxu0 0.0
    %7168 = vmatprep.subr.mxu0 0.0
    %7169 = vmatpush1.msra.mxu0 0.0
    %7170 = vmatprep.subr.mxu0 0.0
    %7171 = vmatpush1.msra.mxu0 0.0
    %7172 = vmatprep.subr.mxu0 0.0
    %7173 = vmatpush1.msra.mxu0 0.0
    %7174 = vmatprep.subr.mxu0 0.0
    %7175 = vmatpush1.msra.mxu0 0.0
    %7176 = vmatprep.subr.mxu0 0.0
    %7177 = vmatpush1.msra.mxu0 0.0
    %7178 = vmatprep.subr.mxu0 0.0
    %7179 = vmatpush1.msra.mxu0 0.0
    %7180 = vmatprep.subr.mxu0 0.0
    %7181 = vmatpush1.msra.mxu0 0.0
    %7182 = vmatprep.subr.mxu0 0.0
    %7183 = vmatpush1.msra.mxu0 0.0
    %7184 = vmatprep.subr.mxu0 0.0
    %7185 = vmatpush1.msra.mxu0 0.0
    %7186 = vmatprep.subr.mxu0 0.0
    %7187 = vmatpush1.msra.mxu0 0.0
    %7188 = vmatprep.subr.mxu0 0.0
    %7189 = vmatpush1.msra.mxu0 0.0
    %7190 = vmatprep.subr.mxu0 0.0
    %7191 = vmatpush1.msra.mxu0 0.0
    %7192 = vmatprep.subr.mxu0 0.0
    %7193 = vmatpush1.msra.mxu0 0.0
    %7194 = vmatprep.subr.mxu0 0.0
    %7195 = vmatpush1.msra.mxu0 0.0
    %7196 = vmatprep.subr.mxu0 0.0
    %7197 = vmatpush1.msra.mxu0 0.0
    %7198 = vmatprep.subr.mxu0 0.0
    %7199 = vmatpush1.msra.mxu0 0.0
    %7200 = vmatprep.subr.mxu0 0.0
    %7201 = vmatpush1.msra.mxu0 0.0
    %7202 = vmatprep.subr.mxu0 0.0
    %7203 = vmatpush1.msra.mxu0 0.0
    %7204 = vmatprep.subr.mxu0 0.0
    %7205 = vmatpush1.msra.mxu0 0.0
    %7206 = vmatprep.subr.mxu0 0.0
    %7207 = vmatpush1.msra.mxu0 0.0
    %7208 = vmatprep.subr.mxu0 0.0
    %7209 = vmatpush1.msra.mxu0 0.0
    %7210 = vmatprep.subr.mxu0 0.0
    %7211 = vmatpush1.msra.mxu0 0.0
    %7212 = vmatprep.subr.mxu0 0.0
    %7213 = vmatpush1.msra.mxu0 0.0
    %7214 = vmatprep.subr.mxu0 0.0
    %7215 = vmatpush1.msra.mxu0 0.0
    %7216 = vmatprep.subr.mxu0 0.0
    %7217 = vmatpush1.msra.mxu0 0.0
    %7218 = vmatprep.subr.mxu0 0.0
    %7219 = vmatpush1.msra.mxu0 0.0
    %7220 = vmatprep.subr.mxu0 0.0
    %7221 = vmatpush1.msra.mxu0 0.0
    %7222 = vmatprep.subr.mxu0 0.0
    %7223 = vmatpush1.msra.mxu0 0.0
    %7224 = vmatprep.subr.mxu0 0.0
    %7225 = vmatpush1.msra.mxu0 0.0
    %7226 = vmatprep.subr.mxu0 0.0
    %7227 = vmatpush1.msra.mxu0 0.0
    %7228 = vmatprep.mubr.f32.mxu0 0.0
    %7229 = vmatmul.mubr.f32.gmra.mrb[0].mxu0 %v7160
    %v7230 = vpop.f32.mrb[0].mxu0
    %v7231 = vadd.f32 0.0, %v7230
    %v7232 = vpop.f32.mrb[0].mxu0
    %7233 = vmatprep.mubr.f32.mxu0 0.0
    %7234 = vmatmul.mubr.f32.gmra.mrb[0].mxu0 %v7162
    %v7235 = vpop.f32.mrb[0].mxu0
    %v7236 = vadd.f32 0.0, %v7235
    %v7237 = vpop.f32.mrb[0].mxu0
    %7238 = vdwg.mxu0
    %v7239 = vadd.f32 %v7128, %v7231
    %v7240 = vadd.f32 %v7129, %v7236
    %7241 = vmatprep.subr.mxu0 0.0
    %7242 = vmatpush1.msra.mxu0 %v59
    %7243 = vmatprep.subr.mxu0 0.0
    %7244 = vmatpush1.msra.mxu0 %v60
    %7245 = vmatprep.subr.mxu0 0.0
    %7246 = vmatpush1.msra.mxu0 0.0
    %7247 = vmatprep.subr.mxu0 0.0
    %7248 = vmatpush1.msra.mxu0 0.0
    %7249 = vmatprep.subr.mxu0 0.0
    %7250 = vmatpush1.msra.mxu0 0.0
    %7251 = vmatprep.subr.mxu0 0.0
    %7252 = vmatpush1.msra.mxu0 0.0
    %7253 = vmatprep.subr.mxu0 0.0
    %7254 = vmatpush1.msra.mxu0 0.0
    %7255 = vmatprep.subr.mxu0 0.0
    %7256 = vmatpush1.msra.mxu0 0.0
    %7257 = vmatprep.subr.mxu0 0.0
    %7258 = vmatpush1.msra.mxu0 0.0
    %7259 = vmatprep.subr.mxu0 0.0
    %7260 = vmatpush1.msra.mxu0 0.0
    %7261 = vmatprep.subr.mxu0 0.0
    %7262 = vmatpush1.msra.mxu0 0.0
    %7263 = vmatprep.subr.mxu0 0.0
    %7264 = vmatpush1.msra.mxu0 0.0
    %7265 = vmatprep.subr.mxu0 0.0
    %7266 = vmatpush1.msra.mxu0 0.0
    %7267 = vmatprep.subr.mxu0 0.0
    %7268 = vmatpush1.msra.mxu0 0.0
    %7269 = vmatprep.subr.mxu0 0.0
    %7270 = vmatpush1.msra.mxu0 0.0
    %7271 = vmatprep.subr.mxu0 0.0
    %7272 = vmatpush1.msra.mxu0 0.0
    %7273 = vmatprep.subr.mxu0 0.0
    %7274 = vmatpush1.msra.mxu0 0.0
    %7275 = vmatprep.subr.mxu0 0.0
    %7276 = vmatpush1.msra.mxu0 0.0
    %7277 = vmatprep.subr.mxu0 0.0
    %7278 = vmatpush1.msra.mxu0 0.0
    %7279 = vmatprep.subr.mxu0 0.0
    %7280 = vmatpush1.msra.mxu0 0.0
    %7281 = vmatprep.subr.mxu0 0.0
    %7282 = vmatpush1.msra.mxu0 0.0
    %7283 = vmatprep.subr.mxu0 0.0
    %7284 = vmatpush1.msra.mxu0 0.0
    %7285 = vmatprep.subr.mxu0 0.0
    %7286 = vmatpush1.msra.mxu0 0.0
    %7287 = vmatprep.subr.mxu0 0.0
    %7288 = vmatpush1.msra.mxu0 0.0
    %7289 = vmatprep.subr.mxu0 0.0
    %7290 = vmatpush1.msra.mxu0 0.0
    %7291 = vmatprep.subr.mxu0 0.0
    %7292 = vmatpush1.msra.mxu0 0.0
    %7293 = vmatprep.subr.mxu0 0.0
    %7294 = vmatpush1.msra.mxu0 0.0
    %7295 = vmatprep.subr.mxu0 0.0
    %7296 = vmatpush1.msra.mxu0 0.0
    %7297 = vmatprep.subr.mxu0 0.0
    %7298 = vmatpush1.msra.mxu0 0.0
    %7299 = vmatprep.subr.mxu0 0.0
    %7300 = vmatpush1.msra.mxu0 0.0
    %7301 = vmatprep.subr.mxu0 0.0
    %7302 = vmatpush1.msra.mxu0 0.0
    %7303 = vmatprep.subr.mxu0 0.0
    %7304 = vmatpush1.msra.mxu0 0.0
    %7305 = vmatprep.mubr.f32.mxu0 0.0
    %7306 = vmatmul.mubr.f32.gmra.mrb[0].mxu0 %v6777
    %v7307 = vpop.f32.mrb[0].mxu0
    %v7308 = vadd.f32 0.0, %v7307
    %v7309 = vpop.f32.mrb[0].mxu0
    %7310 = vdwg.mxu0
    %v7313 = vunpack.c.l.s4 1966171168
    %v7314 = vunpack.c.0.s8 %v7313
    %v7315 = vlaneseq
    %v7316 = vshrl.u32 %v7315, 7
    %v7317 = vsub.s32 %v7314, %v7316
    %v7318 = vrot.slane %v7308, %v7317
    %v7319 = vcombine.high %v7318, %v7318
    %v7321 = vunpack.c.l.s4 1966171168
    %v7322 = vunpack.c.0.s8 %v7321
    %v7323 = vlaneseq
    %v7324 = vshrl.u32 %v7323, 7
    %v7325 = vsub.s32 %v7322, %v7324
    %v7326 = vrot.slane %v7318, %v7325
    %v7328 = vunpack.c.l.s4 1966171168
    %v7329 = vunpack.c.0.s8 %v7328
    %v7330 = vlaneseq
    %v7331 = vshrl.u32 %v7330, 7
    %v7332 = vsub.s32 %v7329, %v7331
    %v7333 = vrot.slane %v7319, %v7332
    %v7334 = vlaneseq
    %v7335 = vshrl.u32 %v7334, 7
    %v7336 = vsub.s32 0, %v7335
    %v7337 = vrot.slane %v7326, %v7336
    %v7338 = vlaneseq
    %v7339 = vshrl.u32 %v7338, 7
    %v7340 = vsub.s32 0, %v7339
    %v7341 = vrot.slane %v7333, %v7340
    %v7344 = vadd.f32 %v7239, %v7337
    %v7345 = vadd.f32 %v7240, %v7341
    %7346 = vmatprep.subr.mxu0 0.0
    %7347 = vmatpush1.msra.mxu0 %v61
    %7348 = vmatprep.subr.mxu0 0.0
    %7349 = vmatpush1.msra.mxu0 %v62
    %7350 = vmatprep.subr.mxu0 0.0
    %7351 = vmatpush1.msra.mxu0 0.0
    %7352 = vmatprep.subr.mxu0 0.0
    %7353 = vmatpush1.msra.mxu0 0.0
    %7354 = vmatprep.subr.mxu0 0.0
    %7355 = vmatpush1.msra.mxu0 0.0
    %7356 = vmatprep.subr.mxu0 0.0
    %7357 = vmatpush1.msra.mxu0 0.0
    %7358 = vmatprep.subr.mxu0 0.0
    %7359 = vmatpush1.msra.mxu0 0.0
    %7360 = vmatprep.subr.mxu0 0.0
    %7361 = vmatpush1.msra.mxu0 0.0
    %7362 = vmatprep.subr.mxu0 0.0
    %7363 = vmatpush1.msra.mxu0 0.0
    %7364 = vmatprep.subr.mxu0 0.0
    %7365 = vmatpush1.msra.mxu0 0.0
    %7366 = vmatprep.subr.mxu0 0.0
    %7367 = vmatpush1.msra.mxu0 0.0
    %7368 = vmatprep.subr.mxu0 0.0
    %7369 = vmatpush1.msra.mxu0 0.0
    %7370 = vmatprep.subr.mxu0 0.0
    %7371 = vmatpush1.msra.mxu0 0.0
    %7372 = vmatprep.subr.mxu0 0.0
    %7373 = vmatpush1.msra.mxu0 0.0
    %7374 = vmatprep.subr.mxu0 0.0
    %7375 = vmatpush1.msra.mxu0 0.0
    %7376 = vmatprep.subr.mxu0 0.0
    %7377 = vmatpush1.msra.mxu0 0.0
    %7378 = vmatprep.subr.mxu0 0.0
    %7379 = vmatpush1.msra.mxu0 0.0
    %7380 = vmatprep.subr.mxu0 0.0
    %7381 = vmatpush1.msra.mxu0 0.0
    %7382 = vmatprep.subr.mxu0 0.0
    %7383 = vmatpush1.msra.mxu0 0.0
    %7384 = vmatprep.subr.mxu0 0.0
    %7385 = vmatpush1.msra.mxu0 0.0
    %7386 = vmatprep.subr.mxu0 0.0
    %7387 = vmatpush1.msra.mxu0 0.0
    %7388 = vmatprep.subr.mxu0 0.0
    %7389 = vmatpush1.msra.mxu0 0.0
    %7390 = vmatprep.subr.mxu0 0.0
    %7391 = vmatpush1.msra.mxu0 0.0
    %7392 = vmatprep.subr.mxu0 0.0
    %7393 = vmatpush1.msra.mxu0 0.0
    %7394 = vmatprep.subr.mxu0 0.0
    %7395 = vmatpush1.msra.mxu0 0.0
    %7396 = vmatprep.subr.mxu0 0.0
    %7397 = vmatpush1.msra.mxu0 0.0
    %7398 = vmatprep.subr.mxu0 0.0
    %7399 = vmatpush1.msra.mxu0 0.0
    %7400 = vmatprep.subr.mxu0 0.0
    %7401 = vmatpush1.msra.mxu0 0.0
    %7402 = vmatprep.subr.mxu0 0.0
    %7403 = vmatpush1.msra.mxu0 0.0
    %7404 = vmatprep.subr.mxu0 0.0
    %7405 = vmatpush1.msra.mxu0 0.0
    %7406 = vmatprep.subr.mxu0 0.0
    %7407 = vmatpush1.msra.mxu0 0.0
    %7408 = vmatprep.subr.mxu0 0.0
    %7409 = vmatpush1.msra.mxu0 0.0
    %7410 = vmatprep.mubr.f32.mxu0 0.0
    %7411 = vmatmul.mubr.f32.gmra.mrb[0].mxu0 %v5002
    %v7412 = vpop.f32.mrb[0].mxu0
    %v7413 = vadd.f32 0.0, %v7412
    %v7414 = vpop.f32.mrb[0].mxu0
    %7415 = vmatprep.mubr.f32.mxu0 0.0
    %7416 = vmatmul.mubr.f32.gmra.mrb[0].mxu0 %v5004
    %v7417 = vpop.f32.mrb[0].mxu0
    %v7418 = vadd.f32 0.0, %v7417
    %v7419 = vpop.f32.mrb[0].mxu0
    %7420 = vdwg.mxu0
    %v7421 = vadd.f32 %v7413, %v4390
    %v7422 = vadd.f32 %v7418, %v4390
    %v7423 = vadd.f32 %v7344, %v7421
    %v7424 = vadd.f32 %v7345, %v7422
    %v7425 = vxor.u32 %v7423, 2147483648
    %v7426 = vxor.u32 %v7424, 2147483648
    %v7427 = vmul.f32 %v7425, 1.442695
    %v7428 = vpow.pop %v7427
    %v7429 = vmul.f32 %v7426, 1.442695
    %v7430 = vpow.pop %v7429
    %v7431 = vadd.f32 %v7428, 1.0
    %v7432 = vadd.f32 %v7430, 1.0
    %v7433 = vrcp.pop %v7431
    %v7434 = vmul.f32 1.0, %v7433
    %v7435 = vrcp.pop %v7432
    %v7436 = vmul.f32 1.0, %v7435
    %7439 = vrot.lane.b32.xlu0 %v7421, 96
    %v7440 = vpop.permute.xlu0 %7439
    %7441 = vrot.lane.b32.xlu0 %v7422, 96
    %v7442 = vpop.permute.xlu0 %7441
    %v7445 = vmul.f32 %v7434, %v7440
    %v7446 = vmul.f32 %v7436, %v7442
    %7449 = vrot.lane.b32.xlu0 %v7445, 32
    %v7450 = vpop.permute.xlu0 %7449
    %7451 = vrot.lane.b32.xlu0 %v7446, 32
    %v7452 = vpop.permute.xlu0 %7451
    %v7455 = vadd.f32 %v7344, %v7450
    %v7456 = vadd.f32 %v7345, %v7452
    %v7457 = vtanh.pop %v7455
    %v7458 = vtanh.pop %v7456
    %v7459 = vmul.f32 %v7434, %v4455
    %v7460 = vmul.f32 %v7436, %v4456
    %v7461 = vsub.f32 1.0, %v7434
    %v7462 = vsub.f32 1.0, %v7436
    %7465 = vrot.lane.b32.xlu0 %v7457, 112
    %v7466 = vpop.permute.xlu0 %7465
    %7467 = vrot.lane.b32.xlu0 %v7458, 112
    %v7468 = vpop.permute.xlu0 %7467
    %v7471 = vmul.f32 %v7461, %v7466
    %v7472 = vmul.f32 %v7462, %v7468
    %v7473 = vadd.f32 %v7459, %v7471
    %v7474 = vadd.f32 %v7460, %v7472
    %v7475 = vmul.f32 %v7473, %v4448
    %v7476 = vmul.f32 %v7474, %v4453
    %v7477 = vsel %vm4457, %v7013, 0.0
    %v7478 = vrot.slane %v7477, 4
    %v7479 = vadd.f32 %v7477, %v7478
    %v7480 = vrot.slane %v7479, 2
    %v7481 = vadd.f32 %v7479, %v7480
    %v7482 = vrot.slane %v7481, 1
    %v7483 = vadd.f32 %v7481, %v7482
    %v7484 = vsel %vm4457, %v7014, 0.0
    %v7485 = vrot.slane %v7484, 4
    %v7486 = vadd.f32 %v7484, %v7485
    %v7487 = vrot.slane %v7486, 2
    %v7488 = vadd.f32 %v7486, %v7487
    %v7489 = vrot.slane %v7488, 1
    %v7490 = vadd.f32 %v7488, %v7489
    %v7491 = vmul.f32 %v7483, %v4475
    %v7492 = vmul.f32 %v7490, %v4480
    %v7493 = vsel %vm4457, %v7475, 0.0
    %v7494 = vrot.slane %v7493, 4
    %v7495 = vadd.f32 %v7493, %v7494
    %v7496 = vrot.slane %v7495, 2
    %v7497 = vadd.f32 %v7495, %v7496
    %v7498 = vrot.slane %v7497, 1
    %v7499 = vadd.f32 %v7497, %v7498
    %v7500 = vsel %vm4457, %v7476, 0.0
    %v7501 = vrot.slane %v7500, 4
    %v7502 = vadd.f32 %v7500, %v7501
    %v7503 = vrot.slane %v7502, 2
    %v7504 = vadd.f32 %v7502, %v7503
    %v7505 = vrot.slane %v7504, 1
    %v7506 = vadd.f32 %v7504, %v7505
    %v7507 = vmul.f32 %v7499, %v4501
    %v7508 = vmul.f32 %v7506, %v4506
    %v7511 = vsel %vm3518, %v7508, %v7507
    %7512 = vrot.lane.b32.xlu0 %v7511, 112
    %v7513 = vpop.permute.xlu0 %7512
    %v7514 = vsel %vm1323, %v7513, 0
    %7516 = vmatprep.subr.mxu0 0.0
    %7517 = vmatpush1.msra.mxu0 %v67
    %7518 = vmatprep.subr.mxu0 0.0
    %7519 = vmatpush1.msra.mxu0 %v68
    %7520 = vmatprep.subr.mxu0 0.0
    %7521 = vmatpush1.msra.mxu0 0.0
    %7522 = vmatprep.subr.mxu0 0.0
    %7523 = vmatpush1.msra.mxu0 0.0
    %7524 = vmatprep.subr.mxu0 0.0
    %7525 = vmatpush1.msra.mxu0 0.0
    %7526 = vmatprep.subr.mxu0 0.0
    %7527 = vmatpush1.msra.mxu0 0.0
    %7528 = vmatprep.subr.mxu0 0.0
    %7529 = vmatpush1.msra.mxu0 0.0
    %7530 = vmatprep.subr.mxu0 0.0
    %7531 = vmatpush1.msra.mxu0 0.0
    %7532 = vmatprep.subr.mxu0 0.0
    %7533 = vmatpush1.msra.mxu0 0.0
    %7534 = vmatprep.subr.mxu0 0.0
    %7535 = vmatpush1.msra.mxu0 0.0
    %7536 = vmatprep.subr.mxu0 0.0
    %7537 = vmatpush1.msra.mxu0 0.0
    %7538 = vmatprep.subr.mxu0 0.0
    %7539 = vmatpush1.msra.mxu0 0.0
    %7540 = vmatprep.subr.mxu0 0.0
    %7541 = vmatpush1.msra.mxu0 0.0
    %7542 = vmatprep.subr.mxu0 0.0
    %7543 = vmatpush1.msra.mxu0 0.0
    %7544 = vmatprep.subr.mxu0 0.0
    %7545 = vmatpush1.msra.mxu0 0.0
    %7546 = vmatprep.subr.mxu0 0.0
    %7547 = vmatpush1.msra.mxu0 0.0
    %7548 = vmatprep.subr.mxu0 0.0
    %7549 = vmatpush1.msra.mxu0 0.0
    %7550 = vmatprep.subr.mxu0 0.0
    %7551 = vmatpush1.msra.mxu0 0.0
    %7552 = vmatprep.subr.mxu0 0.0
    %7553 = vmatpush1.msra.mxu0 0.0
    %7554 = vmatprep.subr.mxu0 0.0
    %7555 = vmatpush1.msra.mxu0 0.0
    %7556 = vmatprep.subr.mxu0 0.0
    %7557 = vmatpush1.msra.mxu0 0.0
    %7558 = vmatprep.subr.mxu0 0.0
    %7559 = vmatpush1.msra.mxu0 0.0
    %7560 = vmatprep.subr.mxu0 0.0
    %7561 = vmatpush1.msra.mxu0 0.0
    %7562 = vmatprep.subr.mxu0 0.0
    %7563 = vmatpush1.msra.mxu0 0.0
    %7564 = vmatprep.subr.mxu0 0.0
    %7565 = vmatpush1.msra.mxu0 0.0
    %7566 = vmatprep.subr.mxu0 0.0
    %7567 = vmatpush1.msra.mxu0 0.0
    %7568 = vmatprep.subr.mxu0 0.0
    %7569 = vmatpush1.msra.mxu0 0.0
    %7570 = vmatprep.subr.mxu0 0.0
    %7571 = vmatpush1.msra.mxu0 0.0
    %7572 = vmatprep.subr.mxu0 0.0
    %7573 = vmatpush1.msra.mxu0 0.0
    %7574 = vmatprep.subr.mxu0 0.0
    %7575 = vmatpush1.msra.mxu0 0.0
    %7576 = vmatprep.subr.mxu0 0.0
    %7577 = vmatpush1.msra.mxu0 0.0
    %7578 = vmatprep.subr.mxu0 0.0
    %7579 = vmatpush1.msra.mxu0 0.0
    %7580 = vmatprep.mubr.f32.mxu0 0.0
    %7581 = vmatmul.mubr.f32.gmra.mrb[0].mxu0 %v7514
    %v7582 = vpop.f32.mrb[0].mxu0
    %v7583 = vadd.f32 0.0, %v7582
    %v7584 = vpop.f32.mrb[0].mxu0
    %7585 = vdwg.mxu0
    %v7588 = vsel %vm3518, %v7492, %v7491
    %7589 = vrot.lane.b32.xlu0 %v7588, 112
    %v7590 = vpop.permute.xlu0 %7589
    %v7591 = vsel %vm1323, %v7590, 0
    %7593 = vmatprep.subr.mxu0 0.0
    %7594 = vmatpush1.msra.mxu0 %v65
    %7595 = vmatprep.subr.mxu0 0.0
    %7596 = vmatpush1.msra.mxu0 %v66
    %7597 = vmatprep.subr.mxu0 0.0
    %7598 = vmatpush1.msra.mxu0 0.0
    %7599 = vmatprep.subr.mxu0 0.0
    %7600 = vmatpush1.msra.mxu0 0.0
    %7601 = vmatprep.subr.mxu0 0.0
    %7602 = vmatpush1.msra.mxu0 0.0
    %7603 = vmatprep.subr.mxu0 0.0
    %7604 = vmatpush1.msra.mxu0 0.0
    %7605 = vmatprep.subr.mxu0 0.0
    %7606 = vmatpush1.msra.mxu0 0.0
    %7607 = vmatprep.subr.mxu0 0.0
    %7608 = vmatpush1.msra.mxu0 0.0
    %7609 = vmatprep.subr.mxu0 0.0
    %7610 = vmatpush1.msra.mxu0 0.0
    %7611 = vmatprep.subr.mxu0 0.0
    %7612 = vmatpush1.msra.mxu0 0.0
    %7613 = vmatprep.subr.mxu0 0.0
    %7614 = vmatpush1.msra.mxu0 0.0
    %7615 = vmatprep.subr.mxu0 0.0
    %7616 = vmatpush1.msra.mxu0 0.0
    %7617 = vmatprep.subr.mxu0 0.0
    %7618 = vmatpush1.msra.mxu0 0.0
    %7619 = vmatprep.subr.mxu0 0.0
    %7620 = vmatpush1.msra.mxu0 0.0
    %7621 = vmatprep.subr.mxu0 0.0
    %7622 = vmatpush1.msra.mxu0 0.0
    %7623 = vmatprep.subr.mxu0 0.0
    %7624 = vmatpush1.msra.mxu0 0.0
    %7625 = vmatprep.subr.mxu0 0.0
    %7626 = vmatpush1.msra.mxu0 0.0
    %7627 = vmatprep.subr.mxu0 0.0
    %7628 = vmatpush1.msra.mxu0 0.0
    %7629 = vmatprep.subr.mxu0 0.0
    %7630 = vmatpush1.msra.mxu0 0.0
    %7631 = vmatprep.subr.mxu0 0.0
    %7632 = vmatpush1.msra.mxu0 0.0
    %7633 = vmatprep.subr.mxu0 0.0
    %7634 = vmatpush1.msra.mxu0 0.0
    %7635 = vmatprep.subr.mxu0 0.0
    %7636 = vmatpush1.msra.mxu0 0.0
    %7637 = vmatprep.subr.mxu0 0.0
    %7638 = vmatpush1.msra.mxu0 0.0
    %7639 = vmatprep.subr.mxu0 0.0
    %7640 = vmatpush1.msra.mxu0 0.0
    %7641 = vmatprep.subr.mxu0 0.0
    %7642 = vmatpush1.msra.mxu0 0.0
    %7643 = vmatprep.subr.mxu0 0.0
    %7644 = vmatpush1.msra.mxu0 0.0
    %7645 = vmatprep.subr.mxu0 0.0
    %7646 = vmatpush1.msra.mxu0 0.0
    %7647 = vmatprep.subr.mxu0 0.0
    %7648 = vmatpush1.msra.mxu0 0.0
    %7649 = vmatprep.subr.mxu0 0.0
    %7650 = vmatpush1.msra.mxu0 0.0
    %7651 = vmatprep.subr.mxu0 0.0
    %7652 = vmatpush1.msra.mxu0 0.0
    %7653 = vmatprep.subr.mxu0 0.0
    %7654 = vmatpush1.msra.mxu0 0.0
    %7655 = vmatprep.subr.mxu0 0.0
    %7656 = vmatpush1.msra.mxu0 0.0
    %7657 = vmatprep.mubr.f32.mxu0 0.0
    %7658 = vmatmul.mubr.f32.gmra.mrb[0].mxu0 %v7591
    %v7659 = vpop.f32.mrb[0].mxu0
    %v7660 = vadd.f32 %v7583, %v7659
    %v7661 = vpop.f32.mrb[0].mxu0
    %7662 = vdwg.mxu0
    %v7663 = vadd.f32 %v7660, %v4667
    %7664 = vmatprep.subr.mxu0 0.0
    %7665 = vmatpush1.msra.mxu0 %v69
    %7666 = vmatprep.subr.mxu0 0.0
    %7667 = vmatpush1.msra.mxu0 %v70
    %7668 = vmatprep.subr.mxu0 0.0
    %7669 = vmatpush1.msra.mxu0 0.0
    %7670 = vmatprep.subr.mxu0 0.0
    %7671 = vmatpush1.msra.mxu0 0.0
    %7672 = vmatprep.subr.mxu0 0.0
    %7673 = vmatpush1.msra.mxu0 0.0
    %7674 = vmatprep.subr.mxu0 0.0
    %7675 = vmatpush1.msra.mxu0 0.0
    %7676 = vmatprep.subr.mxu0 0.0
    %7677 = vmatpush1.msra.mxu0 0.0
    %7678 = vmatprep.subr.mxu0 0.0
    %7679 = vmatpush1.msra.mxu0 0.0
    %7680 = vmatprep.subr.mxu0 0.0
    %7681 = vmatpush1.msra.mxu0 0.0
    %7682 = vmatprep.subr.mxu0 0.0
    %7683 = vmatpush1.msra.mxu0 0.0
    %7684 = vmatprep.subr.mxu0 0.0
    %7685 = vmatpush1.msra.mxu0 0.0
    %7686 = vmatprep.subr.mxu0 0.0
    %7687 = vmatpush1.msra.mxu0 0.0
    %7688 = vmatprep.subr.mxu0 0.0
    %7689 = vmatpush1.msra.mxu0 0.0
    %7690 = vmatprep.subr.mxu0 0.0
    %7691 = vmatpush1.msra.mxu0 0.0
    %7692 = vmatprep.subr.mxu0 0.0
    %7693 = vmatpush1.msra.mxu0 0.0
    %7694 = vmatprep.subr.mxu0 0.0
    %7695 = vmatpush1.msra.mxu0 0.0
    %7696 = vmatprep.subr.mxu0 0.0
    %7697 = vmatpush1.msra.mxu0 0.0
    %7698 = vmatprep.subr.mxu0 0.0
    %7699 = vmatpush1.msra.mxu0 0.0
    %7700 = vmatprep.subr.mxu0 0.0
    %7701 = vmatpush1.msra.mxu0 0.0
    %7702 = vmatprep.subr.mxu0 0.0
    %7703 = vmatpush1.msra.mxu0 0.0
    %7704 = vmatprep.subr.mxu0 0.0
    %7705 = vmatpush1.msra.mxu0 0.0
    %7706 = vmatprep.subr.mxu0 0.0
    %7707 = vmatpush1.msra.mxu0 0.0
    %7708 = vmatprep.subr.mxu0 0.0
    %7709 = vmatpush1.msra.mxu0 0.0
    %7710 = vmatprep.subr.mxu0 0.0
    %7711 = vmatpush1.msra.mxu0 0.0
    %7712 = vmatprep.subr.mxu0 0.0
    %7713 = vmatpush1.msra.mxu0 0.0
    %7714 = vmatprep.subr.mxu0 0.0
    %7715 = vmatpush1.msra.mxu0 0.0
    %7716 = vmatprep.subr.mxu0 0.0
    %7717 = vmatpush1.msra.mxu0 0.0
    %7718 = vmatprep.subr.mxu0 0.0
    %7719 = vmatpush1.msra.mxu0 0.0
    %7720 = vmatprep.subr.mxu0 0.0
    %7721 = vmatpush1.msra.mxu0 0.0
    %7722 = vmatprep.subr.mxu0 0.0
    %7723 = vmatpush1.msra.mxu0 0.0
    %7724 = vmatprep.subr.mxu0 0.0
    %7725 = vmatpush1.msra.mxu0 0.0
    %7726 = vmatprep.subr.mxu0 0.0
    %7727 = vmatpush1.msra.mxu0 0.0
    %7728 = vmatprep.mubr.f32.mxu0 0.0
    %7729 = vmatmul.mubr.f32.gmra.mrb[0].mxu0 %v6777
    %v7730 = vpop.f32.mrb[0].mxu0
    %v7731 = vadd.f32 %v4672, %v7730
    %v7732 = vpop.f32.mrb[0].mxu0
    %7733 = vdwg.mxu0
    %v7734 = vadd.f32 %v7663, %v7731
    %v7735 = vxor.u32 %v7734, 2147483648
    %v7736 = vmul.f32 %v7735, 1.442695
    %v7737 = vpow.pop %v7736
    %v7738 = vadd.f32 %v7737, 1.0
    %v7739 = vrcp.pop %v7738
    %v7740 = vmul.f32 1.0, %v7739
    %7742 = vrot.lane.b32.xlu0 %v7731, 96
    %v7743 = vpop.permute.xlu0 %7742
    %v7745 = vmul.f32 %v7740, %v7743
    %7747 = vrot.lane.b32.xlu0 %v7745, 32
    %v7748 = vpop.permute.xlu0 %7747
    %v7750 = vadd.f32 %v7663, %v7748
    %v7751 = vtanh.pop %v7750
    %v7752 = vmul.f32 %v7740, %v4768
    %v7753 = vsub.f32 1.0, %v7740
    %7755 = vrot.lane.b32.xlu0 %v7751, 112
    %v7756 = vpop.permute.xlu0 %7755
    %v7758 = vmul.f32 %v7753, %v7756
    %v7759 = vadd.f32 %v7752, %v7758
    %v7762 = vrot.slane %v7014, 7
    %v7763 = vsel %vm3518, %v7762, %v7013
    %7764 = vrot.lane.b32.xlu0 %v7763, 112
    %v7765 = vpop.permute.xlu0 %7764
    %v7767 = vrot.slane %v7013, 1
    %v7768 = vsel %vm3518, %v7014, %v7767
    %v7770 = vrot.slane %v7013, 2
    %v7771 = vrot.slane %v7014, 1
    %v7772 = vsel %vm3518, %v7771, %v7770
    %7773 = vrot.lane.b32.xlu0 %v7772, 16
    %v7774 = vpop.permute.xlu0 %7773
    %v7776 = vrot.slane %v7013, 3
    %v7777 = vrot.slane %v7014, 2
    %v7778 = vsel %vm3518, %v7777, %v7776
    %7779 = vrot.lane.b32.xlu0 %v7778, 32
    %v7780 = vpop.permute.xlu0 %7779
    %v7782 = vrot.slane %v7013, 4
    %v7783 = vrot.slane %v7014, 3
    %v7784 = vsel %vm3518, %v7783, %v7782
    %7785 = vrot.lane.b32.xlu0 %v7784, 48
    %v7786 = vpop.permute.xlu0 %7785
    %v7788 = vrot.slane %v7013, 5
    %v7789 = vrot.slane %v7014, 4
    %v7790 = vsel %vm3518, %v7789, %v7788
    %7791 = vrot.lane.b32.xlu0 %v7790, 64
    %v7792 = vpop.permute.xlu0 %7791
    %v7794 = vrot.slane %v7013, 6
    %v7795 = vrot.slane %v7014, 5
    %v7796 = vsel %vm3518, %v7795, %v7794
    %7797 = vrot.lane.b32.xlu0 %v7796, 80
    %v7798 = vpop.permute.xlu0 %7797
    %v7800 = vrot.slane %v7013, 7
    %v7801 = vrot.slane %v7014, 6
    %v7802 = vsel %vm3518, %v7801, %v7800
    %7803 = vrot.lane.b32.xlu0 %v7802, 96
    %v7804 = vpop.permute.xlu0 %7803
    %v7806 = vsel %vm1323, %v7765, %v7768
    %vm7807 = vcmask 261120
    %v7808 = vsel %vm7807, %v7806, %v7774
    %vm7809 = vcmask 392192
    %v7810 = vsel %vm7809, %v7808, %v7780
    %vm7811 = vcmask 523264
    %v7812 = vsel %vm7811, %v7810, %v7786
    %vm7813 = vcmask 654336
    %v7814 = vsel %vm7813, %v7812, %v7792
    %vm7815 = vcmask 785408
    %v7816 = vsel %vm7815, %v7814, %v7798
    %vm7817 = vcmask 916480
    %v7818 = vsel %vm7817, %v7816, %v7804
    %v7821 = vrot.slane %v7476, 7
    %v7822 = vsel %vm3518, %v7821, %v7475
    %7823 = vrot.lane.b32.xlu0 %v7822, 112
    %v7824 = vpop.permute.xlu0 %7823
    %v7826 = vrot.slane %v7475, 1
    %v7827 = vsel %vm3518, %v7476, %v7826
    %v7829 = vrot.slane %v7475, 2
    %v7830 = vrot.slane %v7476, 1
    %v7831 = vsel %vm3518, %v7830, %v7829
    %7832 = vrot.lane.b32.xlu0 %v7831, 16
    %v7833 = vpop.permute.xlu0 %7832
    %v7835 = vrot.slane %v7475, 3
    %v7836 = vrot.slane %v7476, 2
    %v7837 = vsel %vm3518, %v7836, %v7835
    %7838 = vrot.lane.b32.xlu0 %v7837, 32
    %v7839 = vpop.permute.xlu0 %7838
    %v7841 = vrot.slane %v7475, 4
    %v7842 = vrot.slane %v7476, 3
    %v7843 = vsel %vm3518, %v7842, %v7841
    %7844 = vrot.lane.b32.xlu0 %v7843, 48
    %v7845 = vpop.permute.xlu0 %7844
    %v7847 = vrot.slane %v7475, 5
    %v7848 = vrot.slane %v7476, 4
    %v7849 = vsel %vm3518, %v7848, %v7847
    %7850 = vrot.lane.b32.xlu0 %v7849, 64
    %v7851 = vpop.permute.xlu0 %7850
    %v7853 = vrot.slane %v7475, 6
    %v7854 = vrot.slane %v7476, 5
    %v7855 = vsel %vm3518, %v7854, %v7853
    %7856 = vrot.lane.b32.xlu0 %v7855, 80
    %v7857 = vpop.permute.xlu0 %7856
    %v7859 = vrot.slane %v7475, 7
    %v7860 = vrot.slane %v7476, 6
    %v7861 = vsel %vm3518, %v7860, %v7859
    %7862 = vrot.lane.b32.xlu0 %v7861, 96
    %v7863 = vpop.permute.xlu0 %7862
    %v7865 = vsel %vm1323, %v7824, %v7827
    %v7866 = vsel %vm7807, %v7865, %v7833
    %v7867 = vsel %vm7809, %v7866, %v7839
    %v7868 = vsel %vm7811, %v7867, %v7845
    %v7869 = vsel %vm7813, %v7868, %v7851
    %v7870 = vsel %vm7815, %v7869, %v7857
    %v7871 = vsel %vm7817, %v7870, %v7863
    %v7874 = vunpack.c.l.s4 1966171168
    %v7875 = vunpack.c.0.s8 %v7874
    %v7876 = vlaneseq
    %v7877 = vshrl.u32 %v7876, 7
    %v7878 = vsub.s32 %v7875, %v7877
    %v7879 = vrot.slane %v7818, %v7878
    %v7880 = vcombine.high %v7879, %v7879
    %v7882 = vunpack.c.l.s4 1966171168
    %v7883 = vunpack.c.0.s8 %v7882
    %v7884 = vlaneseq
    %v7885 = vshrl.u32 %v7884, 7
    %v7886 = vsub.s32 %v7883, %v7885
    %v7887 = vrot.slane %v7879, %v7886
    %v7889 = vunpack.c.l.s4 1966171168
    %v7890 = vunpack.c.0.s8 %v7889
    %v7891 = vlaneseq
    %v7892 = vshrl.u32 %v7891, 7
    %v7893 = vsub.s32 %v7890, %v7892
    %v7894 = vrot.slane %v7880, %v7893
    %7897 = vst [vmem:[#allocation2] sm:$0x1] %v7887
    %7898 = vst [vmem:[#allocation2 + $0x1] sm:$0x1] %v7894
    %v7901 = vunpack.c.l.s4 1966171168
    %v7902 = vunpack.c.0.s8 %v7901
    %v7903 = vlaneseq
    %v7904 = vshrl.u32 %v7903, 7
    %v7905 = vsub.s32 %v7902, %v7904
    %v7906 = vrot.slane %v7871, %v7905
    %v7907 = vcombine.high %v7906, %v7906
    %v7909 = vunpack.c.l.s4 1966171168
    %v7910 = vunpack.c.0.s8 %v7909
    %v7911 = vlaneseq
    %v7912 = vshrl.u32 %v7911, 7
    %v7913 = vsub.s32 %v7910, %v7912
    %v7914 = vrot.slane %v7906, %v7913
    %v7916 = vunpack.c.l.s4 1966171168
    %v7917 = vunpack.c.0.s8 %v7916
    %v7918 = vlaneseq
    %v7919 = vshrl.u32 %v7918, 7
    %v7920 = vsub.s32 %v7917, %v7919
    %v7921 = vrot.slane %v7907, %v7920
    %7924 = vst [vmem:[#allocation4] sm:$0x1] %v7914
    %7925 = vst [vmem:[#allocation4 + $0x1] sm:$0x1] %v7921
    %v7928 = vunpack.c.l.s4 1966171168
    %v7929 = vunpack.c.0.s8 %v7928
    %v7930 = vlaneseq
    %v7931 = vshrl.u32 %v7930, 7
    %v7932 = vsub.s32 %v7929, %v7931
    %v7933 = vrot.slane %v7759, %v7932
    %v7934 = vcombine.high %v7933, %v7933
    %v7936 = vunpack.c.l.s4 1966171168
    %v7937 = vunpack.c.0.s8 %v7936
    %v7938 = vlaneseq
    %v7939 = vshrl.u32 %v7938, 7
    %v7940 = vsub.s32 %v7937, %v7939
    %v7941 = vrot.slane %v7933, %v7940
    %v7943 = vunpack.c.l.s4 1966171168
    %v7944 = vunpack.c.0.s8 %v7943
    %v7945 = vlaneseq
    %v7946 = vshrl.u32 %v7945, 7
    %v7947 = vsub.s32 %v7944, %v7946
    %v7948 = vrot.slane %v7934, %v7947
    %v7949 = vlaneseq
    %v7950 = vshrl.u32 %v7949, 7
    %v7951 = vsub.s32 0, %v7950
    %v7952 = vrot.slane %v7941, %v7951
    %v7953 = vlaneseq
    %v7954 = vshrl.u32 %v7953, 7
    %v7955 = vsub.s32 0, %v7954
    %v7956 = vrot.slane %v7948, %v7955
    %7957 = vrot.lane.b32.xlu0 %v7952, 112
    %v7958 = vpop.permute.xlu0 %7957
    %7959 = vrot.lane.b32.xlu0 %v7956, 112
    %v7960 = vpop.permute.xlu0 %7959
    %vm7963 = vcmask 122880
    %7964 = vst.msk [vmem:[#allocation6] sm:$0x1] %vm7963, %v7958
    %7965 = vst.msk [vmem:[#allocation6 + $0x1] sm:$0x1] %vm7963, %v7960
    // Predicated region
    $region34: #{tpu_custom_call.1} parent=1 // pred_check
      _
    $region35: #{tpu_custom_call.1} parent=1 // pred_check_branch
      %7967 = sbr.rel (0) target = $region37
    $region36: #{tpu_custom_call.1} parent=1 // pred_region
      %s7969 = ssub.s32 32, 32
      %7970 = vsyncadd [#allocation3], %s7969
      %s7971 = sshll.u32 [#allocation2], 4
      %s7972 = int_to_ptr.vmem [resolvable:$true] %s7971
      %7977 = dma.vmem_to_hbm [thread:$0]  %s7972, 32, %s8, [#allocation3], 16, 16, 1
    $region37: #{tpu_custom_call.1} parent=1 // pred_fallthru
      _
    // Predicated region
    $region38: #{tpu_custom_call.1} parent=1 // pred_check
      _
    $region39: #{tpu_custom_call.1} parent=1 // pred_check_branch
      %7979 = sbr.rel (0) target = $region41
    $region40: #{tpu_custom_call.1} parent=1 // pred_region
      %s7981 = ssub.s32 32, 32
      %7982 = vsyncadd [#allocation5], %s7981
      %s7983 = sshll.u32 [#allocation4], 4
      %s7984 = int_to_ptr.vmem [resolvable:$true] %s7983
      %7989 = dma.vmem_to_hbm [thread:$0]  %s7984, 32, %s9, [#allocation5], 16, 16, 1
    $region41: #{tpu_custom_call.1} parent=1 // pred_fallthru
      _
    // Predicated region
    $region42: #{tpu_custom_call.1} parent=1 // pred_check
      _
    $region43: #{tpu_custom_call.1} parent=1 // pred_check_branch
      %7991 = sbr.rel (0) target = $region45
    $region44: #{tpu_custom_call.1} parent=1 // pred_region
      %s7993 = ssub.s32 32, 32
      %7994 = vsyncadd [#allocation5], %s7993
      %s7995 = sshll.u32 [#allocation6], 4
      %s7996 = int_to_ptr.vmem [resolvable:$true] %s7995
      %8001 = dma.vmem_to_hbm [thread:$0]  %s7996, 32, %s10, [#allocation5], 16, 16, 1
    $region45: #{tpu_custom_call.1} parent=1 // pred_fallthru
      _
    // Predicated region
    $region46: #{tpu_custom_call.1} parent=1 // pred_check
      _
    $region47: #{tpu_custom_call.1} parent=1 // pred_check_branch
      %8003 = sbr.rel (0) target = $region49
    $region48: #{tpu_custom_call.1} parent=1 // pred_region
      %8004 = dma.done [#allocation3], 32
    $region49: #{tpu_custom_call.1} parent=1 // pred_fallthru
      _
    // Predicated region
    $region50: #{tpu_custom_call.1} parent=1 // pred_check
      _
    $region51: #{tpu_custom_call.1} parent=1 // pred_check_branch
      %8006 = sbr.rel (0) target = $region53
    $region52: #{tpu_custom_call.1} parent=1 // pred_region
      %8007 = dma.done [#allocation5], 32
    $region53: #{tpu_custom_call.1} parent=1 // pred_fallthru
      _
    // Predicated region
    $region54: #{tpu_custom_call.1} parent=1 // pred_check
      _
    $region55: #{tpu_custom_call.1} parent=1 // pred_check_branch
      %8009 = sbr.rel (0) target = $region57
    $region56: #{tpu_custom_call.1} parent=1 // pred_region
      %8010 = dma.done [#allocation5], 32
    $region57: #{tpu_custom_call.1} parent=1 // pred_fallthru
      _
    %8011 = vsyncpa [#allocation3], 1
    %8012 = vsyncpa [#allocation5], 1

</llo_original>
